<compile_context>
chip_gen: v7x
topology: tpu7x:2x2x1
jax: 0.10.0
libtpu: 0.0.40
codegen_flags: <defaults>
</compile_context>

<pallas_src>
import functools

import numpy as np
import jax
import jax.numpy as jnp
from jax import lax
from jax.experimental import pallas as pl
from jax.experimental.pallas import tpu as pltpu

_EPS = 1e-6                          # every norm in ConvNeXt uses eps=1e-6
_VMEM_LIMIT = 32 * 1024 * 1024       # explicit, safe on v5e/v6e/v7x


# ----------------------------------------------------------------------------
# in-kernel math helpers
# ----------------------------------------------------------------------------
def _layernorm(x, gamma, beta):
  """LayerNorm over the last axis (biased variance), matching F.layer_norm."""
  mu = jnp.mean(x, axis=-1, keepdims=True)
  xc = x - mu
  var = jnp.mean(xc * xc, axis=-1, keepdims=True)
  return xc * lax.rsqrt(var + _EPS) * gamma + beta


def _erf(x):
  # Abramowitz & Stegun 7.1.26 rational approximation (|err| < 1.5e-7).
  # Divide pushed to the EUP via approximate reciprocal.
  a1, a2, a3, a4, a5 = 0.254829592, -0.284496736, 1.421413741, -1.453152027, 1.061405429
  p = 0.3275911
  ax = jnp.abs(x)
  t = pl.reciprocal(1.0 + p * ax, approx=True)
  poly = ((((a5 * t + a4) * t + a3) * t + a2) * t + a1) * t
  r = 1.0 - poly * jnp.exp(-ax * ax)
  return jnp.where(x < 0.0, -r, r)


def _gelu(x):
  # PyTorch nn.GELU() default is the exact (erf-based) GELU.
  return 0.5 * x * (1.0 + _erf(x * 0.7071067811865476))


# ----------------------------------------------------------------------------
# Pallas kernels
# ----------------------------------------------------------------------------
def _stem_kernel(p_ref, w_ref, b_ref, g_ref, beta_ref, o_ref):
  # Stem: 4x4/4 conv as patch matmul (bf16 MXU, f32 acc) fused with LayerNorm2d.
  y = jnp.dot(p_ref[...].astype(jnp.bfloat16), w_ref[...],
              preferred_element_type=jnp.float32) + b_ref[...]
  o_ref[...] = _layernorm(y, g_ref[...], beta_ref[...])


def _downsample_kernel(x0_ref, x1_ref, x2_ref, x3_ref, g_ref, beta_ref,
                       w_ref, b_ref, o_ref):
  # LayerNorm2d fused with the 2x2/stride-2 conv: 4 per-tap matmuls summed.
  acc = jnp.zeros(o_ref.shape, jnp.float32)
  for p, xr in enumerate((x0_ref, x1_ref, x2_ref, x3_ref)):
    ln = _layernorm(xr[...], g_ref[...], beta_ref[...])
    acc = acc + jnp.dot(ln.astype(jnp.bfloat16), w_ref[p],
                        preferred_element_type=jnp.float32)
  o_ref[...] = acc + b_ref[...]


def _cnblock_kernel(x_ref, mask_ref, dww_ref, dwb_ref, g_ref, beta_ref,
                    w1_ref, b1_ref, w2_ref, b2_ref, ls_ref, o_ref, *, H, W):
  # Fully fused CNBlock for one image (grid step = one batch element):
  #   depthwise 7x7 (pad 3)  ->  LN  ->  Linear(C,4C)  ->  GELU
  #   ->  Linear(4C,C)  ->  * layer_scale  ->  + residual (kernel input).
  x = x_ref[0]                       # [HW, C] float32, also the residual
  HW = H * W

  # Depthwise conv on the flattened [HW, C] slab: each tap is a sublane roll
  # (XLU) of the whole slab plus a precomputed border-validity mask.  No pad
  # buffer, no unaligned sublane slices.
  acc = jnp.zeros(x.shape, jnp.float32)
  for t in range(49):
    dh, dw = t // 7 - 3, t % 7 - 3
    s = dh * W + dw                  # flat shift for this tap
    shift = (-s) % HW
    shifted = pltpu.roll(x, shift, 0) if shift != 0 else x
    acc = acc + (shifted * mask_ref[t]) * dww_ref[t]
  y = acc + dwb_ref[...]

  # Inverted-bottleneck MLP: bf16 MXU operands, f32 accumulation/elementwise.
  h = _layernorm(y, g_ref[...], beta_ref[...])
  h = jnp.dot(h.astype(jnp.bfloat16), w1_ref[...],
              preferred_element_type=jnp.float32) + b1_ref[...]
  h = _gelu(h)
  h = jnp.dot(h.astype(jnp.bfloat16), w2_ref[...],
              preferred_element_type=jnp.float32) + b2_ref[...]

  # TODO(synk): StochasticDepth (training-mode row dropout) is identity at inference.
  o_ref[0] = x + ls_ref[...] * h


def _head_kernel(x_ref, g_ref, beta_ref, w_ref, b_ref, o_ref):
  # AdaptiveAvgPool2d(1) -> LayerNorm2d -> Flatten -> Linear
  pooled = jnp.mean(x_ref[...], axis=1)                       # [N, C]
  h = _layernorm(pooled, g_ref[...], beta_ref[...])
  o_ref[...] = jnp.dot(h, w_ref[...],
                       preferred_element_type=jnp.float32) + b_ref[...]


# ----------------------------------------------------------------------------
# wrappers / glue
# ----------------------------------------------------------------------------
def _row_tile(rows):
  """Largest convenient row tile (multiple of 8) dividing `rows`."""
  for cand in (512, 256, 128, 64, 32, 16, 8):
    if rows % cand == 0:
      return cand
  return rows  # full array (exempt from the (8,128) rule)


def _patchify(x, k):
  """[N,H,W,C] -> [N*(H//k)*(W//k), k*k*C]; in-patch order (kh, kw, cin)."""
  N, H, W, C = x.shape
  x = x.reshape(N, H // k, k, W // k, k, C)
  x = x.transpose(0, 1, 3, 2, 4, 5)
  return x.reshape(N * (H // k) * (W // k), k * k * C)


def _dw_mask(H, W):
  """[49, H*W, 1] validity mask for each 7x7 tap (zero-padding semantics)."""
  r = np.arange(H * W)
  h, w = r // W, r % W
  m = np.zeros((49, H * W, 1), np.float32)
  for t in range(49):
    dh, dw = t // 7 - 3, t % 7 - 3
    valid = (h + dh >= 0) & (h + dh < H) & (w + dw >= 0) & (w + dw < W)
    m[t, :, 0] = valid.astype(np.float32)
  return jnp.asarray(m)


def _stem(x_nhwc, p):
  N, H, W, _ = x_nhwc.shape
  # TODO(synk): the 4x4 patch extraction (transpose) remains XLA-side glue.
  patches = _patchify(x_nhwc, 4)                 # [rows, 48]
  rows, K = patches.shape
  c_out = p["w"].shape[1]
  tm = _row_tile(rows)
  out = pl.pallas_call(
      _stem_kernel,
      out_shape=jax.ShapeDtypeStruct((rows, c_out), jnp.float32),
      grid=(rows // tm,),
      in_specs=[
          pl.BlockSpec((tm, K), lambda i: (i, 0)),
          pl.BlockSpec((K, c_out), lambda i: (0, 0)),       # weights resident
          pl.BlockSpec((1, c_out), lambda i: (0, 0)),
          pl.BlockSpec((1, c_out), lambda i: (0, 0)),
          pl.BlockSpec((1, c_out), lambda i: (0, 0)),
      ],
      out_specs=pl.BlockSpec((tm, c_out), lambda i: (i, 0)),
      compiler_params=pltpu.CompilerParams(
          dimension_semantics=("parallel",),
          vmem_limit_bytes=_VMEM_LIMIT),
  )(patches, p["w"], p["b"], p["ln_g"], p["ln_b"])
  return out.reshape(N, (H // 4) * (W // 4), c_out), H // 4, W // 4


def _cnblock(x, H, W, p, mask):
  # x: [N, H*W, C] flat activations.
  N, HW, C = x.shape
  kern = functools.partial(_cnblock_kernel, H=H, W=W)
  return pl.pallas_call(
      kern,
      out_shape=jax.ShapeDtypeStruct((N, HW, C), jnp.float32),
      grid=(N,),
      in_specs=[
          pl.BlockSpec((1, HW, C), lambda n: (n, 0, 0)),
          pl.BlockSpec((49, HW, 1), lambda n: (0, 0, 0)),
          pl.BlockSpec((49, C), lambda n: (0, 0)),
          pl.BlockSpec((1, C), lambda n: (0, 0)),
          pl.BlockSpec((1, C), lambda n: (0, 0)),
          pl.BlockSpec((1, C), lambda n: (0, 0)),
          pl.BlockSpec((C, 4 * C), lambda n: (0, 0)),
          pl.BlockSpec((1, 4 * C), lambda n: (0, 0)),
          pl.BlockSpec((4 * C, C), lambda n: (0, 0)),
          pl.BlockSpec((1, C), lambda n: (0, 0)),
          pl.BlockSpec((1, C), lambda n: (0, 0)),
      ],
      out_specs=pl.BlockSpec((1, HW, C), lambda n: (n, 0, 0)),
      compiler_params=pltpu.CompilerParams(
          dimension_semantics=("parallel",),         # megacore over batch
          vmem_limit_bytes=_VMEM_LIMIT),
  )(x, mask, p["dw_w"], p["dw_b"], p["ln_g"], p["ln_b"],
    p["w1"], p["b1"], p["w2"], p["b2"], p["ls"])


def _downsample(x, H, W, p):
  N, HW, C = x.shape
  x4 = x.reshape(N, H, W, C)
  # Four per-tap pixel streams of the 2x2/stride-2 conv (lane-dense [rows, C]).
  taps = [x4[:, kh::2, kw::2, :].reshape(N * (H // 2) * (W // 2), C)
          for kh in range(2) for kw in range(2)]
  rows = taps[0].shape[0]
  c_out = p["w"].shape[-1]
  tm = _row_tile(rows)
  tap_spec = pl.BlockSpec((tm, C), lambda i: (i, 0))
  out = pl.pallas_call(
      _downsample_kernel,
      out_shape=jax.ShapeDtypeStruct((rows, c_out), jnp.float32),
      grid=(rows // tm,),
      in_specs=[tap_spec, tap_spec, tap_spec, tap_spec,
                pl.BlockSpec((1, C), lambda i: (0, 0)),
                pl.BlockSpec((1, C), lambda i: (0, 0)),
                pl.BlockSpec((4, C, c_out), lambda i: (0, 0, 0)),
                pl.BlockSpec((1, c_out), lambda i: (0, 0))],
      out_specs=pl.BlockSpec((tm, c_out), lambda i: (i, 0)),
      compiler_params=pltpu.CompilerParams(
          dimension_semantics=("parallel",),
          vmem_limit_bytes=_VMEM_LIMIT),
  )(*taps, p["ln_g"], p["ln_b"], p["w"], p["b"])
  return out.reshape(N, (H // 2) * (W // 2), c_out), H // 2, W // 2


def _head(x, p):
  N, HW, C = x.shape
  nc = p["w"].shape[1]
  return pl.pallas_call(
      _head_kernel,
      out_shape=jax.ShapeDtypeStruct((N, nc), jnp.float32),
      in_specs=[pl.BlockSpec(memory_space=pltpu.MemorySpace.VMEM)] * 5,
      out_specs=pl.BlockSpec(memory_space=pltpu.MemorySpace.VMEM),
      compiler_params=pltpu.CompilerParams(vmem_limit_bytes=_VMEM_LIMIT),
  )(x, p["ln_g"], p["ln_b"], p["w"], p["b"])


def convnext_forward(x_nchw, params):
  """x_nchw: [N, 3, H, W] float32 (PyTorch convention) -> logits [N, num_classes]."""
  x = jnp.transpose(x_nchw, (0, 2, 3, 1)).astype(jnp.float32)  # NCHW -> NHWC
  x, H, W = _stem(x, params["stem"])
  for stage in params["stages"]:
    mask = _dw_mask(H, W)            # per-resolution 7x7 border masks (constant)
    for blk in stage["blocks"]:
      x = _cnblock(x, H, W, blk, mask)
    if stage["downsample"] is not None:
      x, H, W = _downsample(x, H, W, stage["downsample"])
  return _head(x, params["head"])


# ----------------------------------------------------------------------------
# deterministic parameter init (matches __init__: trunc_normal std=0.02 for
# conv/linear weights, zero biases, unit LN gains, layer_scale * ones).
# MXU weight matrices are stored in bfloat16 (f32 accumulation in-kernel).
# ----------------------------------------------------------------------------
def init_params(key, block_setting, layer_scale, num_classes):
  std = 0.02
  keys = iter(jax.random.split(key, 512))

  def tn(shape, dtype=jnp.float32):
    w = std * jax.random.truncated_normal(next(keys), -2.0 / std, 2.0 / std, shape)
    return w.astype(dtype)

  zeros = lambda s: jnp.zeros(s, jnp.float32)
  ones = lambda s: jnp.ones(s, jnp.float32)

  c0 = block_setting[0][0]
  params = {
      "stem": dict(w=tn((4 * 4 * 3, c0), jnp.bfloat16), b=zeros((1, c0)),
                   ln_g=ones((1, c0)), ln_b=zeros((1, c0))),
      "stages": [],
  }
  for (cin, cout, num_layers) in block_setting:
    blocks = []
    for _ in range(num_layers):
      d = cin
      blocks.append(dict(
          dw_w=tn((49, d)), dw_b=zeros((1, d)),
          ln_g=ones((1, d)), ln_b=zeros((1, d)),
          w1=tn((d, 4 * d), jnp.bfloat16), b1=zeros((1, 4 * d)),
          w2=tn((4 * d, d), jnp.bfloat16), b2=zeros((1, d)),
          ls=jnp.full((1, d), layer_scale, jnp.float32)))
    ds = None
    if cout is not None:
      ds = dict(ln_g=ones((1, cin)), ln_b=zeros((1, cin)),
                w=tn((4, cin, cout), jnp.bfloat16), b=zeros((1, cout)))
    params["stages"].append(dict(blocks=blocks, downsample=ds))

  last_c = block_setting[-1][1] if block_setting[-1][1] is not None else block_setting[-1][0]
  params["head"] = dict(ln_g=ones((1, last_c)), ln_b=zeros((1, last_c)),
                        w=tn((last_c, num_classes)), b=zeros((1, num_classes)))
  return params


if __name__ == "__main__":
  # CNBlockConfig equivalents: (input_channels, output_channels, num_layers)
  block_setting = [(32, 64, 2), (64, None, 2)]
  layer_scale = 1e-6
  num_classes = 10
  # stochastic_depth_prob = 0.1  # identity at inference; unused here

  key = jax.random.PRNGKey(0)
  pkey, xkey = jax.random.split(key)
  params = init_params(pkey, block_setting, layer_scale, num_classes)
  x = jax.random.normal(xkey, (2, 3, 16, 16), jnp.float32)

  out = jax.jit(lambda inp: convnext_forward(inp, params))(x)
  jax.block_until_ready(out)
  assert out.shape == (2, num_classes), out.shape
  print("KERNEL_OK")
</pallas_src>

<mosaic_0001>
module attributes {stable_mosaic.version = 11 : i64} {
  func.func @_stem_kernel(%arg0: i32, %arg1: memref<32x48xf32, #tpu.memory_space<vmem>>, %arg2: memref<48x32xbf16, #tpu.memory_space<vmem>>, %arg3: memref<1x32xf32, #tpu.memory_space<vmem>>, %arg4: memref<1x32xf32, #tpu.memory_space<vmem>>, %arg5: memref<1x32xf32, #tpu.memory_space<vmem>>, %arg6: memref<32x32xf32, #tpu.memory_space<vmem>>) attributes {dimension_semantics = [#tpu.dimension_semantics<parallel>], iteration_bounds = array<i64: 1>, scalar_prefetch = 0 : i64, scratch_operands = 0 : i64, tpu.core_type = #tpu.core_type<tc>, window_params = [{transform_indices = @transform_0, window_bounds = array<i64: 32, 48>}, {pipeline_mode = #tpu.pipeline_mode<synchronous>, transform_indices = @transform_1, window_bounds = array<i64: 48, 32>}, {pipeline_mode = #tpu.pipeline_mode<synchronous>, transform_indices = @transform_2, window_bounds = array<i64: 1, 32>}, {pipeline_mode = #tpu.pipeline_mode<synchronous>, transform_indices = @transform_3, window_bounds = array<i64: 1, 32>}, {pipeline_mode = #tpu.pipeline_mode<synchronous>, transform_indices = @transform_4, window_bounds = array<i64: 1, 32>}, {transform_indices = @transform_5, window_bounds = array<i64: 32, 32>}]} {
    %c0 = arith.constant 0 : index
    %c0_0 = arith.constant 0 : index
    %0 = vector.load %arg1[%c0, %c0_0] : memref<32x48xf32, #tpu.memory_space<vmem>>, vector<32x48xf32>
    %1 = arith.truncf %0 : vector<32x48xf32> to vector<32x48xbf16>
    %c0_1 = arith.constant 0 : index
    %c0_2 = arith.constant 0 : index
    %2 = vector.load %arg2[%c0_1, %c0_2] : memref<48x32xbf16, #tpu.memory_space<vmem>>, vector<48x32xbf16>
    %cst = arith.constant dense<0.000000e+00> : vector<32x32xf32>
    %3 = tpu.matmul %1, %2, %cst {dimension_numbers = #tpu.dot_dimension_numbers<[1], [0], [0], [1], [0, 0, 1, 1], [], []>} : vector<32x48xbf16>, vector<48x32xbf16>, vector<32x32xf32> -> vector<32x32xf32>
    %c0_3 = arith.constant 0 : index
    %c0_4 = arith.constant 0 : index
    %4 = vector.load %arg3[%c0_3, %c0_4] : memref<1x32xf32, #tpu.memory_space<vmem>>, vector<1x32xf32>
    %5 = vector.broadcast %4 : vector<1x32xf32> to vector<32x32xf32>
    %6 = arith.addf %3, %5 : vector<32x32xf32>
    %c0_5 = arith.constant 0 : index
    %c0_6 = arith.constant 0 : index
    %7 = vector.load %arg4[%c0_5, %c0_6] : memref<1x32xf32, #tpu.memory_space<vmem>>, vector<1x32xf32>
    %c0_7 = arith.constant 0 : index
    %c0_8 = arith.constant 0 : index
    %8 = vector.load %arg5[%c0_7, %c0_8] : memref<1x32xf32, #tpu.memory_space<vmem>>, vector<1x32xf32>
    %cst_9 = arith.constant dense<0.000000e+00> : vector<32xf32>
    %9 = vector.multi_reduction <add>, %6, %cst_9 [1] : vector<32x32xf32> to vector<32xf32>
    %10 = vector.shape_cast %9 : vector<32xf32> to vector<32x1xf32>
    %cst_10 = arith.constant 3.200000e+01 : f32
    %11 = vector.broadcast %cst_10 : f32 to vector<32x1xf32>
    %12 = arith.divf %10, %11 : vector<32x1xf32>
    %13 = vector.broadcast %12 : vector<32x1xf32> to vector<32x32xf32>
    %14 = arith.subf %6, %13 : vector<32x32xf32>
    %15 = arith.mulf %14, %14 : vector<32x32xf32>
    %cst_11 = arith.constant dense<0.000000e+00> : vector<32xf32>
    %16 = vector.multi_reduction <add>, %15, %cst_11 [1] : vector<32x32xf32> to vector<32xf32>
    %17 = vector.shape_cast %16 : vector<32xf32> to vector<32x1xf32>
    %cst_12 = arith.constant 3.200000e+01 : f32
    %18 = vector.broadcast %cst_12 : f32 to vector<32x1xf32>
    %19 = arith.divf %17, %18 : vector<32x1xf32>
    %cst_13 = arith.constant 9.99999997E-7 : f32
    %20 = vector.broadcast %cst_13 : f32 to vector<32x1xf32>
    %21 = arith.addf %19, %20 : vector<32x1xf32>
    %22 = math.rsqrt %21 : vector<32x1xf32>
    %23 = vector.broadcast %22 : vector<32x1xf32> to vector<32x32xf32>
    %24 = arith.mulf %14, %23 : vector<32x32xf32>
    %25 = vector.broadcast %7 : vector<1x32xf32> to vector<32x32xf32>
    %26 = arith.mulf %24, %25 : vector<32x32xf32>
    %27 = vector.broadcast %8 : vector<1x32xf32> to vector<32x32xf32>
    %28 = arith.addf %26, %27 : vector<32x32xf32>
    %c0_14 = arith.constant 0 : index
    %c0_15 = arith.constant 0 : index
    %29 = vector.load %arg6[%c0_14, %c0_15] : memref<32x32xf32, #tpu.memory_space<vmem>>, vector<32x32xf32>
    tpu.vector_store %arg6[%c0_14, %c0_15], %28 {strides = array<i32>} : memref<32x32xf32, #tpu.memory_space<vmem>>, vector<32x32xf32>,
    return
  }
  func.func @transform_0(%arg0: i32) -> (i32, i32) {
    %c0_i32 = arith.constant 0 : i32
    %c0_i32_0 = arith.constant 0 : i32
    return %arg0, %c0_i32 : i32, i32
  }
  func.func @transform_1(%arg0: i32) -> (i32, i32) {
    %c0_i32 = arith.constant 0 : i32
    %c0_i32_0 = arith.constant 0 : i32
    %c0_i32_1 = arith.constant 0 : i32
    return %c0_i32, %c0_i32_0 : i32, i32
  }
  func.func @transform_2(%arg0: i32) -> (i32, i32) {
    %c0_i32 = arith.constant 0 : i32
    %c0_i32_0 = arith.constant 0 : i32
    %c0_i32_1 = arith.constant 0 : i32
    return %c0_i32, %c0_i32_0 : i32, i32
  }
  func.func @transform_3(%arg0: i32) -> (i32, i32) {
    %c0_i32 = arith.constant 0 : i32
    %c0_i32_0 = arith.constant 0 : i32
    %c0_i32_1 = arith.constant 0 : i32
    return %c0_i32, %c0_i32_0 : i32, i32
  }
  func.func @transform_4(%arg0: i32) -> (i32, i32) {
    %c0_i32 = arith.constant 0 : i32
    %c0_i32_0 = arith.constant 0 : i32
    %c0_i32_1 = arith.constant 0 : i32
    return %c0_i32, %c0_i32_0 : i32, i32
  }
  func.func @transform_5(%arg0: i32) -> (i32, i32) {
    %c0_i32 = arith.constant 0 : i32
    %c0_i32_0 = arith.constant 0 : i32
    return %arg0, %c0_i32 : i32, i32
  }
}

module attributes {stable_mosaic.version = 11 : i64} {
  func.func @_cnblock_kernel(%arg0: i32, %arg1: memref<1x16x32xf32, #tpu.memory_space<vmem>>, %arg2: memref<49x16x1xf32, #tpu.memory_space<vmem>>, %arg3: memref<49x32xf32, #tpu.memory_space<vmem>>, %arg4: memref<1x32xf32, #tpu.memory_space<vmem>>, %arg5: memref<1x32xf32, #tpu.memory_space<vmem>>, %arg6: memref<1x32xf32, #tpu.memory_space<vmem>>, %arg7: memref<32x128xbf16, #tpu.memory_space<vmem>>, %arg8: memref<1x128xf32, #tpu.memory_space<vmem>>, %arg9: memref<128x32xbf16, #tpu.memory_space<vmem>>, %arg10: memref<1x32xf32, #tpu.memory_space<vmem>>, %arg11: memref<1x32xf32, #tpu.memory_space<vmem>>, %arg12: memref<1x16x32xf32, #tpu.memory_space<vmem>>) attributes {dimension_semantics = [#tpu.dimension_semantics<parallel>], iteration_bounds = array<i64: 2>, scalar_prefetch = 0 : i64, scratch_operands = 0 : i64, tpu.core_type = #tpu.core_type<tc>, window_params = [{transform_indices = @transform_0, window_bounds = array<i64: 1, 16, 32>}, {pipeline_mode = #tpu.pipeline_mode<synchronous>, transform_indices = @transform_1, window_bounds = array<i64: 49, 16, 1>}, {pipeline_mode = #tpu.pipeline_mode<synchronous>, transform_indices = @transform_2, window_bounds = array<i64: 49, 32>}, {pipeline_mode = #tpu.pipeline_mode<synchronous>, transform_indices = @transform_3, window_bounds = array<i64: 1, 32>}, {pipeline_mode = #tpu.pipeline_mode<synchronous>, transform_indices = @transform_4, window_bounds = array<i64: 1, 32>}, {pipeline_mode = #tpu.pipeline_mode<synchronous>, transform_indices = @transform_5, window_bounds = array<i64: 1, 32>}, {pipeline_mode = #tpu.pipeline_mode<synchronous>, transform_indices = @transform_6, window_bounds = array<i64: 32, 128>}, {pipeline_mode = #tpu.pipeline_mode<synchronous>, transform_indices = @transform_7, window_bounds = array<i64: 1, 128>}, {pipeline_mode = #tpu.pipeline_mode<synchronous>, transform_indices = @transform_8, window_bounds = array<i64: 128, 32>}, {pipeline_mode = #tpu.pipeline_mode<synchronous>, transform_indices = @transform_9, window_bounds = array<i64: 1, 32>}, {pipeline_mode = #tpu.pipeline_mode<synchronous>, transform_indices = @transform_10, window_bounds = array<i64: 1, 32>}, {transform_indices = @transform_11, window_bounds = array<i64: 1, 16, 32>}]} {
    %c0 = arith.constant 0 : index
    %c0_0 = arith.constant 0 : index
    %c0_1 = arith.constant 0 : index
    %0 = vector.load %arg1[%c0, %c0_0, %c0_1] : memref<1x16x32xf32, #tpu.memory_space<vmem>>, vector<1x16x32xf32>
    %1 = vector.shape_cast %0 : vector<1x16x32xf32> to vector<16x32xf32>
    %cst = arith.constant 0.000000e+00 : f32
    %2 = vector.broadcast %cst : f32 to vector<16x32xf32>
    %c15_i32 = arith.constant 15 : i32
    %3 = tpu.dynamic_rotate %1 by %c15_i32 dim 0 : vector<16x32xf32>, i32 -> vector<16x32xf32>
    %c0_2 = arith.constant 0 : index
    %c0_3 = arith.constant 0 : index
    %c0_4 = arith.constant 0 : index
    %4 = vector.load %arg2[%c0_2, %c0_3, %c0_4] : memref<49x16x1xf32, #tpu.memory_space<vmem>>, vector<1x16x1xf32>
    %5 = vector.shape_cast %4 : vector<1x16x1xf32> to vector<16x1xf32>
    %6 = vector.broadcast %5 : vector<16x1xf32> to vector<16x32xf32>
    %7 = arith.mulf %3, %6 : vector<16x32xf32>
    %c0_5 = arith.constant 0 : index
    %c0_6 = arith.constant 0 : index
    %8 = vector.load %arg3[%c0_5, %c0_6] : memref<49x32xf32, #tpu.memory_space<vmem>>, vector<1x32xf32>
    %9 = vector.shape_cast %8 : vector<1x32xf32> to vector<32xf32>
    %10 = vector.shape_cast %9 : vector<32xf32> to vector<1x32xf32>
    %11 = vector.broadcast %10 : vector<1x32xf32> to vector<16x32xf32>
    %12 = arith.mulf %7, %11 : vector<16x32xf32>
    %13 = arith.addf %2, %12 : vector<16x32xf32>
    %c14_i32 = arith.constant 14 : i32
    %14 = tpu.dynamic_rotate %1 by %c14_i32 dim 0 : vector<16x32xf32>, i32 -> vector<16x32xf32>
    %c1 = arith.constant 1 : index
    %c0_7 = arith.constant 0 : index
    %c0_8 = arith.constant 0 : index
    %15 = vector.load %arg2[%c1, %c0_7, %c0_8] : memref<49x16x1xf32, #tpu.memory_space<vmem>>, vector<1x16x1xf32>
    %16 = vector.shape_cast %15 : vector<1x16x1xf32> to vector<16x1xf32>
    %17 = vector.broadcast %16 : vector<16x1xf32> to vector<16x32xf32>
    %18 = arith.mulf %14, %17 : vector<16x32xf32>
    %c1_9 = arith.constant 1 : index
    %c0_10 = arith.constant 0 : index
    %19 = vector.load %arg3[%c1_9, %c0_10] : memref<49x32xf32, #tpu.memory_space<vmem>>, vector<1x32xf32>
    %20 = vector.shape_cast %19 : vector<1x32xf32> to vector<32xf32>
    %21 = vector.shape_cast %20 : vector<32xf32> to vector<1x32xf32>
    %22 = vector.broadcast %21 : vector<1x32xf32> to vector<16x32xf32>
    %23 = arith.mulf %18, %22 : vector<16x32xf32>
    %24 = arith.addf %13, %23 : vector<16x32xf32>
    %c13_i32 = arith.constant 13 : i32
    %25 = tpu.dynamic_rotate %1 by %c13_i32 dim 0 : vector<16x32xf32>, i32 -> vector<16x32xf32>
    %c2 = arith.constant 2 : index
    %c0_11 = arith.constant 0 : index
    %c0_12 = arith.constant 0 : index
    %26 = vector.load %arg2[%c2, %c0_11, %c0_12] : memref<49x16x1xf32, #tpu.memory_space<vmem>>, vector<1x16x1xf32>
    %27 = vector.shape_cast %26 : vector<1x16x1xf32> to vector<16x1xf32>
    %28 = vector.broadcast %27 : vector<16x1xf32> to vector<16x32xf32>
    %29 = arith.mulf %25, %28 : vector<16x32xf32>
    %c2_13 = arith.constant 2 : index
    %c0_14 = arith.constant 0 : index
    %30 = vector.load %arg3[%c2_13, %c0_14] : memref<49x32xf32, #tpu.memory_space<vmem>>, vector<1x32xf32>
    %31 = vector.shape_cast %30 : vector<1x32xf32> to vector<32xf32>
    %32 = vector.shape_cast %31 : vector<32xf32> to vector<1x32xf32>
    %33 = vector.broadcast %32 : vector<1x32xf32> to vector<16x32xf32>
    %34 = arith.mulf %29, %33 : vector<16x32xf32>
    %35 = arith.addf %24, %34 : vector<16x32xf32>
    %c12_i32 = arith.constant 12 : i32
    %36 = tpu.dynamic_rotate %1 by %c12_i32 dim 0 : vector<16x32xf32>, i32 -> vector<16x32xf32>
    %c3 = arith.constant 3 : index
    %c0_15 = arith.constant 0 : index
    %c0_16 = arith.constant 0 : index
    %37 = vector.load %arg2[%c3, %c0_15, %c0_16] : memref<49x16x1xf32, #tpu.memory_space<vmem>>, vector<1x16x1xf32>
    %38 = vector.shape_cast %37 : vector<1x16x1xf32> to vector<16x1xf32>
    %39 = vector.broadcast %38 : vector<16x1xf32> to vector<16x32xf32>
    %40 = arith.mulf %36, %39 : vector<16x32xf32>
    %c3_17 = arith.constant 3 : index
    %c0_18 = arith.constant 0 : index
    %41 = vector.load %arg3[%c3_17, %c0_18] : memref<49x32xf32, #tpu.memory_space<vmem>>, vector<1x32xf32>
    %42 = vector.shape_cast %41 : vector<1x32xf32> to vector<32xf32>
    %43 = vector.shape_cast %42 : vector<32xf32> to vector<1x32xf32>
    %44 = vector.broadcast %43 : vector<1x32xf32> to vector<16x32xf32>
    %45 = arith.mulf %40, %44 : vector<16x32xf32>
    %46 = arith.addf %35, %45 : vector<16x32xf32>
    %c11_i32 = arith.constant 11 : i32
    %47 = tpu.dynamic_rotate %1 by %c11_i32 dim 0 : vector<16x32xf32>, i32 -> vector<16x32xf32>
    %c4 = arith.constant 4 : index
    %c0_19 = arith.constant 0 : index
    %c0_20 = arith.constant 0 : index
    %48 = vector.load %arg2[%c4, %c0_19, %c0_20] : memref<49x16x1xf32, #tpu.memory_space<vmem>>, vector<1x16x1xf32>
    %49 = vector.shape_cast %48 : vector<1x16x1xf32> to vector<16x1xf32>
    %50 = vector.broadcast %49 : vector<16x1xf32> to vector<16x32xf32>
    %51 = arith.mulf %47, %50 : vector<16x32xf32>
    %c4_21 = arith.constant 4 : index
    %c0_22 = arith.constant 0 : index
    %52 = vector.load %arg3[%c4_21, %c0_22] : memref<49x32xf32, #tpu.memory_space<vmem>>, vector<1x32xf32>
    %53 = vector.shape_cast %52 : vector<1x32xf32> to vector<32xf32>
    %54 = vector.shape_cast %53 : vector<32xf32> to vector<1x32xf32>
    %55 = vector.broadcast %54 : vector<1x32xf32> to vector<16x32xf32>
    %56 = arith.mulf %51, %55 : vector<16x32xf32>
    %57 = arith.addf %46, %56 : vector<16x32xf32>
    %c10_i32 = arith.constant 10 : i32
    %58 = tpu.dynamic_rotate %1 by %c10_i32 dim 0 : vector<16x32xf32>, i32 -> vector<16x32xf32>
    %c5 = arith.constant 5 : index
    %c0_23 = arith.constant 0 : index
    %c0_24 = arith.constant 0 : index
    %59 = vector.load %arg2[%c5, %c0_23, %c0_24] : memref<49x16x1xf32, #tpu.memory_space<vmem>>, vector<1x16x1xf32>
    %60 = vector.shape_cast %59 : vector<1x16x1xf32> to vector<16x1xf32>
    %61 = vector.broadcast %60 : vector<16x1xf32> to vector<16x32xf32>
    %62 = arith.mulf %58, %61 : vector<16x32xf32>
    %c5_25 = arith.constant 5 : index
    %c0_26 = arith.constant 0 : index
    %63 = vector.load %arg3[%c5_25, %c0_26] : memref<49x32xf32, #tpu.memory_space<vmem>>, vector<1x32xf32>
    %64 = vector.shape_cast %63 : vector<1x32xf32> to vector<32xf32>
    %65 = vector.shape_cast %64 : vector<32xf32> to vector<1x32xf32>
    %66 = vector.broadcast %65 : vector<1x32xf32> to vector<16x32xf32>
    %67 = arith.mulf %62, %66 : vector<16x32xf32>
    %68 = arith.addf %57, %67 : vector<16x32xf32>
    %c9_i32 = arith.constant 9 : i32
    %69 = tpu.dynamic_rotate %1 by %c9_i32 dim 0 : vector<16x32xf32>, i32 -> vector<16x32xf32>
    %c6 = arith.constant 6 : index
    %c0_27 = arith.constant 0 : index
    %c0_28 = arith.constant 0 : index
    %70 = vector.load %arg2[%c6, %c0_27, %c0_28] : memref<49x16x1xf32, #tpu.memory_space<vmem>>, vector<1x16x1xf32>
    %71 = vector.shape_cast %70 : vector<1x16x1xf32> to vector<16x1xf32>
    %72 = vector.broadcast %71 : vector<16x1xf32> to vector<16x32xf32>
    %73 = arith.mulf %69, %72 : vector<16x32xf32>
    %c6_29 = arith.constant 6 : index
    %c0_30 = arith.constant 0 : index
    %74 = vector.load %arg3[%c6_29, %c0_30] : memref<49x32xf32, #tpu.memory_space<vmem>>, vector<1x32xf32>
    %75 = vector.shape_cast %74 : vector<1x32xf32> to vector<32xf32>
    %76 = vector.shape_cast %75 : vector<32xf32> to vector<1x32xf32>
    %77 = vector.broadcast %76 : vector<1x32xf32> to vector<16x32xf32>
    %78 = arith.mulf %73, %77 : vector<16x32xf32>
    %79 = arith.addf %68, %78 : vector<16x32xf32>
    %c11_i32_31 = arith.constant 11 : i32
    %80 = tpu.dynamic_rotate %1 by %c11_i32_31 dim 0 : vector<16x32xf32>, i32 -> vector<16x32xf32>
    %c7 = arith.constant 7 : index
    %c0_32 = arith.constant 0 : index
    %c0_33 = arith.constant 0 : index
    %81 = vector.load %arg2[%c7, %c0_32, %c0_33] : memref<49x16x1xf32, #tpu.memory_space<vmem>>, vector<1x16x1xf32>
    %82 = vector.shape_cast %81 : vector<1x16x1xf32> to vector<16x1xf32>
    %83 = vector.broadcast %82 : vector<16x1xf32> to vector<16x32xf32>
    %84 = arith.mulf %80, %83 : vector<16x32xf32>
    %c7_34 = arith.constant 7 : index
    %c0_35 = arith.constant 0 : index
    %85 = vector.load %arg3[%c7_34, %c0_35] : memref<49x32xf32, #tpu.memory_space<vmem>>, vector<1x32xf32>
    %86 = vector.shape_cast %85 : vector<1x32xf32> to vector<32xf32>
    %87 = vector.shape_cast %86 : vector<32xf32> to vector<1x32xf32>
    %88 = vector.broadcast %87 : vector<1x32xf32> to vector<16x32xf32>
    %89 = arith.mulf %84, %88 : vector<16x32xf32>
    %90 = arith.addf %79, %89 : vector<16x32xf32>
    %c10_i32_36 = arith.constant 10 : i32
    %91 = tpu.dynamic_rotate %1 by %c10_i32_36 dim 0 : vector<16x32xf32>, i32 -> vector<16x32xf32>
    %c8 = arith.constant 8 : index
    %c0_37 = arith.constant 0 : index
    %c0_38 = arith.constant 0 : index
    %92 = vector.load %arg2[%c8, %c0_37, %c0_38] : memref<49x16x1xf32, #tpu.memory_space<vmem>>, vector<1x16x1xf32>
    %93 = vector.shape_cast %92 : vector<1x16x1xf32> to vector<16x1xf32>
    %94 = vector.broadcast %93 : vector<16x1xf32> to vector<16x32xf32>
    %95 = arith.mulf %91, %94 : vector<16x32xf32>
    %c8_39 = arith.constant 8 : index
    %c0_40 = arith.constant 0 : index
    %96 = vector.load %arg3[%c8_39, %c0_40] : memref<49x32xf32, #tpu.memory_space<vmem>>, vector<1x32xf32>
    %97 = vector.shape_cast %96 : vector<1x32xf32> to vector<32xf32>
    %98 = vector.shape_cast %97 : vector<32xf32> to vector<1x32xf32>
    %99 = vector.broadcast %98 : vector<1x32xf32> to vector<16x32xf32>
    %100 = arith.mulf %95, %99 : vector<16x32xf32>
    %101 = arith.addf %90, %100 : vector<16x32xf32>
    %c9_i32_41 = arith.constant 9 : i32
    %102 = tpu.dynamic_rotate %1 by %c9_i32_41 dim 0 : vector<16x32xf32>, i32 -> vector<16x32xf32>
    %c9 = arith.constant 9 : index
    %c0_42 = arith.constant 0 : index
    %c0_43 = arith.constant 0 : index
    %103 = vector.load %arg2[%c9, %c0_42, %c0_43] : memref<49x16x1xf32, #tpu.memory_space<vmem>>, vector<1x16x1xf32>
    %104 = vector.shape_cast %103 : vector<1x16x1xf32> to vector<16x1xf32>
    %105 = vector.broadcast %104 : vector<16x1xf32> to vector<16x32xf32>
    %106 = arith.mulf %102, %105 : vector<16x32xf32>
    %c9_44 = arith.constant 9 : index
    %c0_45 = arith.constant 0 : index
    %107 = vector.load %arg3[%c9_44, %c0_45] : memref<49x32xf32, #tpu.memory_space<vmem>>, vector<1x32xf32>
    %108 = vector.shape_cast %107 : vector<1x32xf32> to vector<32xf32>
    %109 = vector.shape_cast %108 : vector<32xf32> to vector<1x32xf32>
    %110 = vector.broadcast %109 : vector<1x32xf32> to vector<16x32xf32>
    %111 = arith.mulf %106, %110 : vector<16x32xf32>
    %112 = arith.addf %101, %111 : vector<16x32xf32>
    %c8_i32 = arith.constant 8 : i32
    %113 = tpu.dynamic_rotate %1 by %c8_i32 dim 0 : vector<16x32xf32>, i32 -> vector<16x32xf32>
    %c10 = arith.constant 10 : index
    %c0_46 = arith.constant 0 : index
    %c0_47 = arith.constant 0 : index
    %114 = vector.load %arg2[%c10, %c0_46, %c0_47] : memref<49x16x1xf32, #tpu.memory_space<vmem>>, vector<1x16x1xf32>
    %115 = vector.shape_cast %114 : vector<1x16x1xf32> to vector<16x1xf32>
    %116 = vector.broadcast %115 : vector<16x1xf32> to vector<16x32xf32>
    %117 = arith.mulf %113, %116 : vector<16x32xf32>
    %c10_48 = arith.constant 10 : index
    %c0_49 = arith.constant 0 : index
    %118 = vector.load %arg3[%c10_48, %c0_49] : memref<49x32xf32, #tpu.memory_space<vmem>>, vector<1x32xf32>
    %119 = vector.shape_cast %118 : vector<1x32xf32> to vector<32xf32>
    %120 = vector.shape_cast %119 : vector<32xf32> to vector<1x32xf32>
    %121 = vector.broadcast %120 : vector<1x32xf32> to vector<16x32xf32>
    %122 = arith.mulf %117, %121 : vector<16x32xf32>
    %123 = arith.addf %112, %122 : vector<16x32xf32>
    %c7_i32 = arith.constant 7 : i32
    %124 = tpu.dynamic_rotate %1 by %c7_i32 dim 0 : vector<16x32xf32>, i32 -> vector<16x32xf32>
    %c11 = arith.constant 11 : index
    %c0_50 = arith.constant 0 : index
    %c0_51 = arith.constant 0 : index
    %125 = vector.load %arg2[%c11, %c0_50, %c0_51] : memref<49x16x1xf32, #tpu.memory_space<vmem>>, vector<1x16x1xf32>
    %126 = vector.shape_cast %125 : vector<1x16x1xf32> to vector<16x1xf32>
    %127 = vector.broadcast %126 : vector<16x1xf32> to vector<16x32xf32>
    %128 = arith.mulf %124, %127 : vector<16x32xf32>
    %c11_52 = arith.constant 11 : index
    %c0_53 = arith.constant 0 : index
    %129 = vector.load %arg3[%c11_52, %c0_53] : memref<49x32xf32, #tpu.memory_space<vmem>>, vector<1x32xf32>
    %130 = vector.shape_cast %129 : vector<1x32xf32> to vector<32xf32>
    %131 = vector.shape_cast %130 : vector<32xf32> to vector<1x32xf32>
    %132 = vector.broadcast %131 : vector<1x32xf32> to vector<16x32xf32>
    %133 = arith.mulf %128, %132 : vector<16x32xf32>
    %134 = arith.addf %123, %133 : vector<16x32xf32>
    %c6_i32 = arith.constant 6 : i32
    %135 = tpu.dynamic_rotate %1 by %c6_i32 dim 0 : vector<16x32xf32>, i32 -> vector<16x32xf32>
    %c12 = arith.constant 12 : index
    %c0_54 = arith.constant 0 : index
    %c0_55 = arith.constant 0 : index
    %136 = vector.load %arg2[%c12, %c0_54, %c0_55] : memref<49x16x1xf32, #tpu.memory_space<vmem>>, vector<1x16x1xf32>
    %137 = vector.shape_cast %136 : vector<1x16x1xf32> to vector<16x1xf32>
    %138 = vector.broadcast %137 : vector<16x1xf32> to vector<16x32xf32>
    %139 = arith.mulf %135, %138 : vector<16x32xf32>
    %c12_56 = arith.constant 12 : index
    %c0_57 = arith.constant 0 : index
    %140 = vector.load %arg3[%c12_56, %c0_57] : memref<49x32xf32, #tpu.memory_space<vmem>>, vector<1x32xf32>
    %141 = vector.shape_cast %140 : vector<1x32xf32> to vector<32xf32>
    %142 = vector.shape_cast %141 : vector<32xf32> to vector<1x32xf32>
    %143 = vector.broadcast %142 : vector<1x32xf32> to vector<16x32xf32>
    %144 = arith.mulf %139, %143 : vector<16x32xf32>
    %145 = arith.addf %134, %144 : vector<16x32xf32>
    %c5_i32 = arith.constant 5 : i32
    %146 = tpu.dynamic_rotate %1 by %c5_i32 dim 0 : vector<16x32xf32>, i32 -> vector<16x32xf32>
    %c13 = arith.constant 13 : index
    %c0_58 = arith.constant 0 : index
    %c0_59 = arith.constant 0 : index
    %147 = vector.load %arg2[%c13, %c0_58, %c0_59] : memref<49x16x1xf32, #tpu.memory_space<vmem>>, vector<1x16x1xf32>
    %148 = vector.shape_cast %147 : vector<1x16x1xf32> to vector<16x1xf32>
    %149 = vector.broadcast %148 : vector<16x1xf32> to vector<16x32xf32>
    %150 = arith.mulf %146, %149 : vector<16x32xf32>
    %c13_60 = arith.constant 13 : index
    %c0_61 = arith.constant 0 : index
    %151 = vector.load %arg3[%c13_60, %c0_61] : memref<49x32xf32, #tpu.memory_space<vmem>>, vector<1x32xf32>
    %152 = vector.shape_cast %151 : vector<1x32xf32> to vector<32xf32>
    %153 = vector.shape_cast %152 : vector<32xf32> to vector<1x32xf32>
    %154 = vector.broadcast %153 : vector<1x32xf32> to vector<16x32xf32>
    %155 = arith.mulf %150, %154 : vector<16x32xf32>
    %156 = arith.addf %145, %155 : vector<16x32xf32>
    %c7_i32_62 = arith.constant 7 : i32
    %157 = tpu.dynamic_rotate %1 by %c7_i32_62 dim 0 : vector<16x32xf32>, i32 -> vector<16x32xf32>
    %c14 = arith.constant 14 : index
    %c0_63 = arith.constant 0 : index
    %c0_64 = arith.constant 0 : index
    %158 = vector.load %arg2[%c14, %c0_63, %c0_64] : memref<49x16x1xf32, #tpu.memory_space<vmem>>, vector<1x16x1xf32>
    %159 = vector.shape_cast %158 : vector<1x16x1xf32> to vector<16x1xf32>
    %160 = vector.broadcast %159 : vector<16x1xf32> to vector<16x32xf32>
    %161 = arith.mulf %157, %160 : vector<16x32xf32>
    %c14_65 = arith.constant 14 : index
    %c0_66 = arith.constant 0 : index
    %162 = vector.load %arg3[%c14_65, %c0_66] : memref<49x32xf32, #tpu.memory_space<vmem>>, vector<1x32xf32>
    %163 = vector.shape_cast %162 : vector<1x32xf32> to vector<32xf32>
    %164 = vector.shape_cast %163 : vector<32xf32> to vector<1x32xf32>
    %165 = vector.broadcast %164 : vector<1x32xf32> to vector<16x32xf32>
    %166 = arith.mulf %161, %165 : vector<16x32xf32>
    %167 = arith.addf %156, %166 : vector<16x32xf32>
    %c6_i32_67 = arith.constant 6 : i32
    %168 = tpu.dynamic_rotate %1 by %c6_i32_67 dim 0 : vector<16x32xf32>, i32 -> vector<16x32xf32>
    %c15 = arith.constant 15 : index
    %c0_68 = arith.constant 0 : index
    %c0_69 = arith.constant 0 : index
    %169 = vector.load %arg2[%c15, %c0_68, %c0_69] : memref<49x16x1xf32, #tpu.memory_space<vmem>>, vector<1x16x1xf32>
    %170 = vector.shape_cast %169 : vector<1x16x1xf32> to vector<16x1xf32>
    %171 = vector.broadcast %170 : vector<16x1xf32> to vector<16x32xf32>
    %172 = arith.mulf %168, %171 : vector<16x32xf32>
    %c15_70 = arith.constant 15 : index
    %c0_71 = arith.constant 0 : index
    %173 = vector.load %arg3[%c15_70, %c0_71] : memref<49x32xf32, #tpu.memory_space<vmem>>, vector<1x32xf32>
    %174 = vector.shape_cast %173 : vector<1x32xf32> to vector<32xf32>
    %175 = vector.shape_cast %174 : vector<32xf32> to vector<1x32xf32>
    %176 = vector.broadcast %175 : vector<1x32xf32> to vector<16x32xf32>
    %177 = arith.mulf %172, %176 : vector<16x32xf32>
    %178 = arith.addf %167, %177 : vector<16x32xf32>
    %c5_i32_72 = arith.constant 5 : i32
    %179 = tpu.dynamic_rotate %1 by %c5_i32_72 dim 0 : vector<16x32xf32>, i32 -> vector<16x32xf32>
    %c16 = arith.constant 16 : index
    %c0_73 = arith.constant 0 : index
    %c0_74 = arith.constant 0 : index
    %180 = vector.load %arg2[%c16, %c0_73, %c0_74] : memref<49x16x1xf32, #tpu.memory_space<vmem>>, vector<1x16x1xf32>
    %181 = vector.shape_cast %180 : vector<1x16x1xf32> to vector<16x1xf32>
    %182 = vector.broadcast %181 : vector<16x1xf32> to vector<16x32xf32>
    %183 = arith.mulf %179, %182 : vector<16x32xf32>
    %c16_75 = arith.constant 16 : index
    %c0_76 = arith.constant 0 : index
    %184 = vector.load %arg3[%c16_75, %c0_76] : memref<49x32xf32, #tpu.memory_space<vmem>>, vector<1x32xf32>
    %185 = vector.shape_cast %184 : vector<1x32xf32> to vector<32xf32>
    %186 = vector.shape_cast %185 : vector<32xf32> to vector<1x32xf32>
    %187 = vector.broadcast %186 : vector<1x32xf32> to vector<16x32xf32>
    %188 = arith.mulf %183, %187 : vector<16x32xf32>
    %189 = arith.addf %178, %188 : vector<16x32xf32>
    %c4_i32 = arith.constant 4 : i32
    %190 = tpu.dynamic_rotate %1 by %c4_i32 dim 0 : vector<16x32xf32>, i32 -> vector<16x32xf32>
    %c17 = arith.constant 17 : index
    %c0_77 = arith.constant 0 : index
    %c0_78 = arith.constant 0 : index
    %191 = vector.load %arg2[%c17, %c0_77, %c0_78] : memref<49x16x1xf32, #tpu.memory_space<vmem>>, vector<1x16x1xf32>
    %192 = vector.shape_cast %191 : vector<1x16x1xf32> to vector<16x1xf32>
    %193 = vector.broadcast %192 : vector<16x1xf32> to vector<16x32xf32>
    %194 = arith.mulf %190, %193 : vector<16x32xf32>
    %c17_79 = arith.constant 17 : index
    %c0_80 = arith.constant 0 : index
    %195 = vector.load %arg3[%c17_79, %c0_80] : memref<49x32xf32, #tpu.memory_space<vmem>>, vector<1x32xf32>
    %196 = vector.shape_cast %195 : vector<1x32xf32> to vector<32xf32>
    %197 = vector.shape_cast %196 : vector<32xf32> to vector<1x32xf32>
    %198 = vector.broadcast %197 : vector<1x32xf32> to vector<16x32xf32>
    %199 = arith.mulf %194, %198 : vector<16x32xf32>
    %200 = arith.addf %189, %199 : vector<16x32xf32>
    %c3_i32 = arith.constant 3 : i32
    %201 = tpu.dynamic_rotate %1 by %c3_i32 dim 0 : vector<16x32xf32>, i32 -> vector<16x32xf32>
    %c18 = arith.constant 18 : index
    %c0_81 = arith.constant 0 : index
    %c0_82 = arith.constant 0 : index
    %202 = vector.load %arg2[%c18, %c0_81, %c0_82] : memref<49x16x1xf32, #tpu.memory_space<vmem>>, vector<1x16x1xf32>
    %203 = vector.shape_cast %202 : vector<1x16x1xf32> to vector<16x1xf32>
    %204 = vector.broadcast %203 : vector<16x1xf32> to vector<16x32xf32>
    %205 = arith.mulf %201, %204 : vector<16x32xf32>
    %c18_83 = arith.constant 18 : index
    %c0_84 = arith.constant 0 : index
    %206 = vector.load %arg3[%c18_83, %c0_84] : memref<49x32xf32, #tpu.memory_space<vmem>>, vector<1x32xf32>
    %207 = vector.shape_cast %206 : vector<1x32xf32> to vector<32xf32>
    %208 = vector.shape_cast %207 : vector<32xf32> to vector<1x32xf32>
    %209 = vector.broadcast %208 : vector<1x32xf32> to vector<16x32xf32>
    %210 = arith.mulf %205, %209 : vector<16x32xf32>
    %211 = arith.addf %200, %210 : vector<16x32xf32>
    %c2_i32 = arith.constant 2 : i32
    %212 = tpu.dynamic_rotate %1 by %c2_i32 dim 0 : vector<16x32xf32>, i32 -> vector<16x32xf32>
    %c19 = arith.constant 19 : index
    %c0_85 = arith.constant 0 : index
    %c0_86 = arith.constant 0 : index
    %213 = vector.load %arg2[%c19, %c0_85, %c0_86] : memref<49x16x1xf32, #tpu.memory_space<vmem>>, vector<1x16x1xf32>
    %214 = vector.shape_cast %213 : vector<1x16x1xf32> to vector<16x1xf32>
    %215 = vector.broadcast %214 : vector<16x1xf32> to vector<16x32xf32>
    %216 = arith.mulf %212, %215 : vector<16x32xf32>
    %c19_87 = arith.constant 19 : index
    %c0_88 = arith.constant 0 : index
    %217 = vector.load %arg3[%c19_87, %c0_88] : memref<49x32xf32, #tpu.memory_space<vmem>>, vector<1x32xf32>
    %218 = vector.shape_cast %217 : vector<1x32xf32> to vector<32xf32>
    %219 = vector.shape_cast %218 : vector<32xf32> to vector<1x32xf32>
    %220 = vector.broadcast %219 : vector<1x32xf32> to vector<16x32xf32>
    %221 = arith.mulf %216, %220 : vector<16x32xf32>
    %222 = arith.addf %211, %221 : vector<16x32xf32>
    %c1_i32 = arith.constant 1 : i32
    %223 = tpu.dynamic_rotate %1 by %c1_i32 dim 0 : vector<16x32xf32>, i32 -> vector<16x32xf32>
    %c20 = arith.constant 20 : index
    %c0_89 = arith.constant 0 : index
    %c0_90 = arith.constant 0 : index
    %224 = vector.load %arg2[%c20, %c0_89, %c0_90] : memref<49x16x1xf32, #tpu.memory_space<vmem>>, vector<1x16x1xf32>
    %225 = vector.shape_cast %224 : vector<1x16x1xf32> to vector<16x1xf32>
    %226 = vector.broadcast %225 : vector<16x1xf32> to vector<16x32xf32>
    %227 = arith.mulf %223, %226 : vector<16x32xf32>
    %c20_91 = arith.constant 20 : index
    %c0_92 = arith.constant 0 : index
    %228 = vector.load %arg3[%c20_91, %c0_92] : memref<49x32xf32, #tpu.memory_space<vmem>>, vector<1x32xf32>
    %229 = vector.shape_cast %228 : vector<1x32xf32> to vector<32xf32>
    %230 = vector.shape_cast %229 : vector<32xf32> to vector<1x32xf32>
    %231 = vector.broadcast %230 : vector<1x32xf32> to vector<16x32xf32>
    %232 = arith.mulf %227, %231 : vector<16x32xf32>
    %233 = arith.addf %222, %232 : vector<16x32xf32>
    %c3_i32_93 = arith.constant 3 : i32
    %234 = tpu.dynamic_rotate %1 by %c3_i32_93 dim 0 : vector<16x32xf32>, i32 -> vector<16x32xf32>
    %c21 = arith.constant 21 : index
    %c0_94 = arith.constant 0 : index
    %c0_95 = arith.constant 0 : index
    %235 = vector.load %arg2[%c21, %c0_94, %c0_95] : memref<49x16x1xf32, #tpu.memory_space<vmem>>, vector<1x16x1xf32>
    %236 = vector.shape_cast %235 : vector<1x16x1xf32> to vector<16x1xf32>
    %237 = vector.broadcast %236 : vector<16x1xf32> to vector<16x32xf32>
    %238 = arith.mulf %234, %237 : vector<16x32xf32>
    %c21_96 = arith.constant 21 : index
    %c0_97 = arith.constant 0 : index
    %239 = vector.load %arg3[%c21_96, %c0_97] : memref<49x32xf32, #tpu.memory_space<vmem>>, vector<1x32xf32>
    %240 = vector.shape_cast %239 : vector<1x32xf32> to vector<32xf32>
    %241 = vector.shape_cast %240 : vector<32xf32> to vector<1x32xf32>
    %242 = vector.broadcast %241 : vector<1x32xf32> to vector<16x32xf32>
    %243 = arith.mulf %238, %242 : vector<16x32xf32>
    %244 = arith.addf %233, %243 : vector<16x32xf32>
    %c2_i32_98 = arith.constant 2 : i32
    %245 = tpu.dynamic_rotate %1 by %c2_i32_98 dim 0 : vector<16x32xf32>, i32 -> vector<16x32xf32>
    %c22 = arith.constant 22 : index
    %c0_99 = arith.constant 0 : index
    %c0_100 = arith.constant 0 : index
    %246 = vector.load %arg2[%c22, %c0_99, %c0_100] : memref<49x16x1xf32, #tpu.memory_space<vmem>>, vector<1x16x1xf32>
    %247 = vector.shape_cast %246 : vector<1x16x1xf32> to vector<16x1xf32>
    %248 = vector.broadcast %247 : vector<16x1xf32> to vector<16x32xf32>
    %249 = arith.mulf %245, %248 : vector<16x32xf32>
    %c22_101 = arith.constant 22 : index
    %c0_102 = arith.constant 0 : index
    %250 = vector.load %arg3[%c22_101, %c0_102] : memref<49x32xf32, #tpu.memory_space<vmem>>, vector<1x32xf32>
    %251 = vector.shape_cast %250 : vector<1x32xf32> to vector<32xf32>
    %252 = vector.shape_cast %251 : vector<32xf32> to vector<1x32xf32>
    %253 = vector.broadcast %252 : vector<1x32xf32> to vector<16x32xf32>
    %254 = arith.mulf %249, %253 : vector<16x32xf32>
    %255 = arith.addf %244, %254 : vector<16x32xf32>
    %c1_i32_103 = arith.constant 1 : i32
    %256 = tpu.dynamic_rotate %1 by %c1_i32_103 dim 0 : vector<16x32xf32>, i32 -> vector<16x32xf32>
    %c23 = arith.constant 23 : index
    %c0_104 = arith.constant 0 : index
    %c0_105 = arith.constant 0 : index
    %257 = vector.load %arg2[%c23, %c0_104, %c0_105] : memref<49x16x1xf32, #tpu.memory_space<vmem>>, vector<1x16x1xf32>
    %258 = vector.shape_cast %257 : vector<1x16x1xf32> to vector<16x1xf32>
    %259 = vector.broadcast %258 : vector<16x1xf32> to vector<16x32xf32>
    %260 = arith.mulf %256, %259 : vector<16x32xf32>
    %c23_106 = arith.constant 23 : index
    %c0_107 = arith.constant 0 : index
    %261 = vector.load %arg3[%c23_106, %c0_107] : memref<49x32xf32, #tpu.memory_space<vmem>>, vector<1x32xf32>
    %262 = vector.shape_cast %261 : vector<1x32xf32> to vector<32xf32>
    %263 = vector.shape_cast %262 : vector<32xf32> to vector<1x32xf32>
    %264 = vector.broadcast %263 : vector<1x32xf32> to vector<16x32xf32>
    %265 = arith.mulf %260, %264 : vector<16x32xf32>
    %266 = arith.addf %255, %265 : vector<16x32xf32>
    %c24 = arith.constant 24 : index
    %c0_108 = arith.constant 0 : index
    %c0_109 = arith.constant 0 : index
    %267 = vector.load %arg2[%c24, %c0_108, %c0_109] : memref<49x16x1xf32, #tpu.memory_space<vmem>>, vector<1x16x1xf32>
    %268 = vector.shape_cast %267 : vector<1x16x1xf32> to vector<16x1xf32>
    %269 = vector.broadcast %268 : vector<16x1xf32> to vector<16x32xf32>
    %270 = arith.mulf %1, %269 : vector<16x32xf32>
    %c24_110 = arith.constant 24 : index
    %c0_111 = arith.constant 0 : index
    %271 = vector.load %arg3[%c24_110, %c0_111] : memref<49x32xf32, #tpu.memory_space<vmem>>, vector<1x32xf32>
    %272 = vector.shape_cast %271 : vector<1x32xf32> to vector<32xf32>
    %273 = vector.shape_cast %272 : vector<32xf32> to vector<1x32xf32>
    %274 = vector.broadcast %273 : vector<1x32xf32> to vector<16x32xf32>
    %275 = arith.mulf %270, %274 : vector<16x32xf32>
    %276 = arith.addf %266, %275 : vector<16x32xf32>
    %c15_i32_112 = arith.constant 15 : i32
    %277 = tpu.dynamic_rotate %1 by %c15_i32_112 dim 0 : vector<16x32xf32>, i32 -> vector<16x32xf32>
    %c25 = arith.constant 25 : index
    %c0_113 = arith.constant 0 : index
    %c0_114 = arith.constant 0 : index
    %278 = vector.load %arg2[%c25, %c0_113, %c0_114] : memref<49x16x1xf32, #tpu.memory_space<vmem>>, vector<1x16x1xf32>
    %279 = vector.shape_cast %278 : vector<1x16x1xf32> to vector<16x1xf32>
    %280 = vector.broadcast %279 : vector<16x1xf32> to vector<16x32xf32>
    %281 = arith.mulf %277, %280 : vector<16x32xf32>
    %c25_115 = arith.constant 25 : index
    %c0_116 = arith.constant 0 : index
    %282 = vector.load %arg3[%c25_115, %c0_116] : memref<49x32xf32, #tpu.memory_space<vmem>>, vector<1x32xf32>
    %283 = vector.shape_cast %282 : vector<1x32xf32> to vector<32xf32>
    %284 = vector.shape_cast %283 : vector<32xf32> to vector<1x32xf32>
    %285 = vector.broadcast %284 : vector<1x32xf32> to vector<16x32xf32>
    %286 = arith.mulf %281, %285 : vector<16x32xf32>
    %287 = arith.addf %276, %286 : vector<16x32xf32>
    %c14_i32_117 = arith.constant 14 : i32
    %288 = tpu.dynamic_rotate %1 by %c14_i32_117 dim 0 : vector<16x32xf32>, i32 -> vector<16x32xf32>
    %c26 = arith.constant 26 : index
    %c0_118 = arith.constant 0 : index
    %c0_119 = arith.constant 0 : index
    %289 = vector.load %arg2[%c26, %c0_118, %c0_119] : memref<49x16x1xf32, #tpu.memory_space<vmem>>, vector<1x16x1xf32>
    %290 = vector.shape_cast %289 : vector<1x16x1xf32> to vector<16x1xf32>
    %291 = vector.broadcast %290 : vector<16x1xf32> to vector<16x32xf32>
    %292 = arith.mulf %288, %291 : vector<16x32xf32>
    %c26_120 = arith.constant 26 : index
    %c0_121 = arith.constant 0 : index
    %293 = vector.load %arg3[%c26_120, %c0_121] : memref<49x32xf32, #tpu.memory_space<vmem>>, vector<1x32xf32>
    %294 = vector.shape_cast %293 : vector<1x32xf32> to vector<32xf32>
    %295 = vector.shape_cast %294 : vector<32xf32> to vector<1x32xf32>
    %296 = vector.broadcast %295 : vector<1x32xf32> to vector<16x32xf32>
    %297 = arith.mulf %292, %296 : vector<16x32xf32>
    %298 = arith.addf %287, %297 : vector<16x32xf32>
    %c13_i32_122 = arith.constant 13 : i32
    %299 = tpu.dynamic_rotate %1 by %c13_i32_122 dim 0 : vector<16x32xf32>, i32 -> vector<16x32xf32>
    %c27 = arith.constant 27 : index
    %c0_123 = arith.constant 0 : index
    %c0_124 = arith.constant 0 : index
    %300 = vector.load %arg2[%c27, %c0_123, %c0_124] : memref<49x16x1xf32, #tpu.memory_space<vmem>>, vector<1x16x1xf32>
    %301 = vector.shape_cast %300 : vector<1x16x1xf32> to vector<16x1xf32>
    %302 = vector.broadcast %301 : vector<16x1xf32> to vector<16x32xf32>
    %303 = arith.mulf %299, %302 : vector<16x32xf32>
    %c27_125 = arith.constant 27 : index
    %c0_126 = arith.constant 0 : index
    %304 = vector.load %arg3[%c27_125, %c0_126] : memref<49x32xf32, #tpu.memory_space<vmem>>, vector<1x32xf32>
    %305 = vector.shape_cast %304 : vector<1x32xf32> to vector<32xf32>
    %306 = vector.shape_cast %305 : vector<32xf32> to vector<1x32xf32>
    %307 = vector.broadcast %306 : vector<1x32xf32> to vector<16x32xf32>
    %308 = arith.mulf %303, %307 : vector<16x32xf32>
    %309 = arith.addf %298, %308 : vector<16x32xf32>
    %c15_i32_127 = arith.constant 15 : i32
    %310 = tpu.dynamic_rotate %1 by %c15_i32_127 dim 0 : vector<16x32xf32>, i32 -> vector<16x32xf32>
    %c28 = arith.constant 28 : index
    %c0_128 = arith.constant 0 : index
    %c0_129 = arith.constant 0 : index
    %311 = vector.load %arg2[%c28, %c0_128, %c0_129] : memref<49x16x1xf32, #tpu.memory_space<vmem>>, vector<1x16x1xf32>
    %312 = vector.shape_cast %311 : vector<1x16x1xf32> to vector<16x1xf32>
    %313 = vector.broadcast %312 : vector<16x1xf32> to vector<16x32xf32>
    %314 = arith.mulf %310, %313 : vector<16x32xf32>
    %c28_130 = arith.constant 28 : index
    %c0_131 = arith.constant 0 : index
    %315 = vector.load %arg3[%c28_130, %c0_131] : memref<49x32xf32, #tpu.memory_space<vmem>>, vector<1x32xf32>
    %316 = vector.shape_cast %315 : vector<1x32xf32> to vector<32xf32>
    %317 = vector.shape_cast %316 : vector<32xf32> to vector<1x32xf32>
    %318 = vector.broadcast %317 : vector<1x32xf32> to vector<16x32xf32>
    %319 = arith.mulf %314, %318 : vector<16x32xf32>
    %320 = arith.addf %309, %319 : vector<16x32xf32>
    %c14_i32_132 = arith.constant 14 : i32
    %321 = tpu.dynamic_rotate %1 by %c14_i32_132 dim 0 : vector<16x32xf32>, i32 -> vector<16x32xf32>
    %c29 = arith.constant 29 : index
    %c0_133 = arith.constant 0 : index
    %c0_134 = arith.constant 0 : index
    %322 = vector.load %arg2[%c29, %c0_133, %c0_134] : memref<49x16x1xf32, #tpu.memory_space<vmem>>, vector<1x16x1xf32>
    %323 = vector.shape_cast %322 : vector<1x16x1xf32> to vector<16x1xf32>
    %324 = vector.broadcast %323 : vector<16x1xf32> to vector<16x32xf32>
    %325 = arith.mulf %321, %324 : vector<16x32xf32>
    %c29_135 = arith.constant 29 : index
    %c0_136 = arith.constant 0 : index
    %326 = vector.load %arg3[%c29_135, %c0_136] : memref<49x32xf32, #tpu.memory_space<vmem>>, vector<1x32xf32>
    %327 = vector.shape_cast %326 : vector<1x32xf32> to vector<32xf32>
    %328 = vector.shape_cast %327 : vector<32xf32> to vector<1x32xf32>
    %329 = vector.broadcast %328 : vector<1x32xf32> to vector<16x32xf32>
    %330 = arith.mulf %325, %329 : vector<16x32xf32>
    %331 = arith.addf %320, %330 : vector<16x32xf32>
    %c13_i32_137 = arith.constant 13 : i32
    %332 = tpu.dynamic_rotate %1 by %c13_i32_137 dim 0 : vector<16x32xf32>, i32 -> vector<16x32xf32>
    %c30 = arith.constant 30 : index
    %c0_138 = arith.constant 0 : index
    %c0_139 = arith.constant 0 : index
    %333 = vector.load %arg2[%c30, %c0_138, %c0_139] : memref<49x16x1xf32, #tpu.memory_space<vmem>>, vector<1x16x1xf32>
    %334 = vector.shape_cast %333 : vector<1x16x1xf32> to vector<16x1xf32>
    %335 = vector.broadcast %334 : vector<16x1xf32> to vector<16x32xf32>
    %336 = arith.mulf %332, %335 : vector<16x32xf32>
    %c30_140 = arith.constant 30 : index
    %c0_141 = arith.constant 0 : index
    %337 = vector.load %arg3[%c30_140, %c0_141] : memref<49x32xf32, #tpu.memory_space<vmem>>, vector<1x32xf32>
    %338 = vector.shape_cast %337 : vector<1x32xf32> to vector<32xf32>
    %339 = vector.shape_cast %338 : vector<32xf32> to vector<1x32xf32>
    %340 = vector.broadcast %339 : vector<1x32xf32> to vector<16x32xf32>
    %341 = arith.mulf %336, %340 : vector<16x32xf32>
    %342 = arith.addf %331, %341 : vector<16x32xf32>
    %c12_i32_142 = arith.constant 12 : i32
    %343 = tpu.dynamic_rotate %1 by %c12_i32_142 dim 0 : vector<16x32xf32>, i32 -> vector<16x32xf32>
    %c31 = arith.constant 31 : index
    %c0_143 = arith.constant 0 : index
    %c0_144 = arith.constant 0 : index
    %344 = vector.load %arg2[%c31, %c0_143, %c0_144] : memref<49x16x1xf32, #tpu.memory_space<vmem>>, vector<1x16x1xf32>
    %345 = vector.shape_cast %344 : vector<1x16x1xf32> to vector<16x1xf32>
    %346 = vector.broadcast %345 : vector<16x1xf32> to vector<16x32xf32>
    %347 = arith.mulf %343, %346 : vector<16x32xf32>
    %c31_145 = arith.constant 31 : index
    %c0_146 = arith.constant 0 : index
    %348 = vector.load %arg3[%c31_145, %c0_146] : memref<49x32xf32, #tpu.memory_space<vmem>>, vector<1x32xf32>
    %349 = vector.shape_cast %348 : vector<1x32xf32> to vector<32xf32>
    %350 = vector.shape_cast %349 : vector<32xf32> to vector<1x32xf32>
    %351 = vector.broadcast %350 : vector<1x32xf32> to vector<16x32xf32>
    %352 = arith.mulf %347, %351 : vector<16x32xf32>
    %353 = arith.addf %342, %352 : vector<16x32xf32>
    %c11_i32_147 = arith.constant 11 : i32
    %354 = tpu.dynamic_rotate %1 by %c11_i32_147 dim 0 : vector<16x32xf32>, i32 -> vector<16x32xf32>
    %c32 = arith.constant 32 : index
    %c0_148 = arith.constant 0 : index
    %c0_149 = arith.constant 0 : index
    %355 = vector.load %arg2[%c32, %c0_148, %c0_149] : memref<49x16x1xf32, #tpu.memory_space<vmem>>, vector<1x16x1xf32>
    %356 = vector.shape_cast %355 : vector<1x16x1xf32> to vector<16x1xf32>
    %357 = vector.broadcast %356 : vector<16x1xf32> to vector<16x32xf32>
    %358 = arith.mulf %354, %357 : vector<16x32xf32>
    %c32_150 = arith.constant 32 : index
    %c0_151 = arith.constant 0 : index
    %359 = vector.load %arg3[%c32_150, %c0_151] : memref<49x32xf32, #tpu.memory_space<vmem>>, vector<1x32xf32>
    %360 = vector.shape_cast %359 : vector<1x32xf32> to vector<32xf32>
    %361 = vector.shape_cast %360 : vector<32xf32> to vector<1x32xf32>
    %362 = vector.broadcast %361 : vector<1x32xf32> to vector<16x32xf32>
    %363 = arith.mulf %358, %362 : vector<16x32xf32>
    %364 = arith.addf %353, %363 : vector<16x32xf32>
    %c10_i32_152 = arith.constant 10 : i32
    %365 = tpu.dynamic_rotate %1 by %c10_i32_152 dim 0 : vector<16x32xf32>, i32 -> vector<16x32xf32>
    %c33 = arith.constant 33 : index
    %c0_153 = arith.constant 0 : index
    %c0_154 = arith.constant 0 : index
    %366 = vector.load %arg2[%c33, %c0_153, %c0_154] : memref<49x16x1xf32, #tpu.memory_space<vmem>>, vector<1x16x1xf32>
    %367 = vector.shape_cast %366 : vector<1x16x1xf32> to vector<16x1xf32>
    %368 = vector.broadcast %367 : vector<16x1xf32> to vector<16x32xf32>
    %369 = arith.mulf %365, %368 : vector<16x32xf32>
    %c33_155 = arith.constant 33 : index
    %c0_156 = arith.constant 0 : index
    %370 = vector.load %arg3[%c33_155, %c0_156] : memref<49x32xf32, #tpu.memory_space<vmem>>, vector<1x32xf32>
    %371 = vector.shape_cast %370 : vector<1x32xf32> to vector<32xf32>
    %372 = vector.shape_cast %371 : vector<32xf32> to vector<1x32xf32>
    %373 = vector.broadcast %372 : vector<1x32xf32> to vector<16x32xf32>
    %374 = arith.mulf %369, %373 : vector<16x32xf32>
    %375 = arith.addf %364, %374 : vector<16x32xf32>
    %c9_i32_157 = arith.constant 9 : i32
    %376 = tpu.dynamic_rotate %1 by %c9_i32_157 dim 0 : vector<16x32xf32>, i32 -> vector<16x32xf32>
    %c34 = arith.constant 34 : index
    %c0_158 = arith.constant 0 : index
    %c0_159 = arith.constant 0 : index
    %377 = vector.load %arg2[%c34, %c0_158, %c0_159] : memref<49x16x1xf32, #tpu.memory_space<vmem>>, vector<1x16x1xf32>
    %378 = vector.shape_cast %377 : vector<1x16x1xf32> to vector<16x1xf32>
    %379 = vector.broadcast %378 : vector<16x1xf32> to vector<16x32xf32>
    %380 = arith.mulf %376, %379 : vector<16x32xf32>
    %c34_160 = arith.constant 34 : index
    %c0_161 = arith.constant 0 : index
    %381 = vector.load %arg3[%c34_160, %c0_161] : memref<49x32xf32, #tpu.memory_space<vmem>>, vector<1x32xf32>
    %382 = vector.shape_cast %381 : vector<1x32xf32> to vector<32xf32>
    %383 = vector.shape_cast %382 : vector<32xf32> to vector<1x32xf32>
    %384 = vector.broadcast %383 : vector<1x32xf32> to vector<16x32xf32>
    %385 = arith.mulf %380, %384 : vector<16x32xf32>
    %386 = arith.addf %375, %385 : vector<16x32xf32>
    %c11_i32_162 = arith.constant 11 : i32
    %387 = tpu.dynamic_rotate %1 by %c11_i32_162 dim 0 : vector<16x32xf32>, i32 -> vector<16x32xf32>
    %c35 = arith.constant 35 : index
    %c0_163 = arith.constant 0 : index
    %c0_164 = arith.constant 0 : index
    %388 = vector.load %arg2[%c35, %c0_163, %c0_164] : memref<49x16x1xf32, #tpu.memory_space<vmem>>, vector<1x16x1xf32>
    %389 = vector.shape_cast %388 : vector<1x16x1xf32> to vector<16x1xf32>
    %390 = vector.broadcast %389 : vector<16x1xf32> to vector<16x32xf32>
    %391 = arith.mulf %387, %390 : vector<16x32xf32>
    %c35_165 = arith.constant 35 : index
    %c0_166 = arith.constant 0 : index
    %392 = vector.load %arg3[%c35_165, %c0_166] : memref<49x32xf32, #tpu.memory_space<vmem>>, vector<1x32xf32>
    %393 = vector.shape_cast %392 : vector<1x32xf32> to vector<32xf32>
    %394 = vector.shape_cast %393 : vector<32xf32> to vector<1x32xf32>
    %395 = vector.broadcast %394 : vector<1x32xf32> to vector<16x32xf32>
    %396 = arith.mulf %391, %395 : vector<16x32xf32>
    %397 = arith.addf %386, %396 : vector<16x32xf32>
    %c10_i32_167 = arith.constant 10 : i32
    %398 = tpu.dynamic_rotate %1 by %c10_i32_167 dim 0 : vector<16x32xf32>, i32 -> vector<16x32xf32>
    %c36 = arith.constant 36 : index
    %c0_168 = arith.constant 0 : index
    %c0_169 = arith.constant 0 : index
    %399 = vector.load %arg2[%c36, %c0_168, %c0_169] : memref<49x16x1xf32, #tpu.memory_space<vmem>>, vector<1x16x1xf32>
    %400 = vector.shape_cast %399 : vector<1x16x1xf32> to vector<16x1xf32>
    %401 = vector.broadcast %400 : vector<16x1xf32> to vector<16x32xf32>
    %402 = arith.mulf %398, %401 : vector<16x32xf32>
    %c36_170 = arith.constant 36 : index
    %c0_171 = arith.constant 0 : index
    %403 = vector.load %arg3[%c36_170, %c0_171] : memref<49x32xf32, #tpu.memory_space<vmem>>, vector<1x32xf32>
    %404 = vector.shape_cast %403 : vector<1x32xf32> to vector<32xf32>
    %405 = vector.shape_cast %404 : vector<32xf32> to vector<1x32xf32>
    %406 = vector.broadcast %405 : vector<1x32xf32> to vector<16x32xf32>
    %407 = arith.mulf %402, %406 : vector<16x32xf32>
    %408 = arith.addf %397, %407 : vector<16x32xf32>
    %c9_i32_172 = arith.constant 9 : i32
    %409 = tpu.dynamic_rotate %1 by %c9_i32_172 dim 0 : vector<16x32xf32>, i32 -> vector<16x32xf32>
    %c37 = arith.constant 37 : index
    %c0_173 = arith.constant 0 : index
    %c0_174 = arith.constant 0 : index
    %410 = vector.load %arg2[%c37, %c0_173, %c0_174] : memref<49x16x1xf32, #tpu.memory_space<vmem>>, vector<1x16x1xf32>
    %411 = vector.shape_cast %410 : vector<1x16x1xf32> to vector<16x1xf32>
    %412 = vector.broadcast %411 : vector<16x1xf32> to vector<16x32xf32>
    %413 = arith.mulf %409, %412 : vector<16x32xf32>
    %c37_175 = arith.constant 37 : index
    %c0_176 = arith.constant 0 : index
    %414 = vector.load %arg3[%c37_175, %c0_176] : memref<49x32xf32, #tpu.memory_space<vmem>>, vector<1x32xf32>
    %415 = vector.shape_cast %414 : vector<1x32xf32> to vector<32xf32>
    %416 = vector.shape_cast %415 : vector<32xf32> to vector<1x32xf32>
    %417 = vector.broadcast %416 : vector<1x32xf32> to vector<16x32xf32>
    %418 = arith.mulf %413, %417 : vector<16x32xf32>
    %419 = arith.addf %408, %418 : vector<16x32xf32>
    %c8_i32_177 = arith.constant 8 : i32
    %420 = tpu.dynamic_rotate %1 by %c8_i32_177 dim 0 : vector<16x32xf32>, i32 -> vector<16x32xf32>
    %c38 = arith.constant 38 : index
    %c0_178 = arith.constant 0 : index
    %c0_179 = arith.constant 0 : index
    %421 = vector.load %arg2[%c38, %c0_178, %c0_179] : memref<49x16x1xf32, #tpu.memory_space<vmem>>, vector<1x16x1xf32>
    %422 = vector.shape_cast %421 : vector<1x16x1xf32> to vector<16x1xf32>
    %423 = vector.broadcast %422 : vector<16x1xf32> to vector<16x32xf32>
    %424 = arith.mulf %420, %423 : vector<16x32xf32>
    %c38_180 = arith.constant 38 : index
    %c0_181 = arith.constant 0 : index
    %425 = vector.load %arg3[%c38_180, %c0_181] : memref<49x32xf32, #tpu.memory_space<vmem>>, vector<1x32xf32>
    %426 = vector.shape_cast %425 : vector<1x32xf32> to vector<32xf32>
    %427 = vector.shape_cast %426 : vector<32xf32> to vector<1x32xf32>
    %428 = vector.broadcast %427 : vector<1x32xf32> to vector<16x32xf32>
    %429 = arith.mulf %424, %428 : vector<16x32xf32>
    %430 = arith.addf %419, %429 : vector<16x32xf32>
    %c7_i32_182 = arith.constant 7 : i32
    %431 = tpu.dynamic_rotate %1 by %c7_i32_182 dim 0 : vector<16x32xf32>, i32 -> vector<16x32xf32>
    %c39 = arith.constant 39 : index
    %c0_183 = arith.constant 0 : index
    %c0_184 = arith.constant 0 : index
    %432 = vector.load %arg2[%c39, %c0_183, %c0_184] : memref<49x16x1xf32, #tpu.memory_space<vmem>>, vector<1x16x1xf32>
    %433 = vector.shape_cast %432 : vector<1x16x1xf32> to vector<16x1xf32>
    %434 = vector.broadcast %433 : vector<16x1xf32> to vector<16x32xf32>
    %435 = arith.mulf %431, %434 : vector<16x32xf32>
    %c39_185 = arith.constant 39 : index
    %c0_186 = arith.constant 0 : index
    %436 = vector.load %arg3[%c39_185, %c0_186] : memref<49x32xf32, #tpu.memory_space<vmem>>, vector<1x32xf32>
    %437 = vector.shape_cast %436 : vector<1x32xf32> to vector<32xf32>
    %438 = vector.shape_cast %437 : vector<32xf32> to vector<1x32xf32>
    %439 = vector.broadcast %438 : vector<1x32xf32> to vector<16x32xf32>
    %440 = arith.mulf %435, %439 : vector<16x32xf32>
    %441 = arith.addf %430, %440 : vector<16x32xf32>
    %c6_i32_187 = arith.constant 6 : i32
    %442 = tpu.dynamic_rotate %1 by %c6_i32_187 dim 0 : vector<16x32xf32>, i32 -> vector<16x32xf32>
    %c40 = arith.constant 40 : index
    %c0_188 = arith.constant 0 : index
    %c0_189 = arith.constant 0 : index
    %443 = vector.load %arg2[%c40, %c0_188, %c0_189] : memref<49x16x1xf32, #tpu.memory_space<vmem>>, vector<1x16x1xf32>
    %444 = vector.shape_cast %443 : vector<1x16x1xf32> to vector<16x1xf32>
    %445 = vector.broadcast %444 : vector<16x1xf32> to vector<16x32xf32>
    %446 = arith.mulf %442, %445 : vector<16x32xf32>
    %c40_190 = arith.constant 40 : index
    %c0_191 = arith.constant 0 : index
    %447 = vector.load %arg3[%c40_190, %c0_191] : memref<49x32xf32, #tpu.memory_space<vmem>>, vector<1x32xf32>
    %448 = vector.shape_cast %447 : vector<1x32xf32> to vector<32xf32>
    %449 = vector.shape_cast %448 : vector<32xf32> to vector<1x32xf32>
    %450 = vector.broadcast %449 : vector<1x32xf32> to vector<16x32xf32>
    %451 = arith.mulf %446, %450 : vector<16x32xf32>
    %452 = arith.addf %441, %451 : vector<16x32xf32>
    %c5_i32_192 = arith.constant 5 : i32
    %453 = tpu.dynamic_rotate %1 by %c5_i32_192 dim 0 : vector<16x32xf32>, i32 -> vector<16x32xf32>
    %c41 = arith.constant 41 : index
    %c0_193 = arith.constant 0 : index
    %c0_194 = arith.constant 0 : index
    %454 = vector.load %arg2[%c41, %c0_193, %c0_194] : memref<49x16x1xf32, #tpu.memory_space<vmem>>, vector<1x16x1xf32>
    %455 = vector.shape_cast %454 : vector<1x16x1xf32> to vector<16x1xf32>
    %456 = vector.broadcast %455 : vector<16x1xf32> to vector<16x32xf32>
    %457 = arith.mulf %453, %456 : vector<16x32xf32>
    %c41_195 = arith.constant 41 : index
    %c0_196 = arith.constant 0 : index
    %458 = vector.load %arg3[%c41_195, %c0_196] : memref<49x32xf32, #tpu.memory_space<vmem>>, vector<1x32xf32>
    %459 = vector.shape_cast %458 : vector<1x32xf32> to vector<32xf32>
    %460 = vector.shape_cast %459 : vector<32xf32> to vector<1x32xf32>
    %461 = vector.broadcast %460 : vector<1x32xf32> to vector<16x32xf32>
    %462 = arith.mulf %457, %461 : vector<16x32xf32>
    %463 = arith.addf %452, %462 : vector<16x32xf32>
    %c7_i32_197 = arith.constant 7 : i32
    %464 = tpu.dynamic_rotate %1 by %c7_i32_197 dim 0 : vector<16x32xf32>, i32 -> vector<16x32xf32>
    %c42 = arith.constant 42 : index
    %c0_198 = arith.constant 0 : index
    %c0_199 = arith.constant 0 : index
    %465 = vector.load %arg2[%c42, %c0_198, %c0_199] : memref<49x16x1xf32, #tpu.memory_space<vmem>>, vector<1x16x1xf32>
    %466 = vector.shape_cast %465 : vector<1x16x1xf32> to vector<16x1xf32>
    %467 = vector.broadcast %466 : vector<16x1xf32> to vector<16x32xf32>
    %468 = arith.mulf %464, %467 : vector<16x32xf32>
    %c42_200 = arith.constant 42 : index
    %c0_201 = arith.constant 0 : index
    %469 = vector.load %arg3[%c42_200, %c0_201] : memref<49x32xf32, #tpu.memory_space<vmem>>, vector<1x32xf32>
    %470 = vector.shape_cast %469 : vector<1x32xf32> to vector<32xf32>
    %471 = vector.shape_cast %470 : vector<32xf32> to vector<1x32xf32>
    %472 = vector.broadcast %471 : vector<1x32xf32> to vector<16x32xf32>
    %473 = arith.mulf %468, %472 : vector<16x32xf32>
    %474 = arith.addf %463, %473 : vector<16x32xf32>
    %c6_i32_202 = arith.constant 6 : i32
    %475 = tpu.dynamic_rotate %1 by %c6_i32_202 dim 0 : vector<16x32xf32>, i32 -> vector<16x32xf32>
    %c43 = arith.constant 43 : index
    %c0_203 = arith.constant 0 : index
    %c0_204 = arith.constant 0 : index
    %476 = vector.load %arg2[%c43, %c0_203, %c0_204] : memref<49x16x1xf32, #tpu.memory_space<vmem>>, vector<1x16x1xf32>
    %477 = vector.shape_cast %476 : vector<1x16x1xf32> to vector<16x1xf32>
    %478 = vector.broadcast %477 : vector<16x1xf32> to vector<16x32xf32>
    %479 = arith.mulf %475, %478 : vector<16x32xf32>
    %c43_205 = arith.constant 43 : index
    %c0_206 = arith.constant 0 : index
    %480 = vector.load %arg3[%c43_205, %c0_206] : memref<49x32xf32, #tpu.memory_space<vmem>>, vector<1x32xf32>
    %481 = vector.shape_cast %480 : vector<1x32xf32> to vector<32xf32>
    %482 = vector.shape_cast %481 : vector<32xf32> to vector<1x32xf32>
    %483 = vector.broadcast %482 : vector<1x32xf32> to vector<16x32xf32>
    %484 = arith.mulf %479, %483 : vector<16x32xf32>
    %485 = arith.addf %474, %484 : vector<16x32xf32>
    %c5_i32_207 = arith.constant 5 : i32
    %486 = tpu.dynamic_rotate %1 by %c5_i32_207 dim 0 : vector<16x32xf32>, i32 -> vector<16x32xf32>
    %c44 = arith.constant 44 : index
    %c0_208 = arith.constant 0 : index
    %c0_209 = arith.constant 0 : index
    %487 = vector.load %arg2[%c44, %c0_208, %c0_209] : memref<49x16x1xf32, #tpu.memory_space<vmem>>, vector<1x16x1xf32>
    %488 = vector.shape_cast %487 : vector<1x16x1xf32> to vector<16x1xf32>
    %489 = vector.broadcast %488 : vector<16x1xf32> to vector<16x32xf32>
    %490 = arith.mulf %486, %489 : vector<16x32xf32>
    %c44_210 = arith.constant 44 : index
    %c0_211 = arith.constant 0 : index
    %491 = vector.load %arg3[%c44_210, %c0_211] : memref<49x32xf32, #tpu.memory_space<vmem>>, vector<1x32xf32>
    %492 = vector.shape_cast %491 : vector<1x32xf32> to vector<32xf32>
    %493 = vector.shape_cast %492 : vector<32xf32> to vector<1x32xf32>
    %494 = vector.broadcast %493 : vector<1x32xf32> to vector<16x32xf32>
    %495 = arith.mulf %490, %494 : vector<16x32xf32>
    %496 = arith.addf %485, %495 : vector<16x32xf32>
    %c4_i32_212 = arith.constant 4 : i32
    %497 = tpu.dynamic_rotate %1 by %c4_i32_212 dim 0 : vector<16x32xf32>, i32 -> vector<16x32xf32>
    %c45 = arith.constant 45 : index
    %c0_213 = arith.constant 0 : index
    %c0_214 = arith.constant 0 : index
    %498 = vector.load %arg2[%c45, %c0_213, %c0_214] : memref<49x16x1xf32, #tpu.memory_space<vmem>>, vector<1x16x1xf32>
    %499 = vector.shape_cast %498 : vector<1x16x1xf32> to vector<16x1xf32>
    %500 = vector.broadcast %499 : vector<16x1xf32> to vector<16x32xf32>
    %501 = arith.mulf %497, %500 : vector<16x32xf32>
    %c45_215 = arith.constant 45 : index
    %c0_216 = arith.constant 0 : index
    %502 = vector.load %arg3[%c45_215, %c0_216] : memref<49x32xf32, #tpu.memory_space<vmem>>, vector<1x32xf32>
    %503 = vector.shape_cast %502 : vector<1x32xf32> to vector<32xf32>
    %504 = vector.shape_cast %503 : vector<32xf32> to vector<1x32xf32>
    %505 = vector.broadcast %504 : vector<1x32xf32> to vector<16x32xf32>
    %506 = arith.mulf %501, %505 : vector<16x32xf32>
    %507 = arith.addf %496, %506 : vector<16x32xf32>
    %c3_i32_217 = arith.constant 3 : i32
    %508 = tpu.dynamic_rotate %1 by %c3_i32_217 dim 0 : vector<16x32xf32>, i32 -> vector<16x32xf32>
    %c46 = arith.constant 46 : index
    %c0_218 = arith.constant 0 : index
    %c0_219 = arith.constant 0 : index
    %509 = vector.load %arg2[%c46, %c0_218, %c0_219] : memref<49x16x1xf32, #tpu.memory_space<vmem>>, vector<1x16x1xf32>
    %510 = vector.shape_cast %509 : vector<1x16x1xf32> to vector<16x1xf32>
    %511 = vector.broadcast %510 : vector<16x1xf32> to vector<16x32xf32>
    %512 = arith.mulf %508, %511 : vector<16x32xf32>
    %c46_220 = arith.constant 46 : index
    %c0_221 = arith.constant 0 : index
    %513 = vector.load %arg3[%c46_220, %c0_221] : memref<49x32xf32, #tpu.memory_space<vmem>>, vector<1x32xf32>
    %514 = vector.shape_cast %513 : vector<1x32xf32> to vector<32xf32>
    %515 = vector.shape_cast %514 : vector<32xf32> to vector<1x32xf32>
    %516 = vector.broadcast %515 : vector<1x32xf32> to vector<16x32xf32>
    %517 = arith.mulf %512, %516 : vector<16x32xf32>
    %518 = arith.addf %507, %517 : vector<16x32xf32>
    %c2_i32_222 = arith.constant 2 : i32
    %519 = tpu.dynamic_rotate %1 by %c2_i32_222 dim 0 : vector<16x32xf32>, i32 -> vector<16x32xf32>
    %c47 = arith.constant 47 : index
    %c0_223 = arith.constant 0 : index
    %c0_224 = arith.constant 0 : index
    %520 = vector.load %arg2[%c47, %c0_223, %c0_224] : memref<49x16x1xf32, #tpu.memory_space<vmem>>, vector<1x16x1xf32>
    %521 = vector.shape_cast %520 : vector<1x16x1xf32> to vector<16x1xf32>
    %522 = vector.broadcast %521 : vector<16x1xf32> to vector<16x32xf32>
    %523 = arith.mulf %519, %522 : vector<16x32xf32>
    %c47_225 = arith.constant 47 : index
    %c0_226 = arith.constant 0 : index
    %524 = vector.load %arg3[%c47_225, %c0_226] : memref<49x32xf32, #tpu.memory_space<vmem>>, vector<1x32xf32>
    %525 = vector.shape_cast %524 : vector<1x32xf32> to vector<32xf32>
    %526 = vector.shape_cast %525 : vector<32xf32> to vector<1x32xf32>
    %527 = vector.broadcast %526 : vector<1x32xf32> to vector<16x32xf32>
    %528 = arith.mulf %523, %527 : vector<16x32xf32>
    %529 = arith.addf %518, %528 : vector<16x32xf32>
    %c1_i32_227 = arith.constant 1 : i32
    %530 = tpu.dynamic_rotate %1 by %c1_i32_227 dim 0 : vector<16x32xf32>, i32 -> vector<16x32xf32>
    %c48 = arith.constant 48 : index
    %c0_228 = arith.constant 0 : index
    %c0_229 = arith.constant 0 : index
    %531 = vector.load %arg2[%c48, %c0_228, %c0_229] : memref<49x16x1xf32, #tpu.memory_space<vmem>>, vector<1x16x1xf32>
    %532 = vector.shape_cast %531 : vector<1x16x1xf32> to vector<16x1xf32>
    %533 = vector.broadcast %532 : vector<16x1xf32> to vector<16x32xf32>
    %534 = arith.mulf %530, %533 : vector<16x32xf32>
    %c48_230 = arith.constant 48 : index
    %c0_231 = arith.constant 0 : index
    %535 = vector.load %arg3[%c48_230, %c0_231] : memref<49x32xf32, #tpu.memory_space<vmem>>, vector<1x32xf32>
    %536 = vector.shape_cast %535 : vector<1x32xf32> to vector<32xf32>
    %537 = vector.shape_cast %536 : vector<32xf32> to vector<1x32xf32>
    %538 = vector.broadcast %537 : vector<1x32xf32> to vector<16x32xf32>
    %539 = arith.mulf %534, %538 : vector<16x32xf32>
    %540 = arith.addf %529, %539 : vector<16x32xf32>
    %c0_232 = arith.constant 0 : index
    %c0_233 = arith.constant 0 : index
    %541 = vector.load %arg4[%c0_232, %c0_233] : memref<1x32xf32, #tpu.memory_space<vmem>>, vector<1x32xf32>
    %542 = vector.broadcast %541 : vector<1x32xf32> to vector<16x32xf32>
    %543 = arith.addf %540, %542 : vector<16x32xf32>
    %c0_234 = arith.constant 0 : index
    %c0_235 = arith.constant 0 : index
    %544 = vector.load %arg5[%c0_234, %c0_235] : memref<1x32xf32, #tpu.memory_space<vmem>>, vector<1x32xf32>
    %c0_236 = arith.constant 0 : index
    %c0_237 = arith.constant 0 : index
    %545 = vector.load %arg6[%c0_236, %c0_237] : memref<1x32xf32, #tpu.memory_space<vmem>>, vector<1x32xf32>
    %cst_238 = arith.constant dense<0.000000e+00> : vector<16xf32>
    %546 = vector.multi_reduction <add>, %543, %cst_238 [1] : vector<16x32xf32> to vector<16xf32>
    %547 = vector.shape_cast %546 : vector<16xf32> to vector<16x1xf32>
    %cst_239 = arith.constant 3.200000e+01 : f32
    %548 = vector.broadcast %cst_239 : f32 to vector<16x1xf32>
    %549 = arith.divf %547, %548 : vector<16x1xf32>
    %550 = vector.broadcast %549 : vector<16x1xf32> to vector<16x32xf32>
    %551 = arith.subf %543, %550 : vector<16x32xf32>
    %552 = arith.mulf %551, %551 : vector<16x32xf32>
    %cst_240 = arith.constant dense<0.000000e+00> : vector<16xf32>
    %553 = vector.multi_reduction <add>, %552, %cst_240 [1] : vector<16x32xf32> to vector<16xf32>
    %554 = vector.shape_cast %553 : vector<16xf32> to vector<16x1xf32>
    %cst_241 = arith.constant 3.200000e+01 : f32
    %555 = vector.broadcast %cst_241 : f32 to vector<16x1xf32>
    %556 = arith.divf %554, %555 : vector<16x1xf32>
    %cst_242 = arith.constant 9.99999997E-7 : f32
    %557 = vector.broadcast %cst_242 : f32 to vector<16x1xf32>
    %558 = arith.addf %556, %557 : vector<16x1xf32>
    %559 = math.rsqrt %558 : vector<16x1xf32>
    %560 = vector.broadcast %559 : vector<16x1xf32> to vector<16x32xf32>
    %561 = arith.mulf %551, %560 : vector<16x32xf32>
    %562 = vector.broadcast %544 : vector<1x32xf32> to vector<16x32xf32>
    %563 = arith.mulf %561, %562 : vector<16x32xf32>
    %564 = vector.broadcast %545 : vector<1x32xf32> to vector<16x32xf32>
    %565 = arith.addf %563, %564 : vector<16x32xf32>
    %566 = arith.truncf %565 : vector<16x32xf32> to vector<16x32xbf16>
    %c0_243 = arith.constant 0 : index
    %c0_244 = arith.constant 0 : index
    %567 = vector.load %arg7[%c0_243, %c0_244] : memref<32x128xbf16, #tpu.memory_space<vmem>>, vector<32x128xbf16>
    %cst_245 = arith.constant dense<0.000000e+00> : vector<16x128xf32>
    %568 = tpu.matmul %566, %567, %cst_245 {dimension_numbers = #tpu.dot_dimension_numbers<[1], [0], [0], [1], [0, 0, 1, 1], [], []>} : vector<16x32xbf16>, vector<32x128xbf16>, vector<16x128xf32> -> vector<16x128xf32>
    %c0_246 = arith.constant 0 : index
    %c0_247 = arith.constant 0 : index
    %569 = vector.load %arg8[%c0_246, %c0_247] : memref<1x128xf32, #tpu.memory_space<vmem>>, vector<1x128xf32>
    %570 = vector.broadcast %569 : vector<1x128xf32> to vector<16x128xf32>
    %571 = arith.addf %568, %570 : vector<16x128xf32>
    %cst_248 = arith.constant 5.000000e-01 : f32
    %572 = vector.broadcast %cst_248 : f32 to vector<16x128xf32>
    %573 = arith.mulf %572, %571 : vector<16x128xf32>
    %cst_249 = arith.constant 0.707106769 : f32
    %574 = vector.broadcast %cst_249 : f32 to vector<16x128xf32>
    %575 = arith.mulf %571, %574 : vector<16x128xf32>
    %576 = math.absf %575 : vector<16x128xf32>
    %cst_250 = arith.constant 0.327591091 : f32
    %577 = vector.broadcast %cst_250 : f32 to vector<16x128xf32>
    %578 = arith.mulf %577, %576 : vector<16x128xf32>
    %cst_251 = arith.constant 1.000000e+00 : f32
    %579 = vector.broadcast %cst_251 : f32 to vector<16x128xf32>
    %580 = arith.addf %579, %578 : vector<16x128xf32>
    %581 = tpu.reciprocal %580 {approx = true} : vector<16x128xf32> -> vector<16x128xf32>
    %cst_252 = arith.constant 1.06140542 : f32
    %582 = vector.broadcast %cst_252 : f32 to vector<16x128xf32>
    %583 = arith.mulf %582, %581 : vector<16x128xf32>
    %cst_253 = arith.constant -1.45315206 : f32
    %584 = vector.broadcast %cst_253 : f32 to vector<16x128xf32>
    %585 = arith.addf %583, %584 : vector<16x128xf32>
    %586 = arith.mulf %585, %581 : vector<16x128xf32>
    %cst_254 = arith.constant 1.42141378 : f32
    %587 = vector.broadcast %cst_254 : f32 to vector<16x128xf32>
    %588 = arith.addf %586, %587 : vector<16x128xf32>
    %589 = arith.mulf %588, %581 : vector<16x128xf32>
    %cst_255 = arith.constant -0.284496725 : f32
    %590 = vector.broadcast %cst_255 : f32 to vector<16x128xf32>
    %591 = arith.addf %589, %590 : vector<16x128xf32>
    %592 = arith.mulf %591, %581 : vector<16x128xf32>
    %cst_256 = arith.constant 0.254829586 : f32
    %593 = vector.broadcast %cst_256 : f32 to vector<16x128xf32>
    %594 = arith.addf %592, %593 : vector<16x128xf32>
    %595 = arith.mulf %594, %581 : vector<16x128xf32>
    %cst_257 = arith.constant 0.000000e+00 : f32
    %596 = vector.broadcast %cst_257 : f32 to vector<16x128xf32>
    %597 = arith.subf %596, %576 : vector<16x128xf32>
    %598 = arith.mulf %597, %576 : vector<16x128xf32>
    %599 = math.exp %598 : vector<16x128xf32>
    %600 = arith.mulf %595, %599 : vector<16x128xf32>
    %cst_258 = arith.constant 1.000000e+00 : f32
    %601 = vector.broadcast %cst_258 : f32 to vector<16x128xf32>
    %602 = arith.subf %601, %600 : vector<16x128xf32>
    %cst_259 = arith.constant 0.000000e+00 : f32
    %603 = vector.broadcast %cst_259 : f32 to vector<16x128xf32>
    %604 = arith.cmpf olt, %575, %603 : vector<16x128xf32>
    %cst_260 = arith.constant 0.000000e+00 : f32
    %605 = vector.broadcast %cst_260 : f32 to vector<16x128xf32>
    %606 = arith.subf %605, %602 : vector<16x128xf32>
    %607 = arith.select %604, %606, %602 : vector<16x128xi1>, vector<16x128xf32>
    %cst_261 = arith.constant 1.000000e+00 : f32
    %608 = vector.broadcast %cst_261 : f32 to vector<16x128xf32>
    %609 = arith.addf %608, %607 : vector<16x128xf32>
    %610 = arith.mulf %573, %609 : vector<16x128xf32>
    %611 = arith.truncf %610 : vector<16x128xf32> to vector<16x128xbf16>
    %c0_262 = arith.constant 0 : index
    %c0_263 = arith.constant 0 : index
    %612 = vector.load %arg9[%c0_262, %c0_263] : memref<128x32xbf16, #tpu.memory_space<vmem>>, vector<128x32xbf16>
    %cst_264 = arith.constant dense<0.000000e+00> : vector<16x32xf32>
    %613 = tpu.matmul %611, %612, %cst_264 {dimension_numbers = #tpu.dot_dimension_numbers<[1], [0], [0], [1], [0, 0, 1, 1], [], []>} : vector<16x128xbf16>, vector<128x32xbf16>, vector<16x32xf32> -> vector<16x32xf32>
    %c0_265 = arith.constant 0 : index
    %c0_266 = arith.constant 0 : index
    %614 = vector.load %arg10[%c0_265, %c0_266] : memref<1x32xf32, #tpu.memory_space<vmem>>, vector<1x32xf32>
    %615 = vector.broadcast %614 : vector<1x32xf32> to vector<16x32xf32>
    %616 = arith.addf %613, %615 : vector<16x32xf32>
    %c0_267 = arith.constant 0 : index
    %c0_268 = arith.constant 0 : index
    %617 = vector.load %arg11[%c0_267, %c0_268] : memref<1x32xf32, #tpu.memory_space<vmem>>, vector<1x32xf32>
    %618 = vector.broadcast %617 : vector<1x32xf32> to vector<16x32xf32>
    %619 = arith.mulf %618, %616 : vector<16x32xf32>
    %620 = arith.addf %1, %619 : vector<16x32xf32>
    %c0_269 = arith.constant 0 : index
    %c0_270 = arith.constant 0 : index
    %c0_271 = arith.constant 0 : index
    %621 = vector.load %arg12[%c0_269, %c0_270, %c0_271] : memref<1x16x32xf32, #tpu.memory_space<vmem>>, vector<1x16x32xf32>
    %622 = vector.shape_cast %621 : vector<1x16x32xf32> to vector<16x32xf32>
    %623 = vector.shape_cast %620 : vector<16x32xf32> to vector<1x16x32xf32>
    tpu.vector_store %arg12[%c0_269, %c0_270, %c0_271], %623 {strides = array<i32>} : memref<1x16x32xf32, #tpu.memory_space<vmem>>, vector<1x16x32xf32>,
    return
  }
  func.func @transform_0(%arg0: i32) -> (i32, i32, i32) {
    %c0_i32 = arith.constant 0 : i32
    %c0_i32_0 = arith.constant 0 : i32
    %c0_i32_1 = arith.constant 0 : i32
    return %arg0, %c0_i32, %c0_i32_0 : i32, i32, i32
  }
  func.func @transform_1(%arg0: i32) -> (i32, i32, i32) {
    %c0_i32 = arith.constant 0 : i32
    %c0_i32_0 = arith.constant 0 : i32
    %c0_i32_1 = arith.constant 0 : i32
    %c0_i32_2 = arith.constant 0 : i32
    return %c0_i32, %c0_i32_0, %c0_i32_1 : i32, i32, i32
  }
  func.func @transform_2(%arg0: i32) -> (i32, i32) {
    %c0_i32 = arith.constant 0 : i32
    %c0_i32_0 = arith.constant 0 : i32
    %c0_i32_1 = arith.constant 0 : i32
    return %c0_i32, %c0_i32_0 : i32, i32
  }
  func.func @transform_3(%arg0: i32) -> (i32, i32) {
    %c0_i32 = arith.constant 0 : i32
    %c0_i32_0 = arith.constant 0 : i32
    %c0_i32_1 = arith.constant 0 : i32
    return %c0_i32, %c0_i32_0 : i32, i32
  }
  func.func @transform_4(%arg0: i32) -> (i32, i32) {
    %c0_i32 = arith.constant 0 : i32
    %c0_i32_0 = arith.constant 0 : i32
    %c0_i32_1 = arith.constant 0 : i32
    return %c0_i32, %c0_i32_0 : i32, i32
  }
  func.func @transform_5(%arg0: i32) -> (i32, i32) {
    %c0_i32 = arith.constant 0 : i32
    %c0_i32_0 = arith.constant 0 : i32
    %c0_i32_1 = arith.constant 0 : i32
    return %c0_i32, %c0_i32_0 : i32, i32
  }
  func.func @transform_6(%arg0: i32) -> (i32, i32) {
    %c0_i32 = arith.constant 0 : i32
    %c0_i32_0 = arith.constant 0 : i32
    %c0_i32_1 = arith.constant 0 : i32
    return %c0_i32, %c0_i32_0 : i32, i32
  }
  func.func @transform_7(%arg0: i32) -> (i32, i32) {
    %c0_i32 = arith.constant 0 : i32
    %c0_i32_0 = arith.constant 0 : i32
    %c0_i32_1 = arith.constant 0 : i32
    return %c0_i32, %c0_i32_0 : i32, i32
  }
  func.func @transform_8(%arg0: i32) -> (i32, i32) {
    %c0_i32 = arith.constant 0 : i32
    %c0_i32_0 = arith.constant 0 : i32
    %c0_i32_1 = arith.constant 0 : i32
    return %c0_i32, %c0_i32_0 : i32, i32
  }
  func.func @transform_9(%arg0: i32) -> (i32, i32) {
    %c0_i32 = arith.constant 0 : i32
    %c0_i32_0 = arith.constant 0 : i32
    %c0_i32_1 = arith.constant 0 : i32
    return %c0_i32, %c0_i32_0 : i32, i32
  }
  func.func @transform_10(%arg0: i32) -> (i32, i32) {
    %c0_i32 = arith.constant 0 : i32
    %c0_i32_0 = arith.constant 0 : i32
    %c0_i32_1 = arith.constant 0 : i32
    return %c0_i32, %c0_i32_0 : i32, i32
  }
  func.func @transform_11(%arg0: i32) -> (i32, i32, i32) {
    %c0_i32 = arith.constant 0 : i32
    %c0_i32_0 = arith.constant 0 : i32
    %c0_i32_1 = arith.constant 0 : i32
    return %arg0, %c0_i32, %c0_i32_0 : i32, i32, i32
  }
}

module attributes {stable_mosaic.version = 11 : i64} {
  func.func @_downsample_kernel(%arg0: i32, %arg1: memref<8x32xf32, #tpu.memory_space<vmem>>, %arg2: memref<8x32xf32, #tpu.memory_space<vmem>>, %arg3: memref<8x32xf32, #tpu.memory_space<vmem>>, %arg4: memref<8x32xf32, #tpu.memory_space<vmem>>, %arg5: memref<1x32xf32, #tpu.memory_space<vmem>>, %arg6: memref<1x32xf32, #tpu.memory_space<vmem>>, %arg7: memref<4x32x64xbf16, #tpu.memory_space<vmem>>, %arg8: memref<1x64xf32, #tpu.memory_space<vmem>>, %arg9: memref<8x64xf32, #tpu.memory_space<vmem>>) attributes {dimension_semantics = [#tpu.dimension_semantics<parallel>], iteration_bounds = array<i64: 1>, scalar_prefetch = 0 : i64, scratch_operands = 0 : i64, tpu.core_type = #tpu.core_type<tc>, window_params = [{transform_indices = @transform_0, window_bounds = array<i64: 8, 32>}, {transform_indices = @transform_1, window_bounds = array<i64: 8, 32>}, {transform_indices = @transform_2, window_bounds = array<i64: 8, 32>}, {transform_indices = @transform_3, window_bounds = array<i64: 8, 32>}, {pipeline_mode = #tpu.pipeline_mode<synchronous>, transform_indices = @transform_4, window_bounds = array<i64: 1, 32>}, {pipeline_mode = #tpu.pipeline_mode<synchronous>, transform_indices = @transform_5, window_bounds = array<i64: 1, 32>}, {pipeline_mode = #tpu.pipeline_mode<synchronous>, transform_indices = @transform_6, window_bounds = array<i64: 4, 32, 64>}, {pipeline_mode = #tpu.pipeline_mode<synchronous>, transform_indices = @transform_7, window_bounds = array<i64: 1, 64>}, {transform_indices = @transform_8, window_bounds = array<i64: 8, 64>}]} {
    %cst = arith.constant 0.000000e+00 : f32
    %0 = vector.broadcast %cst : f32 to vector<8x64xf32>
    %c0 = arith.constant 0 : index
    %c0_0 = arith.constant 0 : index
    %1 = vector.load %arg1[%c0, %c0_0] : memref<8x32xf32, #tpu.memory_space<vmem>>, vector<8x32xf32>
    %c0_1 = arith.constant 0 : index
    %c0_2 = arith.constant 0 : index
    %2 = vector.load %arg5[%c0_1, %c0_2] : memref<1x32xf32, #tpu.memory_space<vmem>>, vector<1x32xf32>
    %c0_3 = arith.constant 0 : index
    %c0_4 = arith.constant 0 : index
    %3 = vector.load %arg6[%c0_3, %c0_4] : memref<1x32xf32, #tpu.memory_space<vmem>>, vector<1x32xf32>
    %cst_5 = arith.constant dense<0.000000e+00> : vector<8xf32>
    %4 = vector.multi_reduction <add>, %1, %cst_5 [1] : vector<8x32xf32> to vector<8xf32>
    %5 = vector.shape_cast %4 : vector<8xf32> to vector<8x1xf32>
    %cst_6 = arith.constant 3.200000e+01 : f32
    %6 = vector.broadcast %cst_6 : f32 to vector<8x1xf32>
    %7 = arith.divf %5, %6 : vector<8x1xf32>
    %8 = vector.broadcast %7 : vector<8x1xf32> to vector<8x32xf32>
    %9 = arith.subf %1, %8 : vector<8x32xf32>
    %10 = arith.mulf %9, %9 : vector<8x32xf32>
    %cst_7 = arith.constant dense<0.000000e+00> : vector<8xf32>
    %11 = vector.multi_reduction <add>, %10, %cst_7 [1] : vector<8x32xf32> to vector<8xf32>
    %12 = vector.shape_cast %11 : vector<8xf32> to vector<8x1xf32>
    %cst_8 = arith.constant 3.200000e+01 : f32
    %13 = vector.broadcast %cst_8 : f32 to vector<8x1xf32>
    %14 = arith.divf %12, %13 : vector<8x1xf32>
    %cst_9 = arith.constant 9.99999997E-7 : f32
    %15 = vector.broadcast %cst_9 : f32 to vector<8x1xf32>
    %16 = arith.addf %14, %15 : vector<8x1xf32>
    %17 = math.rsqrt %16 : vector<8x1xf32>
    %18 = vector.broadcast %17 : vector<8x1xf32> to vector<8x32xf32>
    %19 = arith.mulf %9, %18 : vector<8x32xf32>
    %20 = vector.broadcast %2 : vector<1x32xf32> to vector<8x32xf32>
    %21 = arith.mulf %19, %20 : vector<8x32xf32>
    %22 = vector.broadcast %3 : vector<1x32xf32> to vector<8x32xf32>
    %23 = arith.addf %21, %22 : vector<8x32xf32>
    %24 = arith.truncf %23 : vector<8x32xf32> to vector<8x32xbf16>
    %c0_10 = arith.constant 0 : index
    %c0_11 = arith.constant 0 : index
    %c0_12 = arith.constant 0 : index
    %25 = vector.load %arg7[%c0_10, %c0_11, %c0_12] : memref<4x32x64xbf16, #tpu.memory_space<vmem>>, vector<1x32x64xbf16>
    %26 = vector.shape_cast %25 : vector<1x32x64xbf16> to vector<32x64xbf16>
    %cst_13 = arith.constant dense<0.000000e+00> : vector<8x64xf32>
    %27 = tpu.matmul %24, %26, %cst_13 {dimension_numbers = #tpu.dot_dimension_numbers<[1], [0], [0], [1], [0, 0, 1, 1], [], []>} : vector<8x32xbf16>, vector<32x64xbf16>, vector<8x64xf32> -> vector<8x64xf32>
    %28 = arith.addf %0, %27 : vector<8x64xf32>
    %c0_14 = arith.constant 0 : index
    %c0_15 = arith.constant 0 : index
    %29 = vector.load %arg2[%c0_14, %c0_15] : memref<8x32xf32, #tpu.memory_space<vmem>>, vector<8x32xf32>
    %c0_16 = arith.constant 0 : index
    %c0_17 = arith.constant 0 : index
    %30 = vector.load %arg5[%c0_16, %c0_17] : memref<1x32xf32, #tpu.memory_space<vmem>>, vector<1x32xf32>
    %c0_18 = arith.constant 0 : index
    %c0_19 = arith.constant 0 : index
    %31 = vector.load %arg6[%c0_18, %c0_19] : memref<1x32xf32, #tpu.memory_space<vmem>>, vector<1x32xf32>
    %cst_20 = arith.constant dense<0.000000e+00> : vector<8xf32>
    %32 = vector.multi_reduction <add>, %29, %cst_20 [1] : vector<8x32xf32> to vector<8xf32>
    %33 = vector.shape_cast %32 : vector<8xf32> to vector<8x1xf32>
    %cst_21 = arith.constant 3.200000e+01 : f32
    %34 = vector.broadcast %cst_21 : f32 to vector<8x1xf32>
    %35 = arith.divf %33, %34 : vector<8x1xf32>
    %36 = vector.broadcast %35 : vector<8x1xf32> to vector<8x32xf32>
    %37 = arith.subf %29, %36 : vector<8x32xf32>
    %38 = arith.mulf %37, %37 : vector<8x32xf32>
    %cst_22 = arith.constant dense<0.000000e+00> : vector<8xf32>
    %39 = vector.multi_reduction <add>, %38, %cst_22 [1] : vector<8x32xf32> to vector<8xf32>
    %40 = vector.shape_cast %39 : vector<8xf32> to vector<8x1xf32>
    %cst_23 = arith.constant 3.200000e+01 : f32
    %41 = vector.broadcast %cst_23 : f32 to vector<8x1xf32>
    %42 = arith.divf %40, %41 : vector<8x1xf32>
    %cst_24 = arith.constant 9.99999997E-7 : f32
    %43 = vector.broadcast %cst_24 : f32 to vector<8x1xf32>
    %44 = arith.addf %42, %43 : vector<8x1xf32>
    %45 = math.rsqrt %44 : vector<8x1xf32>
    %46 = vector.broadcast %45 : vector<8x1xf32> to vector<8x32xf32>
    %47 = arith.mulf %37, %46 : vector<8x32xf32>
    %48 = vector.broadcast %30 : vector<1x32xf32> to vector<8x32xf32>
    %49 = arith.mulf %47, %48 : vector<8x32xf32>
    %50 = vector.broadcast %31 : vector<1x32xf32> to vector<8x32xf32>
    %51 = arith.addf %49, %50 : vector<8x32xf32>
    %52 = arith.truncf %51 : vector<8x32xf32> to vector<8x32xbf16>
    %c1 = arith.constant 1 : index
    %c0_25 = arith.constant 0 : index
    %c0_26 = arith.constant 0 : index
    %53 = vector.load %arg7[%c1, %c0_25, %c0_26] : memref<4x32x64xbf16, #tpu.memory_space<vmem>>, vector<1x32x64xbf16>
    %54 = vector.shape_cast %53 : vector<1x32x64xbf16> to vector<32x64xbf16>
    %cst_27 = arith.constant dense<0.000000e+00> : vector<8x64xf32>
    %55 = tpu.matmul %52, %54, %cst_27 {dimension_numbers = #tpu.dot_dimension_numbers<[1], [0], [0], [1], [0, 0, 1, 1], [], []>} : vector<8x32xbf16>, vector<32x64xbf16>, vector<8x64xf32> -> vector<8x64xf32>
    %56 = arith.addf %28, %55 : vector<8x64xf32>
    %c0_28 = arith.constant 0 : index
    %c0_29 = arith.constant 0 : index
    %57 = vector.load %arg3[%c0_28, %c0_29] : memref<8x32xf32, #tpu.memory_space<vmem>>, vector<8x32xf32>
    %c0_30 = arith.constant 0 : index
    %c0_31 = arith.constant 0 : index
    %58 = vector.load %arg5[%c0_30, %c0_31] : memref<1x32xf32, #tpu.memory_space<vmem>>, vector<1x32xf32>
    %c0_32 = arith.constant 0 : index
    %c0_33 = arith.constant 0 : index
    %59 = vector.load %arg6[%c0_32, %c0_33] : memref<1x32xf32, #tpu.memory_space<vmem>>, vector<1x32xf32>
    %cst_34 = arith.constant dense<0.000000e+00> : vector<8xf32>
    %60 = vector.multi_reduction <add>, %57, %cst_34 [1] : vector<8x32xf32> to vector<8xf32>
    %61 = vector.shape_cast %60 : vector<8xf32> to vector<8x1xf32>
    %cst_35 = arith.constant 3.200000e+01 : f32
    %62 = vector.broadcast %cst_35 : f32 to vector<8x1xf32>
    %63 = arith.divf %61, %62 : vector<8x1xf32>
    %64 = vector.broadcast %63 : vector<8x1xf32> to vector<8x32xf32>
    %65 = arith.subf %57, %64 : vector<8x32xf32>
    %66 = arith.mulf %65, %65 : vector<8x32xf32>
    %cst_36 = arith.constant dense<0.000000e+00> : vector<8xf32>
    %67 = vector.multi_reduction <add>, %66, %cst_36 [1] : vector<8x32xf32> to vector<8xf32>
    %68 = vector.shape_cast %67 : vector<8xf32> to vector<8x1xf32>
    %cst_37 = arith.constant 3.200000e+01 : f32
    %69 = vector.broadcast %cst_37 : f32 to vector<8x1xf32>
    %70 = arith.divf %68, %69 : vector<8x1xf32>
    %cst_38 = arith.constant 9.99999997E-7 : f32
    %71 = vector.broadcast %cst_38 : f32 to vector<8x1xf32>
    %72 = arith.addf %70, %71 : vector<8x1xf32>
    %73 = math.rsqrt %72 : vector<8x1xf32>
    %74 = vector.broadcast %73 : vector<8x1xf32> to vector<8x32xf32>
    %75 = arith.mulf %65, %74 : vector<8x32xf32>
    %76 = vector.broadcast %58 : vector<1x32xf32> to vector<8x32xf32>
    %77 = arith.mulf %75, %76 : vector<8x32xf32>
    %78 = vector.broadcast %59 : vector<1x32xf32> to vector<8x32xf32>
    %79 = arith.addf %77, %78 : vector<8x32xf32>
    %80 = arith.truncf %79 : vector<8x32xf32> to vector<8x32xbf16>
    %c2 = arith.constant 2 : index
    %c0_39 = arith.constant 0 : index
    %c0_40 = arith.constant 0 : index
    %81 = vector.load %arg7[%c2, %c0_39, %c0_40] : memref<4x32x64xbf16, #tpu.memory_space<vmem>>, vector<1x32x64xbf16>
    %82 = vector.shape_cast %81 : vector<1x32x64xbf16> to vector<32x64xbf16>
    %cst_41 = arith.constant dense<0.000000e+00> : vector<8x64xf32>
    %83 = tpu.matmul %80, %82, %cst_41 {dimension_numbers = #tpu.dot_dimension_numbers<[1], [0], [0], [1], [0, 0, 1, 1], [], []>} : vector<8x32xbf16>, vector<32x64xbf16>, vector<8x64xf32> -> vector<8x64xf32>
    %84 = arith.addf %56, %83 : vector<8x64xf32>
    %c0_42 = arith.constant 0 : index
    %c0_43 = arith.constant 0 : index
    %85 = vector.load %arg4[%c0_42, %c0_43] : memref<8x32xf32, #tpu.memory_space<vmem>>, vector<8x32xf32>
    %c0_44 = arith.constant 0 : index
    %c0_45 = arith.constant 0 : index
    %86 = vector.load %arg5[%c0_44, %c0_45] : memref<1x32xf32, #tpu.memory_space<vmem>>, vector<1x32xf32>
    %c0_46 = arith.constant 0 : index
    %c0_47 = arith.constant 0 : index
    %87 = vector.load %arg6[%c0_46, %c0_47] : memref<1x32xf32, #tpu.memory_space<vmem>>, vector<1x32xf32>
    %cst_48 = arith.constant dense<0.000000e+00> : vector<8xf32>
    %88 = vector.multi_reduction <add>, %85, %cst_48 [1] : vector<8x32xf32> to vector<8xf32>
    %89 = vector.shape_cast %88 : vector<8xf32> to vector<8x1xf32>
    %cst_49 = arith.constant 3.200000e+01 : f32
    %90 = vector.broadcast %cst_49 : f32 to vector<8x1xf32>
    %91 = arith.divf %89, %90 : vector<8x1xf32>
    %92 = vector.broadcast %91 : vector<8x1xf32> to vector<8x32xf32>
    %93 = arith.subf %85, %92 : vector<8x32xf32>
    %94 = arith.mulf %93, %93 : vector<8x32xf32>
    %cst_50 = arith.constant dense<0.000000e+00> : vector<8xf32>
    %95 = vector.multi_reduction <add>, %94, %cst_50 [1] : vector<8x32xf32> to vector<8xf32>
    %96 = vector.shape_cast %95 : vector<8xf32> to vector<8x1xf32>
    %cst_51 = arith.constant 3.200000e+01 : f32
    %97 = vector.broadcast %cst_51 : f32 to vector<8x1xf32>
    %98 = arith.divf %96, %97 : vector<8x1xf32>
    %cst_52 = arith.constant 9.99999997E-7 : f32
    %99 = vector.broadcast %cst_52 : f32 to vector<8x1xf32>
    %100 = arith.addf %98, %99 : vector<8x1xf32>
    %101 = math.rsqrt %100 : vector<8x1xf32>
    %102 = vector.broadcast %101 : vector<8x1xf32> to vector<8x32xf32>
    %103 = arith.mulf %93, %102 : vector<8x32xf32>
    %104 = vector.broadcast %86 : vector<1x32xf32> to vector<8x32xf32>
    %105 = arith.mulf %103, %104 : vector<8x32xf32>
    %106 = vector.broadcast %87 : vector<1x32xf32> to vector<8x32xf32>
    %107 = arith.addf %105, %106 : vector<8x32xf32>
    %108 = arith.truncf %107 : vector<8x32xf32> to vector<8x32xbf16>
    %c3 = arith.constant 3 : index
    %c0_53 = arith.constant 0 : index
    %c0_54 = arith.constant 0 : index
    %109 = vector.load %arg7[%c3, %c0_53, %c0_54] : memref<4x32x64xbf16, #tpu.memory_space<vmem>>, vector<1x32x64xbf16>
    %110 = vector.shape_cast %109 : vector<1x32x64xbf16> to vector<32x64xbf16>
    %cst_55 = arith.constant dense<0.000000e+00> : vector<8x64xf32>
    %111 = tpu.matmul %108, %110, %cst_55 {dimension_numbers = #tpu.dot_dimension_numbers<[1], [0], [0], [1], [0, 0, 1, 1], [], []>} : vector<8x32xbf16>, vector<32x64xbf16>, vector<8x64xf32> -> vector<8x64xf32>
    %112 = arith.addf %84, %111 : vector<8x64xf32>
    %c0_56 = arith.constant 0 : index
    %c0_57 = arith.constant 0 : index
    %113 = vector.load %arg8[%c0_56, %c0_57] : memref<1x64xf32, #tpu.memory_space<vmem>>, vector<1x64xf32>
    %114 = vector.broadcast %113 : vector<1x64xf32> to vector<8x64xf32>
    %115 = arith.addf %112, %114 : vector<8x64xf32>
    %c0_58 = arith.constant 0 : index
    %c0_59 = arith.constant 0 : index
    %116 = vector.load %arg9[%c0_58, %c0_59] : memref<8x64xf32, #tpu.memory_space<vmem>>, vector<8x64xf32>
    tpu.vector_store %arg9[%c0_58, %c0_59], %115 {strides = array<i32>} : memref<8x64xf32, #tpu.memory_space<vmem>>, vector<8x64xf32>,
    return
  }
  func.func @transform_0(%arg0: i32) -> (i32, i32) {
    %c0_i32 = arith.constant 0 : i32
    %c0_i32_0 = arith.constant 0 : i32
    return %arg0, %c0_i32 : i32, i32
  }
  func.func @transform_1(%arg0: i32) -> (i32, i32) {
    %c0_i32 = arith.constant 0 : i32
    %c0_i32_0 = arith.constant 0 : i32
    return %arg0, %c0_i32 : i32, i32
  }
  func.func @transform_2(%arg0: i32) -> (i32, i32) {
    %c0_i32 = arith.constant 0 : i32
    %c0_i32_0 = arith.constant 0 : i32
    return %arg0, %c0_i32 : i32, i32
  }
  func.func @transform_3(%arg0: i32) -> (i32, i32) {
    %c0_i32 = arith.constant 0 : i32
    %c0_i32_0 = arith.constant 0 : i32
    return %arg0, %c0_i32 : i32, i32
  }
  func.func @transform_4(%arg0: i32) -> (i32, i32) {
    %c0_i32 = arith.constant 0 : i32
    %c0_i32_0 = arith.constant 0 : i32
    %c0_i32_1 = arith.constant 0 : i32
    return %c0_i32, %c0_i32_0 : i32, i32
  }
  func.func @transform_5(%arg0: i32) -> (i32, i32) {
    %c0_i32 = arith.constant 0 : i32
    %c0_i32_0 = arith.constant 0 : i32
    %c0_i32_1 = arith.constant 0 : i32
    return %c0_i32, %c0_i32_0 : i32, i32
  }
  func.func @transform_6(%arg0: i32) -> (i32, i32, i32) {
    %c0_i32 = arith.constant 0 : i32
    %c0_i32_0 = arith.constant 0 : i32
    %c0_i32_1 = arith.constant 0 : i32
    %c0_i32_2 = arith.constant 0 : i32
    return %c0_i32, %c0_i32_0, %c0_i32_1 : i32, i32, i32
  }
  func.func @transform_7(%arg0: i32) -> (i32, i32) {
    %c0_i32 = arith.constant 0 : i32
    %c0_i32_0 = arith.constant 0 : i32
    %c0_i32_1 = arith.constant 0 : i32
    return %c0_i32, %c0_i32_0 : i32, i32
  }
  func.func @transform_8(%arg0: i32) -> (i32, i32) {
    %c0_i32 = arith.constant 0 : i32
    %c0_i32_0 = arith.constant 0 : i32
    return %arg0, %c0_i32 : i32, i32
  }
}

module attributes {stable_mosaic.version = 11 : i64} {
  func.func @_head_kernel(%arg0: memref<2x4x64xf32, #tpu.memory_space<vmem>>, %arg1: memref<1x64xf32, #tpu.memory_space<vmem>>, %arg2: memref<1x64xf32, #tpu.memory_space<vmem>>, %arg3: memref<64x10xf32, #tpu.memory_space<vmem>>, %arg4: memref<1x10xf32, #tpu.memory_space<vmem>>, %arg5: memref<2x10xf32, #tpu.memory_space<vmem>>) attributes {dimension_semantics = [], scalar_prefetch = 0 : i64, scratch_operands = 0 : i64, tpu.core_type = #tpu.core_type<tc>} {
    %c0 = arith.constant 0 : index
    %c0_0 = arith.constant 0 : index
    %c0_1 = arith.constant 0 : index
    %0 = vector.load %arg0[%c0, %c0_0, %c0_1] : memref<2x4x64xf32, #tpu.memory_space<vmem>>, vector<2x4x64xf32>
    %cst = arith.constant dense<0.000000e+00> : vector<2x64xf32>
    %1 = vector.multi_reduction <add>, %0, %cst [1] : vector<2x4x64xf32> to vector<2x64xf32>
    %cst_2 = arith.constant 4.000000e+00 : f32
    %2 = vector.broadcast %cst_2 : f32 to vector<2x64xf32>
    %3 = arith.divf %1, %2 : vector<2x64xf32>
    %c0_3 = arith.constant 0 : index
    %c0_4 = arith.constant 0 : index
    %4 = vector.load %arg1[%c0_3, %c0_4] : memref<1x64xf32, #tpu.memory_space<vmem>>, vector<1x64xf32>
    %c0_5 = arith.constant 0 : index
    %c0_6 = arith.constant 0 : index
    %5 = vector.load %arg2[%c0_5, %c0_6] : memref<1x64xf32, #tpu.memory_space<vmem>>, vector<1x64xf32>
    %cst_7 = arith.constant dense<0.000000e+00> : vector<2xf32>
    %6 = vector.multi_reduction <add>, %3, %cst_7 [1] : vector<2x64xf32> to vector<2xf32>
    %7 = vector.shape_cast %6 : vector<2xf32> to vector<2x1xf32>
    %cst_8 = arith.constant 6.400000e+01 : f32
    %8 = vector.broadcast %cst_8 : f32 to vector<2x1xf32>
    %9 = arith.divf %7, %8 : vector<2x1xf32>
    %10 = vector.broadcast %9 : vector<2x1xf32> to vector<2x64xf32>
    %11 = arith.subf %3, %10 : vector<2x64xf32>
    %12 = arith.mulf %11, %11 : vector<2x64xf32>
    %cst_9 = arith.constant dense<0.000000e+00> : vector<2xf32>
    %13 = vector.multi_reduction <add>, %12, %cst_9 [1] : vector<2x64xf32> to vector<2xf32>
    %14 = vector.shape_cast %13 : vector<2xf32> to vector<2x1xf32>
    %cst_10 = arith.constant 6.400000e+01 : f32
    %15 = vector.broadcast %cst_10 : f32 to vector<2x1xf32>
    %16 = arith.divf %14, %15 : vector<2x1xf32>
    %cst_11 = arith.constant 9.99999997E-7 : f32
    %17 = vector.broadcast %cst_11 : f32 to vector<2x1xf32>
    %18 = arith.addf %16, %17 : vector<2x1xf32>
    %19 = math.rsqrt %18 : vector<2x1xf32>
    %20 = vector.broadcast %19 : vector<2x1xf32> to vector<2x64xf32>
    %21 = arith.mulf %11, %20 : vector<2x64xf32>
    %22 = vector.broadcast %4 : vector<1x64xf32> to vector<2x64xf32>
    %23 = arith.mulf %21, %22 : vector<2x64xf32>
    %24 = vector.broadcast %5 : vector<1x64xf32> to vector<2x64xf32>
    %25 = arith.addf %23, %24 : vector<2x64xf32>
    %c0_12 = arith.constant 0 : index
    %c0_13 = arith.constant 0 : index
    %26 = vector.load %arg3[%c0_12, %c0_13] : memref<64x10xf32, #tpu.memory_space<vmem>>, vector<64x10xf32>
    %cst_14 = arith.constant dense<0.000000e+00> : vector<2x10xf32>
    %27 = tpu.matmul %25, %26, %cst_14 {dimension_numbers = #tpu.dot_dimension_numbers<[1], [0], [0], [1], [0, 0, 1, 1], [], []>} : vector<2x64xf32>, vector<64x10xf32>, vector<2x10xf32> -> vector<2x10xf32>
    %c0_15 = arith.constant 0 : index
    %c0_16 = arith.constant 0 : index
    %28 = vector.load %arg4[%c0_15, %c0_16] : memref<1x10xf32, #tpu.memory_space<vmem>>, vector<1x10xf32>
    %29 = vector.broadcast %28 : vector<1x10xf32> to vector<2x10xf32>
    %30 = arith.addf %27, %29 : vector<2x10xf32>
    %c0_17 = arith.constant 0 : index
    %c0_18 = arith.constant 0 : index
    %31 = vector.load %arg5[%c0_17, %c0_18] : memref<2x10xf32, #tpu.memory_space<vmem>>, vector<2x10xf32>
    tpu.vector_store %arg5[%c0_17, %c0_18], %30 {strides = array<i32>} : memref<2x10xf32, #tpu.memory_space<vmem>>, vector<2x10xf32>,
    return
  }
}

module attributes {stable_mosaic.version = 11 : i64} {
  func.func @_cnblock_kernel(%arg0: i32, %arg1: memref<1x4x64xf32, #tpu.memory_space<vmem>>, %arg2: memref<49x4x1xf32, #tpu.memory_space<vmem>>, %arg3: memref<49x64xf32, #tpu.memory_space<vmem>>, %arg4: memref<1x64xf32, #tpu.memory_space<vmem>>, %arg5: memref<1x64xf32, #tpu.memory_space<vmem>>, %arg6: memref<1x64xf32, #tpu.memory_space<vmem>>, %arg7: memref<64x256xbf16, #tpu.memory_space<vmem>>, %arg8: memref<1x256xf32, #tpu.memory_space<vmem>>, %arg9: memref<256x64xbf16, #tpu.memory_space<vmem>>, %arg10: memref<1x64xf32, #tpu.memory_space<vmem>>, %arg11: memref<1x64xf32, #tpu.memory_space<vmem>>, %arg12: memref<1x4x64xf32, #tpu.memory_space<vmem>>) attributes {dimension_semantics = [#tpu.dimension_semantics<parallel>], iteration_bounds = array<i64: 2>, scalar_prefetch = 0 : i64, scratch_operands = 0 : i64, tpu.core_type = #tpu.core_type<tc>, window_params = [{transform_indices = @transform_0, window_bounds = array<i64: 1, 4, 64>}, {pipeline_mode = #tpu.pipeline_mode<synchronous>, transform_indices = @transform_1, window_bounds = array<i64: 49, 4, 1>}, {pipeline_mode = #tpu.pipeline_mode<synchronous>, transform_indices = @transform_2, window_bounds = array<i64: 49, 64>}, {pipeline_mode = #tpu.pipeline_mode<synchronous>, transform_indices = @transform_3, window_bounds = array<i64: 1, 64>}, {pipeline_mode = #tpu.pipeline_mode<synchronous>, transform_indices = @transform_4, window_bounds = array<i64: 1, 64>}, {pipeline_mode = #tpu.pipeline_mode<synchronous>, transform_indices = @transform_5, window_bounds = array<i64: 1, 64>}, {pipeline_mode = #tpu.pipeline_mode<synchronous>, transform_indices = @transform_6, window_bounds = array<i64: 64, 256>}, {pipeline_mode = #tpu.pipeline_mode<synchronous>, transform_indices = @transform_7, window_bounds = array<i64: 1, 256>}, {pipeline_mode = #tpu.pipeline_mode<synchronous>, transform_indices = @transform_8, window_bounds = array<i64: 256, 64>}, {pipeline_mode = #tpu.pipeline_mode<synchronous>, transform_indices = @transform_9, window_bounds = array<i64: 1, 64>}, {pipeline_mode = #tpu.pipeline_mode<synchronous>, transform_indices = @transform_10, window_bounds = array<i64: 1, 64>}, {transform_indices = @transform_11, window_bounds = array<i64: 1, 4, 64>}]} {
    %c0 = arith.constant 0 : index
    %c0_0 = arith.constant 0 : index
    %c0_1 = arith.constant 0 : index
    %0 = vector.load %arg1[%c0, %c0_0, %c0_1] : memref<1x4x64xf32, #tpu.memory_space<vmem>>, vector<1x4x64xf32>
    %1 = vector.shape_cast %0 : vector<1x4x64xf32> to vector<4x64xf32>
    %cst = arith.constant 0.000000e+00 : f32
    %2 = vector.broadcast %cst : f32 to vector<4x64xf32>
    %c1_i32 = arith.constant 1 : i32
    %3 = tpu.dynamic_rotate %1 by %c1_i32 dim 0 : vector<4x64xf32>, i32 -> vector<4x64xf32>
    %c0_2 = arith.constant 0 : index
    %c0_3 = arith.constant 0 : index
    %c0_4 = arith.constant 0 : index
    %4 = vector.load %arg2[%c0_2, %c0_3, %c0_4] : memref<49x4x1xf32, #tpu.memory_space<vmem>>, vector<1x4x1xf32>
    %5 = vector.shape_cast %4 : vector<1x4x1xf32> to vector<4x1xf32>
    %6 = vector.broadcast %5 : vector<4x1xf32> to vector<4x64xf32>
    %7 = arith.mulf %3, %6 : vector<4x64xf32>
    %c0_5 = arith.constant 0 : index
    %c0_6 = arith.constant 0 : index
    %8 = vector.load %arg3[%c0_5, %c0_6] : memref<49x64xf32, #tpu.memory_space<vmem>>, vector<1x64xf32>
    %9 = vector.shape_cast %8 : vector<1x64xf32> to vector<64xf32>
    %10 = vector.shape_cast %9 : vector<64xf32> to vector<1x64xf32>
    %11 = vector.broadcast %10 : vector<1x64xf32> to vector<4x64xf32>
    %12 = arith.mulf %7, %11 : vector<4x64xf32>
    %13 = arith.addf %2, %12 : vector<4x64xf32>
    %c1 = arith.constant 1 : index
    %c0_7 = arith.constant 0 : index
    %c0_8 = arith.constant 0 : index
    %14 = vector.load %arg2[%c1, %c0_7, %c0_8] : memref<49x4x1xf32, #tpu.memory_space<vmem>>, vector<1x4x1xf32>
    %15 = vector.shape_cast %14 : vector<1x4x1xf32> to vector<4x1xf32>
    %16 = vector.broadcast %15 : vector<4x1xf32> to vector<4x64xf32>
    %17 = arith.mulf %1, %16 : vector<4x64xf32>
    %c1_9 = arith.constant 1 : index
    %c0_10 = arith.constant 0 : index
    %18 = vector.load %arg3[%c1_9, %c0_10] : memref<49x64xf32, #tpu.memory_space<vmem>>, vector<1x64xf32>
    %19 = vector.shape_cast %18 : vector<1x64xf32> to vector<64xf32>
    %20 = vector.shape_cast %19 : vector<64xf32> to vector<1x64xf32>
    %21 = vector.broadcast %20 : vector<1x64xf32> to vector<4x64xf32>
    %22 = arith.mulf %17, %21 : vector<4x64xf32>
    %23 = arith.addf %13, %22 : vector<4x64xf32>
    %c3_i32 = arith.constant 3 : i32
    %24 = tpu.dynamic_rotate %1 by %c3_i32 dim 0 : vector<4x64xf32>, i32 -> vector<4x64xf32>
    %c2 = arith.constant 2 : index
    %c0_11 = arith.constant 0 : index
    %c0_12 = arith.constant 0 : index
    %25 = vector.load %arg2[%c2, %c0_11, %c0_12] : memref<49x4x1xf32, #tpu.memory_space<vmem>>, vector<1x4x1xf32>
    %26 = vector.shape_cast %25 : vector<1x4x1xf32> to vector<4x1xf32>
    %27 = vector.broadcast %26 : vector<4x1xf32> to vector<4x64xf32>
    %28 = arith.mulf %24, %27 : vector<4x64xf32>
    %c2_13 = arith.constant 2 : index
    %c0_14 = arith.constant 0 : index
    %29 = vector.load %arg3[%c2_13, %c0_14] : memref<49x64xf32, #tpu.memory_space<vmem>>, vector<1x64xf32>
    %30 = vector.shape_cast %29 : vector<1x64xf32> to vector<64xf32>
    %31 = vector.shape_cast %30 : vector<64xf32> to vector<1x64xf32>
    %32 = vector.broadcast %31 : vector<1x64xf32> to vector<4x64xf32>
    %33 = arith.mulf %28, %32 : vector<4x64xf32>
    %34 = arith.addf %23, %33 : vector<4x64xf32>
    %c2_i32 = arith.constant 2 : i32
    %35 = tpu.dynamic_rotate %1 by %c2_i32 dim 0 : vector<4x64xf32>, i32 -> vector<4x64xf32>
    %c3 = arith.constant 3 : index
    %c0_15 = arith.constant 0 : index
    %c0_16 = arith.constant 0 : index
    %36 = vector.load %arg2[%c3, %c0_15, %c0_16] : memref<49x4x1xf32, #tpu.memory_space<vmem>>, vector<1x4x1xf32>
    %37 = vector.shape_cast %36 : vector<1x4x1xf32> to vector<4x1xf32>
    %38 = vector.broadcast %37 : vector<4x1xf32> to vector<4x64xf32>
    %39 = arith.mulf %35, %38 : vector<4x64xf32>
    %c3_17 = arith.constant 3 : index
    %c0_18 = arith.constant 0 : index
    %40 = vector.load %arg3[%c3_17, %c0_18] : memref<49x64xf32, #tpu.memory_space<vmem>>, vector<1x64xf32>
    %41 = vector.shape_cast %40 : vector<1x64xf32> to vector<64xf32>
    %42 = vector.shape_cast %41 : vector<64xf32> to vector<1x64xf32>
    %43 = vector.broadcast %42 : vector<1x64xf32> to vector<4x64xf32>
    %44 = arith.mulf %39, %43 : vector<4x64xf32>
    %45 = arith.addf %34, %44 : vector<4x64xf32>
    %c1_i32_19 = arith.constant 1 : i32
    %46 = tpu.dynamic_rotate %1 by %c1_i32_19 dim 0 : vector<4x64xf32>, i32 -> vector<4x64xf32>
    %c4 = arith.constant 4 : index
    %c0_20 = arith.constant 0 : index
    %c0_21 = arith.constant 0 : index
    %47 = vector.load %arg2[%c4, %c0_20, %c0_21] : memref<49x4x1xf32, #tpu.memory_space<vmem>>, vector<1x4x1xf32>
    %48 = vector.shape_cast %47 : vector<1x4x1xf32> to vector<4x1xf32>
    %49 = vector.broadcast %48 : vector<4x1xf32> to vector<4x64xf32>
    %50 = arith.mulf %46, %49 : vector<4x64xf32>
    %c4_22 = arith.constant 4 : index
    %c0_23 = arith.constant 0 : index
    %51 = vector.load %arg3[%c4_22, %c0_23] : memref<49x64xf32, #tpu.memory_space<vmem>>, vector<1x64xf32>
    %52 = vector.shape_cast %51 : vector<1x64xf32> to vector<64xf32>
    %53 = vector.shape_cast %52 : vector<64xf32> to vector<1x64xf32>
    %54 = vector.broadcast %53 : vector<1x64xf32> to vector<4x64xf32>
    %55 = arith.mulf %50, %54 : vector<4x64xf32>
    %56 = arith.addf %45, %55 : vector<4x64xf32>
    %c5 = arith.constant 5 : index
    %c0_24 = arith.constant 0 : index
    %c0_25 = arith.constant 0 : index
    %57 = vector.load %arg2[%c5, %c0_24, %c0_25] : memref<49x4x1xf32, #tpu.memory_space<vmem>>, vector<1x4x1xf32>
    %58 = vector.shape_cast %57 : vector<1x4x1xf32> to vector<4x1xf32>
    %59 = vector.broadcast %58 : vector<4x1xf32> to vector<4x64xf32>
    %60 = arith.mulf %1, %59 : vector<4x64xf32>
    %c5_26 = arith.constant 5 : index
    %c0_27 = arith.constant 0 : index
    %61 = vector.load %arg3[%c5_26, %c0_27] : memref<49x64xf32, #tpu.memory_space<vmem>>, vector<1x64xf32>
    %62 = vector.shape_cast %61 : vector<1x64xf32> to vector<64xf32>
    %63 = vector.shape_cast %62 : vector<64xf32> to vector<1x64xf32>
    %64 = vector.broadcast %63 : vector<1x64xf32> to vector<4x64xf32>
    %65 = arith.mulf %60, %64 : vector<4x64xf32>
    %66 = arith.addf %56, %65 : vector<4x64xf32>
    %c3_i32_28 = arith.constant 3 : i32
    %67 = tpu.dynamic_rotate %1 by %c3_i32_28 dim 0 : vector<4x64xf32>, i32 -> vector<4x64xf32>
    %c6 = arith.constant 6 : index
    %c0_29 = arith.constant 0 : index
    %c0_30 = arith.constant 0 : index
    %68 = vector.load %arg2[%c6, %c0_29, %c0_30] : memref<49x4x1xf32, #tpu.memory_space<vmem>>, vector<1x4x1xf32>
    %69 = vector.shape_cast %68 : vector<1x4x1xf32> to vector<4x1xf32>
    %70 = vector.broadcast %69 : vector<4x1xf32> to vector<4x64xf32>
    %71 = arith.mulf %67, %70 : vector<4x64xf32>
    %c6_31 = arith.constant 6 : index
    %c0_32 = arith.constant 0 : index
    %72 = vector.load %arg3[%c6_31, %c0_32] : memref<49x64xf32, #tpu.memory_space<vmem>>, vector<1x64xf32>
    %73 = vector.shape_cast %72 : vector<1x64xf32> to vector<64xf32>
    %74 = vector.shape_cast %73 : vector<64xf32> to vector<1x64xf32>
    %75 = vector.broadcast %74 : vector<1x64xf32> to vector<4x64xf32>
    %76 = arith.mulf %71, %75 : vector<4x64xf32>
    %77 = arith.addf %66, %76 : vector<4x64xf32>
    %c3_i32_33 = arith.constant 3 : i32
    %78 = tpu.dynamic_rotate %1 by %c3_i32_33 dim 0 : vector<4x64xf32>, i32 -> vector<4x64xf32>
    %c7 = arith.constant 7 : index
    %c0_34 = arith.constant 0 : index
    %c0_35 = arith.constant 0 : index
    %79 = vector.load %arg2[%c7, %c0_34, %c0_35] : memref<49x4x1xf32, #tpu.memory_space<vmem>>, vector<1x4x1xf32>
    %80 = vector.shape_cast %79 : vector<1x4x1xf32> to vector<4x1xf32>
    %81 = vector.broadcast %80 : vector<4x1xf32> to vector<4x64xf32>
    %82 = arith.mulf %78, %81 : vector<4x64xf32>
    %c7_36 = arith.constant 7 : index
    %c0_37 = arith.constant 0 : index
    %83 = vector.load %arg3[%c7_36, %c0_37] : memref<49x64xf32, #tpu.memory_space<vmem>>, vector<1x64xf32>
    %84 = vector.shape_cast %83 : vector<1x64xf32> to vector<64xf32>
    %85 = vector.shape_cast %84 : vector<64xf32> to vector<1x64xf32>
    %86 = vector.broadcast %85 : vector<1x64xf32> to vector<4x64xf32>
    %87 = arith.mulf %82, %86 : vector<4x64xf32>
    %88 = arith.addf %77, %87 : vector<4x64xf32>
    %c2_i32_38 = arith.constant 2 : i32
    %89 = tpu.dynamic_rotate %1 by %c2_i32_38 dim 0 : vector<4x64xf32>, i32 -> vector<4x64xf32>
    %c8 = arith.constant 8 : index
    %c0_39 = arith.constant 0 : index
    %c0_40 = arith.constant 0 : index
    %90 = vector.load %arg2[%c8, %c0_39, %c0_40] : memref<49x4x1xf32, #tpu.memory_space<vmem>>, vector<1x4x1xf32>
    %91 = vector.shape_cast %90 : vector<1x4x1xf32> to vector<4x1xf32>
    %92 = vector.broadcast %91 : vector<4x1xf32> to vector<4x64xf32>
    %93 = arith.mulf %89, %92 : vector<4x64xf32>
    %c8_41 = arith.constant 8 : index
    %c0_42 = arith.constant 0 : index
    %94 = vector.load %arg3[%c8_41, %c0_42] : memref<49x64xf32, #tpu.memory_space<vmem>>, vector<1x64xf32>
    %95 = vector.shape_cast %94 : vector<1x64xf32> to vector<64xf32>
    %96 = vector.shape_cast %95 : vector<64xf32> to vector<1x64xf32>
    %97 = vector.broadcast %96 : vector<1x64xf32> to vector<4x64xf32>
    %98 = arith.mulf %93, %97 : vector<4x64xf32>
    %99 = arith.addf %88, %98 : vector<4x64xf32>
    %c1_i32_43 = arith.constant 1 : i32
    %100 = tpu.dynamic_rotate %1 by %c1_i32_43 dim 0 : vector<4x64xf32>, i32 -> vector<4x64xf32>
    %c9 = arith.constant 9 : index
    %c0_44 = arith.constant 0 : index
    %c0_45 = arith.constant 0 : index
    %101 = vector.load %arg2[%c9, %c0_44, %c0_45] : memref<49x4x1xf32, #tpu.memory_space<vmem>>, vector<1x4x1xf32>
    %102 = vector.shape_cast %101 : vector<1x4x1xf32> to vector<4x1xf32>
    %103 = vector.broadcast %102 : vector<4x1xf32> to vector<4x64xf32>
    %104 = arith.mulf %100, %103 : vector<4x64xf32>
    %c9_46 = arith.constant 9 : index
    %c0_47 = arith.constant 0 : index
    %105 = vector.load %arg3[%c9_46, %c0_47] : memref<49x64xf32, #tpu.memory_space<vmem>>, vector<1x64xf32>
    %106 = vector.shape_cast %105 : vector<1x64xf32> to vector<64xf32>
    %107 = vector.shape_cast %106 : vector<64xf32> to vector<1x64xf32>
    %108 = vector.broadcast %107 : vector<1x64xf32> to vector<4x64xf32>
    %109 = arith.mulf %104, %108 : vector<4x64xf32>
    %110 = arith.addf %99, %109 : vector<4x64xf32>
    %c10 = arith.constant 10 : index
    %c0_48 = arith.constant 0 : index
    %c0_49 = arith.constant 0 : index
    %111 = vector.load %arg2[%c10, %c0_48, %c0_49] : memref<49x4x1xf32, #tpu.memory_space<vmem>>, vector<1x4x1xf32>
    %112 = vector.shape_cast %111 : vector<1x4x1xf32> to vector<4x1xf32>
    %113 = vector.broadcast %112 : vector<4x1xf32> to vector<4x64xf32>
    %114 = arith.mulf %1, %113 : vector<4x64xf32>
    %c10_50 = arith.constant 10 : index
    %c0_51 = arith.constant 0 : index
    %115 = vector.load %arg3[%c10_50, %c0_51] : memref<49x64xf32, #tpu.memory_space<vmem>>, vector<1x64xf32>
    %116 = vector.shape_cast %115 : vector<1x64xf32> to vector<64xf32>
    %117 = vector.shape_cast %116 : vector<64xf32> to vector<1x64xf32>
    %118 = vector.broadcast %117 : vector<1x64xf32> to vector<4x64xf32>
    %119 = arith.mulf %114, %118 : vector<4x64xf32>
    %120 = arith.addf %110, %119 : vector<4x64xf32>
    %c3_i32_52 = arith.constant 3 : i32
    %121 = tpu.dynamic_rotate %1 by %c3_i32_52 dim 0 : vector<4x64xf32>, i32 -> vector<4x64xf32>
    %c11 = arith.constant 11 : index
    %c0_53 = arith.constant 0 : index
    %c0_54 = arith.constant 0 : index
    %122 = vector.load %arg2[%c11, %c0_53, %c0_54] : memref<49x4x1xf32, #tpu.memory_space<vmem>>, vector<1x4x1xf32>
    %123 = vector.shape_cast %122 : vector<1x4x1xf32> to vector<4x1xf32>
    %124 = vector.broadcast %123 : vector<4x1xf32> to vector<4x64xf32>
    %125 = arith.mulf %121, %124 : vector<4x64xf32>
    %c11_55 = arith.constant 11 : index
    %c0_56 = arith.constant 0 : index
    %126 = vector.load %arg3[%c11_55, %c0_56] : memref<49x64xf32, #tpu.memory_space<vmem>>, vector<1x64xf32>
    %127 = vector.shape_cast %126 : vector<1x64xf32> to vector<64xf32>
    %128 = vector.shape_cast %127 : vector<64xf32> to vector<1x64xf32>
    %129 = vector.broadcast %128 : vector<1x64xf32> to vector<4x64xf32>
    %130 = arith.mulf %125, %129 : vector<4x64xf32>
    %131 = arith.addf %120, %130 : vector<4x64xf32>
    %c2_i32_57 = arith.constant 2 : i32
    %132 = tpu.dynamic_rotate %1 by %c2_i32_57 dim 0 : vector<4x64xf32>, i32 -> vector<4x64xf32>
    %c12 = arith.constant 12 : index
    %c0_58 = arith.constant 0 : index
    %c0_59 = arith.constant 0 : index
    %133 = vector.load %arg2[%c12, %c0_58, %c0_59] : memref<49x4x1xf32, #tpu.memory_space<vmem>>, vector<1x4x1xf32>
    %134 = vector.shape_cast %133 : vector<1x4x1xf32> to vector<4x1xf32>
    %135 = vector.broadcast %134 : vector<4x1xf32> to vector<4x64xf32>
    %136 = arith.mulf %132, %135 : vector<4x64xf32>
    %c12_60 = arith.constant 12 : index
    %c0_61 = arith.constant 0 : index
    %137 = vector.load %arg3[%c12_60, %c0_61] : memref<49x64xf32, #tpu.memory_space<vmem>>, vector<1x64xf32>
    %138 = vector.shape_cast %137 : vector<1x64xf32> to vector<64xf32>
    %139 = vector.shape_cast %138 : vector<64xf32> to vector<1x64xf32>
    %140 = vector.broadcast %139 : vector<1x64xf32> to vector<4x64xf32>
    %141 = arith.mulf %136, %140 : vector<4x64xf32>
    %142 = arith.addf %131, %141 : vector<4x64xf32>
    %c1_i32_62 = arith.constant 1 : i32
    %143 = tpu.dynamic_rotate %1 by %c1_i32_62 dim 0 : vector<4x64xf32>, i32 -> vector<4x64xf32>
    %c13 = arith.constant 13 : index
    %c0_63 = arith.constant 0 : index
    %c0_64 = arith.constant 0 : index
    %144 = vector.load %arg2[%c13, %c0_63, %c0_64] : memref<49x4x1xf32, #tpu.memory_space<vmem>>, vector<1x4x1xf32>
    %145 = vector.shape_cast %144 : vector<1x4x1xf32> to vector<4x1xf32>
    %146 = vector.broadcast %145 : vector<4x1xf32> to vector<4x64xf32>
    %147 = arith.mulf %143, %146 : vector<4x64xf32>
    %c13_65 = arith.constant 13 : index
    %c0_66 = arith.constant 0 : index
    %148 = vector.load %arg3[%c13_65, %c0_66] : memref<49x64xf32, #tpu.memory_space<vmem>>, vector<1x64xf32>
    %149 = vector.shape_cast %148 : vector<1x64xf32> to vector<64xf32>
    %150 = vector.shape_cast %149 : vector<64xf32> to vector<1x64xf32>
    %151 = vector.broadcast %150 : vector<1x64xf32> to vector<4x64xf32>
    %152 = arith.mulf %147, %151 : vector<4x64xf32>
    %153 = arith.addf %142, %152 : vector<4x64xf32>
    %c1_i32_67 = arith.constant 1 : i32
    %154 = tpu.dynamic_rotate %1 by %c1_i32_67 dim 0 : vector<4x64xf32>, i32 -> vector<4x64xf32>
    %c14 = arith.constant 14 : index
    %c0_68 = arith.constant 0 : index
    %c0_69 = arith.constant 0 : index
    %155 = vector.load %arg2[%c14, %c0_68, %c0_69] : memref<49x4x1xf32, #tpu.memory_space<vmem>>, vector<1x4x1xf32>
    %156 = vector.shape_cast %155 : vector<1x4x1xf32> to vector<4x1xf32>
    %157 = vector.broadcast %156 : vector<4x1xf32> to vector<4x64xf32>
    %158 = arith.mulf %154, %157 : vector<4x64xf32>
    %c14_70 = arith.constant 14 : index
    %c0_71 = arith.constant 0 : index
    %159 = vector.load %arg3[%c14_70, %c0_71] : memref<49x64xf32, #tpu.memory_space<vmem>>, vector<1x64xf32>
    %160 = vector.shape_cast %159 : vector<1x64xf32> to vector<64xf32>
    %161 = vector.shape_cast %160 : vector<64xf32> to vector<1x64xf32>
    %162 = vector.broadcast %161 : vector<1x64xf32> to vector<4x64xf32>
    %163 = arith.mulf %158, %162 : vector<4x64xf32>
    %164 = arith.addf %153, %163 : vector<4x64xf32>
    %c15 = arith.constant 15 : index
    %c0_72 = arith.constant 0 : index
    %c0_73 = arith.constant 0 : index
    %165 = vector.load %arg2[%c15, %c0_72, %c0_73] : memref<49x4x1xf32, #tpu.memory_space<vmem>>, vector<1x4x1xf32>
    %166 = vector.shape_cast %165 : vector<1x4x1xf32> to vector<4x1xf32>
    %167 = vector.broadcast %166 : vector<4x1xf32> to vector<4x64xf32>
    %168 = arith.mulf %1, %167 : vector<4x64xf32>
    %c15_74 = arith.constant 15 : index
    %c0_75 = arith.constant 0 : index
    %169 = vector.load %arg3[%c15_74, %c0_75] : memref<49x64xf32, #tpu.memory_space<vmem>>, vector<1x64xf32>
    %170 = vector.shape_cast %169 : vector<1x64xf32> to vector<64xf32>
    %171 = vector.shape_cast %170 : vector<64xf32> to vector<1x64xf32>
    %172 = vector.broadcast %171 : vector<1x64xf32> to vector<4x64xf32>
    %173 = arith.mulf %168, %172 : vector<4x64xf32>
    %174 = arith.addf %164, %173 : vector<4x64xf32>
    %c3_i32_76 = arith.constant 3 : i32
    %175 = tpu.dynamic_rotate %1 by %c3_i32_76 dim 0 : vector<4x64xf32>, i32 -> vector<4x64xf32>
    %c16 = arith.constant 16 : index
    %c0_77 = arith.constant 0 : index
    %c0_78 = arith.constant 0 : index
    %176 = vector.load %arg2[%c16, %c0_77, %c0_78] : memref<49x4x1xf32, #tpu.memory_space<vmem>>, vector<1x4x1xf32>
    %177 = vector.shape_cast %176 : vector<1x4x1xf32> to vector<4x1xf32>
    %178 = vector.broadcast %177 : vector<4x1xf32> to vector<4x64xf32>
    %179 = arith.mulf %175, %178 : vector<4x64xf32>
    %c16_79 = arith.constant 16 : index
    %c0_80 = arith.constant 0 : index
    %180 = vector.load %arg3[%c16_79, %c0_80] : memref<49x64xf32, #tpu.memory_space<vmem>>, vector<1x64xf32>
    %181 = vector.shape_cast %180 : vector<1x64xf32> to vector<64xf32>
    %182 = vector.shape_cast %181 : vector<64xf32> to vector<1x64xf32>
    %183 = vector.broadcast %182 : vector<1x64xf32> to vector<4x64xf32>
    %184 = arith.mulf %179, %183 : vector<4x64xf32>
    %185 = arith.addf %174, %184 : vector<4x64xf32>
    %c2_i32_81 = arith.constant 2 : i32
    %186 = tpu.dynamic_rotate %1 by %c2_i32_81 dim 0 : vector<4x64xf32>, i32 -> vector<4x64xf32>
    %c17 = arith.constant 17 : index
    %c0_82 = arith.constant 0 : index
    %c0_83 = arith.constant 0 : index
    %187 = vector.load %arg2[%c17, %c0_82, %c0_83] : memref<49x4x1xf32, #tpu.memory_space<vmem>>, vector<1x4x1xf32>
    %188 = vector.shape_cast %187 : vector<1x4x1xf32> to vector<4x1xf32>
    %189 = vector.broadcast %188 : vector<4x1xf32> to vector<4x64xf32>
    %190 = arith.mulf %186, %189 : vector<4x64xf32>
    %c17_84 = arith.constant 17 : index
    %c0_85 = arith.constant 0 : index
    %191 = vector.load %arg3[%c17_84, %c0_85] : memref<49x64xf32, #tpu.memory_space<vmem>>, vector<1x64xf32>
    %192 = vector.shape_cast %191 : vector<1x64xf32> to vector<64xf32>
    %193 = vector.shape_cast %192 : vector<64xf32> to vector<1x64xf32>
    %194 = vector.broadcast %193 : vector<1x64xf32> to vector<4x64xf32>
    %195 = arith.mulf %190, %194 : vector<4x64xf32>
    %196 = arith.addf %185, %195 : vector<4x64xf32>
    %c1_i32_86 = arith.constant 1 : i32
    %197 = tpu.dynamic_rotate %1 by %c1_i32_86 dim 0 : vector<4x64xf32>, i32 -> vector<4x64xf32>
    %c18 = arith.constant 18 : index
    %c0_87 = arith.constant 0 : index
    %c0_88 = arith.constant 0 : index
    %198 = vector.load %arg2[%c18, %c0_87, %c0_88] : memref<49x4x1xf32, #tpu.memory_space<vmem>>, vector<1x4x1xf32>
    %199 = vector.shape_cast %198 : vector<1x4x1xf32> to vector<4x1xf32>
    %200 = vector.broadcast %199 : vector<4x1xf32> to vector<4x64xf32>
    %201 = arith.mulf %197, %200 : vector<4x64xf32>
    %c18_89 = arith.constant 18 : index
    %c0_90 = arith.constant 0 : index
    %202 = vector.load %arg3[%c18_89, %c0_90] : memref<49x64xf32, #tpu.memory_space<vmem>>, vector<1x64xf32>
    %203 = vector.shape_cast %202 : vector<1x64xf32> to vector<64xf32>
    %204 = vector.shape_cast %203 : vector<64xf32> to vector<1x64xf32>
    %205 = vector.broadcast %204 : vector<1x64xf32> to vector<4x64xf32>
    %206 = arith.mulf %201, %205 : vector<4x64xf32>
    %207 = arith.addf %196, %206 : vector<4x64xf32>
    %c19 = arith.constant 19 : index
    %c0_91 = arith.constant 0 : index
    %c0_92 = arith.constant 0 : index
    %208 = vector.load %arg2[%c19, %c0_91, %c0_92] : memref<49x4x1xf32, #tpu.memory_space<vmem>>, vector<1x4x1xf32>
    %209 = vector.shape_cast %208 : vector<1x4x1xf32> to vector<4x1xf32>
    %210 = vector.broadcast %209 : vector<4x1xf32> to vector<4x64xf32>
    %211 = arith.mulf %1, %210 : vector<4x64xf32>
    %c19_93 = arith.constant 19 : index
    %c0_94 = arith.constant 0 : index
    %212 = vector.load %arg3[%c19_93, %c0_94] : memref<49x64xf32, #tpu.memory_space<vmem>>, vector<1x64xf32>
    %213 = vector.shape_cast %212 : vector<1x64xf32> to vector<64xf32>
    %214 = vector.shape_cast %213 : vector<64xf32> to vector<1x64xf32>
    %215 = vector.broadcast %214 : vector<1x64xf32> to vector<4x64xf32>
    %216 = arith.mulf %211, %215 : vector<4x64xf32>
    %217 = arith.addf %207, %216 : vector<4x64xf32>
    %c3_i32_95 = arith.constant 3 : i32
    %218 = tpu.dynamic_rotate %1 by %c3_i32_95 dim 0 : vector<4x64xf32>, i32 -> vector<4x64xf32>
    %c20 = arith.constant 20 : index
    %c0_96 = arith.constant 0 : index
    %c0_97 = arith.constant 0 : index
    %219 = vector.load %arg2[%c20, %c0_96, %c0_97] : memref<49x4x1xf32, #tpu.memory_space<vmem>>, vector<1x4x1xf32>
    %220 = vector.shape_cast %219 : vector<1x4x1xf32> to vector<4x1xf32>
    %221 = vector.broadcast %220 : vector<4x1xf32> to vector<4x64xf32>
    %222 = arith.mulf %218, %221 : vector<4x64xf32>
    %c20_98 = arith.constant 20 : index
    %c0_99 = arith.constant 0 : index
    %223 = vector.load %arg3[%c20_98, %c0_99] : memref<49x64xf32, #tpu.memory_space<vmem>>, vector<1x64xf32>
    %224 = vector.shape_cast %223 : vector<1x64xf32> to vector<64xf32>
    %225 = vector.shape_cast %224 : vector<64xf32> to vector<1x64xf32>
    %226 = vector.broadcast %225 : vector<1x64xf32> to vector<4x64xf32>
    %227 = arith.mulf %222, %226 : vector<4x64xf32>
    %228 = arith.addf %217, %227 : vector<4x64xf32>
    %c3_i32_100 = arith.constant 3 : i32
    %229 = tpu.dynamic_rotate %1 by %c3_i32_100 dim 0 : vector<4x64xf32>, i32 -> vector<4x64xf32>
    %c21 = arith.constant 21 : index
    %c0_101 = arith.constant 0 : index
    %c0_102 = arith.constant 0 : index
    %230 = vector.load %arg2[%c21, %c0_101, %c0_102] : memref<49x4x1xf32, #tpu.memory_space<vmem>>, vector<1x4x1xf32>
    %231 = vector.shape_cast %230 : vector<1x4x1xf32> to vector<4x1xf32>
    %232 = vector.broadcast %231 : vector<4x1xf32> to vector<4x64xf32>
    %233 = arith.mulf %229, %232 : vector<4x64xf32>
    %c21_103 = arith.constant 21 : index
    %c0_104 = arith.constant 0 : index
    %234 = vector.load %arg3[%c21_103, %c0_104] : memref<49x64xf32, #tpu.memory_space<vmem>>, vector<1x64xf32>
    %235 = vector.shape_cast %234 : vector<1x64xf32> to vector<64xf32>
    %236 = vector.shape_cast %235 : vector<64xf32> to vector<1x64xf32>
    %237 = vector.broadcast %236 : vector<1x64xf32> to vector<4x64xf32>
    %238 = arith.mulf %233, %237 : vector<4x64xf32>
    %239 = arith.addf %228, %238 : vector<4x64xf32>
    %c2_i32_105 = arith.constant 2 : i32
    %240 = tpu.dynamic_rotate %1 by %c2_i32_105 dim 0 : vector<4x64xf32>, i32 -> vector<4x64xf32>
    %c22 = arith.constant 22 : index
    %c0_106 = arith.constant 0 : index
    %c0_107 = arith.constant 0 : index
    %241 = vector.load %arg2[%c22, %c0_106, %c0_107] : memref<49x4x1xf32, #tpu.memory_space<vmem>>, vector<1x4x1xf32>
    %242 = vector.shape_cast %241 : vector<1x4x1xf32> to vector<4x1xf32>
    %243 = vector.broadcast %242 : vector<4x1xf32> to vector<4x64xf32>
    %244 = arith.mulf %240, %243 : vector<4x64xf32>
    %c22_108 = arith.constant 22 : index
    %c0_109 = arith.constant 0 : index
    %245 = vector.load %arg3[%c22_108, %c0_109] : memref<49x64xf32, #tpu.memory_space<vmem>>, vector<1x64xf32>
    %246 = vector.shape_cast %245 : vector<1x64xf32> to vector<64xf32>
    %247 = vector.shape_cast %246 : vector<64xf32> to vector<1x64xf32>
    %248 = vector.broadcast %247 : vector<1x64xf32> to vector<4x64xf32>
    %249 = arith.mulf %244, %248 : vector<4x64xf32>
    %250 = arith.addf %239, %249 : vector<4x64xf32>
    %c1_i32_110 = arith.constant 1 : i32
    %251 = tpu.dynamic_rotate %1 by %c1_i32_110 dim 0 : vector<4x64xf32>, i32 -> vector<4x64xf32>
    %c23 = arith.constant 23 : index
    %c0_111 = arith.constant 0 : index
    %c0_112 = arith.constant 0 : index
    %252 = vector.load %arg2[%c23, %c0_111, %c0_112] : memref<49x4x1xf32, #tpu.memory_space<vmem>>, vector<1x4x1xf32>
    %253 = vector.shape_cast %252 : vector<1x4x1xf32> to vector<4x1xf32>
    %254 = vector.broadcast %253 : vector<4x1xf32> to vector<4x64xf32>
    %255 = arith.mulf %251, %254 : vector<4x64xf32>
    %c23_113 = arith.constant 23 : index
    %c0_114 = arith.constant 0 : index
    %256 = vector.load %arg3[%c23_113, %c0_114] : memref<49x64xf32, #tpu.memory_space<vmem>>, vector<1x64xf32>
    %257 = vector.shape_cast %256 : vector<1x64xf32> to vector<64xf32>
    %258 = vector.shape_cast %257 : vector<64xf32> to vector<1x64xf32>
    %259 = vector.broadcast %258 : vector<1x64xf32> to vector<4x64xf32>
    %260 = arith.mulf %255, %259 : vector<4x64xf32>
    %261 = arith.addf %250, %260 : vector<4x64xf32>
    %c24 = arith.constant 24 : index
    %c0_115 = arith.constant 0 : index
    %c0_116 = arith.constant 0 : index
    %262 = vector.load %arg2[%c24, %c0_115, %c0_116] : memref<49x4x1xf32, #tpu.memory_space<vmem>>, vector<1x4x1xf32>
    %263 = vector.shape_cast %262 : vector<1x4x1xf32> to vector<4x1xf32>
    %264 = vector.broadcast %263 : vector<4x1xf32> to vector<4x64xf32>
    %265 = arith.mulf %1, %264 : vector<4x64xf32>
    %c24_117 = arith.constant 24 : index
    %c0_118 = arith.constant 0 : index
    %266 = vector.load %arg3[%c24_117, %c0_118] : memref<49x64xf32, #tpu.memory_space<vmem>>, vector<1x64xf32>
    %267 = vector.shape_cast %266 : vector<1x64xf32> to vector<64xf32>
    %268 = vector.shape_cast %267 : vector<64xf32> to vector<1x64xf32>
    %269 = vector.broadcast %268 : vector<1x64xf32> to vector<4x64xf32>
    %270 = arith.mulf %265, %269 : vector<4x64xf32>
    %271 = arith.addf %261, %270 : vector<4x64xf32>
    %c3_i32_119 = arith.constant 3 : i32
    %272 = tpu.dynamic_rotate %1 by %c3_i32_119 dim 0 : vector<4x64xf32>, i32 -> vector<4x64xf32>
    %c25 = arith.constant 25 : index
    %c0_120 = arith.constant 0 : index
    %c0_121 = arith.constant 0 : index
    %273 = vector.load %arg2[%c25, %c0_120, %c0_121] : memref<49x4x1xf32, #tpu.memory_space<vmem>>, vector<1x4x1xf32>
    %274 = vector.shape_cast %273 : vector<1x4x1xf32> to vector<4x1xf32>
    %275 = vector.broadcast %274 : vector<4x1xf32> to vector<4x64xf32>
    %276 = arith.mulf %272, %275 : vector<4x64xf32>
    %c25_122 = arith.constant 25 : index
    %c0_123 = arith.constant 0 : index
    %277 = vector.load %arg3[%c25_122, %c0_123] : memref<49x64xf32, #tpu.memory_space<vmem>>, vector<1x64xf32>
    %278 = vector.shape_cast %277 : vector<1x64xf32> to vector<64xf32>
    %279 = vector.shape_cast %278 : vector<64xf32> to vector<1x64xf32>
    %280 = vector.broadcast %279 : vector<1x64xf32> to vector<4x64xf32>
    %281 = arith.mulf %276, %280 : vector<4x64xf32>
    %282 = arith.addf %271, %281 : vector<4x64xf32>
    %c2_i32_124 = arith.constant 2 : i32
    %283 = tpu.dynamic_rotate %1 by %c2_i32_124 dim 0 : vector<4x64xf32>, i32 -> vector<4x64xf32>
    %c26 = arith.constant 26 : index
    %c0_125 = arith.constant 0 : index
    %c0_126 = arith.constant 0 : index
    %284 = vector.load %arg2[%c26, %c0_125, %c0_126] : memref<49x4x1xf32, #tpu.memory_space<vmem>>, vector<1x4x1xf32>
    %285 = vector.shape_cast %284 : vector<1x4x1xf32> to vector<4x1xf32>
    %286 = vector.broadcast %285 : vector<4x1xf32> to vector<4x64xf32>
    %287 = arith.mulf %283, %286 : vector<4x64xf32>
    %c26_127 = arith.constant 26 : index
    %c0_128 = arith.constant 0 : index
    %288 = vector.load %arg3[%c26_127, %c0_128] : memref<49x64xf32, #tpu.memory_space<vmem>>, vector<1x64xf32>
    %289 = vector.shape_cast %288 : vector<1x64xf32> to vector<64xf32>
    %290 = vector.shape_cast %289 : vector<64xf32> to vector<1x64xf32>
    %291 = vector.broadcast %290 : vector<1x64xf32> to vector<4x64xf32>
    %292 = arith.mulf %287, %291 : vector<4x64xf32>
    %293 = arith.addf %282, %292 : vector<4x64xf32>
    %c1_i32_129 = arith.constant 1 : i32
    %294 = tpu.dynamic_rotate %1 by %c1_i32_129 dim 0 : vector<4x64xf32>, i32 -> vector<4x64xf32>
    %c27 = arith.constant 27 : index
    %c0_130 = arith.constant 0 : index
    %c0_131 = arith.constant 0 : index
    %295 = vector.load %arg2[%c27, %c0_130, %c0_131] : memref<49x4x1xf32, #tpu.memory_space<vmem>>, vector<1x4x1xf32>
    %296 = vector.shape_cast %295 : vector<1x4x1xf32> to vector<4x1xf32>
    %297 = vector.broadcast %296 : vector<4x1xf32> to vector<4x64xf32>
    %298 = arith.mulf %294, %297 : vector<4x64xf32>
    %c27_132 = arith.constant 27 : index
    %c0_133 = arith.constant 0 : index
    %299 = vector.load %arg3[%c27_132, %c0_133] : memref<49x64xf32, #tpu.memory_space<vmem>>, vector<1x64xf32>
    %300 = vector.shape_cast %299 : vector<1x64xf32> to vector<64xf32>
    %301 = vector.shape_cast %300 : vector<64xf32> to vector<1x64xf32>
    %302 = vector.broadcast %301 : vector<1x64xf32> to vector<4x64xf32>
    %303 = arith.mulf %298, %302 : vector<4x64xf32>
    %304 = arith.addf %293, %303 : vector<4x64xf32>
    %c1_i32_134 = arith.constant 1 : i32
    %305 = tpu.dynamic_rotate %1 by %c1_i32_134 dim 0 : vector<4x64xf32>, i32 -> vector<4x64xf32>
    %c28 = arith.constant 28 : index
    %c0_135 = arith.constant 0 : index
    %c0_136 = arith.constant 0 : index
    %306 = vector.load %arg2[%c28, %c0_135, %c0_136] : memref<49x4x1xf32, #tpu.memory_space<vmem>>, vector<1x4x1xf32>
    %307 = vector.shape_cast %306 : vector<1x4x1xf32> to vector<4x1xf32>
    %308 = vector.broadcast %307 : vector<4x1xf32> to vector<4x64xf32>
    %309 = arith.mulf %305, %308 : vector<4x64xf32>
    %c28_137 = arith.constant 28 : index
    %c0_138 = arith.constant 0 : index
    %310 = vector.load %arg3[%c28_137, %c0_138] : memref<49x64xf32, #tpu.memory_space<vmem>>, vector<1x64xf32>
    %311 = vector.shape_cast %310 : vector<1x64xf32> to vector<64xf32>
    %312 = vector.shape_cast %311 : vector<64xf32> to vector<1x64xf32>
    %313 = vector.broadcast %312 : vector<1x64xf32> to vector<4x64xf32>
    %314 = arith.mulf %309, %313 : vector<4x64xf32>
    %315 = arith.addf %304, %314 : vector<4x64xf32>
    %c29 = arith.constant 29 : index
    %c0_139 = arith.constant 0 : index
    %c0_140 = arith.constant 0 : index
    %316 = vector.load %arg2[%c29, %c0_139, %c0_140] : memref<49x4x1xf32, #tpu.memory_space<vmem>>, vector<1x4x1xf32>
    %317 = vector.shape_cast %316 : vector<1x4x1xf32> to vector<4x1xf32>
    %318 = vector.broadcast %317 : vector<4x1xf32> to vector<4x64xf32>
    %319 = arith.mulf %1, %318 : vector<4x64xf32>
    %c29_141 = arith.constant 29 : index
    %c0_142 = arith.constant 0 : index
    %320 = vector.load %arg3[%c29_141, %c0_142] : memref<49x64xf32, #tpu.memory_space<vmem>>, vector<1x64xf32>
    %321 = vector.shape_cast %320 : vector<1x64xf32> to vector<64xf32>
    %322 = vector.shape_cast %321 : vector<64xf32> to vector<1x64xf32>
    %323 = vector.broadcast %322 : vector<1x64xf32> to vector<4x64xf32>
    %324 = arith.mulf %319, %323 : vector<4x64xf32>
    %325 = arith.addf %315, %324 : vector<4x64xf32>
    %c3_i32_143 = arith.constant 3 : i32
    %326 = tpu.dynamic_rotate %1 by %c3_i32_143 dim 0 : vector<4x64xf32>, i32 -> vector<4x64xf32>
    %c30 = arith.constant 30 : index
    %c0_144 = arith.constant 0 : index
    %c0_145 = arith.constant 0 : index
    %327 = vector.load %arg2[%c30, %c0_144, %c0_145] : memref<49x4x1xf32, #tpu.memory_space<vmem>>, vector<1x4x1xf32>
    %328 = vector.shape_cast %327 : vector<1x4x1xf32> to vector<4x1xf32>
    %329 = vector.broadcast %328 : vector<4x1xf32> to vector<4x64xf32>
    %330 = arith.mulf %326, %329 : vector<4x64xf32>
    %c30_146 = arith.constant 30 : index
    %c0_147 = arith.constant 0 : index
    %331 = vector.load %arg3[%c30_146, %c0_147] : memref<49x64xf32, #tpu.memory_space<vmem>>, vector<1x64xf32>
    %332 = vector.shape_cast %331 : vector<1x64xf32> to vector<64xf32>
    %333 = vector.shape_cast %332 : vector<64xf32> to vector<1x64xf32>
    %334 = vector.broadcast %333 : vector<1x64xf32> to vector<4x64xf32>
    %335 = arith.mulf %330, %334 : vector<4x64xf32>
    %336 = arith.addf %325, %335 : vector<4x64xf32>
    %c2_i32_148 = arith.constant 2 : i32
    %337 = tpu.dynamic_rotate %1 by %c2_i32_148 dim 0 : vector<4x64xf32>, i32 -> vector<4x64xf32>
    %c31 = arith.constant 31 : index
    %c0_149 = arith.constant 0 : index
    %c0_150 = arith.constant 0 : index
    %338 = vector.load %arg2[%c31, %c0_149, %c0_150] : memref<49x4x1xf32, #tpu.memory_space<vmem>>, vector<1x4x1xf32>
    %339 = vector.shape_cast %338 : vector<1x4x1xf32> to vector<4x1xf32>
    %340 = vector.broadcast %339 : vector<4x1xf32> to vector<4x64xf32>
    %341 = arith.mulf %337, %340 : vector<4x64xf32>
    %c31_151 = arith.constant 31 : index
    %c0_152 = arith.constant 0 : index
    %342 = vector.load %arg3[%c31_151, %c0_152] : memref<49x64xf32, #tpu.memory_space<vmem>>, vector<1x64xf32>
    %343 = vector.shape_cast %342 : vector<1x64xf32> to vector<64xf32>
    %344 = vector.shape_cast %343 : vector<64xf32> to vector<1x64xf32>
    %345 = vector.broadcast %344 : vector<1x64xf32> to vector<4x64xf32>
    %346 = arith.mulf %341, %345 : vector<4x64xf32>
    %347 = arith.addf %336, %346 : vector<4x64xf32>
    %c1_i32_153 = arith.constant 1 : i32
    %348 = tpu.dynamic_rotate %1 by %c1_i32_153 dim 0 : vector<4x64xf32>, i32 -> vector<4x64xf32>
    %c32 = arith.constant 32 : index
    %c0_154 = arith.constant 0 : index
    %c0_155 = arith.constant 0 : index
    %349 = vector.load %arg2[%c32, %c0_154, %c0_155] : memref<49x4x1xf32, #tpu.memory_space<vmem>>, vector<1x4x1xf32>
    %350 = vector.shape_cast %349 : vector<1x4x1xf32> to vector<4x1xf32>
    %351 = vector.broadcast %350 : vector<4x1xf32> to vector<4x64xf32>
    %352 = arith.mulf %348, %351 : vector<4x64xf32>
    %c32_156 = arith.constant 32 : index
    %c0_157 = arith.constant 0 : index
    %353 = vector.load %arg3[%c32_156, %c0_157] : memref<49x64xf32, #tpu.memory_space<vmem>>, vector<1x64xf32>
    %354 = vector.shape_cast %353 : vector<1x64xf32> to vector<64xf32>
    %355 = vector.shape_cast %354 : vector<64xf32> to vector<1x64xf32>
    %356 = vector.broadcast %355 : vector<1x64xf32> to vector<4x64xf32>
    %357 = arith.mulf %352, %356 : vector<4x64xf32>
    %358 = arith.addf %347, %357 : vector<4x64xf32>
    %c33 = arith.constant 33 : index
    %c0_158 = arith.constant 0 : index
    %c0_159 = arith.constant 0 : index
    %359 = vector.load %arg2[%c33, %c0_158, %c0_159] : memref<49x4x1xf32, #tpu.memory_space<vmem>>, vector<1x4x1xf32>
    %360 = vector.shape_cast %359 : vector<1x4x1xf32> to vector<4x1xf32>
    %361 = vector.broadcast %360 : vector<4x1xf32> to vector<4x64xf32>
    %362 = arith.mulf %1, %361 : vector<4x64xf32>
    %c33_160 = arith.constant 33 : index
    %c0_161 = arith.constant 0 : index
    %363 = vector.load %arg3[%c33_160, %c0_161] : memref<49x64xf32, #tpu.memory_space<vmem>>, vector<1x64xf32>
    %364 = vector.shape_cast %363 : vector<1x64xf32> to vector<64xf32>
    %365 = vector.shape_cast %364 : vector<64xf32> to vector<1x64xf32>
    %366 = vector.broadcast %365 : vector<1x64xf32> to vector<4x64xf32>
    %367 = arith.mulf %362, %366 : vector<4x64xf32>
    %368 = arith.addf %358, %367 : vector<4x64xf32>
    %c3_i32_162 = arith.constant 3 : i32
    %369 = tpu.dynamic_rotate %1 by %c3_i32_162 dim 0 : vector<4x64xf32>, i32 -> vector<4x64xf32>
    %c34 = arith.constant 34 : index
    %c0_163 = arith.constant 0 : index
    %c0_164 = arith.constant 0 : index
    %370 = vector.load %arg2[%c34, %c0_163, %c0_164] : memref<49x4x1xf32, #tpu.memory_space<vmem>>, vector<1x4x1xf32>
    %371 = vector.shape_cast %370 : vector<1x4x1xf32> to vector<4x1xf32>
    %372 = vector.broadcast %371 : vector<4x1xf32> to vector<4x64xf32>
    %373 = arith.mulf %369, %372 : vector<4x64xf32>
    %c34_165 = arith.constant 34 : index
    %c0_166 = arith.constant 0 : index
    %374 = vector.load %arg3[%c34_165, %c0_166] : memref<49x64xf32, #tpu.memory_space<vmem>>, vector<1x64xf32>
    %375 = vector.shape_cast %374 : vector<1x64xf32> to vector<64xf32>
    %376 = vector.shape_cast %375 : vector<64xf32> to vector<1x64xf32>
    %377 = vector.broadcast %376 : vector<1x64xf32> to vector<4x64xf32>
    %378 = arith.mulf %373, %377 : vector<4x64xf32>
    %379 = arith.addf %368, %378 : vector<4x64xf32>
    %c3_i32_167 = arith.constant 3 : i32
    %380 = tpu.dynamic_rotate %1 by %c3_i32_167 dim 0 : vector<4x64xf32>, i32 -> vector<4x64xf32>
    %c35 = arith.constant 35 : index
    %c0_168 = arith.constant 0 : index
    %c0_169 = arith.constant 0 : index
    %381 = vector.load %arg2[%c35, %c0_168, %c0_169] : memref<49x4x1xf32, #tpu.memory_space<vmem>>, vector<1x4x1xf32>
    %382 = vector.shape_cast %381 : vector<1x4x1xf32> to vector<4x1xf32>
    %383 = vector.broadcast %382 : vector<4x1xf32> to vector<4x64xf32>
    %384 = arith.mulf %380, %383 : vector<4x64xf32>
    %c35_170 = arith.constant 35 : index
    %c0_171 = arith.constant 0 : index
    %385 = vector.load %arg3[%c35_170, %c0_171] : memref<49x64xf32, #tpu.memory_space<vmem>>, vector<1x64xf32>
    %386 = vector.shape_cast %385 : vector<1x64xf32> to vector<64xf32>
    %387 = vector.shape_cast %386 : vector<64xf32> to vector<1x64xf32>
    %388 = vector.broadcast %387 : vector<1x64xf32> to vector<4x64xf32>
    %389 = arith.mulf %384, %388 : vector<4x64xf32>
    %390 = arith.addf %379, %389 : vector<4x64xf32>
    %c2_i32_172 = arith.constant 2 : i32
    %391 = tpu.dynamic_rotate %1 by %c2_i32_172 dim 0 : vector<4x64xf32>, i32 -> vector<4x64xf32>
    %c36 = arith.constant 36 : index
    %c0_173 = arith.constant 0 : index
    %c0_174 = arith.constant 0 : index
    %392 = vector.load %arg2[%c36, %c0_173, %c0_174] : memref<49x4x1xf32, #tpu.memory_space<vmem>>, vector<1x4x1xf32>
    %393 = vector.shape_cast %392 : vector<1x4x1xf32> to vector<4x1xf32>
    %394 = vector.broadcast %393 : vector<4x1xf32> to vector<4x64xf32>
    %395 = arith.mulf %391, %394 : vector<4x64xf32>
    %c36_175 = arith.constant 36 : index
    %c0_176 = arith.constant 0 : index
    %396 = vector.load %arg3[%c36_175, %c0_176] : memref<49x64xf32, #tpu.memory_space<vmem>>, vector<1x64xf32>
    %397 = vector.shape_cast %396 : vector<1x64xf32> to vector<64xf32>
    %398 = vector.shape_cast %397 : vector<64xf32> to vector<1x64xf32>
    %399 = vector.broadcast %398 : vector<1x64xf32> to vector<4x64xf32>
    %400 = arith.mulf %395, %399 : vector<4x64xf32>
    %401 = arith.addf %390, %400 : vector<4x64xf32>
    %c1_i32_177 = arith.constant 1 : i32
    %402 = tpu.dynamic_rotate %1 by %c1_i32_177 dim 0 : vector<4x64xf32>, i32 -> vector<4x64xf32>
    %c37 = arith.constant 37 : index
    %c0_178 = arith.constant 0 : index
    %c0_179 = arith.constant 0 : index
    %403 = vector.load %arg2[%c37, %c0_178, %c0_179] : memref<49x4x1xf32, #tpu.memory_space<vmem>>, vector<1x4x1xf32>
    %404 = vector.shape_cast %403 : vector<1x4x1xf32> to vector<4x1xf32>
    %405 = vector.broadcast %404 : vector<4x1xf32> to vector<4x64xf32>
    %406 = arith.mulf %402, %405 : vector<4x64xf32>
    %c37_180 = arith.constant 37 : index
    %c0_181 = arith.constant 0 : index
    %407 = vector.load %arg3[%c37_180, %c0_181] : memref<49x64xf32, #tpu.memory_space<vmem>>, vector<1x64xf32>
    %408 = vector.shape_cast %407 : vector<1x64xf32> to vector<64xf32>
    %409 = vector.shape_cast %408 : vector<64xf32> to vector<1x64xf32>
    %410 = vector.broadcast %409 : vector<1x64xf32> to vector<4x64xf32>
    %411 = arith.mulf %406, %410 : vector<4x64xf32>
    %412 = arith.addf %401, %411 : vector<4x64xf32>
    %c38 = arith.constant 38 : index
    %c0_182 = arith.constant 0 : index
    %c0_183 = arith.constant 0 : index
    %413 = vector.load %arg2[%c38, %c0_182, %c0_183] : memref<49x4x1xf32, #tpu.memory_space<vmem>>, vector<1x4x1xf32>
    %414 = vector.shape_cast %413 : vector<1x4x1xf32> to vector<4x1xf32>
    %415 = vector.broadcast %414 : vector<4x1xf32> to vector<4x64xf32>
    %416 = arith.mulf %1, %415 : vector<4x64xf32>
    %c38_184 = arith.constant 38 : index
    %c0_185 = arith.constant 0 : index
    %417 = vector.load %arg3[%c38_184, %c0_185] : memref<49x64xf32, #tpu.memory_space<vmem>>, vector<1x64xf32>
    %418 = vector.shape_cast %417 : vector<1x64xf32> to vector<64xf32>
    %419 = vector.shape_cast %418 : vector<64xf32> to vector<1x64xf32>
    %420 = vector.broadcast %419 : vector<1x64xf32> to vector<4x64xf32>
    %421 = arith.mulf %416, %420 : vector<4x64xf32>
    %422 = arith.addf %412, %421 : vector<4x64xf32>
    %c3_i32_186 = arith.constant 3 : i32
    %423 = tpu.dynamic_rotate %1 by %c3_i32_186 dim 0 : vector<4x64xf32>, i32 -> vector<4x64xf32>
    %c39 = arith.constant 39 : index
    %c0_187 = arith.constant 0 : index
    %c0_188 = arith.constant 0 : index
    %424 = vector.load %arg2[%c39, %c0_187, %c0_188] : memref<49x4x1xf32, #tpu.memory_space<vmem>>, vector<1x4x1xf32>
    %425 = vector.shape_cast %424 : vector<1x4x1xf32> to vector<4x1xf32>
    %426 = vector.broadcast %425 : vector<4x1xf32> to vector<4x64xf32>
    %427 = arith.mulf %423, %426 : vector<4x64xf32>
    %c39_189 = arith.constant 39 : index
    %c0_190 = arith.constant 0 : index
    %428 = vector.load %arg3[%c39_189, %c0_190] : memref<49x64xf32, #tpu.memory_space<vmem>>, vector<1x64xf32>
    %429 = vector.shape_cast %428 : vector<1x64xf32> to vector<64xf32>
    %430 = vector.shape_cast %429 : vector<64xf32> to vector<1x64xf32>
    %431 = vector.broadcast %430 : vector<1x64xf32> to vector<4x64xf32>
    %432 = arith.mulf %427, %431 : vector<4x64xf32>
    %433 = arith.addf %422, %432 : vector<4x64xf32>
    %c2_i32_191 = arith.constant 2 : i32
    %434 = tpu.dynamic_rotate %1 by %c2_i32_191 dim 0 : vector<4x64xf32>, i32 -> vector<4x64xf32>
    %c40 = arith.constant 40 : index
    %c0_192 = arith.constant 0 : index
    %c0_193 = arith.constant 0 : index
    %435 = vector.load %arg2[%c40, %c0_192, %c0_193] : memref<49x4x1xf32, #tpu.memory_space<vmem>>, vector<1x4x1xf32>
    %436 = vector.shape_cast %435 : vector<1x4x1xf32> to vector<4x1xf32>
    %437 = vector.broadcast %436 : vector<4x1xf32> to vector<4x64xf32>
    %438 = arith.mulf %434, %437 : vector<4x64xf32>
    %c40_194 = arith.constant 40 : index
    %c0_195 = arith.constant 0 : index
    %439 = vector.load %arg3[%c40_194, %c0_195] : memref<49x64xf32, #tpu.memory_space<vmem>>, vector<1x64xf32>
    %440 = vector.shape_cast %439 : vector<1x64xf32> to vector<64xf32>
    %441 = vector.shape_cast %440 : vector<64xf32> to vector<1x64xf32>
    %442 = vector.broadcast %441 : vector<1x64xf32> to vector<4x64xf32>
    %443 = arith.mulf %438, %442 : vector<4x64xf32>
    %444 = arith.addf %433, %443 : vector<4x64xf32>
    %c1_i32_196 = arith.constant 1 : i32
    %445 = tpu.dynamic_rotate %1 by %c1_i32_196 dim 0 : vector<4x64xf32>, i32 -> vector<4x64xf32>
    %c41 = arith.constant 41 : index
    %c0_197 = arith.constant 0 : index
    %c0_198 = arith.constant 0 : index
    %446 = vector.load %arg2[%c41, %c0_197, %c0_198] : memref<49x4x1xf32, #tpu.memory_space<vmem>>, vector<1x4x1xf32>
    %447 = vector.shape_cast %446 : vector<1x4x1xf32> to vector<4x1xf32>
    %448 = vector.broadcast %447 : vector<4x1xf32> to vector<4x64xf32>
    %449 = arith.mulf %445, %448 : vector<4x64xf32>
    %c41_199 = arith.constant 41 : index
    %c0_200 = arith.constant 0 : index
    %450 = vector.load %arg3[%c41_199, %c0_200] : memref<49x64xf32, #tpu.memory_space<vmem>>, vector<1x64xf32>
    %451 = vector.shape_cast %450 : vector<1x64xf32> to vector<64xf32>
    %452 = vector.shape_cast %451 : vector<64xf32> to vector<1x64xf32>
    %453 = vector.broadcast %452 : vector<1x64xf32> to vector<4x64xf32>
    %454 = arith.mulf %449, %453 : vector<4x64xf32>
    %455 = arith.addf %444, %454 : vector<4x64xf32>
    %c1_i32_201 = arith.constant 1 : i32
    %456 = tpu.dynamic_rotate %1 by %c1_i32_201 dim 0 : vector<4x64xf32>, i32 -> vector<4x64xf32>
    %c42 = arith.constant 42 : index
    %c0_202 = arith.constant 0 : index
    %c0_203 = arith.constant 0 : index
    %457 = vector.load %arg2[%c42, %c0_202, %c0_203] : memref<49x4x1xf32, #tpu.memory_space<vmem>>, vector<1x4x1xf32>
    %458 = vector.shape_cast %457 : vector<1x4x1xf32> to vector<4x1xf32>
    %459 = vector.broadcast %458 : vector<4x1xf32> to vector<4x64xf32>
    %460 = arith.mulf %456, %459 : vector<4x64xf32>
    %c42_204 = arith.constant 42 : index
    %c0_205 = arith.constant 0 : index
    %461 = vector.load %arg3[%c42_204, %c0_205] : memref<49x64xf32, #tpu.memory_space<vmem>>, vector<1x64xf32>
    %462 = vector.shape_cast %461 : vector<1x64xf32> to vector<64xf32>
    %463 = vector.shape_cast %462 : vector<64xf32> to vector<1x64xf32>
    %464 = vector.broadcast %463 : vector<1x64xf32> to vector<4x64xf32>
    %465 = arith.mulf %460, %464 : vector<4x64xf32>
    %466 = arith.addf %455, %465 : vector<4x64xf32>
    %c43 = arith.constant 43 : index
    %c0_206 = arith.constant 0 : index
    %c0_207 = arith.constant 0 : index
    %467 = vector.load %arg2[%c43, %c0_206, %c0_207] : memref<49x4x1xf32, #tpu.memory_space<vmem>>, vector<1x4x1xf32>
    %468 = vector.shape_cast %467 : vector<1x4x1xf32> to vector<4x1xf32>
    %469 = vector.broadcast %468 : vector<4x1xf32> to vector<4x64xf32>
    %470 = arith.mulf %1, %469 : vector<4x64xf32>
    %c43_208 = arith.constant 43 : index
    %c0_209 = arith.constant 0 : index
    %471 = vector.load %arg3[%c43_208, %c0_209] : memref<49x64xf32, #tpu.memory_space<vmem>>, vector<1x64xf32>
    %472 = vector.shape_cast %471 : vector<1x64xf32> to vector<64xf32>
    %473 = vector.shape_cast %472 : vector<64xf32> to vector<1x64xf32>
    %474 = vector.broadcast %473 : vector<1x64xf32> to vector<4x64xf32>
    %475 = arith.mulf %470, %474 : vector<4x64xf32>
    %476 = arith.addf %466, %475 : vector<4x64xf32>
    %c3_i32_210 = arith.constant 3 : i32
    %477 = tpu.dynamic_rotate %1 by %c3_i32_210 dim 0 : vector<4x64xf32>, i32 -> vector<4x64xf32>
    %c44 = arith.constant 44 : index
    %c0_211 = arith.constant 0 : index
    %c0_212 = arith.constant 0 : index
    %478 = vector.load %arg2[%c44, %c0_211, %c0_212] : memref<49x4x1xf32, #tpu.memory_space<vmem>>, vector<1x4x1xf32>
    %479 = vector.shape_cast %478 : vector<1x4x1xf32> to vector<4x1xf32>
    %480 = vector.broadcast %479 : vector<4x1xf32> to vector<4x64xf32>
    %481 = arith.mulf %477, %480 : vector<4x64xf32>
    %c44_213 = arith.constant 44 : index
    %c0_214 = arith.constant 0 : index
    %482 = vector.load %arg3[%c44_213, %c0_214] : memref<49x64xf32, #tpu.memory_space<vmem>>, vector<1x64xf32>
    %483 = vector.shape_cast %482 : vector<1x64xf32> to vector<64xf32>
    %484 = vector.shape_cast %483 : vector<64xf32> to vector<1x64xf32>
    %485 = vector.broadcast %484 : vector<1x64xf32> to vector<4x64xf32>
    %486 = arith.mulf %481, %485 : vector<4x64xf32>
    %487 = arith.addf %476, %486 : vector<4x64xf32>
    %c2_i32_215 = arith.constant 2 : i32
    %488 = tpu.dynamic_rotate %1 by %c2_i32_215 dim 0 : vector<4x64xf32>, i32 -> vector<4x64xf32>
    %c45 = arith.constant 45 : index
    %c0_216 = arith.constant 0 : index
    %c0_217 = arith.constant 0 : index
    %489 = vector.load %arg2[%c45, %c0_216, %c0_217] : memref<49x4x1xf32, #tpu.memory_space<vmem>>, vector<1x4x1xf32>
    %490 = vector.shape_cast %489 : vector<1x4x1xf32> to vector<4x1xf32>
    %491 = vector.broadcast %490 : vector<4x1xf32> to vector<4x64xf32>
    %492 = arith.mulf %488, %491 : vector<4x64xf32>
    %c45_218 = arith.constant 45 : index
    %c0_219 = arith.constant 0 : index
    %493 = vector.load %arg3[%c45_218, %c0_219] : memref<49x64xf32, #tpu.memory_space<vmem>>, vector<1x64xf32>
    %494 = vector.shape_cast %493 : vector<1x64xf32> to vector<64xf32>
    %495 = vector.shape_cast %494 : vector<64xf32> to vector<1x64xf32>
    %496 = vector.broadcast %495 : vector<1x64xf32> to vector<4x64xf32>
    %497 = arith.mulf %492, %496 : vector<4x64xf32>
    %498 = arith.addf %487, %497 : vector<4x64xf32>
    %c1_i32_220 = arith.constant 1 : i32
    %499 = tpu.dynamic_rotate %1 by %c1_i32_220 dim 0 : vector<4x64xf32>, i32 -> vector<4x64xf32>
    %c46 = arith.constant 46 : index
    %c0_221 = arith.constant 0 : index
    %c0_222 = arith.constant 0 : index
    %500 = vector.load %arg2[%c46, %c0_221, %c0_222] : memref<49x4x1xf32, #tpu.memory_space<vmem>>, vector<1x4x1xf32>
    %501 = vector.shape_cast %500 : vector<1x4x1xf32> to vector<4x1xf32>
    %502 = vector.broadcast %501 : vector<4x1xf32> to vector<4x64xf32>
    %503 = arith.mulf %499, %502 : vector<4x64xf32>
    %c46_223 = arith.constant 46 : index
    %c0_224 = arith.constant 0 : index
    %504 = vector.load %arg3[%c46_223, %c0_224] : memref<49x64xf32, #tpu.memory_space<vmem>>, vector<1x64xf32>
    %505 = vector.shape_cast %504 : vector<1x64xf32> to vector<64xf32>
    %506 = vector.shape_cast %505 : vector<64xf32> to vector<1x64xf32>
    %507 = vector.broadcast %506 : vector<1x64xf32> to vector<4x64xf32>
    %508 = arith.mulf %503, %507 : vector<4x64xf32>
    %509 = arith.addf %498, %508 : vector<4x64xf32>
    %c47 = arith.constant 47 : index
    %c0_225 = arith.constant 0 : index
    %c0_226 = arith.constant 0 : index
    %510 = vector.load %arg2[%c47, %c0_225, %c0_226] : memref<49x4x1xf32, #tpu.memory_space<vmem>>, vector<1x4x1xf32>
    %511 = vector.shape_cast %510 : vector<1x4x1xf32> to vector<4x1xf32>
    %512 = vector.broadcast %511 : vector<4x1xf32> to vector<4x64xf32>
    %513 = arith.mulf %1, %512 : vector<4x64xf32>
    %c47_227 = arith.constant 47 : index
    %c0_228 = arith.constant 0 : index
    %514 = vector.load %arg3[%c47_227, %c0_228] : memref<49x64xf32, #tpu.memory_space<vmem>>, vector<1x64xf32>
    %515 = vector.shape_cast %514 : vector<1x64xf32> to vector<64xf32>
    %516 = vector.shape_cast %515 : vector<64xf32> to vector<1x64xf32>
    %517 = vector.broadcast %516 : vector<1x64xf32> to vector<4x64xf32>
    %518 = arith.mulf %513, %517 : vector<4x64xf32>
    %519 = arith.addf %509, %518 : vector<4x64xf32>
    %c3_i32_229 = arith.constant 3 : i32
    %520 = tpu.dynamic_rotate %1 by %c3_i32_229 dim 0 : vector<4x64xf32>, i32 -> vector<4x64xf32>
    %c48 = arith.constant 48 : index
    %c0_230 = arith.constant 0 : index
    %c0_231 = arith.constant 0 : index
    %521 = vector.load %arg2[%c48, %c0_230, %c0_231] : memref<49x4x1xf32, #tpu.memory_space<vmem>>, vector<1x4x1xf32>
    %522 = vector.shape_cast %521 : vector<1x4x1xf32> to vector<4x1xf32>
    %523 = vector.broadcast %522 : vector<4x1xf32> to vector<4x64xf32>
    %524 = arith.mulf %520, %523 : vector<4x64xf32>
    %c48_232 = arith.constant 48 : index
    %c0_233 = arith.constant 0 : index
    %525 = vector.load %arg3[%c48_232, %c0_233] : memref<49x64xf32, #tpu.memory_space<vmem>>, vector<1x64xf32>
    %526 = vector.shape_cast %525 : vector<1x64xf32> to vector<64xf32>
    %527 = vector.shape_cast %526 : vector<64xf32> to vector<1x64xf32>
    %528 = vector.broadcast %527 : vector<1x64xf32> to vector<4x64xf32>
    %529 = arith.mulf %524, %528 : vector<4x64xf32>
    %530 = arith.addf %519, %529 : vector<4x64xf32>
    %c0_234 = arith.constant 0 : index
    %c0_235 = arith.constant 0 : index
    %531 = vector.load %arg4[%c0_234, %c0_235] : memref<1x64xf32, #tpu.memory_space<vmem>>, vector<1x64xf32>
    %532 = vector.broadcast %531 : vector<1x64xf32> to vector<4x64xf32>
    %533 = arith.addf %530, %532 : vector<4x64xf32>
    %c0_236 = arith.constant 0 : index
    %c0_237 = arith.constant 0 : index
    %534 = vector.load %arg5[%c0_236, %c0_237] : memref<1x64xf32, #tpu.memory_space<vmem>>, vector<1x64xf32>
    %c0_238 = arith.constant 0 : index
    %c0_239 = arith.constant 0 : index
    %535 = vector.load %arg6[%c0_238, %c0_239] : memref<1x64xf32, #tpu.memory_space<vmem>>, vector<1x64xf32>
    %cst_240 = arith.constant dense<0.000000e+00> : vector<4xf32>
    %536 = vector.multi_reduction <add>, %533, %cst_240 [1] : vector<4x64xf32> to vector<4xf32>
    %537 = vector.shape_cast %536 : vector<4xf32> to vector<4x1xf32>
    %cst_241 = arith.constant 6.400000e+01 : f32
    %538 = vector.broadcast %cst_241 : f32 to vector<4x1xf32>
    %539 = arith.divf %537, %538 : vector<4x1xf32>
    %540 = vector.broadcast %539 : vector<4x1xf32> to vector<4x64xf32>
    %541 = arith.subf %533, %540 : vector<4x64xf32>
    %542 = arith.mulf %541, %541 : vector<4x64xf32>
    %cst_242 = arith.constant dense<0.000000e+00> : vector<4xf32>
    %543 = vector.multi_reduction <add>, %542, %cst_242 [1] : vector<4x64xf32> to vector<4xf32>
    %544 = vector.shape_cast %543 : vector<4xf32> to vector<4x1xf32>
    %cst_243 = arith.constant 6.400000e+01 : f32
    %545 = vector.broadcast %cst_243 : f32 to vector<4x1xf32>
    %546 = arith.divf %544, %545 : vector<4x1xf32>
    %cst_244 = arith.constant 9.99999997E-7 : f32
    %547 = vector.broadcast %cst_244 : f32 to vector<4x1xf32>
    %548 = arith.addf %546, %547 : vector<4x1xf32>
    %549 = math.rsqrt %548 : vector<4x1xf32>
    %550 = vector.broadcast %549 : vector<4x1xf32> to vector<4x64xf32>
    %551 = arith.mulf %541, %550 : vector<4x64xf32>
    %552 = vector.broadcast %534 : vector<1x64xf32> to vector<4x64xf32>
    %553 = arith.mulf %551, %552 : vector<4x64xf32>
    %554 = vector.broadcast %535 : vector<1x64xf32> to vector<4x64xf32>
    %555 = arith.addf %553, %554 : vector<4x64xf32>
    %556 = arith.truncf %555 : vector<4x64xf32> to vector<4x64xbf16>
    %c0_245 = arith.constant 0 : index
    %c0_246 = arith.constant 0 : index
    %557 = vector.load %arg7[%c0_245, %c0_246] : memref<64x256xbf16, #tpu.memory_space<vmem>>, vector<64x256xbf16>
    %cst_247 = arith.constant dense<0.000000e+00> : vector<4x256xf32>
    %558 = tpu.matmul %556, %557, %cst_247 {dimension_numbers = #tpu.dot_dimension_numbers<[1], [0], [0], [1], [0, 0, 1, 1], [], []>} : vector<4x64xbf16>, vector<64x256xbf16>, vector<4x256xf32> -> vector<4x256xf32>
    %c0_248 = arith.constant 0 : index
    %c0_249 = arith.constant 0 : index
    %559 = vector.load %arg8[%c0_248, %c0_249] : memref<1x256xf32, #tpu.memory_space<vmem>>, vector<1x256xf32>
    %560 = vector.broadcast %559 : vector<1x256xf32> to vector<4x256xf32>
    %561 = arith.addf %558, %560 : vector<4x256xf32>
    %cst_250 = arith.constant 5.000000e-01 : f32
    %562 = vector.broadcast %cst_250 : f32 to vector<4x256xf32>
    %563 = arith.mulf %562, %561 : vector<4x256xf32>
    %cst_251 = arith.constant 0.707106769 : f32
    %564 = vector.broadcast %cst_251 : f32 to vector<4x256xf32>
    %565 = arith.mulf %561, %564 : vector<4x256xf32>
    %566 = math.absf %565 : vector<4x256xf32>
    %cst_252 = arith.constant 0.327591091 : f32
    %567 = vector.broadcast %cst_252 : f32 to vector<4x256xf32>
    %568 = arith.mulf %567, %566 : vector<4x256xf32>
    %cst_253 = arith.constant 1.000000e+00 : f32
    %569 = vector.broadcast %cst_253 : f32 to vector<4x256xf32>
    %570 = arith.addf %569, %568 : vector<4x256xf32>
    %571 = tpu.reciprocal %570 {approx = true} : vector<4x256xf32> -> vector<4x256xf32>
    %cst_254 = arith.constant 1.06140542 : f32
    %572 = vector.broadcast %cst_254 : f32 to vector<4x256xf32>
    %573 = arith.mulf %572, %571 : vector<4x256xf32>
    %cst_255 = arith.constant -1.45315206 : f32
    %574 = vector.broadcast %cst_255 : f32 to vector<4x256xf32>
    %575 = arith.addf %573, %574 : vector<4x256xf32>
    %576 = arith.mulf %575, %571 : vector<4x256xf32>
    %cst_256 = arith.constant 1.42141378 : f32
    %577 = vector.broadcast %cst_256 : f32 to vector<4x256xf32>
    %578 = arith.addf %576, %577 : vector<4x256xf32>
    %579 = arith.mulf %578, %571 : vector<4x256xf32>
    %cst_257 = arith.constant -0.284496725 : f32
    %580 = vector.broadcast %cst_257 : f32 to vector<4x256xf32>
    %581 = arith.addf %579, %580 : vector<4x256xf32>
    %582 = arith.mulf %581, %571 : vector<4x256xf32>
    %cst_258 = arith.constant 0.254829586 : f32
    %583 = vector.broadcast %cst_258 : f32 to vector<4x256xf32>
    %584 = arith.addf %582, %583 : vector<4x256xf32>
    %585 = arith.mulf %584, %571 : vector<4x256xf32>
    %cst_259 = arith.constant 0.000000e+00 : f32
    %586 = vector.broadcast %cst_259 : f32 to vector<4x256xf32>
    %587 = arith.subf %586, %566 : vector<4x256xf32>
    %588 = arith.mulf %587, %566 : vector<4x256xf32>
    %589 = math.exp %588 : vector<4x256xf32>
    %590 = arith.mulf %585, %589 : vector<4x256xf32>
    %cst_260 = arith.constant 1.000000e+00 : f32
    %591 = vector.broadcast %cst_260 : f32 to vector<4x256xf32>
    %592 = arith.subf %591, %590 : vector<4x256xf32>
    %cst_261 = arith.constant 0.000000e+00 : f32
    %593 = vector.broadcast %cst_261 : f32 to vector<4x256xf32>
    %594 = arith.cmpf olt, %565, %593 : vector<4x256xf32>
    %cst_262 = arith.constant 0.000000e+00 : f32
    %595 = vector.broadcast %cst_262 : f32 to vector<4x256xf32>
    %596 = arith.subf %595, %592 : vector<4x256xf32>
    %597 = arith.select %594, %596, %592 : vector<4x256xi1>, vector<4x256xf32>
    %cst_263 = arith.constant 1.000000e+00 : f32
    %598 = vector.broadcast %cst_263 : f32 to vector<4x256xf32>
    %599 = arith.addf %598, %597 : vector<4x256xf32>
    %600 = arith.mulf %563, %599 : vector<4x256xf32>
    %601 = arith.truncf %600 : vector<4x256xf32> to vector<4x256xbf16>
    %c0_264 = arith.constant 0 : index
    %c0_265 = arith.constant 0 : index
    %602 = vector.load %arg9[%c0_264, %c0_265] : memref<256x64xbf16, #tpu.memory_space<vmem>>, vector<256x64xbf16>
    %cst_266 = arith.constant dense<0.000000e+00> : vector<4x64xf32>
    %603 = tpu.matmul %601, %602, %cst_266 {dimension_numbers = #tpu.dot_dimension_numbers<[1], [0], [0], [1], [0, 0, 1, 1], [], []>} : vector<4x256xbf16>, vector<256x64xbf16>, vector<4x64xf32> -> vector<4x64xf32>
    %c0_267 = arith.constant 0 : index
    %c0_268 = arith.constant 0 : index
    %604 = vector.load %arg10[%c0_267, %c0_268] : memref<1x64xf32, #tpu.memory_space<vmem>>, vector<1x64xf32>
    %605 = vector.broadcast %604 : vector<1x64xf32> to vector<4x64xf32>
    %606 = arith.addf %603, %605 : vector<4x64xf32>
    %c0_269 = arith.constant 0 : index
    %c0_270 = arith.constant 0 : index
    %607 = vector.load %arg11[%c0_269, %c0_270] : memref<1x64xf32, #tpu.memory_space<vmem>>, vector<1x64xf32>
    %608 = vector.broadcast %607 : vector<1x64xf32> to vector<4x64xf32>
    %609 = arith.mulf %608, %606 : vector<4x64xf32>
    %610 = arith.addf %1, %609 : vector<4x64xf32>
    %c0_271 = arith.constant 0 : index
    %c0_272 = arith.constant 0 : index
    %c0_273 = arith.constant 0 : index
    %611 = vector.load %arg12[%c0_271, %c0_272, %c0_273] : memref<1x4x64xf32, #tpu.memory_space<vmem>>, vector<1x4x64xf32>
    %612 = vector.shape_cast %611 : vector<1x4x64xf32> to vector<4x64xf32>
    %613 = vector.shape_cast %610 : vector<4x64xf32> to vector<1x4x64xf32>
    tpu.vector_store %arg12[%c0_271, %c0_272, %c0_273], %613 {strides = array<i32>} : memref<1x4x64xf32, #tpu.memory_space<vmem>>, vector<1x4x64xf32>,
    return
  }
  func.func @transform_0(%arg0: i32) -> (i32, i32, i32) {
    %c0_i32 = arith.constant 0 : i32
    %c0_i32_0 = arith.constant 0 : i32
    %c0_i32_1 = arith.constant 0 : i32
    return %arg0, %c0_i32, %c0_i32_0 : i32, i32, i32
  }
  func.func @transform_1(%arg0: i32) -> (i32, i32, i32) {
    %c0_i32 = arith.constant 0 : i32
    %c0_i32_0 = arith.constant 0 : i32
    %c0_i32_1 = arith.constant 0 : i32
    %c0_i32_2 = arith.constant 0 : i32
    return %c0_i32, %c0_i32_0, %c0_i32_1 : i32, i32, i32
  }
  func.func @transform_2(%arg0: i32) -> (i32, i32) {
    %c0_i32 = arith.constant 0 : i32
    %c0_i32_0 = arith.constant 0 : i32
    %c0_i32_1 = arith.constant 0 : i32
    return %c0_i32, %c0_i32_0 : i32, i32
  }
  func.func @transform_3(%arg0: i32) -> (i32, i32) {
    %c0_i32 = arith.constant 0 : i32
    %c0_i32_0 = arith.constant 0 : i32
    %c0_i32_1 = arith.constant 0 : i32
    return %c0_i32, %c0_i32_0 : i32, i32
  }
  func.func @transform_4(%arg0: i32) -> (i32, i32) {
    %c0_i32 = arith.constant 0 : i32
    %c0_i32_0 = arith.constant 0 : i32
    %c0_i32_1 = arith.constant 0 : i32
    return %c0_i32, %c0_i32_0 : i32, i32
  }
  func.func @transform_5(%arg0: i32) -> (i32, i32) {
    %c0_i32 = arith.constant 0 : i32
    %c0_i32_0 = arith.constant 0 : i32
    %c0_i32_1 = arith.constant 0 : i32
    return %c0_i32, %c0_i32_0 : i32, i32
  }
  func.func @transform_6(%arg0: i32) -> (i32, i32) {
    %c0_i32 = arith.constant 0 : i32
    %c0_i32_0 = arith.constant 0 : i32
    %c0_i32_1 = arith.constant 0 : i32
    return %c0_i32, %c0_i32_0 : i32, i32
  }
  func.func @transform_7(%arg0: i32) -> (i32, i32) {
    %c0_i32 = arith.constant 0 : i32
    %c0_i32_0 = arith.constant 0 : i32
    %c0_i32_1 = arith.constant 0 : i32
    return %c0_i32, %c0_i32_0 : i32, i32
  }
  func.func @transform_8(%arg0: i32) -> (i32, i32) {
    %c0_i32 = arith.constant 0 : i32
    %c0_i32_0 = arith.constant 0 : i32
    %c0_i32_1 = arith.constant 0 : i32
    return %c0_i32, %c0_i32_0 : i32, i32
  }
  func.func @transform_9(%arg0: i32) -> (i32, i32) {
    %c0_i32 = arith.constant 0 : i32
    %c0_i32_0 = arith.constant 0 : i32
    %c0_i32_1 = arith.constant 0 : i32
    return %c0_i32, %c0_i32_0 : i32, i32
  }
  func.func @transform_10(%arg0: i32) -> (i32, i32) {
    %c0_i32 = arith.constant 0 : i32
    %c0_i32_0 = arith.constant 0 : i32
    %c0_i32_1 = arith.constant 0 : i32
    return %c0_i32, %c0_i32_0 : i32, i32
  }
  func.func @transform_11(%arg0: i32) -> (i32, i32, i32) {
    %c0_i32 = arith.constant 0 : i32
    %c0_i32_0 = arith.constant 0 : i32
    %c0_i32_1 = arith.constant 0 : i32
    return %arg0, %c0_i32, %c0_i32_0 : i32, i32, i32
  }
}

</mosaic_0001>

<llo_original>
// kernel: _lambda_.7
$region0: #{_lambda_.7}
  #allocation0 [shape = 'u32[]', space=smem, size = 0x4, offset = 0x4, fixed_abs, tag = 'smem constant byte address 0x4 - core index']
  #allocation1 [shape = 'u32[144,128]{1,0:T(1,128)}', space=vmem, size = 0x12000, scoped, tag = 'internal scratch']
  %s0 = inlined_call_operand.vmem [shape: f32[32,48], index: 0, kind: input, shape index: {}]
  %s1 = inlined_call_operand.vmem [shape: bf16[48,32], index: 1, kind: input, shape index: {}]
  %s2 = inlined_call_operand.vmem [shape: f32[1,32], index: 2, kind: input, shape index: {}, may-alias: {2,4}]
  %s3 = inlined_call_operand.vmem [shape: f32[1,32], index: 3, kind: input, shape index: {}]
  %s4 = inlined_call_operand.vmem [shape: f32[1,32], index: 4, kind: input, shape index: {}, may-alias: {2,4}]
  %s5 = inlined_call_operand.vmem [shape: f32[32,32], index: 5, kind: output, shape index: {}]
  %s6 = sld [smem:[#allocation0]]
  $region30: #{_lambda_.7} parent=0
    _
  %s8 = ssub.s32 1, %s6
  %s9 = scalar_select 0, %s8, %s6
  // Predicated region
  $region2: #{_lambda_.7} parent=0 // pred_check
    _
  $region3: #{_lambda_.7} parent=0 // pred_check_branch
    %11 = sbr.rel (0) target = $region5
  $region4: #{_lambda_.7} parent=0 // pred_region
    _
  $region5: #{_lambda_.7} parent=0 // pred_fallthru
    _
  // Predicated region
  $region6: #{_lambda_.7} parent=0 // pred_check
    _
  $region7: #{_lambda_.7} parent=0 // pred_check_branch
    %13 = sbr.rel (0) target = $region9
  $region8: #{_lambda_.7} parent=0 // pred_region
    _
  $region9: #{_lambda_.7} parent=0 // pred_fallthru
    _
  // Predicated region
  $region10: #{_lambda_.7} parent=0 // pred_check
    _
  $region11: #{_lambda_.7} parent=0 // pred_check_branch
    %15 = sbr.rel (0) target = $region13
  $region12: #{_lambda_.7} parent=0 // pred_region
    _
  $region13: #{_lambda_.7} parent=0 // pred_fallthru
    _
  // Predicated region
  $region14: #{_lambda_.7} parent=0 // pred_check
    _
  $region15: #{_lambda_.7} parent=0 // pred_check_branch
    %17 = sbr.rel (0) target = $region17
  $region16: #{_lambda_.7} parent=0 // pred_region
    _
  $region17: #{_lambda_.7} parent=0 // pred_fallthru
    _
  // Predicated region
  $region18: #{_lambda_.7} parent=0 // pred_check
    _
  $region19: #{_lambda_.7} parent=0 // pred_check_branch
    %19 = sbr.rel (0) target = $region21
  $region20: #{_lambda_.7} parent=0 // pred_region
    _
  $region21: #{_lambda_.7} parent=0 // pred_fallthru
    _
  %v21 = vld [vmem:[%s0] sm:$0xff]
  %v22 = vld [vmem:[%s0 + $0x8] sm:$0xff]
  %v23 = vld [vmem:[%s0 + $0x10] sm:$0xff]
  %v24 = vld [vmem:[%s0 + $0x18] sm:$0xff]
  %v25 = vpack.c.bf16 %v22, %v21
  %v26 = vpack.c.bf16 %v24, %v23
  %v27 = vld [vmem:[%s1] sm:$0xf]
  %v28 = vld [vmem:[%s1 + $0x4] sm:$0xf]
  %v29 = vld [vmem:[%s1 + $0x8] sm:$0xf]
  %v30 = vld [vmem:[%s1 + $0xc] sm:$0xf]
  %v31 = vld [vmem:[%s1 + $0x10] sm:$0xf]
  %v32 = vld [vmem:[%s1 + $0x14] sm:$0xf]
  %v33 = vld [vmem:[%s2] sm:$0x1]
  %v35 = vlaneseq
  %v36 = vshrl.u32 %v35, 7
  %v37 = vsub.s32 0, %v36
  %v38 = vrot.slane %v33, %v37
  %v46 = vunpack.c.l.b16 %v27
  %v47 = vunpack.c.l.b16 %v28
  %v48 = vunpack.c.l.b16 %v29
  %v49 = vunpack.c.l.b16 %v30
  %v50 = vunpack.c.l.b16 %v31
  %v51 = vunpack.c.l.b16 %v32
  %v52 = vpack.c.b16 %v47, %v46
  %v53 = vpack.c.b16 %v49, %v48
  %v54 = vpack.c.b16 %v51, %v50
  %vm58 = vcmask 392192
  %v60 = vsel %vm58, %v25, 0
  %v63 = vsel %vm58, %v26, 0
  %65 = vmatprep.subr.bf16.mxu0 0
  %66 = vmatpush1.bf16.msra.mxu0 %v52
  %67 = vmatprep.subr.bf16.mxu0 0
  %68 = vmatpush1.bf16.msra.mxu0 %v53
  %69 = vmatprep.subr.bf16.mxu0 0
  %70 = vmatpush1.bf16.msra.mxu0 %v54
  %71 = vmatprep.subr.bf16.mxu0 0
  %72 = vmatpush1.bf16.msra.mxu0 0
  %73 = vmatprep.subr.bf16.mxu0 0
  %74 = vmatpush1.bf16.msra.mxu0 0
  %75 = vmatprep.subr.bf16.mxu0 0
  %76 = vmatpush1.bf16.msra.mxu0 0
  %77 = vmatprep.subr.bf16.mxu0 0
  %78 = vmatpush1.bf16.msra.mxu0 0
  %79 = vmatprep.subr.bf16.mxu0 0
  %80 = vmatpush1.bf16.msra.mxu0 0
  %81 = vmatprep.subr.bf16.mxu0 0
  %82 = vmatpush1.bf16.msra.mxu0 0
  %83 = vmatprep.subr.bf16.mxu0 0
  %84 = vmatpush1.bf16.msra.mxu0 0
  %85 = vmatprep.subr.bf16.mxu0 0
  %86 = vmatpush1.bf16.msra.mxu0 0
  %87 = vmatprep.subr.bf16.mxu0 0
  %88 = vmatpush1.bf16.msra.mxu0 0
  %89 = vmatprep.subr.bf16.mxu0 0
  %90 = vmatpush1.bf16.msra.mxu0 0
  %91 = vmatprep.subr.bf16.mxu0 0
  %92 = vmatpush1.bf16.msra.mxu0 0
  %93 = vmatprep.subr.bf16.mxu0 0
  %94 = vmatpush1.bf16.msra.mxu0 0
  %95 = vmatprep.subr.bf16.mxu0 0
  %96 = vmatpush1.bf16.msra.mxu0 0
  %97 = vmatprep.mubr.bf16.mxu0 0
  %98 = vmatmul.mubr.bf16.gmra.mrb[0].mxu0 %v60
  %v99 = vpop.f32.mrb[0].mxu0
  %v100 = vadd.f32 %v38, %v99
  %v101 = vpop.f32.mrb[0].mxu0
  %v102 = vpop.f32.mrb[0].mxu0
  %v103 = vadd.f32 %v38, %v102
  %v104 = vpop.f32.mrb[0].mxu0
  %105 = vmatprep.mubr.bf16.mxu0 0
  %106 = vmatmul.mubr.bf16.gmra.mrb[0].mxu0 %v63
  %v107 = vpop.f32.mrb[0].mxu0
  %v108 = vadd.f32 %v38, %v107
  %v109 = vpop.f32.mrb[0].mxu0
  %v110 = vpop.f32.mrb[0].mxu0
  %v111 = vadd.f32 %v38, %v110
  %v112 = vpop.f32.mrb[0].mxu0
  %113 = vdwg.mxu0
  %v114 = vld [vmem:[%s3] sm:$0x1]
  %v115 = vld [vmem:[%s4] sm:$0x1]
  %vm116 = vcmask 261120
  %v117 = vsel %vm116, %v100, 0.0
  %118 = vadd.xlane.f32.xlu0 %v117
  %v119 = vpop.xlane.xlu0 %118
  %v120 = vsel %vm116, %v103, 0.0
  %121 = vadd.xlane.f32.xlu0 %v120
  %v122 = vpop.xlane.xlu0 %121
  %v123 = vsel %vm116, %v108, 0.0
  %124 = vadd.xlane.f32.xlu0 %v123
  %v125 = vpop.xlane.xlu0 %124
  %v126 = vsel %vm116, %v111, 0.0
  %127 = vadd.xlane.f32.xlu0 %v126
  %v128 = vpop.xlane.xlu0 %127
  %v129 = vrcp.pop 32.0
  %v130 = vmul.f32 %v119, %v129
  %v131 = vmul.f32 %v122, %v129
  %v132 = vmul.f32 %v125, %v129
  %v133 = vmul.f32 %v128, %v129
  %v134 = vsub.f32 %v100, %v130
  %v135 = vsub.f32 %v103, %v131
  %v136 = vsub.f32 %v108, %v132
  %v137 = vsub.f32 %v111, %v133
  %v138 = vmul.f32 %v134, %v134
  %v139 = vmul.f32 %v135, %v135
  %v140 = vmul.f32 %v136, %v136
  %v141 = vmul.f32 %v137, %v137
  %v142 = vsel %vm116, %v138, 0.0
  %143 = vadd.xlane.f32.xlu0 %v142
  %v144 = vpop.xlane.xlu0 %143
  %v145 = vsel %vm116, %v139, 0.0
  %146 = vadd.xlane.f32.xlu0 %v145
  %v147 = vpop.xlane.xlu0 %146
  %v148 = vsel %vm116, %v140, 0.0
  %149 = vadd.xlane.f32.xlu0 %v148
  %v150 = vpop.xlane.xlu0 %149
  %v151 = vsel %vm116, %v141, 0.0
  %152 = vadd.xlane.f32.xlu0 %v151
  %v153 = vpop.xlane.xlu0 %152
  %v154 = vmul.f32 %v144, %v129
  %v155 = vmul.f32 %v147, %v129
  %v156 = vmul.f32 %v150, %v129
  %v157 = vmul.f32 %v153, %v129
  %v158 = vadd.f32 %v154, 1e-06
  %v159 = vadd.f32 %v155, 1e-06
  %v160 = vadd.f32 %v156, 1e-06
  %v161 = vadd.f32 %v157, 1e-06
  %v162 = vrsqrt.pop %v158
  %v163 = vrsqrt.pop %v159
  %v164 = vrsqrt.pop %v160
  %v165 = vrsqrt.pop %v161
  %v166 = vmul.f32 %v134, %v162
  %v167 = vmul.f32 %v135, %v163
  %v168 = vmul.f32 %v136, %v164
  %v169 = vmul.f32 %v137, %v165
  %v171 = vlaneseq
  %v172 = vshrl.u32 %v171, 7
  %v173 = vsub.s32 0, %v172
  %v174 = vrot.slane %v114, %v173
  %v176 = vmul.f32 %v166, %v174
  %v177 = vmul.f32 %v167, %v174
  %v178 = vmul.f32 %v168, %v174
  %v179 = vmul.f32 %v169, %v174
  %v181 = vlaneseq
  %v182 = vshrl.u32 %v181, 7
  %v183 = vsub.s32 0, %v182
  %v184 = vrot.slane %v115, %v183
  %v186 = vadd.f32 %v176, %v184
  %v187 = vadd.f32 %v177, %v184
  %v188 = vadd.f32 %v178, %v184
  %v189 = vadd.f32 %v179, %v184
  %190 = vst.msk [vmem:[%s5] sm:$0xff] %vm116, %v186
  %191 = vst.msk [vmem:[%s5 + $0x8] sm:$0xff] %vm116, %v187
  %192 = vst.msk [vmem:[%s5 + $0x10] sm:$0xff] %vm116, %v188
  %193 = vst.msk [vmem:[%s5 + $0x18] sm:$0xff] %vm116, %v189
  // Predicated region
  $region22: #{_lambda_.7} parent=0 // pred_check
    _
  $region23: #{_lambda_.7} parent=0 // pred_check_branch
    %195 = sbr.rel (0) target = $region25
  $region24: #{_lambda_.7} parent=0 // pred_region
    _
  $region25: #{_lambda_.7} parent=0 // pred_fallthru
    _
  // Predicated region
  $region26: #{_lambda_.7} parent=0 // pred_check
    _
  $region27: #{_lambda_.7} parent=0 // pred_check_branch
    %197 = sbr.rel (0) target = $region29
  $region28: #{_lambda_.7} parent=0 // pred_region
    _
  $region29: #{_lambda_.7} parent=0 // pred_fallthru
    _

// kernel: _lambda_.10
$region0: #{_lambda_.10}
  #allocation0 [shape = 'u32[]', space=smem, size = 0x4, offset = 0x4, fixed_abs, tag = 'smem constant byte address 0x4 - core index']
  #allocation1 [shape = 'u32[144,128]{1,0:T(1,128)}', space=vmem, size = 0x12000, scoped, tag = 'internal scratch']
  %s0 = inlined_call_operand.vmem [shape: f32[8,32], index: 0, kind: input, shape index: {}]
  %s1 = inlined_call_operand.vmem [shape: f32[8,32], index: 1, kind: input, shape index: {}]
  %s2 = inlined_call_operand.vmem [shape: f32[8,32], index: 2, kind: input, shape index: {}]
  %s3 = inlined_call_operand.vmem [shape: f32[8,32], index: 3, kind: input, shape index: {}]
  %s4 = inlined_call_operand.vmem [shape: f32[1,32], index: 4, kind: input, shape index: {}]
  %s5 = inlined_call_operand.vmem [shape: f32[1,32], index: 5, kind: input, shape index: {}]
  %s6 = inlined_call_operand.vmem [shape: bf16[4,32,64], index: 6, kind: input, shape index: {}]
  %s7 = inlined_call_operand.vmem [shape: f32[1,64], index: 7, kind: input, shape index: {}]
  %s8 = inlined_call_operand.vmem [shape: f32[8,64], index: 8, kind: output, shape index: {}]
  %s9 = sld [smem:[#allocation0]]
  $region42: #{_lambda_.10} parent=0
    _
  %s11 = ssub.s32 1, %s9
  %s12 = scalar_select 0, %s11, %s9
  // Predicated region
  $region2: #{_lambda_.10} parent=0 // pred_check
    _
  $region3: #{_lambda_.10} parent=0 // pred_check_branch
    %14 = sbr.rel (0) target = $region5
  $region4: #{_lambda_.10} parent=0 // pred_region
    _
  $region5: #{_lambda_.10} parent=0 // pred_fallthru
    _
  // Predicated region
  $region6: #{_lambda_.10} parent=0 // pred_check
    _
  $region7: #{_lambda_.10} parent=0 // pred_check_branch
    %16 = sbr.rel (0) target = $region9
  $region8: #{_lambda_.10} parent=0 // pred_region
    _
  $region9: #{_lambda_.10} parent=0 // pred_fallthru
    _
  // Predicated region
  $region10: #{_lambda_.10} parent=0 // pred_check
    _
  $region11: #{_lambda_.10} parent=0 // pred_check_branch
    %18 = sbr.rel (0) target = $region13
  $region12: #{_lambda_.10} parent=0 // pred_region
    _
  $region13: #{_lambda_.10} parent=0 // pred_fallthru
    _
  // Predicated region
  $region14: #{_lambda_.10} parent=0 // pred_check
    _
  $region15: #{_lambda_.10} parent=0 // pred_check_branch
    %20 = sbr.rel (0) target = $region17
  $region16: #{_lambda_.10} parent=0 // pred_region
    _
  $region17: #{_lambda_.10} parent=0 // pred_fallthru
    _
  // Predicated region
  $region18: #{_lambda_.10} parent=0 // pred_check
    _
  $region19: #{_lambda_.10} parent=0 // pred_check_branch
    %22 = sbr.rel (0) target = $region21
  $region20: #{_lambda_.10} parent=0 // pred_region
    _
  $region21: #{_lambda_.10} parent=0 // pred_fallthru
    _
  // Predicated region
  $region22: #{_lambda_.10} parent=0 // pred_check
    _
  $region23: #{_lambda_.10} parent=0 // pred_check_branch
    %24 = sbr.rel (0) target = $region25
  $region24: #{_lambda_.10} parent=0 // pred_region
    _
  $region25: #{_lambda_.10} parent=0 // pred_fallthru
    _
  // Predicated region
  $region26: #{_lambda_.10} parent=0 // pred_check
    _
  $region27: #{_lambda_.10} parent=0 // pred_check_branch
    %26 = sbr.rel (0) target = $region29
  $region28: #{_lambda_.10} parent=0 // pred_region
    _
  $region29: #{_lambda_.10} parent=0 // pred_fallthru
    _
  // Predicated region
  $region30: #{_lambda_.10} parent=0 // pred_check
    _
  $region31: #{_lambda_.10} parent=0 // pred_check_branch
    %28 = sbr.rel (0) target = $region33
  $region32: #{_lambda_.10} parent=0 // pred_region
    _
  $region33: #{_lambda_.10} parent=0 // pred_fallthru
    _
  %v30 = vld [vmem:[%s0] sm:$0xff]
  %v31 = vld [vmem:[%s4] sm:$0x1]
  %v32 = vld [vmem:[%s5] sm:$0x1]
  %vm33 = vcmask 261120
  %v34 = vsel %vm33, %v30, 0.0
  %35 = vadd.xlane.f32.xlu0 %v34
  %v36 = vpop.xlane.xlu0 %35
  %v37 = vrcp.pop 32.0
  %v38 = vmul.f32 %v36, %v37
  %v39 = vsub.f32 %v30, %v38
  %v40 = vmul.f32 %v39, %v39
  %v41 = vsel %vm33, %v40, 0.0
  %42 = vadd.xlane.f32.xlu0 %v41
  %v43 = vpop.xlane.xlu0 %42
  %v44 = vmul.f32 %v43, %v37
  %v45 = vadd.f32 %v44, 1e-06
  %v46 = vrsqrt.pop %v45
  %v47 = vmul.f32 %v39, %v46
  %v49 = vlaneseq
  %v50 = vshrl.u32 %v49, 7
  %v51 = vsub.s32 0, %v50
  %v52 = vrot.slane %v31, %v51
  %v54 = vmul.f32 %v47, %v52
  %v56 = vlaneseq
  %v57 = vshrl.u32 %v56, 7
  %v58 = vsub.s32 0, %v57
  %v59 = vrot.slane %v32, %v58
  %v61 = vadd.f32 %v54, %v59
  %v62 = vpack.c.bf16 %v61, %v61
  %v63 = vld [vmem:[%s6] sm:$0xf]
  %v64 = vld [vmem:[%s6 + $0x4] sm:$0xf]
  %v65 = vld [vmem:[%s6 + $0x8] sm:$0xf]
  %v66 = vld [vmem:[%s6 + $0xc] sm:$0xf]
  %v67 = vld [vmem:[%s1] sm:$0xff]
  %v68 = vsel %vm33, %v67, 0.0
  %69 = vadd.xlane.f32.xlu0 %v68
  %v70 = vpop.xlane.xlu0 %69
  %v71 = vmul.f32 %v70, %v37
  %v72 = vsub.f32 %v67, %v71
  %v73 = vmul.f32 %v72, %v72
  %v74 = vsel %vm33, %v73, 0.0
  %75 = vadd.xlane.f32.xlu0 %v74
  %v76 = vpop.xlane.xlu0 %75
  %v77 = vmul.f32 %v76, %v37
  %v78 = vadd.f32 %v77, 1e-06
  %v79 = vrsqrt.pop %v78
  %v80 = vmul.f32 %v72, %v79
  %v81 = vmul.f32 %v80, %v52
  %v82 = vadd.f32 %v81, %v59
  %v83 = vpack.c.bf16 %v82, %v82
  %s84 = scalar_lea.vmem %s6, 16
  %v85 = vld [vmem:[%s84] sm:$0xf]
  %v86 = vld [vmem:[%s84 + $0x4] sm:$0xf]
  %v87 = vld [vmem:[%s84 + $0x8] sm:$0xf]
  %v88 = vld [vmem:[%s84 + $0xc] sm:$0xf]
  %v93 = vunpack.c.l.b16 %v85
  %v94 = vunpack.c.l.b16 %v86
  %v95 = vunpack.c.l.b16 %v87
  %v96 = vunpack.c.l.b16 %v88
  %v97 = vpack.c.b16 %v94, %v93
  %v98 = vpack.c.b16 %v96, %v95
  %v102 = vsel %vm33, %v83, 0
  %104 = vmatprep.subr.bf16.mxu0 0
  %105 = vmatpush1.bf16.msra.mxu0 %v97
  %106 = vmatprep.subr.bf16.mxu0 0
  %107 = vmatpush1.bf16.msra.mxu0 %v98
  %108 = vmatprep.subr.bf16.mxu0 0
  %109 = vmatpush1.bf16.msra.mxu0 0
  %110 = vmatprep.subr.bf16.mxu0 0
  %111 = vmatpush1.bf16.msra.mxu0 0
  %112 = vmatprep.subr.bf16.mxu0 0
  %113 = vmatpush1.bf16.msra.mxu0 0
  %114 = vmatprep.subr.bf16.mxu0 0
  %115 = vmatpush1.bf16.msra.mxu0 0
  %116 = vmatprep.subr.bf16.mxu0 0
  %117 = vmatpush1.bf16.msra.mxu0 0
  %118 = vmatprep.subr.bf16.mxu0 0
  %119 = vmatpush1.bf16.msra.mxu0 0
  %120 = vmatprep.subr.bf16.mxu0 0
  %121 = vmatpush1.bf16.msra.mxu0 0
  %122 = vmatprep.subr.bf16.mxu0 0
  %123 = vmatpush1.bf16.msra.mxu0 0
  %124 = vmatprep.subr.bf16.mxu0 0
  %125 = vmatpush1.bf16.msra.mxu0 0
  %126 = vmatprep.subr.bf16.mxu0 0
  %127 = vmatpush1.bf16.msra.mxu0 0
  %128 = vmatprep.subr.bf16.mxu0 0
  %129 = vmatpush1.bf16.msra.mxu0 0
  %130 = vmatprep.subr.bf16.mxu0 0
  %131 = vmatpush1.bf16.msra.mxu0 0
  %132 = vmatprep.subr.bf16.mxu0 0
  %133 = vmatpush1.bf16.msra.mxu0 0
  %134 = vmatprep.subr.bf16.mxu0 0
  %135 = vmatpush1.bf16.msra.mxu0 0
  %136 = vmatprep.mubr.bf16.mxu0 0
  %137 = vmatmul.mubr.bf16.gmra.mrb[0].mxu0 %v102
  %v138 = vpop.f32.mrb[0].mxu0
  %v139 = vadd.f32 0.0, %v138
  %v140 = vpop.f32.mrb[0].mxu0
  %v141 = vpop.f32.mrb[0].mxu0
  %v142 = vpop.f32.mrb[0].mxu0
  %143 = vdwg.mxu0
  %v148 = vunpack.c.l.b16 %v63
  %v149 = vunpack.c.l.b16 %v64
  %v150 = vunpack.c.l.b16 %v65
  %v151 = vunpack.c.l.b16 %v66
  %v152 = vpack.c.b16 %v149, %v148
  %v153 = vpack.c.b16 %v151, %v150
  %v157 = vsel %vm33, %v62, 0
  %159 = vmatprep.subr.bf16.mxu0 0
  %160 = vmatpush1.bf16.msra.mxu0 %v152
  %161 = vmatprep.subr.bf16.mxu0 0
  %162 = vmatpush1.bf16.msra.mxu0 %v153
  %163 = vmatprep.subr.bf16.mxu0 0
  %164 = vmatpush1.bf16.msra.mxu0 0
  %165 = vmatprep.subr.bf16.mxu0 0
  %166 = vmatpush1.bf16.msra.mxu0 0
  %167 = vmatprep.subr.bf16.mxu0 0
  %168 = vmatpush1.bf16.msra.mxu0 0
  %169 = vmatprep.subr.bf16.mxu0 0
  %170 = vmatpush1.bf16.msra.mxu0 0
  %171 = vmatprep.subr.bf16.mxu0 0
  %172 = vmatpush1.bf16.msra.mxu0 0
  %173 = vmatprep.subr.bf16.mxu0 0
  %174 = vmatpush1.bf16.msra.mxu0 0
  %175 = vmatprep.subr.bf16.mxu0 0
  %176 = vmatpush1.bf16.msra.mxu0 0
  %177 = vmatprep.subr.bf16.mxu0 0
  %178 = vmatpush1.bf16.msra.mxu0 0
  %179 = vmatprep.subr.bf16.mxu0 0
  %180 = vmatpush1.bf16.msra.mxu0 0
  %181 = vmatprep.subr.bf16.mxu0 0
  %182 = vmatpush1.bf16.msra.mxu0 0
  %183 = vmatprep.subr.bf16.mxu0 0
  %184 = vmatpush1.bf16.msra.mxu0 0
  %185 = vmatprep.subr.bf16.mxu0 0
  %186 = vmatpush1.bf16.msra.mxu0 0
  %187 = vmatprep.subr.bf16.mxu0 0
  %188 = vmatpush1.bf16.msra.mxu0 0
  %189 = vmatprep.subr.bf16.mxu0 0
  %190 = vmatpush1.bf16.msra.mxu0 0
  %191 = vmatprep.mubr.bf16.mxu0 0
  %192 = vmatmul.mubr.bf16.gmra.mrb[0].mxu0 %v157
  %v193 = vpop.f32.mrb[0].mxu0
  %v194 = vadd.f32 %v139, %v193
  %v195 = vpop.f32.mrb[0].mxu0
  %v196 = vpop.f32.mrb[0].mxu0
  %v197 = vpop.f32.mrb[0].mxu0
  %198 = vdwg.mxu0
  %v199 = vld [vmem:[%s2] sm:$0xff]
  %v200 = vsel %vm33, %v199, 0.0
  %201 = vadd.xlane.f32.xlu0 %v200
  %v202 = vpop.xlane.xlu0 %201
  %v203 = vmul.f32 %v202, %v37
  %v204 = vsub.f32 %v199, %v203
  %v205 = vmul.f32 %v204, %v204
  %v206 = vsel %vm33, %v205, 0.0
  %207 = vadd.xlane.f32.xlu0 %v206
  %v208 = vpop.xlane.xlu0 %207
  %v209 = vmul.f32 %v208, %v37
  %v210 = vadd.f32 %v209, 1e-06
  %v211 = vrsqrt.pop %v210
  %v212 = vmul.f32 %v204, %v211
  %v213 = vmul.f32 %v212, %v52
  %v214 = vadd.f32 %v213, %v59
  %v215 = vpack.c.bf16 %v214, %v214
  %s216 = scalar_lea.vmem %s6, 32
  %v217 = vld [vmem:[%s216] sm:$0xf]
  %v218 = vld [vmem:[%s216 + $0x4] sm:$0xf]
  %v219 = vld [vmem:[%s216 + $0x8] sm:$0xf]
  %v220 = vld [vmem:[%s216 + $0xc] sm:$0xf]
  %v225 = vunpack.c.l.b16 %v217
  %v226 = vunpack.c.l.b16 %v218
  %v227 = vunpack.c.l.b16 %v219
  %v228 = vunpack.c.l.b16 %v220
  %v229 = vpack.c.b16 %v226, %v225
  %v230 = vpack.c.b16 %v228, %v227
  %v234 = vsel %vm33, %v215, 0
  %236 = vmatprep.subr.bf16.mxu0 0
  %237 = vmatpush1.bf16.msra.mxu0 %v229
  %238 = vmatprep.subr.bf16.mxu0 0
  %239 = vmatpush1.bf16.msra.mxu0 %v230
  %240 = vmatprep.subr.bf16.mxu0 0
  %241 = vmatpush1.bf16.msra.mxu0 0
  %242 = vmatprep.subr.bf16.mxu0 0
  %243 = vmatpush1.bf16.msra.mxu0 0
  %244 = vmatprep.subr.bf16.mxu0 0
  %245 = vmatpush1.bf16.msra.mxu0 0
  %246 = vmatprep.subr.bf16.mxu0 0
  %247 = vmatpush1.bf16.msra.mxu0 0
  %248 = vmatprep.subr.bf16.mxu0 0
  %249 = vmatpush1.bf16.msra.mxu0 0
  %250 = vmatprep.subr.bf16.mxu0 0
  %251 = vmatpush1.bf16.msra.mxu0 0
  %252 = vmatprep.subr.bf16.mxu0 0
  %253 = vmatpush1.bf16.msra.mxu0 0
  %254 = vmatprep.subr.bf16.mxu0 0
  %255 = vmatpush1.bf16.msra.mxu0 0
  %256 = vmatprep.subr.bf16.mxu0 0
  %257 = vmatpush1.bf16.msra.mxu0 0
  %258 = vmatprep.subr.bf16.mxu0 0
  %259 = vmatpush1.bf16.msra.mxu0 0
  %260 = vmatprep.subr.bf16.mxu0 0
  %261 = vmatpush1.bf16.msra.mxu0 0
  %262 = vmatprep.subr.bf16.mxu0 0
  %263 = vmatpush1.bf16.msra.mxu0 0
  %264 = vmatprep.subr.bf16.mxu0 0
  %265 = vmatpush1.bf16.msra.mxu0 0
  %266 = vmatprep.subr.bf16.mxu0 0
  %267 = vmatpush1.bf16.msra.mxu0 0
  %268 = vmatprep.mubr.bf16.mxu0 0
  %269 = vmatmul.mubr.bf16.gmra.mrb[0].mxu0 %v234
  %v270 = vpop.f32.mrb[0].mxu0
  %v271 = vadd.f32 0.0, %v270
  %v272 = vpop.f32.mrb[0].mxu0
  %v273 = vpop.f32.mrb[0].mxu0
  %v274 = vpop.f32.mrb[0].mxu0
  %275 = vdwg.mxu0
  %v276 = vadd.f32 %v194, %v271
  %v277 = vld [vmem:[%s3] sm:$0xff]
  %v278 = vsel %vm33, %v277, 0.0
  %279 = vadd.xlane.f32.xlu0 %v278
  %v280 = vpop.xlane.xlu0 %279
  %v281 = vmul.f32 %v280, %v37
  %v282 = vsub.f32 %v277, %v281
  %v283 = vmul.f32 %v282, %v282
  %v284 = vsel %vm33, %v283, 0.0
  %285 = vadd.xlane.f32.xlu0 %v284
  %v286 = vpop.xlane.xlu0 %285
  %v287 = vmul.f32 %v286, %v37
  %v288 = vadd.f32 %v287, 1e-06
  %v289 = vrsqrt.pop %v288
  %v290 = vmul.f32 %v282, %v289
  %v291 = vmul.f32 %v290, %v52
  %v292 = vadd.f32 %v291, %v59
  %v293 = vpack.c.bf16 %v292, %v292
  %s294 = scalar_lea.vmem %s6, 48
  %v295 = vld [vmem:[%s294] sm:$0xf]
  %v296 = vld [vmem:[%s294 + $0x4] sm:$0xf]
  %v297 = vld [vmem:[%s294 + $0x8] sm:$0xf]
  %v298 = vld [vmem:[%s294 + $0xc] sm:$0xf]
  %v303 = vunpack.c.l.b16 %v295
  %v304 = vunpack.c.l.b16 %v296
  %v305 = vunpack.c.l.b16 %v297
  %v306 = vunpack.c.l.b16 %v298
  %v307 = vpack.c.b16 %v304, %v303
  %v308 = vpack.c.b16 %v306, %v305
  %v312 = vsel %vm33, %v293, 0
  %314 = vmatprep.subr.bf16.mxu0 0
  %315 = vmatpush1.bf16.msra.mxu0 %v307
  %316 = vmatprep.subr.bf16.mxu0 0
  %317 = vmatpush1.bf16.msra.mxu0 %v308
  %318 = vmatprep.subr.bf16.mxu0 0
  %319 = vmatpush1.bf16.msra.mxu0 0
  %320 = vmatprep.subr.bf16.mxu0 0
  %321 = vmatpush1.bf16.msra.mxu0 0
  %322 = vmatprep.subr.bf16.mxu0 0
  %323 = vmatpush1.bf16.msra.mxu0 0
  %324 = vmatprep.subr.bf16.mxu0 0
  %325 = vmatpush1.bf16.msra.mxu0 0
  %326 = vmatprep.subr.bf16.mxu0 0
  %327 = vmatpush1.bf16.msra.mxu0 0
  %328 = vmatprep.subr.bf16.mxu0 0
  %329 = vmatpush1.bf16.msra.mxu0 0
  %330 = vmatprep.subr.bf16.mxu0 0
  %331 = vmatpush1.bf16.msra.mxu0 0
  %332 = vmatprep.subr.bf16.mxu0 0
  %333 = vmatpush1.bf16.msra.mxu0 0
  %334 = vmatprep.subr.bf16.mxu0 0
  %335 = vmatpush1.bf16.msra.mxu0 0
  %336 = vmatprep.subr.bf16.mxu0 0
  %337 = vmatpush1.bf16.msra.mxu0 0
  %338 = vmatprep.subr.bf16.mxu0 0
  %339 = vmatpush1.bf16.msra.mxu0 0
  %340 = vmatprep.subr.bf16.mxu0 0
  %341 = vmatpush1.bf16.msra.mxu0 0
  %342 = vmatprep.subr.bf16.mxu0 0
  %343 = vmatpush1.bf16.msra.mxu0 0
  %344 = vmatprep.subr.bf16.mxu0 0
  %345 = vmatpush1.bf16.msra.mxu0 0
  %346 = vmatprep.mubr.bf16.mxu0 0
  %347 = vmatmul.mubr.bf16.gmra.mrb[0].mxu0 %v312
  %v348 = vpop.f32.mrb[0].mxu0
  %v349 = vadd.f32 0.0, %v348
  %v350 = vpop.f32.mrb[0].mxu0
  %v351 = vpop.f32.mrb[0].mxu0
  %v352 = vpop.f32.mrb[0].mxu0
  %353 = vdwg.mxu0
  %v354 = vadd.f32 %v276, %v349
  %v355 = vld [vmem:[%s7] sm:$0x1]
  %v357 = vlaneseq
  %v358 = vshrl.u32 %v357, 7
  %v359 = vsub.s32 0, %v358
  %v360 = vrot.slane %v355, %v359
  %v362 = vadd.f32 %v354, %v360
  %vm363 = vcmask 523264
  %364 = vst.msk [vmem:[%s8] sm:$0xff] %vm363, %v362
  // Predicated region
  $region34: #{_lambda_.10} parent=0 // pred_check
    _
  $region35: #{_lambda_.10} parent=0 // pred_check_branch
    %366 = sbr.rel (0) target = $region37
  $region36: #{_lambda_.10} parent=0 // pred_region
    _
  $region37: #{_lambda_.10} parent=0 // pred_fallthru
    _
  // Predicated region
  $region38: #{_lambda_.10} parent=0 // pred_check
    _
  $region39: #{_lambda_.10} parent=0 // pred_check_branch
    %368 = sbr.rel (0) target = $region41
  $region40: #{_lambda_.10} parent=0 // pred_region
    _
  $region41: #{_lambda_.10} parent=0 // pred_fallthru
    _

// kernel: _lambda_.13
$region0: #{_lambda_.13}
  #allocation0 [shape = 'u32[]', space=smem, size = 0x4, offset = 0x4, fixed_abs, tag = 'smem constant byte address 0x4 - core index']
  #allocation1 [shape = 'u32[144,128]{1,0:T(1,128)}', space=vmem, size = 0x12000, scoped, tag = 'internal scratch']
  %s0 = inlined_call_operand.vmem [shape: f32[2,4,64], index: 0, kind: input, shape index: {}]
  %s1 = inlined_call_operand.vmem [shape: f32[1,64], index: 1, kind: input, shape index: {}]
  %s2 = inlined_call_operand.vmem [shape: f32[1,64], index: 2, kind: input, shape index: {}]
  %s3 = inlined_call_operand.vmem [shape: f32[64,10], index: 3, kind: input, shape index: {}]
  %s4 = inlined_call_operand.vmem [shape: f32[1,10], index: 4, kind: input, shape index: {}]
  %s5 = inlined_call_operand.hbm [shape: f32[2,10], index: 5, kind: output, shape index: {}]
  %s6 = sld [smem:[#allocation0]]
  $region30: #{_lambda_.13} parent=0
    _
  %s8 = ssub.s32 1, %s6
  %s9 = scalar_select 0, %s8, %s6
  $region1: #{_lambda_.13} parent=0
    #allocation2 [shape = 'u8[1024]{0}', space=vmem, size = 0x400, scoped, tag = 'output window, operand 0, single buffered']
    #allocation3 [shape = 's32[1]{0}', space=sflag, size = 0x4, scoped, tag = 'scoped memory for _lambda_.13']
    %10 = vsyncpa [#allocation3], 0
    // Predicated region
    $region2: #{_lambda_.13} parent=1 // pred_check
      _
    $region3: #{_lambda_.13} parent=1 // pred_check_branch
      %12 = sbr.rel (0) target = $region5
    $region4: #{_lambda_.13} parent=1 // pred_region
      _
    $region5: #{_lambda_.13} parent=1 // pred_fallthru
      _
    // Predicated region
    $region6: #{_lambda_.13} parent=1 // pred_check
      _
    $region7: #{_lambda_.13} parent=1 // pred_check_branch
      %14 = sbr.rel (0) target = $region9
    $region8: #{_lambda_.13} parent=1 // pred_region
      _
    $region9: #{_lambda_.13} parent=1 // pred_fallthru
      _
    // Predicated region
    $region10: #{_lambda_.13} parent=1 // pred_check
      _
    $region11: #{_lambda_.13} parent=1 // pred_check_branch
      %16 = sbr.rel (0) target = $region13
    $region12: #{_lambda_.13} parent=1 // pred_region
      _
    $region13: #{_lambda_.13} parent=1 // pred_fallthru
      _
    // Predicated region
    $region14: #{_lambda_.13} parent=1 // pred_check
      _
    $region15: #{_lambda_.13} parent=1 // pred_check_branch
      %18 = sbr.rel (0) target = $region17
    $region16: #{_lambda_.13} parent=1 // pred_region
      _
    $region17: #{_lambda_.13} parent=1 // pred_fallthru
      _
    // Predicated region
    $region18: #{_lambda_.13} parent=1 // pred_check
      _
    $region19: #{_lambda_.13} parent=1 // pred_check_branch
      %20 = sbr.rel (0) target = $region21
    $region20: #{_lambda_.13} parent=1 // pred_region
      _
    $region21: #{_lambda_.13} parent=1 // pred_fallthru
      _
    %v21 = vld [vmem:[%s0] sm:$0xf]
    %v22 = vld [vmem:[%s0 + $0x4] sm:$0xf]
    %vm23 = vcmask 519168
    %v24 = vsel %vm23, %v21, 0.0
    %v25 = vrot.slane %v24, 4
    %v26 = vadd.f32 %v24, %v25
    %v27 = vrot.slane %v26, 2
    %v28 = vadd.f32 %v26, %v27
    %v29 = vrot.slane %v28, 1
    %v30 = vadd.f32 %v28, %v29
    %v31 = vsel %vm23, %v22, 0.0
    %v32 = vrot.slane %v31, 4
    %v33 = vadd.f32 %v31, %v32
    %v34 = vrot.slane %v33, 2
    %v35 = vadd.f32 %v33, %v34
    %v36 = vrot.slane %v35, 1
    %v37 = vadd.f32 %v35, %v36
    %v38 = vrcp.pop 4.0
    %v39 = vmul.f32 %v30, %v38
    %v40 = vmul.f32 %v37, %v38
    %v41 = vld [vmem:[%s1] sm:$0x1]
    %v42 = vld [vmem:[%s2] sm:$0x1]
    %vm45 = vcmask 1041409
    %v46 = vsel %vm45, %v40, %v39
    %vm48 = vcmask 517120
    %v49 = vsel %vm48, %v46, 0.0
    %50 = vadd.xlane.f32.xlu0 %v49
    %v51 = vpop.xlane.xlu0 %50
    %v52 = vrcp.pop 64.0
    %v53 = vmul.f32 %v51, %v52
    %v55 = vrot.slane %v53, 1
    %v58 = vsub.f32 %v39, %v53
    %v59 = vsub.f32 %v40, %v55
    %v60 = vmul.f32 %v58, %v58
    %v61 = vmul.f32 %v59, %v59
    %v64 = vrot.slane %v61, 7
    %v65 = vsel %vm45, %v64, %v60
    %v67 = vsel %vm48, %v65, 0.0
    %68 = vadd.xlane.f32.xlu0 %v67
    %v69 = vpop.xlane.xlu0 %68
    %v70 = vmul.f32 %v69, %v52
    %v71 = vadd.f32 %v70, 1e-06
    %v72 = vrsqrt.pop %v71
    %v74 = vrot.slane %v72, 1
    %v77 = vmul.f32 %v58, %v72
    %v78 = vmul.f32 %v59, %v74
    %v80 = vlaneseq
    %v81 = vshrl.u32 %v80, 7
    %v82 = vsub.s32 0, %v81
    %v83 = vrot.slane %v41, %v82
    %v85 = vmul.f32 %v77, %v83
    %v86 = vmul.f32 %v78, %v83
    %v88 = vlaneseq
    %v89 = vshrl.u32 %v88, 7
    %v90 = vsub.s32 0, %v89
    %v91 = vrot.slane %v42, %v90
    %v93 = vadd.f32 %v85, %v91
    %v94 = vadd.f32 %v86, %v91
    %v95 = vld [vmem:[%s3] sm:$0xff]
    %v96 = vld [vmem:[%s3 + $0x8] sm:$0xff]
    %v97 = vld [vmem:[%s3 + $0x10] sm:$0xff]
    %v98 = vld [vmem:[%s3 + $0x18] sm:$0xff]
    %v99 = vld [vmem:[%s3 + $0x20] sm:$0xff]
    %v100 = vld [vmem:[%s3 + $0x28] sm:$0xff]
    %v101 = vld [vmem:[%s3 + $0x30] sm:$0xff]
    %v102 = vld [vmem:[%s3 + $0x38] sm:$0xff]
    %v103 = vld [vmem:[%s4] sm:$0x1]
    %v105 = vlaneseq
    %v106 = vshrl.u32 %v105, 7
    %v107 = vsub.s32 0, %v106
    %v108 = vrot.slane %v103, %v107
    %v112 = vrot.slane %v94, 7
    %v113 = vsel %vm45, %v112, %v93
    %vm114 = vcmask 523264
    %v115 = vsel %vm114, %v113, 0
    %117 = vmatprep.subr.mxu0 0.0
    %118 = vmatpush1.msra.mxu0 %v95
    %119 = vmatprep.subr.mxu0 0.0
    %120 = vmatpush1.msra.mxu0 %v96
    %121 = vmatprep.subr.mxu0 0.0
    %122 = vmatpush1.msra.mxu0 %v97
    %123 = vmatprep.subr.mxu0 0.0
    %124 = vmatpush1.msra.mxu0 %v98
    %125 = vmatprep.subr.mxu0 0.0
    %126 = vmatpush1.msra.mxu0 %v99
    %127 = vmatprep.subr.mxu0 0.0
    %128 = vmatpush1.msra.mxu0 %v100
    %129 = vmatprep.subr.mxu0 0.0
    %130 = vmatpush1.msra.mxu0 %v101
    %131 = vmatprep.subr.mxu0 0.0
    %132 = vmatpush1.msra.mxu0 %v102
    %133 = vmatprep.subr.mxu0 0.0
    %134 = vmatpush1.msra.mxu0 0.0
    %135 = vmatprep.subr.mxu0 0.0
    %136 = vmatpush1.msra.mxu0 0.0
    %137 = vmatprep.subr.mxu0 0.0
    %138 = vmatpush1.msra.mxu0 0.0
    %139 = vmatprep.subr.mxu0 0.0
    %140 = vmatpush1.msra.mxu0 0.0
    %141 = vmatprep.subr.mxu0 0.0
    %142 = vmatpush1.msra.mxu0 0.0
    %143 = vmatprep.subr.mxu0 0.0
    %144 = vmatpush1.msra.mxu0 0.0
    %145 = vmatprep.subr.mxu0 0.0
    %146 = vmatpush1.msra.mxu0 0.0
    %147 = vmatprep.subr.mxu0 0.0
    %148 = vmatpush1.msra.mxu0 0.0
    %149 = vmatprep.subr.mxu0 0.0
    %150 = vmatpush1.msra.mxu0 0.0
    %151 = vmatprep.subr.mxu0 0.0
    %152 = vmatpush1.msra.mxu0 0.0
    %153 = vmatprep.subr.mxu0 0.0
    %154 = vmatpush1.msra.mxu0 0.0
    %155 = vmatprep.subr.mxu0 0.0
    %156 = vmatpush1.msra.mxu0 0.0
    %157 = vmatprep.subr.mxu0 0.0
    %158 = vmatpush1.msra.mxu0 0.0
    %159 = vmatprep.subr.mxu0 0.0
    %160 = vmatpush1.msra.mxu0 0.0
    %161 = vmatprep.subr.mxu0 0.0
    %162 = vmatpush1.msra.mxu0 0.0
    %163 = vmatprep.subr.mxu0 0.0
    %164 = vmatpush1.msra.mxu0 0.0
    %165 = vmatprep.subr.mxu0 0.0
    %166 = vmatpush1.msra.mxu0 0.0
    %167 = vmatprep.subr.mxu0 0.0
    %168 = vmatpush1.msra.mxu0 0.0
    %169 = vmatprep.subr.mxu0 0.0
    %170 = vmatpush1.msra.mxu0 0.0
    %171 = vmatprep.subr.mxu0 0.0
    %172 = vmatpush1.msra.mxu0 0.0
    %173 = vmatprep.subr.mxu0 0.0
    %174 = vmatpush1.msra.mxu0 0.0
    %175 = vmatprep.subr.mxu0 0.0
    %176 = vmatpush1.msra.mxu0 0.0
    %177 = vmatprep.subr.mxu0 0.0
    %178 = vmatpush1.msra.mxu0 0.0
    %179 = vmatprep.subr.mxu0 0.0
    %180 = vmatpush1.msra.mxu0 0.0
    %181 = vmatprep.mubr.f32.mxu0 0.0
    %182 = vmatmul.mubr.f32.gmra.mrb[0].mxu0 %v115
    %v183 = vpop.f32.mrb[0].mxu0
    %v184 = vadd.f32 %v108, %v183
    %v185 = vpop.f32.mrb[0].mxu0
    %186 = vdwg.mxu0
    %vm187 = vcmask 74752
    %188 = vst.msk [vmem:[#allocation2] sm:$0x3] %vm187, %v184
    // Predicated region
    $region22: #{_lambda_.13} parent=1 // pred_check
      _
    $region23: #{_lambda_.13} parent=1 // pred_check_branch
      %190 = sbr.rel (0) target = $region25
    $region24: #{_lambda_.13} parent=1 // pred_region
      %s192 = ssub.s32 32, 32
      %193 = vsyncadd [#allocation3], %s192
      %s195 = sshll.u32 [#allocation2], 4
      %s196 = int_to_ptr.vmem [resolvable:$true] %s195
      %198 = dma.vmem_to_hbm [thread:$0]  %s196, 32, %s5, [#allocation3]
    $region25: #{_lambda_.13} parent=1 // pred_fallthru
      _
    // Predicated region
    $region26: #{_lambda_.13} parent=1 // pred_check
      _
    $region27: #{_lambda_.13} parent=1 // pred_check_branch
      %200 = sbr.rel (0) target = $region29
    $region28: #{_lambda_.13} parent=1 // pred_region
      %201 = dma.done [#allocation3], 32
    $region29: #{_lambda_.13} parent=1 // pred_fallthru
      _
    %202 = vsyncpa [#allocation3], 1

// kernel: _lambda_.8
$region0: #{_lambda_.8}
  #allocation0 [shape = 'u32[]', space=smem, size = 0x4, offset = 0x4, fixed_abs, tag = 'smem constant byte address 0x4 - core index']
  #allocation1 [shape = 'u32[144,128]{1,0:T(1,128)}', space=vmem, size = 0x12000, scoped, tag = 'internal scratch']
  %s0 = inlined_call_operand.vmem [shape: f32[2,16,32], index: 0, kind: input, shape index: {}]
  %s1 = inlined_call_operand.vmem [shape: f32[49,16,1], index: 1, kind: input, shape index: {}]
  %s2 = inlined_call_operand.vmem [shape: f32[49,32], index: 2, kind: input, shape index: {}]
  %s3 = inlined_call_operand.vmem [shape: f32[1,32], index: 3, kind: input, shape index: {}, may-alias: {3,5,9}]
  %s4 = inlined_call_operand.vmem [shape: f32[1,32], index: 4, kind: input, shape index: {}]
  %s5 = inlined_call_operand.vmem [shape: f32[1,32], index: 5, kind: input, shape index: {}, may-alias: {3,5,9}]
  %s6 = inlined_call_operand.vmem [shape: bf16[32,128], index: 6, kind: input, shape index: {}]
  %s7 = inlined_call_operand.vmem [shape: f32[1,128], index: 7, kind: input, shape index: {}]
  %s8 = inlined_call_operand.vmem [shape: bf16[128,32], index: 8, kind: input, shape index: {}]
  %s9 = inlined_call_operand.vmem [shape: f32[1,32], index: 9, kind: input, shape index: {}, may-alias: {3,5,9}]
  %s10 = inlined_call_operand.vmem [shape: f32[1,32], index: 10, kind: input, shape index: {}]
  %s11 = inlined_call_operand.vmem [shape: f32[2,16,32], index: 11, kind: output, shape index: {}]
  %s12 = sld [smem:[#allocation0]]
  $region77: #{_lambda_.8} parent=0
    _
  %s14 = ssub.s32 1, %s12
  %s15 = scalar_select 0, %s14, %s12
  loop: start=0, step=1, limit=4
  $region2: #{_lambda_.8} parent=0 // loop_pre_header
    _
  $region3: #{_lambda_.8} parent=0 // loop_header
    %s17 = sphi 0, %s21
    %p18 = scmp.ge.s32.totalorder %s17, 4
    %s27 = sphi 0, %s29
    %s30 = sphi 0, %s27
    %s31 = sphi 0, %s30
    %s47 = sphi 0, %s31
    %s51 = sphi 0, %s51
    %s53 = sphi 0, %s51
    %s54 = sphi 0, %s53
    %s68 = sphi 0, %s54
    %s72 = sphi 0, %s72
    %s74 = sphi 0, %s72
    %s75 = sphi 0, %s74
    %s89 = sphi 0, %s75
    %s93 = sphi 0, %s93
    %s95 = sphi 0, %s93
    %s96 = sphi 0, %s95
    %s110 = sphi 0, %s96
    %s114 = sphi 0, %s114
    %s116 = sphi 0, %s114
    %s117 = sphi 0, %s116
    %s131 = sphi 0, %s117
    %s135 = sphi 0, %s135
    %s137 = sphi 0, %s135
    %s138 = sphi 0, %s137
    %s152 = sphi 0, %s138
    %s156 = sphi 0, %s156
    %s158 = sphi 0, %s156
    %s159 = sphi 0, %s158
    %s173 = sphi 0, %s159
    %s177 = sphi 0, %s177
    %s179 = sphi 0, %s177
    %s180 = sphi 0, %s179
    %s194 = sphi 0, %s180
    %s198 = sphi 0, %s198
    %s200 = sphi 0, %s198
    %s201 = sphi 0, %s200
    %s215 = sphi 0, %s201
    %s219 = sphi 0, %s219
    %s221 = sphi 0, %s219
    %s222 = sphi 0, %s221
    %s236 = sphi 0, %s222
    %s240 = sphi 0, %s240
    %s242 = sphi 0, %s240
    %s243 = sphi 0, %s242
    %s257 = sphi 0, %s243
    %s263 = sphi 0, %s265
    %s266 = sphi 0, %s263
    %s267 = sphi 0, %s266
    %s283 = sphi 0, %s267
  $region4: #{_lambda_.8} parent=0 // loop_header_branch
    %20 = sbr.rel (%p18) target = $region8
  $region5: #{_lambda_.8} parent=0 // loop_body
    %s22 = ssub.s32 %s17, 1
    %s23 = ssub.s32 %s17, 2
    %s24 = sadd.s32 %s17, 1
    %s25 = ssub.s32 %s17, %s24
    %p26 = scmp.eq.s32.totalorder %s25, 0
    %s28 = sadd.s32 %s27, 1
    %s29 = scalar_select %p26, %s27, %s28
    %p32 = pneg %p26
    %p33 = scmp.eq.s32.totalorder %s17, 1
    %p34 = por %p32, %p33
    %p35 = scmp.ne.s32.totalorder %s27, %s30
    %p36 = scmp.eq.s32.totalorder %s17, 0
    %p37 = por %p35, %p36
    %p38 = scmp.ne.s32.totalorder %s27, %s30
    %p39 = scmp.eq.s32.totalorder %s22, 1
    %p40 = por %p38, %p39
    %p41 = scmp.ne.s32.totalorder %s30, %s31
    %p42 = scmp.eq.s32.totalorder %s22, 0
    %p43 = por %p41, %p42
    %p44 = scmp.ne.s32.totalorder %s30, %s31
    %p45 = scmp.eq.s32.totalorder %s23, 1
    %p46 = por %p44, %p45
    %p48 = scmp.ne.s32.totalorder %s31, %s47
    %p49 = scmp.eq.s32.totalorder %s23, 0
    %p50 = por %p48, %p49
    %s52 = sadd.s32 %s51, 1
    %p55 = scmp.eq.s32.totalorder %s17, 1
    %p56 = scmp.ne.s32.totalorder %s51, %s53
    %p57 = scmp.eq.s32.totalorder %s17, 0
    %p58 = por %p56, %p57
    %p59 = scmp.ne.s32.totalorder %s51, %s53
    %p60 = scmp.eq.s32.totalorder %s22, 1
    %p61 = por %p59, %p60
    %p62 = scmp.ne.s32.totalorder %s53, %s54
    %p63 = scmp.eq.s32.totalorder %s22, 0
    %p64 = por %p62, %p63
    %p65 = scmp.ne.s32.totalorder %s53, %s54
    %p66 = scmp.eq.s32.totalorder %s23, 1
    %p67 = por %p65, %p66
    %p69 = scmp.ne.s32.totalorder %s54, %s68
    %p70 = scmp.eq.s32.totalorder %s23, 0
    %p71 = por %p69, %p70
    %s73 = sadd.s32 %s72, 1
    %p76 = scmp.eq.s32.totalorder %s17, 1
    %p77 = scmp.ne.s32.totalorder %s72, %s74
    %p78 = scmp.eq.s32.totalorder %s17, 0
    %p79 = por %p77, %p78
    %p80 = scmp.ne.s32.totalorder %s72, %s74
    %p81 = scmp.eq.s32.totalorder %s22, 1
    %p82 = por %p80, %p81
    %p83 = scmp.ne.s32.totalorder %s74, %s75
    %p84 = scmp.eq.s32.totalorder %s22, 0
    %p85 = por %p83, %p84
    %p86 = scmp.ne.s32.totalorder %s74, %s75
    %p87 = scmp.eq.s32.totalorder %s23, 1
    %p88 = por %p86, %p87
    %p90 = scmp.ne.s32.totalorder %s75, %s89
    %p91 = scmp.eq.s32.totalorder %s23, 0
    %p92 = por %p90, %p91
    %s94 = sadd.s32 %s93, 1
    %p97 = scmp.eq.s32.totalorder %s17, 1
    %p98 = scmp.ne.s32.totalorder %s93, %s95
    %p99 = scmp.eq.s32.totalorder %s17, 0
    %p100 = por %p98, %p99
    %p101 = scmp.ne.s32.totalorder %s93, %s95
    %p102 = scmp.eq.s32.totalorder %s22, 1
    %p103 = por %p101, %p102
    %p104 = scmp.ne.s32.totalorder %s95, %s96
    %p105 = scmp.eq.s32.totalorder %s22, 0
    %p106 = por %p104, %p105
    %p107 = scmp.ne.s32.totalorder %s95, %s96
    %p108 = scmp.eq.s32.totalorder %s23, 1
    %p109 = por %p107, %p108
    %p111 = scmp.ne.s32.totalorder %s96, %s110
    %p112 = scmp.eq.s32.totalorder %s23, 0
    %p113 = por %p111, %p112
    %s115 = sadd.s32 %s114, 1
    %p118 = scmp.eq.s32.totalorder %s17, 1
    %p119 = scmp.ne.s32.totalorder %s114, %s116
    %p120 = scmp.eq.s32.totalorder %s17, 0
    %p121 = por %p119, %p120
    %p122 = scmp.ne.s32.totalorder %s114, %s116
    %p123 = scmp.eq.s32.totalorder %s22, 1
    %p124 = por %p122, %p123
    %p125 = scmp.ne.s32.totalorder %s116, %s117
    %p126 = scmp.eq.s32.totalorder %s22, 0
    %p127 = por %p125, %p126
    %p128 = scmp.ne.s32.totalorder %s116, %s117
    %p129 = scmp.eq.s32.totalorder %s23, 1
    %p130 = por %p128, %p129
    %p132 = scmp.ne.s32.totalorder %s117, %s131
    %p133 = scmp.eq.s32.totalorder %s23, 0
    %p134 = por %p132, %p133
    %s136 = sadd.s32 %s135, 1
    %p139 = scmp.eq.s32.totalorder %s17, 1
    %p140 = scmp.ne.s32.totalorder %s135, %s137
    %p141 = scmp.eq.s32.totalorder %s17, 0
    %p142 = por %p140, %p141
    %p143 = scmp.ne.s32.totalorder %s135, %s137
    %p144 = scmp.eq.s32.totalorder %s22, 1
    %p145 = por %p143, %p144
    %p146 = scmp.ne.s32.totalorder %s137, %s138
    %p147 = scmp.eq.s32.totalorder %s22, 0
    %p148 = por %p146, %p147
    %p149 = scmp.ne.s32.totalorder %s137, %s138
    %p150 = scmp.eq.s32.totalorder %s23, 1
    %p151 = por %p149, %p150
    %p153 = scmp.ne.s32.totalorder %s138, %s152
    %p154 = scmp.eq.s32.totalorder %s23, 0
    %p155 = por %p153, %p154
    %s157 = sadd.s32 %s156, 1
    %p160 = scmp.eq.s32.totalorder %s17, 1
    %p161 = scmp.ne.s32.totalorder %s156, %s158
    %p162 = scmp.eq.s32.totalorder %s17, 0
    %p163 = por %p161, %p162
    %p164 = scmp.ne.s32.totalorder %s156, %s158
    %p165 = scmp.eq.s32.totalorder %s22, 1
    %p166 = por %p164, %p165
    %p167 = scmp.ne.s32.totalorder %s158, %s159
    %p168 = scmp.eq.s32.totalorder %s22, 0
    %p169 = por %p167, %p168
    %p170 = scmp.ne.s32.totalorder %s158, %s159
    %p171 = scmp.eq.s32.totalorder %s23, 1
    %p172 = por %p170, %p171
    %p174 = scmp.ne.s32.totalorder %s159, %s173
    %p175 = scmp.eq.s32.totalorder %s23, 0
    %p176 = por %p174, %p175
    %s178 = sadd.s32 %s177, 1
    %p181 = scmp.eq.s32.totalorder %s17, 1
    %p182 = scmp.ne.s32.totalorder %s177, %s179
    %p183 = scmp.eq.s32.totalorder %s17, 0
    %p184 = por %p182, %p183
    %p185 = scmp.ne.s32.totalorder %s177, %s179
    %p186 = scmp.eq.s32.totalorder %s22, 1
    %p187 = por %p185, %p186
    %p188 = scmp.ne.s32.totalorder %s179, %s180
    %p189 = scmp.eq.s32.totalorder %s22, 0
    %p190 = por %p188, %p189
    %p191 = scmp.ne.s32.totalorder %s179, %s180
    %p192 = scmp.eq.s32.totalorder %s23, 1
    %p193 = por %p191, %p192
    %p195 = scmp.ne.s32.totalorder %s180, %s194
    %p196 = scmp.eq.s32.totalorder %s23, 0
    %p197 = por %p195, %p196
    %s199 = sadd.s32 %s198, 1
    %p202 = scmp.eq.s32.totalorder %s17, 1
    %p203 = scmp.ne.s32.totalorder %s198, %s200
    %p204 = scmp.eq.s32.totalorder %s17, 0
    %p205 = por %p203, %p204
    %p206 = scmp.ne.s32.totalorder %s198, %s200
    %p207 = scmp.eq.s32.totalorder %s22, 1
    %p208 = por %p206, %p207
    %p209 = scmp.ne.s32.totalorder %s200, %s201
    %p210 = scmp.eq.s32.totalorder %s22, 0
    %p211 = por %p209, %p210
    %p212 = scmp.ne.s32.totalorder %s200, %s201
    %p213 = scmp.eq.s32.totalorder %s23, 1
    %p214 = por %p212, %p213
    %p216 = scmp.ne.s32.totalorder %s201, %s215
    %p217 = scmp.eq.s32.totalorder %s23, 0
    %p218 = por %p216, %p217
    %s220 = sadd.s32 %s219, 1
    %p223 = scmp.eq.s32.totalorder %s17, 1
    %p224 = scmp.ne.s32.totalorder %s219, %s221
    %p225 = scmp.eq.s32.totalorder %s17, 0
    %p226 = por %p224, %p225
    %p227 = scmp.ne.s32.totalorder %s219, %s221
    %p228 = scmp.eq.s32.totalorder %s22, 1
    %p229 = por %p227, %p228
    %p230 = scmp.ne.s32.totalorder %s221, %s222
    %p231 = scmp.eq.s32.totalorder %s22, 0
    %p232 = por %p230, %p231
    %p233 = scmp.ne.s32.totalorder %s221, %s222
    %p234 = scmp.eq.s32.totalorder %s23, 1
    %p235 = por %p233, %p234
    %p237 = scmp.ne.s32.totalorder %s222, %s236
    %p238 = scmp.eq.s32.totalorder %s23, 0
    %p239 = por %p237, %p238
    %s241 = sadd.s32 %s240, 1
    %p244 = scmp.eq.s32.totalorder %s17, 1
    %p245 = scmp.ne.s32.totalorder %s240, %s242
    %p246 = scmp.eq.s32.totalorder %s17, 0
    %p247 = por %p245, %p246
    %p248 = scmp.ne.s32.totalorder %s240, %s242
    %p249 = scmp.eq.s32.totalorder %s22, 1
    %p250 = por %p248, %p249
    %p251 = scmp.ne.s32.totalorder %s242, %s243
    %p252 = scmp.eq.s32.totalorder %s22, 0
    %p253 = por %p251, %p252
    %p254 = scmp.ne.s32.totalorder %s242, %s243
    %p255 = scmp.eq.s32.totalorder %s23, 1
    %p256 = por %p254, %p255
    %p258 = scmp.ne.s32.totalorder %s243, %s257
    %p259 = scmp.eq.s32.totalorder %s23, 0
    %p260 = por %p258, %p259
    %s261 = ssub.s32 %s17, %s24
    %p262 = scmp.eq.s32.totalorder %s261, 0
    %s264 = sadd.s32 %s263, 1
    %s265 = scalar_select %p262, %s263, %s264
    %p268 = pneg %p262
    %p269 = scmp.eq.s32.totalorder %s17, 1
    %p270 = por %p268, %p269
    %p271 = scmp.ne.s32.totalorder %s263, %s266
    %p272 = scmp.eq.s32.totalorder %s17, 0
    %p273 = por %p271, %p272
    %p274 = scmp.ne.s32.totalorder %s263, %s266
    %p275 = scmp.eq.s32.totalorder %s22, 1
    %p276 = por %p274, %p275
    %p277 = scmp.ne.s32.totalorder %s266, %s267
    %p278 = scmp.eq.s32.totalorder %s22, 0
    %p279 = por %p277, %p278
    %p280 = scmp.ne.s32.totalorder %s266, %s267
    %p281 = scmp.eq.s32.totalorder %s23, 1
    %p282 = por %p280, %p281
    %p284 = scmp.ne.s32.totalorder %s267, %s283
    %p285 = scmp.eq.s32.totalorder %s23, 0
    %p286 = por %p284, %p285
    %p287 = scmp.le.s32.totalorder 1, %s17
    %p288 = scmp.lt.s32.totalorder %s17, 3
    %p289 = pnand %p287, %p288
    %p290 = pneg %p289
    // Predicated region
    $region9: #{_lambda_.8} parent=5 // pred_check
      _
    $region10: #{_lambda_.8} parent=5 // pred_check_branch
      %292 = sbr.rel (%p289) target = $region12
    $region11: #{_lambda_.8} parent=5 // pred_region
      %s293 = ssub.s32 %s17, 1
      // Predicated region
      $region13: #{_lambda_.8} parent=11 // pred_check
        %p294 = pneg %p64
      $region14: #{_lambda_.8} parent=11 // pred_check_branch
        %296 = sbr.rel (%p294) target = $region16
      $region15: #{_lambda_.8} parent=11 // pred_region
        _
      $region16: #{_lambda_.8} parent=11 // pred_fallthru
        _
      // Predicated region
      $region17: #{_lambda_.8} parent=11 // pred_check
        %p297 = pneg %p85
      $region18: #{_lambda_.8} parent=11 // pred_check_branch
        %299 = sbr.rel (%p297) target = $region20
      $region19: #{_lambda_.8} parent=11 // pred_region
        _
      $region20: #{_lambda_.8} parent=11 // pred_fallthru
        _
      // Predicated region
      $region21: #{_lambda_.8} parent=11 // pred_check
        %p300 = pneg %p106
      $region22: #{_lambda_.8} parent=11 // pred_check_branch
        %302 = sbr.rel (%p300) target = $region24
      $region23: #{_lambda_.8} parent=11 // pred_region
        _
      $region24: #{_lambda_.8} parent=11 // pred_fallthru
        _
      // Predicated region
      $region25: #{_lambda_.8} parent=11 // pred_check
        %p303 = pneg %p127
      $region26: #{_lambda_.8} parent=11 // pred_check_branch
        %305 = sbr.rel (%p303) target = $region28
      $region27: #{_lambda_.8} parent=11 // pred_region
        _
      $region28: #{_lambda_.8} parent=11 // pred_fallthru
        _
      // Predicated region
      $region29: #{_lambda_.8} parent=11 // pred_check
        %p306 = pneg %p148
      $region30: #{_lambda_.8} parent=11 // pred_check_branch
        %308 = sbr.rel (%p306) target = $region32
      $region31: #{_lambda_.8} parent=11 // pred_region
        _
      $region32: #{_lambda_.8} parent=11 // pred_fallthru
        _
      // Predicated region
      $region33: #{_lambda_.8} parent=11 // pred_check
        %p309 = pneg %p169
      $region34: #{_lambda_.8} parent=11 // pred_check_branch
        %311 = sbr.rel (%p309) target = $region36
      $region35: #{_lambda_.8} parent=11 // pred_region
        _
      $region36: #{_lambda_.8} parent=11 // pred_fallthru
        _
      // Predicated region
      $region37: #{_lambda_.8} parent=11 // pred_check
        %p312 = pneg %p190
      $region38: #{_lambda_.8} parent=11 // pred_check_branch
        %314 = sbr.rel (%p312) target = $region40
      $region39: #{_lambda_.8} parent=11 // pred_region
        _
      $region40: #{_lambda_.8} parent=11 // pred_fallthru
        _
      // Predicated region
      $region41: #{_lambda_.8} parent=11 // pred_check
        %p315 = pneg %p211
      $region42: #{_lambda_.8} parent=11 // pred_check_branch
        %317 = sbr.rel (%p315) target = $region44
      $region43: #{_lambda_.8} parent=11 // pred_region
        _
      $region44: #{_lambda_.8} parent=11 // pred_fallthru
        _
      // Predicated region
      $region45: #{_lambda_.8} parent=11 // pred_check
        %p318 = pneg %p232
      $region46: #{_lambda_.8} parent=11 // pred_check_branch
        %320 = sbr.rel (%p318) target = $region48
      $region47: #{_lambda_.8} parent=11 // pred_region
        _
      $region48: #{_lambda_.8} parent=11 // pred_fallthru
        _
      // Predicated region
      $region49: #{_lambda_.8} parent=11 // pred_check
        %p321 = pneg %p253
      $region50: #{_lambda_.8} parent=11 // pred_check_branch
        %323 = sbr.rel (%p321) target = $region52
      $region51: #{_lambda_.8} parent=11 // pred_region
        _
      $region52: #{_lambda_.8} parent=11 // pred_fallthru
        _
    $region12: #{_lambda_.8} parent=5 // pred_fallthru
      _
    %p324 = scmp.lt.s32.totalorder %s17, 2
    // Predicated region
    $region53: #{_lambda_.8} parent=5 // pred_check
      %p325 = pneg %p324
    $region54: #{_lambda_.8} parent=5 // pred_check_branch
      %327 = sbr.rel (%p325) target = $region56
    $region55: #{_lambda_.8} parent=5 // pred_region
      // Predicated region
      $region57: #{_lambda_.8} parent=55 // pred_check
        %p328 = pneg %p37
      $region58: #{_lambda_.8} parent=55 // pred_check_branch
        %330 = sbr.rel (%p328) target = $region60
      $region59: #{_lambda_.8} parent=55 // pred_region
        %p331 = scmp.lt.s32.totalorder %s17, 1
        %s332 = scalar_select %p331, %s17, 1
        %s333 = smul.addr %s332, 2
        %s334 = smul.addr %s333, 8
        %s335 = scalar_lea.vmem %s0, %s334
      $region60: #{_lambda_.8} parent=55 // pred_fallthru
        _
    $region56: #{_lambda_.8} parent=5 // pred_fallthru
      _
    %p336 = scmp.le.s32.totalorder 1, %s17
    %p337 = scmp.lt.s32.totalorder %s17, 3
    %p338 = pnand %p336, %p337
    %p339 = pneg %p338
    // Predicated region
    $region61: #{_lambda_.8} parent=5 // pred_check
      _
    $region62: #{_lambda_.8} parent=5 // pred_check_branch
      %341 = sbr.rel (%p338) target = $region64
    $region63: #{_lambda_.8} parent=5 // pred_region
      %s342 = ssub.s32 %s17, 1
      %p343 = scmp.lt.s32.totalorder %s22, 1
      %s344 = scalar_select %p343, %s22, 1
      %s345 = smul.addr %s344, 2
      %s346 = smul.addr %s345, 8
      %s347 = scalar_lea.vmem %s0, %s346
      %p348 = pneg %p43
      %p349 = pneg %p40
      %p350 = pneg %p64
      %p351 = pneg %p61
      %p352 = pneg %p85
      %p353 = pneg %p82
      %p354 = pneg %p106
      %p355 = pneg %p103
      %p356 = pneg %p127
      %p357 = pneg %p124
      %p358 = pneg %p148
      %p359 = pneg %p145
      %p360 = pneg %p169
      %p361 = pneg %p166
      %p362 = pneg %p190
      %p363 = pneg %p187
      %p364 = pneg %p211
      %p365 = pneg %p208
      %p366 = pneg %p232
      %p367 = pneg %p229
      %p368 = pneg %p253
      %p369 = pneg %p250
      %p370 = pneg %p279
      %p371 = pneg %p276
      %p372 = scmp.lt.s32.totalorder %s22, 1
      %s373 = scalar_select %p372, %s22, 1
      %s374 = smul.addr %s373, 2
      %s375 = smul.addr %s374, 8
      %s376 = scalar_lea.vmem %s11, %s375
      %p377 = scmp.lt.s32.totalorder %s22, 1
      %s378 = scalar_select %p377, %s22, 1
      %s379 = smul.addr %s378, 2
      %s380 = smul.addr %s379, 8
      %s381 = scalar_lea.vmem %s0, %s380
      %p382 = scmp.lt.s32.totalorder %s22, 1
      %s383 = scalar_select %p382, %s22, 1
      %s384 = smul.addr %s383, 2
      %s385 = smul.addr %s384, 8
      %s386 = scalar_lea.vmem %s11, %s385
      %v388 = vld [vmem:[%s381] sm:$0xff]
      %v389 = vld [vmem:[%s381 + $0x8] sm:$0xff]
      %v390 = vrot.slane %v388, 1
      %v391 = vrot.slane %v389, 1
      %v392 = vlaneseq
      %v393 = vshrl.u32 %v392, 7
      %vm394 = vcmp.lt.s32.totalorder %v393, 7
      %v395 = vsel %vm394, %v390, %v391
      %v396 = vsel %vm394, %v391, %v390
      %v397 = vld [vmem:[%s1] sm:$0xff]
      %v398 = vld [vmem:[%s1 + $0x8] sm:$0xff]
      %400 = vset.pattern.permute.xlu0 0
      %401 = vperm.xlu0 %400, %v397
      %v402 = vpop.permute.xlu0 %401
      %405 = vset.pattern.permute.xlu0 0
      %406 = vperm.xlu0 %405, %v398
      %v407 = vpop.permute.xlu0 %406
      %v409 = vmul.f32 %v395, %v402
      %v410 = vmul.f32 %v396, %v407
      %v411 = vld [vmem:[%s2] sm:$0x1]
      %v412 = vlaneseq
      %v413 = vshrl.u32 %v412, 7
      %v414 = vsub.s32 0, %v413
      %v415 = vrot.slane %v411, %v414
      %v416 = vmul.f32 %v409, %v415
      %v417 = vmul.f32 %v410, %v415
      %v418 = vadd.f32 %v416, 0.0
      %v419 = vadd.f32 %v417, 0.0
      %v420 = vrot.slane %v388, 2
      %v421 = vrot.slane %v389, 2
      %vm422 = vcmp.lt.s32.totalorder %v393, 6
      %v423 = vsel %vm422, %v420, %v421
      %v424 = vsel %vm422, %v421, %v420
      %s425 = scalar_lea.vmem %s1, 16
      %v426 = vld [vmem:[%s425] sm:$0xff]
      %v427 = vld [vmem:[%s425 + $0x8] sm:$0xff]
      %429 = vset.pattern.permute.xlu0 0
      %430 = vperm.xlu0 %429, %v426
      %v431 = vpop.permute.xlu0 %430
      %434 = vset.pattern.permute.xlu0 0
      %435 = vperm.xlu0 %434, %v427
      %v436 = vpop.permute.xlu0 %435
      %v438 = vmul.f32 %v423, %v431
      %v439 = vmul.f32 %v424, %v436
      %v440 = vld [vmem:[%s2 + $0x1] sm:$0x1]
      %v441 = vlaneseq
      %v442 = vshrl.u32 %v441, 7
      %v443 = vsub.s32 0, %v442
      %v444 = vrot.slane %v440, %v443
      %v445 = vmul.f32 %v438, %v444
      %v446 = vmul.f32 %v439, %v444
      %v447 = vadd.f32 %v418, %v445
      %v448 = vadd.f32 %v419, %v446
      %v449 = vrot.slane %v388, 3
      %v450 = vrot.slane %v389, 3
      %vm451 = vcmp.lt.s32.totalorder %v393, 5
      %v452 = vsel %vm451, %v449, %v450
      %v453 = vsel %vm451, %v450, %v449
      %s454 = scalar_lea.vmem %s1, 32
      %v455 = vld [vmem:[%s454] sm:$0xff]
      %v456 = vld [vmem:[%s454 + $0x8] sm:$0xff]
      %458 = vset.pattern.permute.xlu0 0
      %459 = vperm.xlu0 %458, %v455
      %v460 = vpop.permute.xlu0 %459
      %463 = vset.pattern.permute.xlu0 0
      %464 = vperm.xlu0 %463, %v456
      %v465 = vpop.permute.xlu0 %464
      %v467 = vmul.f32 %v452, %v460
      %v468 = vmul.f32 %v453, %v465
      %v469 = vld [vmem:[%s2 + $0x2] sm:$0x1]
      %v470 = vlaneseq
      %v471 = vshrl.u32 %v470, 7
      %v472 = vsub.s32 0, %v471
      %v473 = vrot.slane %v469, %v472
      %v474 = vmul.f32 %v467, %v473
      %v475 = vmul.f32 %v468, %v473
      %v476 = vadd.f32 %v447, %v474
      %v477 = vadd.f32 %v448, %v475
      %v478 = vrot.slane %v388, 4
      %v479 = vrot.slane %v389, 4
      %vm480 = vcmp.lt.s32.totalorder %v393, 4
      %v481 = vsel %vm480, %v478, %v479
      %v482 = vsel %vm480, %v479, %v478
      %s483 = scalar_lea.vmem %s1, 48
      %v484 = vld [vmem:[%s483] sm:$0xff]
      %v485 = vld [vmem:[%s483 + $0x8] sm:$0xff]
      %487 = vset.pattern.permute.xlu0 0
      %488 = vperm.xlu0 %487, %v484
      %v489 = vpop.permute.xlu0 %488
      %492 = vset.pattern.permute.xlu0 0
      %493 = vperm.xlu0 %492, %v485
      %v494 = vpop.permute.xlu0 %493
      %v496 = vmul.f32 %v481, %v489
      %v497 = vmul.f32 %v482, %v494
      %v498 = vld [vmem:[%s2 + $0x3] sm:$0x1]
      %v499 = vlaneseq
      %v500 = vshrl.u32 %v499, 7
      %v501 = vsub.s32 0, %v500
      %v502 = vrot.slane %v498, %v501
      %v503 = vmul.f32 %v496, %v502
      %v504 = vmul.f32 %v497, %v502
      %v505 = vadd.f32 %v476, %v503
      %v506 = vadd.f32 %v477, %v504
      %v507 = vrot.slane %v388, 5
      %v508 = vrot.slane %v389, 5
      %vm509 = vcmp.lt.s32.totalorder %v393, 3
      %v510 = vsel %vm509, %v507, %v508
      %v511 = vsel %vm509, %v508, %v507
      %s512 = scalar_lea.vmem %s1, 64
      %v513 = vld [vmem:[%s512] sm:$0xff]
      %v514 = vld [vmem:[%s512 + $0x8] sm:$0xff]
      %516 = vset.pattern.permute.xlu0 0
      %517 = vperm.xlu0 %516, %v513
      %v518 = vpop.permute.xlu0 %517
      %521 = vset.pattern.permute.xlu0 0
      %522 = vperm.xlu0 %521, %v514
      %v523 = vpop.permute.xlu0 %522
      %v525 = vmul.f32 %v510, %v518
      %v526 = vmul.f32 %v511, %v523
      %v527 = vld [vmem:[%s2 + $0x4] sm:$0x1]
      %v528 = vlaneseq
      %v529 = vshrl.u32 %v528, 7
      %v530 = vsub.s32 0, %v529
      %v531 = vrot.slane %v527, %v530
      %v532 = vmul.f32 %v525, %v531
      %v533 = vmul.f32 %v526, %v531
      %v534 = vadd.f32 %v505, %v532
      %v535 = vadd.f32 %v506, %v533
      %v536 = vrot.slane %v388, 6
      %v537 = vrot.slane %v389, 6
      %vm538 = vcmp.lt.s32.totalorder %v393, 2
      %v539 = vsel %vm538, %v536, %v537
      %v540 = vsel %vm538, %v537, %v536
      %s541 = scalar_lea.vmem %s1, 80
      %v542 = vld [vmem:[%s541] sm:$0xff]
      %v543 = vld [vmem:[%s541 + $0x8] sm:$0xff]
      %545 = vset.pattern.permute.xlu0 0
      %546 = vperm.xlu0 %545, %v542
      %v547 = vpop.permute.xlu0 %546
      %550 = vset.pattern.permute.xlu0 0
      %551 = vperm.xlu0 %550, %v543
      %v552 = vpop.permute.xlu0 %551
      %v554 = vmul.f32 %v539, %v547
      %v555 = vmul.f32 %v540, %v552
      %v556 = vld [vmem:[%s2 + $0x5] sm:$0x1]
      %v557 = vlaneseq
      %v558 = vshrl.u32 %v557, 7
      %v559 = vsub.s32 0, %v558
      %v560 = vrot.slane %v556, %v559
      %v561 = vmul.f32 %v554, %v560
      %v562 = vmul.f32 %v555, %v560
      %v563 = vadd.f32 %v534, %v561
      %v564 = vadd.f32 %v535, %v562
      %v565 = vrot.slane %v388, 7
      %v566 = vrot.slane %v389, 7
      %vm567 = vcmp.lt.s32.totalorder %v393, 1
      %v568 = vsel %vm567, %v565, %v566
      %v569 = vsel %vm567, %v566, %v565
      %s570 = scalar_lea.vmem %s1, 96
      %v571 = vld [vmem:[%s570] sm:$0xff]
      %v572 = vld [vmem:[%s570 + $0x8] sm:$0xff]
      %574 = vset.pattern.permute.xlu0 0
      %575 = vperm.xlu0 %574, %v571
      %v576 = vpop.permute.xlu0 %575
      %579 = vset.pattern.permute.xlu0 0
      %580 = vperm.xlu0 %579, %v572
      %v581 = vpop.permute.xlu0 %580
      %v583 = vmul.f32 %v568, %v576
      %v584 = vmul.f32 %v569, %v581
      %v585 = vld [vmem:[%s2 + $0x6] sm:$0x1]
      %v586 = vlaneseq
      %v587 = vshrl.u32 %v586, 7
      %v588 = vsub.s32 0, %v587
      %v589 = vrot.slane %v585, %v588
      %v590 = vmul.f32 %v583, %v589
      %v591 = vmul.f32 %v584, %v589
      %v592 = vadd.f32 %v563, %v590
      %v593 = vadd.f32 %v564, %v591
      %s594 = scalar_lea.vmem %s1, 112
      %v595 = vld [vmem:[%s594] sm:$0xff]
      %v596 = vld [vmem:[%s594 + $0x8] sm:$0xff]
      %598 = vset.pattern.permute.xlu0 0
      %599 = vperm.xlu0 %598, %v595
      %v600 = vpop.permute.xlu0 %599
      %603 = vset.pattern.permute.xlu0 0
      %604 = vperm.xlu0 %603, %v596
      %v605 = vpop.permute.xlu0 %604
      %v607 = vmul.f32 %v510, %v600
      %v608 = vmul.f32 %v511, %v605
      %v609 = vld [vmem:[%s2 + $0x7] sm:$0x1]
      %v610 = vlaneseq
      %v611 = vshrl.u32 %v610, 7
      %v612 = vsub.s32 0, %v611
      %v613 = vrot.slane %v609, %v612
      %v614 = vmul.f32 %v607, %v613
      %v615 = vmul.f32 %v608, %v613
      %v616 = vadd.f32 %v592, %v614
      %v617 = vadd.f32 %v593, %v615
      %s618 = scalar_lea.vmem %s1, 128
      %v619 = vld [vmem:[%s618] sm:$0xff]
      %v620 = vld [vmem:[%s618 + $0x8] sm:$0xff]
      %622 = vset.pattern.permute.xlu0 0
      %623 = vperm.xlu0 %622, %v619
      %v624 = vpop.permute.xlu0 %623
      %627 = vset.pattern.permute.xlu0 0
      %628 = vperm.xlu0 %627, %v620
      %v629 = vpop.permute.xlu0 %628
      %v631 = vmul.f32 %v539, %v624
      %v632 = vmul.f32 %v540, %v629
      %v633 = vld [vmem:[%s2 + $0x8] sm:$0x1]
      %v634 = vlaneseq
      %v635 = vshrl.u32 %v634, 7
      %v636 = vsub.s32 0, %v635
      %v637 = vrot.slane %v633, %v636
      %v638 = vmul.f32 %v631, %v637
      %v639 = vmul.f32 %v632, %v637
      %v640 = vadd.f32 %v616, %v638
      %v641 = vadd.f32 %v617, %v639
      %s642 = scalar_lea.vmem %s1, 144
      %v643 = vld [vmem:[%s642] sm:$0xff]
      %v644 = vld [vmem:[%s642 + $0x8] sm:$0xff]
      %646 = vset.pattern.permute.xlu0 0
      %647 = vperm.xlu0 %646, %v643
      %v648 = vpop.permute.xlu0 %647
      %651 = vset.pattern.permute.xlu0 0
      %652 = vperm.xlu0 %651, %v644
      %v653 = vpop.permute.xlu0 %652
      %v655 = vmul.f32 %v568, %v648
      %v656 = vmul.f32 %v569, %v653
      %v657 = vld [vmem:[%s2 + $0x9] sm:$0x1]
      %v658 = vlaneseq
      %v659 = vshrl.u32 %v658, 7
      %v660 = vsub.s32 0, %v659
      %v661 = vrot.slane %v657, %v660
      %v662 = vmul.f32 %v655, %v661
      %v663 = vmul.f32 %v656, %v661
      %v664 = vadd.f32 %v640, %v662
      %v665 = vadd.f32 %v641, %v663
      %s666 = scalar_lea.vmem %s1, 160
      %v667 = vld [vmem:[%s666] sm:$0xff]
      %v668 = vld [vmem:[%s666 + $0x8] sm:$0xff]
      %670 = vset.pattern.permute.xlu0 0
      %671 = vperm.xlu0 %670, %v667
      %v672 = vpop.permute.xlu0 %671
      %675 = vset.pattern.permute.xlu0 0
      %676 = vperm.xlu0 %675, %v668
      %v677 = vpop.permute.xlu0 %676
      %v679 = vmul.f32 %v389, %v672
      %v680 = vmul.f32 %v388, %v677
      %v681 = vld [vmem:[%s2 + $0xa] sm:$0x1]
      %v682 = vlaneseq
      %v683 = vshrl.u32 %v682, 7
      %v684 = vsub.s32 0, %v683
      %v685 = vrot.slane %v681, %v684
      %v686 = vmul.f32 %v679, %v685
      %v687 = vmul.f32 %v680, %v685
      %v688 = vadd.f32 %v664, %v686
      %v689 = vadd.f32 %v665, %v687
      %s690 = scalar_lea.vmem %s1, 176
      %v691 = vld [vmem:[%s690] sm:$0xff]
      %v692 = vld [vmem:[%s690 + $0x8] sm:$0xff]
      %694 = vset.pattern.permute.xlu0 0
      %695 = vperm.xlu0 %694, %v691
      %v696 = vpop.permute.xlu0 %695
      %699 = vset.pattern.permute.xlu0 0
      %700 = vperm.xlu0 %699, %v692
      %v701 = vpop.permute.xlu0 %700
      %v703 = vmul.f32 %v396, %v696
      %v704 = vmul.f32 %v395, %v701
      %v705 = vld [vmem:[%s2 + $0xb] sm:$0x1]
      %v706 = vlaneseq
      %v707 = vshrl.u32 %v706, 7
      %v708 = vsub.s32 0, %v707
      %v709 = vrot.slane %v705, %v708
      %v710 = vmul.f32 %v703, %v709
      %v711 = vmul.f32 %v704, %v709
      %v712 = vadd.f32 %v688, %v710
      %v713 = vadd.f32 %v689, %v711
      %s714 = scalar_lea.vmem %s1, 192
      %v715 = vld [vmem:[%s714] sm:$0xff]
      %v716 = vld [vmem:[%s714 + $0x8] sm:$0xff]
      %718 = vset.pattern.permute.xlu0 0
      %719 = vperm.xlu0 %718, %v715
      %v720 = vpop.permute.xlu0 %719
      %723 = vset.pattern.permute.xlu0 0
      %724 = vperm.xlu0 %723, %v716
      %v725 = vpop.permute.xlu0 %724
      %v727 = vmul.f32 %v424, %v720
      %v728 = vmul.f32 %v423, %v725
      %v729 = vld [vmem:[%s2 + $0xc] sm:$0x1]
      %v730 = vlaneseq
      %v731 = vshrl.u32 %v730, 7
      %v732 = vsub.s32 0, %v731
      %v733 = vrot.slane %v729, %v732
      %v734 = vmul.f32 %v727, %v733
      %v735 = vmul.f32 %v728, %v733
      %v736 = vadd.f32 %v712, %v734
      %v737 = vadd.f32 %v713, %v735
      %s738 = scalar_lea.vmem %s1, 208
      %v739 = vld [vmem:[%s738] sm:$0xff]
      %v740 = vld [vmem:[%s738 + $0x8] sm:$0xff]
      %742 = vset.pattern.permute.xlu0 0
      %743 = vperm.xlu0 %742, %v739
      %v744 = vpop.permute.xlu0 %743
      %747 = vset.pattern.permute.xlu0 0
      %748 = vperm.xlu0 %747, %v740
      %v749 = vpop.permute.xlu0 %748
      %v751 = vmul.f32 %v453, %v744
      %v752 = vmul.f32 %v452, %v749
      %v753 = vld [vmem:[%s2 + $0xd] sm:$0x1]
      %v754 = vlaneseq
      %v755 = vshrl.u32 %v754, 7
      %v756 = vsub.s32 0, %v755
      %v757 = vrot.slane %v753, %v756
      %v758 = vmul.f32 %v751, %v757
      %v759 = vmul.f32 %v752, %v757
      %v760 = vadd.f32 %v736, %v758
      %v761 = vadd.f32 %v737, %v759
      %s762 = scalar_lea.vmem %s1, 224
      %v763 = vld [vmem:[%s762] sm:$0xff]
      %v764 = vld [vmem:[%s762 + $0x8] sm:$0xff]
      %766 = vset.pattern.permute.xlu0 0
      %767 = vperm.xlu0 %766, %v763
      %v768 = vpop.permute.xlu0 %767
      %771 = vset.pattern.permute.xlu0 0
      %772 = vperm.xlu0 %771, %v764
      %v773 = vpop.permute.xlu0 %772
      %v775 = vmul.f32 %v396, %v768
      %v776 = vmul.f32 %v395, %v773
      %v777 = vld [vmem:[%s2 + $0xe] sm:$0x1]
      %v778 = vlaneseq
      %v779 = vshrl.u32 %v778, 7
      %v780 = vsub.s32 0, %v779
      %v781 = vrot.slane %v777, %v780
      %v782 = vmul.f32 %v775, %v781
      %v783 = vmul.f32 %v776, %v781
      %v784 = vadd.f32 %v760, %v782
      %v785 = vadd.f32 %v761, %v783
      %s786 = scalar_lea.vmem %s1, 240
      %v787 = vld [vmem:[%s786] sm:$0xff]
      %v788 = vld [vmem:[%s786 + $0x8] sm:$0xff]
      %790 = vset.pattern.permute.xlu0 0
      %791 = vperm.xlu0 %790, %v787
      %v792 = vpop.permute.xlu0 %791
      %795 = vset.pattern.permute.xlu0 0
      %796 = vperm.xlu0 %795, %v788
      %v797 = vpop.permute.xlu0 %796
      %v799 = vmul.f32 %v424, %v792
      %v800 = vmul.f32 %v423, %v797
      %v801 = vld [vmem:[%s2 + $0xf] sm:$0x1]
      %v802 = vlaneseq
      %v803 = vshrl.u32 %v802, 7
      %v804 = vsub.s32 0, %v803
      %v805 = vrot.slane %v801, %v804
      %v806 = vmul.f32 %v799, %v805
      %v807 = vmul.f32 %v800, %v805
      %v808 = vadd.f32 %v784, %v806
      %v809 = vadd.f32 %v785, %v807
      %s810 = scalar_lea.vmem %s1, 256
      %v811 = vld [vmem:[%s810] sm:$0xff]
      %v812 = vld [vmem:[%s810 + $0x8] sm:$0xff]
      %814 = vset.pattern.permute.xlu0 0
      %815 = vperm.xlu0 %814, %v811
      %v816 = vpop.permute.xlu0 %815
      %819 = vset.pattern.permute.xlu0 0
      %820 = vperm.xlu0 %819, %v812
      %v821 = vpop.permute.xlu0 %820
      %v823 = vmul.f32 %v453, %v816
      %v824 = vmul.f32 %v452, %v821
      %v825 = vld [vmem:[%s2 + $0x10] sm:$0x1]
      %v826 = vlaneseq
      %v827 = vshrl.u32 %v826, 7
      %v828 = vsub.s32 0, %v827
      %v829 = vrot.slane %v825, %v828
      %v830 = vmul.f32 %v823, %v829
      %v831 = vmul.f32 %v824, %v829
      %v832 = vadd.f32 %v808, %v830
      %v833 = vadd.f32 %v809, %v831
      %s834 = scalar_lea.vmem %s1, 272
      %v835 = vld [vmem:[%s834] sm:$0xff]
      %v836 = vld [vmem:[%s834 + $0x8] sm:$0xff]
      %838 = vset.pattern.permute.xlu0 0
      %839 = vperm.xlu0 %838, %v835
      %v840 = vpop.permute.xlu0 %839
      %843 = vset.pattern.permute.xlu0 0
      %844 = vperm.xlu0 %843, %v836
      %v845 = vpop.permute.xlu0 %844
      %v847 = vmul.f32 %v482, %v840
      %v848 = vmul.f32 %v481, %v845
      %v849 = vld [vmem:[%s2 + $0x11] sm:$0x1]
      %v850 = vlaneseq
      %v851 = vshrl.u32 %v850, 7
      %v852 = vsub.s32 0, %v851
      %v853 = vrot.slane %v849, %v852
      %v854 = vmul.f32 %v847, %v853
      %v855 = vmul.f32 %v848, %v853
      %v856 = vadd.f32 %v832, %v854
      %v857 = vadd.f32 %v833, %v855
      %s858 = scalar_lea.vmem %s1, 288
      %v859 = vld [vmem:[%s858] sm:$0xff]
      %v860 = vld [vmem:[%s858 + $0x8] sm:$0xff]
      %862 = vset.pattern.permute.xlu0 0
      %863 = vperm.xlu0 %862, %v859
      %v864 = vpop.permute.xlu0 %863
      %867 = vset.pattern.permute.xlu0 0
      %868 = vperm.xlu0 %867, %v860
      %v869 = vpop.permute.xlu0 %868
      %v871 = vmul.f32 %v511, %v864
      %v872 = vmul.f32 %v510, %v869
      %v873 = vld [vmem:[%s2 + $0x12] sm:$0x1]
      %v874 = vlaneseq
      %v875 = vshrl.u32 %v874, 7
      %v876 = vsub.s32 0, %v875
      %v877 = vrot.slane %v873, %v876
      %v878 = vmul.f32 %v871, %v877
      %v879 = vmul.f32 %v872, %v877
      %v880 = vadd.f32 %v856, %v878
      %v881 = vadd.f32 %v857, %v879
      %s882 = scalar_lea.vmem %s1, 304
      %v883 = vld [vmem:[%s882] sm:$0xff]
      %v884 = vld [vmem:[%s882 + $0x8] sm:$0xff]
      %886 = vset.pattern.permute.xlu0 0
      %887 = vperm.xlu0 %886, %v883
      %v888 = vpop.permute.xlu0 %887
      %891 = vset.pattern.permute.xlu0 0
      %892 = vperm.xlu0 %891, %v884
      %v893 = vpop.permute.xlu0 %892
      %v895 = vmul.f32 %v540, %v888
      %v896 = vmul.f32 %v539, %v893
      %v897 = vld [vmem:[%s2 + $0x13] sm:$0x1]
      %v898 = vlaneseq
      %v899 = vshrl.u32 %v898, 7
      %v900 = vsub.s32 0, %v899
      %v901 = vrot.slane %v897, %v900
      %v902 = vmul.f32 %v895, %v901
      %v903 = vmul.f32 %v896, %v901
      %v904 = vadd.f32 %v880, %v902
      %v905 = vadd.f32 %v881, %v903
      %s906 = scalar_lea.vmem %s1, 320
      %v907 = vld [vmem:[%s906] sm:$0xff]
      %v908 = vld [vmem:[%s906 + $0x8] sm:$0xff]
      %910 = vset.pattern.permute.xlu0 0
      %911 = vperm.xlu0 %910, %v907
      %v912 = vpop.permute.xlu0 %911
      %915 = vset.pattern.permute.xlu0 0
      %916 = vperm.xlu0 %915, %v908
      %v917 = vpop.permute.xlu0 %916
      %v919 = vmul.f32 %v569, %v912
      %v920 = vmul.f32 %v568, %v917
      %v921 = vld [vmem:[%s2 + $0x14] sm:$0x1]
      %v922 = vlaneseq
      %v923 = vshrl.u32 %v922, 7
      %v924 = vsub.s32 0, %v923
      %v925 = vrot.slane %v921, %v924
      %v926 = vmul.f32 %v919, %v925
      %v927 = vmul.f32 %v920, %v925
      %v928 = vadd.f32 %v904, %v926
      %v929 = vadd.f32 %v905, %v927
      %s930 = scalar_lea.vmem %s1, 336
      %v931 = vld [vmem:[%s930] sm:$0xff]
      %v932 = vld [vmem:[%s930 + $0x8] sm:$0xff]
      %934 = vset.pattern.permute.xlu0 0
      %935 = vperm.xlu0 %934, %v931
      %v936 = vpop.permute.xlu0 %935
      %939 = vset.pattern.permute.xlu0 0
      %940 = vperm.xlu0 %939, %v932
      %v941 = vpop.permute.xlu0 %940
      %v943 = vmul.f32 %v511, %v936
      %v944 = vmul.f32 %v510, %v941
      %v945 = vld [vmem:[%s2 + $0x15] sm:$0x1]
      %v946 = vlaneseq
      %v947 = vshrl.u32 %v946, 7
      %v948 = vsub.s32 0, %v947
      %v949 = vrot.slane %v945, %v948
      %v950 = vmul.f32 %v943, %v949
      %v951 = vmul.f32 %v944, %v949
      %v952 = vadd.f32 %v928, %v950
      %v953 = vadd.f32 %v929, %v951
      %s954 = scalar_lea.vmem %s1, 352
      %v955 = vld [vmem:[%s954] sm:$0xff]
      %v956 = vld [vmem:[%s954 + $0x8] sm:$0xff]
      %958 = vset.pattern.permute.xlu0 0
      %959 = vperm.xlu0 %958, %v955
      %v960 = vpop.permute.xlu0 %959
      %963 = vset.pattern.permute.xlu0 0
      %964 = vperm.xlu0 %963, %v956
      %v965 = vpop.permute.xlu0 %964
      %v967 = vmul.f32 %v540, %v960
      %v968 = vmul.f32 %v539, %v965
      %v969 = vld [vmem:[%s2 + $0x16] sm:$0x1]
      %v970 = vlaneseq
      %v971 = vshrl.u32 %v970, 7
      %v972 = vsub.s32 0, %v971
      %v973 = vrot.slane %v969, %v972
      %v974 = vmul.f32 %v967, %v973
      %v975 = vmul.f32 %v968, %v973
      %v976 = vadd.f32 %v952, %v974
      %v977 = vadd.f32 %v953, %v975
      %s978 = scalar_lea.vmem %s1, 368
      %v979 = vld [vmem:[%s978] sm:$0xff]
      %v980 = vld [vmem:[%s978 + $0x8] sm:$0xff]
      %982 = vset.pattern.permute.xlu0 0
      %983 = vperm.xlu0 %982, %v979
      %v984 = vpop.permute.xlu0 %983
      %987 = vset.pattern.permute.xlu0 0
      %988 = vperm.xlu0 %987, %v980
      %v989 = vpop.permute.xlu0 %988
      %v991 = vmul.f32 %v569, %v984
      %v992 = vmul.f32 %v568, %v989
      %v993 = vld [vmem:[%s2 + $0x17] sm:$0x1]
      %v994 = vlaneseq
      %v995 = vshrl.u32 %v994, 7
      %v996 = vsub.s32 0, %v995
      %v997 = vrot.slane %v993, %v996
      %v998 = vmul.f32 %v991, %v997
      %v999 = vmul.f32 %v992, %v997
      %v1000 = vadd.f32 %v976, %v998
      %v1001 = vadd.f32 %v977, %v999
      %s1002 = scalar_lea.vmem %s1, 384
      %v1003 = vld [vmem:[%s1002] sm:$0xff]
      %v1004 = vld [vmem:[%s1002 + $0x8] sm:$0xff]
      %1006 = vset.pattern.permute.xlu0 0
      %1007 = vperm.xlu0 %1006, %v1003
      %v1008 = vpop.permute.xlu0 %1007
      %1011 = vset.pattern.permute.xlu0 0
      %1012 = vperm.xlu0 %1011, %v1004
      %v1013 = vpop.permute.xlu0 %1012
      %v1015 = vmul.f32 %v388, %v1008
      %v1016 = vmul.f32 %v389, %v1013
      %v1017 = vld [vmem:[%s2 + $0x18] sm:$0x1]
      %v1018 = vlaneseq
      %v1019 = vshrl.u32 %v1018, 7
      %v1020 = vsub.s32 0, %v1019
      %v1021 = vrot.slane %v1017, %v1020
      %v1022 = vmul.f32 %v1015, %v1021
      %v1023 = vmul.f32 %v1016, %v1021
      %v1024 = vadd.f32 %v1000, %v1022
      %v1025 = vadd.f32 %v1001, %v1023
      %s1026 = scalar_lea.vmem %s1, 400
      %v1027 = vld [vmem:[%s1026] sm:$0xff]
      %v1028 = vld [vmem:[%s1026 + $0x8] sm:$0xff]
      %1030 = vset.pattern.permute.xlu0 0
      %1031 = vperm.xlu0 %1030, %v1027
      %v1032 = vpop.permute.xlu0 %1031
      %1035 = vset.pattern.permute.xlu0 0
      %1036 = vperm.xlu0 %1035, %v1028
      %v1037 = vpop.permute.xlu0 %1036
      %v1039 = vmul.f32 %v395, %v1032
      %v1040 = vmul.f32 %v396, %v1037
      %v1041 = vld [vmem:[%s2 + $0x19] sm:$0x1]
      %v1042 = vlaneseq
      %v1043 = vshrl.u32 %v1042, 7
      %v1044 = vsub.s32 0, %v1043
      %v1045 = vrot.slane %v1041, %v1044
      %v1046 = vmul.f32 %v1039, %v1045
      %v1047 = vmul.f32 %v1040, %v1045
      %v1048 = vadd.f32 %v1024, %v1046
      %v1049 = vadd.f32 %v1025, %v1047
      %s1050 = scalar_lea.vmem %s1, 416
      %v1051 = vld [vmem:[%s1050] sm:$0xff]
      %v1052 = vld [vmem:[%s1050 + $0x8] sm:$0xff]
      %1054 = vset.pattern.permute.xlu0 0
      %1055 = vperm.xlu0 %1054, %v1051
      %v1056 = vpop.permute.xlu0 %1055
      %1059 = vset.pattern.permute.xlu0 0
      %1060 = vperm.xlu0 %1059, %v1052
      %v1061 = vpop.permute.xlu0 %1060
      %v1063 = vmul.f32 %v423, %v1056
      %v1064 = vmul.f32 %v424, %v1061
      %v1065 = vld [vmem:[%s2 + $0x1a] sm:$0x1]
      %v1066 = vlaneseq
      %v1067 = vshrl.u32 %v1066, 7
      %v1068 = vsub.s32 0, %v1067
      %v1069 = vrot.slane %v1065, %v1068
      %v1070 = vmul.f32 %v1063, %v1069
      %v1071 = vmul.f32 %v1064, %v1069
      %v1072 = vadd.f32 %v1048, %v1070
      %v1073 = vadd.f32 %v1049, %v1071
      %s1074 = scalar_lea.vmem %s1, 432
      %v1075 = vld [vmem:[%s1074] sm:$0xff]
      %v1076 = vld [vmem:[%s1074 + $0x8] sm:$0xff]
      %1078 = vset.pattern.permute.xlu0 0
      %1079 = vperm.xlu0 %1078, %v1075
      %v1080 = vpop.permute.xlu0 %1079
      %1083 = vset.pattern.permute.xlu0 0
      %1084 = vperm.xlu0 %1083, %v1076
      %v1085 = vpop.permute.xlu0 %1084
      %v1087 = vmul.f32 %v452, %v1080
      %v1088 = vmul.f32 %v453, %v1085
      %v1089 = vld [vmem:[%s2 + $0x1b] sm:$0x1]
      %v1090 = vlaneseq
      %v1091 = vshrl.u32 %v1090, 7
      %v1092 = vsub.s32 0, %v1091
      %v1093 = vrot.slane %v1089, %v1092
      %v1094 = vmul.f32 %v1087, %v1093
      %v1095 = vmul.f32 %v1088, %v1093
      %v1096 = vadd.f32 %v1072, %v1094
      %v1097 = vadd.f32 %v1073, %v1095
      %s1098 = scalar_lea.vmem %s1, 448
      %v1099 = vld [vmem:[%s1098] sm:$0xff]
      %v1100 = vld [vmem:[%s1098 + $0x8] sm:$0xff]
      %1102 = vset.pattern.permute.xlu0 0
      %1103 = vperm.xlu0 %1102, %v1099
      %v1104 = vpop.permute.xlu0 %1103
      %1107 = vset.pattern.permute.xlu0 0
      %1108 = vperm.xlu0 %1107, %v1100
      %v1109 = vpop.permute.xlu0 %1108
      %v1111 = vmul.f32 %v395, %v1104
      %v1112 = vmul.f32 %v396, %v1109
      %v1113 = vld [vmem:[%s2 + $0x1c] sm:$0x1]
      %v1114 = vlaneseq
      %v1115 = vshrl.u32 %v1114, 7
      %v1116 = vsub.s32 0, %v1115
      %v1117 = vrot.slane %v1113, %v1116
      %v1118 = vmul.f32 %v1111, %v1117
      %v1119 = vmul.f32 %v1112, %v1117
      %v1120 = vadd.f32 %v1096, %v1118
      %v1121 = vadd.f32 %v1097, %v1119
      %s1122 = scalar_lea.vmem %s1, 464
      %v1123 = vld [vmem:[%s1122] sm:$0xff]
      %v1124 = vld [vmem:[%s1122 + $0x8] sm:$0xff]
      %1126 = vset.pattern.permute.xlu0 0
      %1127 = vperm.xlu0 %1126, %v1123
      %v1128 = vpop.permute.xlu0 %1127
      %1131 = vset.pattern.permute.xlu0 0
      %1132 = vperm.xlu0 %1131, %v1124
      %v1133 = vpop.permute.xlu0 %1132
      %v1135 = vmul.f32 %v423, %v1128
      %v1136 = vmul.f32 %v424, %v1133
      %v1137 = vld [vmem:[%s2 + $0x1d] sm:$0x1]
      %v1138 = vlaneseq
      %v1139 = vshrl.u32 %v1138, 7
      %v1140 = vsub.s32 0, %v1139
      %v1141 = vrot.slane %v1137, %v1140
      %v1142 = vmul.f32 %v1135, %v1141
      %v1143 = vmul.f32 %v1136, %v1141
      %v1144 = vadd.f32 %v1120, %v1142
      %v1145 = vadd.f32 %v1121, %v1143
      %s1146 = scalar_lea.vmem %s1, 480
      %v1147 = vld [vmem:[%s1146] sm:$0xff]
      %v1148 = vld [vmem:[%s1146 + $0x8] sm:$0xff]
      %1150 = vset.pattern.permute.xlu0 0
      %1151 = vperm.xlu0 %1150, %v1147
      %v1152 = vpop.permute.xlu0 %1151
      %1155 = vset.pattern.permute.xlu0 0
      %1156 = vperm.xlu0 %1155, %v1148
      %v1157 = vpop.permute.xlu0 %1156
      %v1159 = vmul.f32 %v452, %v1152
      %v1160 = vmul.f32 %v453, %v1157
      %v1161 = vld [vmem:[%s2 + $0x1e] sm:$0x1]
      %v1162 = vlaneseq
      %v1163 = vshrl.u32 %v1162, 7
      %v1164 = vsub.s32 0, %v1163
      %v1165 = vrot.slane %v1161, %v1164
      %v1166 = vmul.f32 %v1159, %v1165
      %v1167 = vmul.f32 %v1160, %v1165
      %v1168 = vadd.f32 %v1144, %v1166
      %v1169 = vadd.f32 %v1145, %v1167
      %s1170 = scalar_lea.vmem %s1, 496
      %v1171 = vld [vmem:[%s1170] sm:$0xff]
      %v1172 = vld [vmem:[%s1170 + $0x8] sm:$0xff]
      %1174 = vset.pattern.permute.xlu0 0
      %1175 = vperm.xlu0 %1174, %v1171
      %v1176 = vpop.permute.xlu0 %1175
      %1179 = vset.pattern.permute.xlu0 0
      %1180 = vperm.xlu0 %1179, %v1172
      %v1181 = vpop.permute.xlu0 %1180
      %v1183 = vmul.f32 %v481, %v1176
      %v1184 = vmul.f32 %v482, %v1181
      %v1185 = vld [vmem:[%s2 + $0x1f] sm:$0x1]
      %v1186 = vlaneseq
      %v1187 = vshrl.u32 %v1186, 7
      %v1188 = vsub.s32 0, %v1187
      %v1189 = vrot.slane %v1185, %v1188
      %v1190 = vmul.f32 %v1183, %v1189
      %v1191 = vmul.f32 %v1184, %v1189
      %v1192 = vadd.f32 %v1168, %v1190
      %v1193 = vadd.f32 %v1169, %v1191
      %s1194 = scalar_lea.vmem %s1, 512
      %v1195 = vld [vmem:[%s1194] sm:$0xff]
      %v1196 = vld [vmem:[%s1194 + $0x8] sm:$0xff]
      %1198 = vset.pattern.permute.xlu0 0
      %1199 = vperm.xlu0 %1198, %v1195
      %v1200 = vpop.permute.xlu0 %1199
      %1203 = vset.pattern.permute.xlu0 0
      %1204 = vperm.xlu0 %1203, %v1196
      %v1205 = vpop.permute.xlu0 %1204
      %v1207 = vmul.f32 %v510, %v1200
      %v1208 = vmul.f32 %v511, %v1205
      %v1209 = vld [vmem:[%s2 + $0x20] sm:$0x1]
      %v1210 = vlaneseq
      %v1211 = vshrl.u32 %v1210, 7
      %v1212 = vsub.s32 0, %v1211
      %v1213 = vrot.slane %v1209, %v1212
      %v1214 = vmul.f32 %v1207, %v1213
      %v1215 = vmul.f32 %v1208, %v1213
      %v1216 = vadd.f32 %v1192, %v1214
      %v1217 = vadd.f32 %v1193, %v1215
      %s1218 = scalar_lea.vmem %s1, 528
      %v1219 = vld [vmem:[%s1218] sm:$0xff]
      %v1220 = vld [vmem:[%s1218 + $0x8] sm:$0xff]
      %1222 = vset.pattern.permute.xlu0 0
      %1223 = vperm.xlu0 %1222, %v1219
      %v1224 = vpop.permute.xlu0 %1223
      %1227 = vset.pattern.permute.xlu0 0
      %1228 = vperm.xlu0 %1227, %v1220
      %v1229 = vpop.permute.xlu0 %1228
      %v1231 = vmul.f32 %v539, %v1224
      %v1232 = vmul.f32 %v540, %v1229
      %v1233 = vld [vmem:[%s2 + $0x21] sm:$0x1]
      %v1234 = vlaneseq
      %v1235 = vshrl.u32 %v1234, 7
      %v1236 = vsub.s32 0, %v1235
      %v1237 = vrot.slane %v1233, %v1236
      %v1238 = vmul.f32 %v1231, %v1237
      %v1239 = vmul.f32 %v1232, %v1237
      %v1240 = vadd.f32 %v1216, %v1238
      %v1241 = vadd.f32 %v1217, %v1239
      %s1242 = scalar_lea.vmem %s1, 544
      %v1243 = vld [vmem:[%s1242] sm:$0xff]
      %v1244 = vld [vmem:[%s1242 + $0x8] sm:$0xff]
      %1246 = vset.pattern.permute.xlu0 0
      %1247 = vperm.xlu0 %1246, %v1243
      %v1248 = vpop.permute.xlu0 %1247
      %1251 = vset.pattern.permute.xlu0 0
      %1252 = vperm.xlu0 %1251, %v1244
      %v1253 = vpop.permute.xlu0 %1252
      %v1255 = vmul.f32 %v568, %v1248
      %v1256 = vmul.f32 %v569, %v1253
      %v1257 = vld [vmem:[%s2 + $0x22] sm:$0x1]
      %v1258 = vlaneseq
      %v1259 = vshrl.u32 %v1258, 7
      %v1260 = vsub.s32 0, %v1259
      %v1261 = vrot.slane %v1257, %v1260
      %v1262 = vmul.f32 %v1255, %v1261
      %v1263 = vmul.f32 %v1256, %v1261
      %v1264 = vadd.f32 %v1240, %v1262
      %v1265 = vadd.f32 %v1241, %v1263
      %s1266 = scalar_lea.vmem %s1, 560
      %v1267 = vld [vmem:[%s1266] sm:$0xff]
      %v1268 = vld [vmem:[%s1266 + $0x8] sm:$0xff]
      %1270 = vset.pattern.permute.xlu0 0
      %1271 = vperm.xlu0 %1270, %v1267
      %v1272 = vpop.permute.xlu0 %1271
      %1275 = vset.pattern.permute.xlu0 0
      %1276 = vperm.xlu0 %1275, %v1268
      %v1277 = vpop.permute.xlu0 %1276
      %v1279 = vmul.f32 %v510, %v1272
      %v1280 = vmul.f32 %v511, %v1277
      %v1281 = vld [vmem:[%s2 + $0x23] sm:$0x1]
      %v1282 = vlaneseq
      %v1283 = vshrl.u32 %v1282, 7
      %v1284 = vsub.s32 0, %v1283
      %v1285 = vrot.slane %v1281, %v1284
      %v1286 = vmul.f32 %v1279, %v1285
      %v1287 = vmul.f32 %v1280, %v1285
      %v1288 = vadd.f32 %v1264, %v1286
      %v1289 = vadd.f32 %v1265, %v1287
      %s1290 = scalar_lea.vmem %s1, 576
      %v1291 = vld [vmem:[%s1290] sm:$0xff]
      %v1292 = vld [vmem:[%s1290 + $0x8] sm:$0xff]
      %1294 = vset.pattern.permute.xlu0 0
      %1295 = vperm.xlu0 %1294, %v1291
      %v1296 = vpop.permute.xlu0 %1295
      %1299 = vset.pattern.permute.xlu0 0
      %1300 = vperm.xlu0 %1299, %v1292
      %v1301 = vpop.permute.xlu0 %1300
      %v1303 = vmul.f32 %v539, %v1296
      %v1304 = vmul.f32 %v540, %v1301
      %v1305 = vld [vmem:[%s2 + $0x24] sm:$0x1]
      %v1306 = vlaneseq
      %v1307 = vshrl.u32 %v1306, 7
      %v1308 = vsub.s32 0, %v1307
      %v1309 = vrot.slane %v1305, %v1308
      %v1310 = vmul.f32 %v1303, %v1309
      %v1311 = vmul.f32 %v1304, %v1309
      %v1312 = vadd.f32 %v1288, %v1310
      %v1313 = vadd.f32 %v1289, %v1311
      %s1314 = scalar_lea.vmem %s1, 592
      %v1315 = vld [vmem:[%s1314] sm:$0xff]
      %v1316 = vld [vmem:[%s1314 + $0x8] sm:$0xff]
      %1318 = vset.pattern.permute.xlu0 0
      %1319 = vperm.xlu0 %1318, %v1315
      %v1320 = vpop.permute.xlu0 %1319
      %1323 = vset.pattern.permute.xlu0 0
      %1324 = vperm.xlu0 %1323, %v1316
      %v1325 = vpop.permute.xlu0 %1324
      %v1327 = vmul.f32 %v568, %v1320
      %v1328 = vmul.f32 %v569, %v1325
      %v1329 = vld [vmem:[%s2 + $0x25] sm:$0x1]
      %v1330 = vlaneseq
      %v1331 = vshrl.u32 %v1330, 7
      %v1332 = vsub.s32 0, %v1331
      %v1333 = vrot.slane %v1329, %v1332
      %v1334 = vmul.f32 %v1327, %v1333
      %v1335 = vmul.f32 %v1328, %v1333
      %v1336 = vadd.f32 %v1312, %v1334
      %v1337 = vadd.f32 %v1313, %v1335
      %s1338 = scalar_lea.vmem %s1, 608
      %v1339 = vld [vmem:[%s1338] sm:$0xff]
      %v1340 = vld [vmem:[%s1338 + $0x8] sm:$0xff]
      %1342 = vset.pattern.permute.xlu0 0
      %1343 = vperm.xlu0 %1342, %v1339
      %v1344 = vpop.permute.xlu0 %1343
      %1347 = vset.pattern.permute.xlu0 0
      %1348 = vperm.xlu0 %1347, %v1340
      %v1349 = vpop.permute.xlu0 %1348
      %v1351 = vmul.f32 %v389, %v1344
      %v1352 = vmul.f32 %v388, %v1349
      %v1353 = vld [vmem:[%s2 + $0x26] sm:$0x1]
      %v1354 = vlaneseq
      %v1355 = vshrl.u32 %v1354, 7
      %v1356 = vsub.s32 0, %v1355
      %v1357 = vrot.slane %v1353, %v1356
      %v1358 = vmul.f32 %v1351, %v1357
      %v1359 = vmul.f32 %v1352, %v1357
      %v1360 = vadd.f32 %v1336, %v1358
      %v1361 = vadd.f32 %v1337, %v1359
      %s1362 = scalar_lea.vmem %s1, 624
      %v1363 = vld [vmem:[%s1362] sm:$0xff]
      %v1364 = vld [vmem:[%s1362 + $0x8] sm:$0xff]
      %1366 = vset.pattern.permute.xlu0 0
      %1367 = vperm.xlu0 %1366, %v1363
      %v1368 = vpop.permute.xlu0 %1367
      %1371 = vset.pattern.permute.xlu0 0
      %1372 = vperm.xlu0 %1371, %v1364
      %v1373 = vpop.permute.xlu0 %1372
      %v1375 = vmul.f32 %v396, %v1368
      %v1376 = vmul.f32 %v395, %v1373
      %v1377 = vld [vmem:[%s2 + $0x27] sm:$0x1]
      %v1378 = vlaneseq
      %v1379 = vshrl.u32 %v1378, 7
      %v1380 = vsub.s32 0, %v1379
      %v1381 = vrot.slane %v1377, %v1380
      %v1382 = vmul.f32 %v1375, %v1381
      %v1383 = vmul.f32 %v1376, %v1381
      %v1384 = vadd.f32 %v1360, %v1382
      %v1385 = vadd.f32 %v1361, %v1383
      %s1386 = scalar_lea.vmem %s1, 640
      %v1387 = vld [vmem:[%s1386] sm:$0xff]
      %v1388 = vld [vmem:[%s1386 + $0x8] sm:$0xff]
      %1390 = vset.pattern.permute.xlu0 0
      %1391 = vperm.xlu0 %1390, %v1387
      %v1392 = vpop.permute.xlu0 %1391
      %1395 = vset.pattern.permute.xlu0 0
      %1396 = vperm.xlu0 %1395, %v1388
      %v1397 = vpop.permute.xlu0 %1396
      %v1399 = vmul.f32 %v424, %v1392
      %v1400 = vmul.f32 %v423, %v1397
      %v1401 = vld [vmem:[%s2 + $0x28] sm:$0x1]
      %v1402 = vlaneseq
      %v1403 = vshrl.u32 %v1402, 7
      %v1404 = vsub.s32 0, %v1403
      %v1405 = vrot.slane %v1401, %v1404
      %v1406 = vmul.f32 %v1399, %v1405
      %v1407 = vmul.f32 %v1400, %v1405
      %v1408 = vadd.f32 %v1384, %v1406
      %v1409 = vadd.f32 %v1385, %v1407
      %s1410 = scalar_lea.vmem %s1, 656
      %v1411 = vld [vmem:[%s1410] sm:$0xff]
      %v1412 = vld [vmem:[%s1410 + $0x8] sm:$0xff]
      %1414 = vset.pattern.permute.xlu0 0
      %1415 = vperm.xlu0 %1414, %v1411
      %v1416 = vpop.permute.xlu0 %1415
      %1419 = vset.pattern.permute.xlu0 0
      %1420 = vperm.xlu0 %1419, %v1412
      %v1421 = vpop.permute.xlu0 %1420
      %v1423 = vmul.f32 %v453, %v1416
      %v1424 = vmul.f32 %v452, %v1421
      %v1425 = vld [vmem:[%s2 + $0x29] sm:$0x1]
      %v1426 = vlaneseq
      %v1427 = vshrl.u32 %v1426, 7
      %v1428 = vsub.s32 0, %v1427
      %v1429 = vrot.slane %v1425, %v1428
      %v1430 = vmul.f32 %v1423, %v1429
      %v1431 = vmul.f32 %v1424, %v1429
      %v1432 = vadd.f32 %v1408, %v1430
      %v1433 = vadd.f32 %v1409, %v1431
      %s1434 = scalar_lea.vmem %s1, 672
      %v1435 = vld [vmem:[%s1434] sm:$0xff]
      %v1436 = vld [vmem:[%s1434 + $0x8] sm:$0xff]
      %1438 = vset.pattern.permute.xlu0 0
      %1439 = vperm.xlu0 %1438, %v1435
      %v1440 = vpop.permute.xlu0 %1439
      %1443 = vset.pattern.permute.xlu0 0
      %1444 = vperm.xlu0 %1443, %v1436
      %v1445 = vpop.permute.xlu0 %1444
      %v1447 = vmul.f32 %v396, %v1440
      %v1448 = vmul.f32 %v395, %v1445
      %v1449 = vld [vmem:[%s2 + $0x2a] sm:$0x1]
      %v1450 = vlaneseq
      %v1451 = vshrl.u32 %v1450, 7
      %v1452 = vsub.s32 0, %v1451
      %v1453 = vrot.slane %v1449, %v1452
      %v1454 = vmul.f32 %v1447, %v1453
      %v1455 = vmul.f32 %v1448, %v1453
      %v1456 = vadd.f32 %v1432, %v1454
      %v1457 = vadd.f32 %v1433, %v1455
      %s1458 = scalar_lea.vmem %s1, 688
      %v1459 = vld [vmem:[%s1458] sm:$0xff]
      %v1460 = vld [vmem:[%s1458 + $0x8] sm:$0xff]
      %1462 = vset.pattern.permute.xlu0 0
      %1463 = vperm.xlu0 %1462, %v1459
      %v1464 = vpop.permute.xlu0 %1463
      %1467 = vset.pattern.permute.xlu0 0
      %1468 = vperm.xlu0 %1467, %v1460
      %v1469 = vpop.permute.xlu0 %1468
      %v1471 = vmul.f32 %v424, %v1464
      %v1472 = vmul.f32 %v423, %v1469
      %v1473 = vld [vmem:[%s2 + $0x2b] sm:$0x1]
      %v1474 = vlaneseq
      %v1475 = vshrl.u32 %v1474, 7
      %v1476 = vsub.s32 0, %v1475
      %v1477 = vrot.slane %v1473, %v1476
      %v1478 = vmul.f32 %v1471, %v1477
      %v1479 = vmul.f32 %v1472, %v1477
      %v1480 = vadd.f32 %v1456, %v1478
      %v1481 = vadd.f32 %v1457, %v1479
      %s1482 = scalar_lea.vmem %s1, 704
      %v1483 = vld [vmem:[%s1482] sm:$0xff]
      %v1484 = vld [vmem:[%s1482 + $0x8] sm:$0xff]
      %1486 = vset.pattern.permute.xlu0 0
      %1487 = vperm.xlu0 %1486, %v1483
      %v1488 = vpop.permute.xlu0 %1487
      %1491 = vset.pattern.permute.xlu0 0
      %1492 = vperm.xlu0 %1491, %v1484
      %v1493 = vpop.permute.xlu0 %1492
      %v1495 = vmul.f32 %v453, %v1488
      %v1496 = vmul.f32 %v452, %v1493
      %v1497 = vld [vmem:[%s2 + $0x2c] sm:$0x1]
      %v1498 = vlaneseq
      %v1499 = vshrl.u32 %v1498, 7
      %v1500 = vsub.s32 0, %v1499
      %v1501 = vrot.slane %v1497, %v1500
      %v1502 = vmul.f32 %v1495, %v1501
      %v1503 = vmul.f32 %v1496, %v1501
      %v1504 = vadd.f32 %v1480, %v1502
      %v1505 = vadd.f32 %v1481, %v1503
      %s1506 = scalar_lea.vmem %s1, 720
      %v1507 = vld [vmem:[%s1506] sm:$0xff]
      %v1508 = vld [vmem:[%s1506 + $0x8] sm:$0xff]
      %1510 = vset.pattern.permute.xlu0 0
      %1511 = vperm.xlu0 %1510, %v1507
      %v1512 = vpop.permute.xlu0 %1511
      %1515 = vset.pattern.permute.xlu0 0
      %1516 = vperm.xlu0 %1515, %v1508
      %v1517 = vpop.permute.xlu0 %1516
      %v1519 = vmul.f32 %v482, %v1512
      %v1520 = vmul.f32 %v481, %v1517
      %v1521 = vld [vmem:[%s2 + $0x2d] sm:$0x1]
      %v1522 = vlaneseq
      %v1523 = vshrl.u32 %v1522, 7
      %v1524 = vsub.s32 0, %v1523
      %v1525 = vrot.slane %v1521, %v1524
      %v1526 = vmul.f32 %v1519, %v1525
      %v1527 = vmul.f32 %v1520, %v1525
      %v1528 = vadd.f32 %v1504, %v1526
      %v1529 = vadd.f32 %v1505, %v1527
      %s1530 = scalar_lea.vmem %s1, 736
      %v1531 = vld [vmem:[%s1530] sm:$0xff]
      %v1532 = vld [vmem:[%s1530 + $0x8] sm:$0xff]
      %1534 = vset.pattern.permute.xlu0 0
      %1535 = vperm.xlu0 %1534, %v1531
      %v1536 = vpop.permute.xlu0 %1535
      %1539 = vset.pattern.permute.xlu0 0
      %1540 = vperm.xlu0 %1539, %v1532
      %v1541 = vpop.permute.xlu0 %1540
      %v1543 = vmul.f32 %v511, %v1536
      %v1544 = vmul.f32 %v510, %v1541
      %v1545 = vld [vmem:[%s2 + $0x2e] sm:$0x1]
      %v1546 = vlaneseq
      %v1547 = vshrl.u32 %v1546, 7
      %v1548 = vsub.s32 0, %v1547
      %v1549 = vrot.slane %v1545, %v1548
      %v1550 = vmul.f32 %v1543, %v1549
      %v1551 = vmul.f32 %v1544, %v1549
      %v1552 = vadd.f32 %v1528, %v1550
      %v1553 = vadd.f32 %v1529, %v1551
      %s1554 = scalar_lea.vmem %s1, 752
      %v1555 = vld [vmem:[%s1554] sm:$0xff]
      %v1556 = vld [vmem:[%s1554 + $0x8] sm:$0xff]
      %1558 = vset.pattern.permute.xlu0 0
      %1559 = vperm.xlu0 %1558, %v1555
      %v1560 = vpop.permute.xlu0 %1559
      %1563 = vset.pattern.permute.xlu0 0
      %1564 = vperm.xlu0 %1563, %v1556
      %v1565 = vpop.permute.xlu0 %1564
      %v1567 = vmul.f32 %v540, %v1560
      %v1568 = vmul.f32 %v539, %v1565
      %v1569 = vld [vmem:[%s2 + $0x2f] sm:$0x1]
      %v1570 = vlaneseq
      %v1571 = vshrl.u32 %v1570, 7
      %v1572 = vsub.s32 0, %v1571
      %v1573 = vrot.slane %v1569, %v1572
      %v1574 = vmul.f32 %v1567, %v1573
      %v1575 = vmul.f32 %v1568, %v1573
      %v1576 = vadd.f32 %v1552, %v1574
      %v1577 = vadd.f32 %v1553, %v1575
      %s1578 = scalar_lea.vmem %s1, 768
      %v1579 = vld [vmem:[%s1578] sm:$0xff]
      %v1580 = vld [vmem:[%s1578 + $0x8] sm:$0xff]
      %1582 = vset.pattern.permute.xlu0 0
      %1583 = vperm.xlu0 %1582, %v1579
      %v1584 = vpop.permute.xlu0 %1583
      %1587 = vset.pattern.permute.xlu0 0
      %1588 = vperm.xlu0 %1587, %v1580
      %v1589 = vpop.permute.xlu0 %1588
      %v1591 = vmul.f32 %v569, %v1584
      %v1592 = vmul.f32 %v568, %v1589
      %v1593 = vld [vmem:[%s2 + $0x30] sm:$0x1]
      %v1594 = vlaneseq
      %v1595 = vshrl.u32 %v1594, 7
      %v1596 = vsub.s32 0, %v1595
      %v1597 = vrot.slane %v1593, %v1596
      %v1598 = vmul.f32 %v1591, %v1597
      %v1599 = vmul.f32 %v1592, %v1597
      %v1600 = vadd.f32 %v1576, %v1598
      %v1601 = vadd.f32 %v1577, %v1599
      %v1602 = vld [vmem:[%s3] sm:$0x1]
      %v1604 = vlaneseq
      %v1605 = vshrl.u32 %v1604, 7
      %v1606 = vsub.s32 0, %v1605
      %v1607 = vrot.slane %v1602, %v1606
      %v1609 = vadd.f32 %v1600, %v1607
      %v1610 = vadd.f32 %v1601, %v1607
      %v1611 = vld [vmem:[%s4] sm:$0x1]
      %v1612 = vld [vmem:[%s5] sm:$0x1]
      %vm1613 = vcmask 261120
      %v1614 = vsel %vm1613, %v1609, 0.0
      %1615 = vadd.xlane.f32.xlu0 %v1614
      %v1616 = vpop.xlane.xlu0 %1615
      %v1617 = vsel %vm1613, %v1610, 0.0
      %1618 = vadd.xlane.f32.xlu0 %v1617
      %v1619 = vpop.xlane.xlu0 %1618
      %v1620 = vrcp.pop 32.0
      %v1621 = vmul.f32 %v1616, %v1620
      %v1622 = vmul.f32 %v1619, %v1620
      %v1623 = vsub.f32 %v1609, %v1621
      %v1624 = vsub.f32 %v1610, %v1622
      %v1625 = vmul.f32 %v1623, %v1623
      %v1626 = vmul.f32 %v1624, %v1624
      %v1627 = vsel %vm1613, %v1625, 0.0
      %1628 = vadd.xlane.f32.xlu0 %v1627
      %v1629 = vpop.xlane.xlu0 %1628
      %v1630 = vsel %vm1613, %v1626, 0.0
      %1631 = vadd.xlane.f32.xlu0 %v1630
      %v1632 = vpop.xlane.xlu0 %1631
      %v1633 = vmul.f32 %v1629, %v1620
      %v1634 = vmul.f32 %v1632, %v1620
      %v1635 = vadd.f32 %v1633, 1e-06
      %v1636 = vadd.f32 %v1634, 1e-06
      %v1637 = vrsqrt.pop %v1635
      %v1638 = vrsqrt.pop %v1636
      %v1639 = vmul.f32 %v1623, %v1637
      %v1640 = vmul.f32 %v1624, %v1638
      %v1642 = vlaneseq
      %v1643 = vshrl.u32 %v1642, 7
      %v1644 = vsub.s32 0, %v1643
      %v1645 = vrot.slane %v1611, %v1644
      %v1647 = vmul.f32 %v1639, %v1645
      %v1648 = vmul.f32 %v1640, %v1645
      %v1650 = vlaneseq
      %v1651 = vshrl.u32 %v1650, 7
      %v1652 = vsub.s32 0, %v1651
      %v1653 = vrot.slane %v1612, %v1652
      %v1655 = vadd.f32 %v1647, %v1653
      %v1656 = vadd.f32 %v1648, %v1653
      %v1657 = vpack.c.bf16 %v1656, %v1655
      %v1658 = vld [vmem:[%s6] sm:$0xf]
      %v1659 = vld [vmem:[%s6 + $0x4] sm:$0xf]
      %v1660 = vld [vmem:[%s6 + $0x8] sm:$0xf]
      %v1661 = vld [vmem:[%s6 + $0xc] sm:$0xf]
      %v1662 = vld [vmem:[%s7] sm:$0x1]
      %v1664 = vlaneseq
      %v1665 = vshrl.u32 %v1664, 7
      %v1666 = vsub.s32 0, %v1665
      %v1667 = vrot.slane %v1662, %v1666
      %v1673 = vunpack.c.l.b16 %v1658
      %v1674 = vunpack.c.l.b16 %v1659
      %v1675 = vunpack.c.l.b16 %v1660
      %v1676 = vunpack.c.l.b16 %v1661
      %v1677 = vpack.c.b16 %v1674, %v1673
      %v1678 = vpack.c.b16 %v1676, %v1675
      %v1682 = vsel %vm1613, %v1657, 0
      %1684 = vmatprep.subr.bf16.mxu0 0
      %1685 = vmatpush1.bf16.msra.mxu0 %v1677
      %1686 = vmatprep.subr.bf16.mxu0 0
      %1687 = vmatpush1.bf16.msra.mxu0 %v1678
      %1688 = vmatprep.subr.bf16.mxu0 0
      %1689 = vmatpush1.bf16.msra.mxu0 0
      %1690 = vmatprep.subr.bf16.mxu0 0
      %1691 = vmatpush1.bf16.msra.mxu0 0
      %1692 = vmatprep.subr.bf16.mxu0 0
      %1693 = vmatpush1.bf16.msra.mxu0 0
      %1694 = vmatprep.subr.bf16.mxu0 0
      %1695 = vmatpush1.bf16.msra.mxu0 0
      %1696 = vmatprep.subr.bf16.mxu0 0
      %1697 = vmatpush1.bf16.msra.mxu0 0
      %1698 = vmatprep.subr.bf16.mxu0 0
      %1699 = vmatpush1.bf16.msra.mxu0 0
      %1700 = vmatprep.subr.bf16.mxu0 0
      %1701 = vmatpush1.bf16.msra.mxu0 0
      %1702 = vmatprep.subr.bf16.mxu0 0
      %1703 = vmatpush1.bf16.msra.mxu0 0
      %1704 = vmatprep.subr.bf16.mxu0 0
      %1705 = vmatpush1.bf16.msra.mxu0 0
      %1706 = vmatprep.subr.bf16.mxu0 0
      %1707 = vmatpush1.bf16.msra.mxu0 0
      %1708 = vmatprep.subr.bf16.mxu0 0
      %1709 = vmatpush1.bf16.msra.mxu0 0
      %1710 = vmatprep.subr.bf16.mxu0 0
      %1711 = vmatpush1.bf16.msra.mxu0 0
      %1712 = vmatprep.subr.bf16.mxu0 0
      %1713 = vmatpush1.bf16.msra.mxu0 0
      %1714 = vmatprep.subr.bf16.mxu0 0
      %1715 = vmatpush1.bf16.msra.mxu0 0
      %1716 = vmatprep.mubr.bf16.mxu0 0
      %1717 = vmatmul.mubr.bf16.gmra.mrb[0].mxu0 %v1682
      %v1718 = vpop.f32.mrb[0].mxu0
      %v1719 = vadd.f32 %v1667, %v1718
      %v1720 = vpop.f32.mrb[0].mxu0
      %v1721 = vpop.f32.mrb[0].mxu0
      %v1722 = vadd.f32 %v1667, %v1721
      %v1723 = vpop.f32.mrb[0].mxu0
      %1724 = vdwg.mxu0
      %v1725 = vmul.f32 %v1719, 0.5
      %v1726 = vmul.f32 %v1722, 0.5
      %v1727 = vmul.f32 %v1719, 0.70710677
      %v1728 = vmul.f32 %v1722, 0.70710677
      %v1729 = vand.u32 2147483647, %v1727
      %v1730 = vand.u32 2147483647, %v1728
      %v1731 = vmul.f32 %v1729, 0.3275911
      %v1732 = vmul.f32 %v1730, 0.3275911
      %v1733 = vadd.f32 %v1731, 1.0
      %v1734 = vadd.f32 %v1732, 1.0
      %v1735 = vrcp.pop %v1733
      %v1736 = vrcp.pop %v1734
      %v1737 = vmul.f32 %v1735, 1.0614054
      %v1738 = vmul.f32 %v1736, 1.0614054
      %v1739 = vadd.f32 %v1737, -1.4531521
      %v1740 = vadd.f32 %v1738, -1.4531521
      %v1741 = vmul.f32 %v1739, %v1735
      %v1742 = vmul.f32 %v1740, %v1736
      %v1743 = vadd.f32 %v1741, 1.4214138
      %v1744 = vadd.f32 %v1742, 1.4214138
      %v1745 = vmul.f32 %v1743, %v1735
      %v1746 = vmul.f32 %v1744, %v1736
      %v1747 = vadd.f32 %v1745, -0.28449672
      %v1748 = vadd.f32 %v1746, -0.28449672
      %v1749 = vmul.f32 %v1747, %v1735
      %v1750 = vmul.f32 %v1748, %v1736
      %v1751 = vadd.f32 %v1749, 0.2548296
      %v1752 = vadd.f32 %v1750, 0.2548296
      %v1753 = vmul.f32 %v1751, %v1735
      %v1754 = vmul.f32 %v1752, %v1736
      %v1755 = vsub.f32 0.0, %v1729
      %v1756 = vsub.f32 0.0, %v1730
      %v1757 = vmul.f32 %v1755, %v1729
      %v1758 = vmul.f32 %v1756, %v1730
      %v1759 = vmul.f32 %v1757, 1.442695
      %v1760 = vpow.pop %v1759
      %v1761 = vmul.f32 %v1758, 1.442695
      %v1762 = vpow.pop %v1761
      %v1763 = vmul.f32 %v1753, %v1760
      %v1764 = vmul.f32 %v1754, %v1762
      %v1765 = vsub.f32 1.0, %v1763
      %v1766 = vsub.f32 1.0, %v1764
      %vm1767 = vcmp.lt.f32.partialorder %v1727, 0.0
      %vm1768 = vcmp.lt.f32.partialorder %v1728, 0.0
      %v1769 = vsub.f32 0.0, %v1765
      %v1770 = vsub.f32 0.0, %v1766
      %v1771 = vsel %vm1767, %v1769, %v1765
      %v1772 = vsel %vm1768, %v1770, %v1766
      %v1773 = vadd.f32 %v1771, 1.0
      %v1774 = vadd.f32 %v1772, 1.0
      %v1775 = vmul.f32 %v1725, %v1773
      %v1776 = vmul.f32 %v1726, %v1774
      %v1777 = vpack.c.bf16 %v1776, %v1775
      %v1778 = vld [vmem:[%s8] sm:$0xf]
      %v1779 = vld [vmem:[%s8 + $0x4] sm:$0xf]
      %v1780 = vld [vmem:[%s8 + $0x8] sm:$0xf]
      %v1781 = vld [vmem:[%s8 + $0xc] sm:$0xf]
      %v1782 = vld [vmem:[%s8 + $0x10] sm:$0xf]
      %v1783 = vld [vmem:[%s8 + $0x14] sm:$0xf]
      %v1784 = vld [vmem:[%s8 + $0x18] sm:$0xf]
      %v1785 = vld [vmem:[%s8 + $0x1c] sm:$0xf]
      %v1786 = vld [vmem:[%s8 + $0x20] sm:$0xf]
      %v1787 = vld [vmem:[%s8 + $0x24] sm:$0xf]
      %v1788 = vld [vmem:[%s8 + $0x28] sm:$0xf]
      %v1789 = vld [vmem:[%s8 + $0x2c] sm:$0xf]
      %v1790 = vld [vmem:[%s8 + $0x30] sm:$0xf]
      %v1791 = vld [vmem:[%s8 + $0x34] sm:$0xf]
      %v1792 = vld [vmem:[%s8 + $0x38] sm:$0xf]
      %v1793 = vld [vmem:[%s8 + $0x3c] sm:$0xf]
      %v1794 = vld [vmem:[%s9] sm:$0x1]
      %v1796 = vlaneseq
      %v1797 = vshrl.u32 %v1796, 7
      %v1798 = vsub.s32 0, %v1797
      %v1799 = vrot.slane %v1794, %v1798
      %v1817 = vunpack.c.l.b16 %v1778
      %v1818 = vunpack.c.l.b16 %v1779
      %v1819 = vunpack.c.l.b16 %v1780
      %v1820 = vunpack.c.l.b16 %v1781
      %v1821 = vunpack.c.l.b16 %v1782
      %v1822 = vunpack.c.l.b16 %v1783
      %v1823 = vunpack.c.l.b16 %v1784
      %v1824 = vunpack.c.l.b16 %v1785
      %v1825 = vunpack.c.l.b16 %v1786
      %v1826 = vunpack.c.l.b16 %v1787
      %v1827 = vunpack.c.l.b16 %v1788
      %v1828 = vunpack.c.l.b16 %v1789
      %v1829 = vunpack.c.l.b16 %v1790
      %v1830 = vunpack.c.l.b16 %v1791
      %v1831 = vunpack.c.l.b16 %v1792
      %v1832 = vunpack.c.l.b16 %v1793
      %v1833 = vpack.c.b16 %v1818, %v1817
      %v1834 = vpack.c.b16 %v1820, %v1819
      %v1835 = vpack.c.b16 %v1822, %v1821
      %v1836 = vpack.c.b16 %v1824, %v1823
      %v1837 = vpack.c.b16 %v1826, %v1825
      %v1838 = vpack.c.b16 %v1828, %v1827
      %v1839 = vpack.c.b16 %v1830, %v1829
      %v1840 = vpack.c.b16 %v1832, %v1831
      %1849 = vmatprep.subr.bf16.mxu0 0
      %1850 = vmatpush1.bf16.msra.mxu0 %v1833
      %1851 = vmatprep.subr.bf16.mxu0 0
      %1852 = vmatpush1.bf16.msra.mxu0 %v1834
      %1853 = vmatprep.subr.bf16.mxu0 0
      %1854 = vmatpush1.bf16.msra.mxu0 %v1835
      %1855 = vmatprep.subr.bf16.mxu0 0
      %1856 = vmatpush1.bf16.msra.mxu0 %v1836
      %1857 = vmatprep.subr.bf16.mxu0 0
      %1858 = vmatpush1.bf16.msra.mxu0 %v1837
      %1859 = vmatprep.subr.bf16.mxu0 0
      %1860 = vmatpush1.bf16.msra.mxu0 %v1838
      %1861 = vmatprep.subr.bf16.mxu0 0
      %1862 = vmatpush1.bf16.msra.mxu0 %v1839
      %1863 = vmatprep.subr.bf16.mxu0 0
      %1864 = vmatpush1.bf16.msra.mxu0 %v1840
      %1865 = vmatprep.subr.bf16.mxu0 0
      %1866 = vmatpush1.bf16.msra.mxu0 0
      %1867 = vmatprep.subr.bf16.mxu0 0
      %1868 = vmatpush1.bf16.msra.mxu0 0
      %1869 = vmatprep.subr.bf16.mxu0 0
      %1870 = vmatpush1.bf16.msra.mxu0 0
      %1871 = vmatprep.subr.bf16.mxu0 0
      %1872 = vmatpush1.bf16.msra.mxu0 0
      %1873 = vmatprep.subr.bf16.mxu0 0
      %1874 = vmatpush1.bf16.msra.mxu0 0
      %1875 = vmatprep.subr.bf16.mxu0 0
      %1876 = vmatpush1.bf16.msra.mxu0 0
      %1877 = vmatprep.subr.bf16.mxu0 0
      %1878 = vmatpush1.bf16.msra.mxu0 0
      %1879 = vmatprep.subr.bf16.mxu0 0
      %1880 = vmatpush1.bf16.msra.mxu0 0
      %1881 = vmatprep.mubr.bf16.mxu0 0
      %1882 = vmatmul.mubr.bf16.gmra.mrb[0].mxu0 %v1777
      %v1883 = vpop.f32.mrb[0].mxu0
      %v1884 = vadd.f32 %v1799, %v1883
      %v1885 = vpop.f32.mrb[0].mxu0
      %v1886 = vpop.f32.mrb[0].mxu0
      %v1887 = vadd.f32 %v1799, %v1886
      %v1888 = vpop.f32.mrb[0].mxu0
      %1889 = vdwg.mxu0
      %v1890 = vld [vmem:[%s10] sm:$0x1]
      %v1892 = vlaneseq
      %v1893 = vshrl.u32 %v1892, 7
      %v1894 = vsub.s32 0, %v1893
      %v1895 = vrot.slane %v1890, %v1894
      %v1897 = vmul.f32 %v1895, %v1884
      %v1898 = vmul.f32 %v1895, %v1887
      %v1899 = vadd.f32 %v388, %v1897
      %v1900 = vadd.f32 %v389, %v1898
      %1901 = vst.msk [vmem:[%s386] sm:$0xff] %vm1613, %v1899
      %1902 = vst.msk [vmem:[%s386 + $0x8] sm:$0xff] %vm1613, %v1900
      %p1903 = scmp.lt.s32.totalorder %s22, 1
      %s1904 = scalar_select %p1903, %s22, 1
      %s1905 = smul.addr %s1904, 2
      %s1906 = smul.addr %s1905, 8
      %s1907 = scalar_lea.vmem %s11, %s1906
      // Predicated region
      $region65: #{_lambda_.8} parent=63 // pred_check
        %p1908 = pneg %p276
      $region66: #{_lambda_.8} parent=63 // pred_check_branch
        %1910 = sbr.rel (%p1908) target = $region68
      $region67: #{_lambda_.8} parent=63 // pred_region
        _
      $region68: #{_lambda_.8} parent=63 // pred_fallthru
        _
    $region64: #{_lambda_.8} parent=5 // pred_fallthru
      _
    %p1911 = scmp.le.s32.totalorder 2, %s17
    // Predicated region
    $region69: #{_lambda_.8} parent=5 // pred_check
      %p1912 = pneg %p1911
    $region70: #{_lambda_.8} parent=5 // pred_check_branch
      %1914 = sbr.rel (%p1912) target = $region72
    $region71: #{_lambda_.8} parent=5 // pred_region
      %s1915 = ssub.s32 %s17, 2
      // Predicated region
      $region73: #{_lambda_.8} parent=71 // pred_check
        %p1916 = pneg %p282
      $region74: #{_lambda_.8} parent=71 // pred_check_branch
        %1918 = sbr.rel (%p1916) target = $region76
      $region75: #{_lambda_.8} parent=71 // pred_region
        %p1919 = scmp.lt.s32.totalorder %s23, 1
        %s1920 = scalar_select %p1919, %s23, 1
        %s1921 = smul.addr %s1920, 2
        %s1922 = smul.addr %s1921, 8
        %s1923 = scalar_lea.vmem %s11, %s1922
      $region76: #{_lambda_.8} parent=71 // pred_fallthru
        _
    $region72: #{_lambda_.8} parent=5 // pred_fallthru
      _
  $region6: #{_lambda_.8} parent=0 // loop_footer
    %s21 = sadd.s32 1, %s17
  $region7: #{_lambda_.8} parent=0 // loop_footer_branch
    %16 = sbr.rel target = $region3
  $region8: #{_lambda_.8} parent=0 // loop_exit
    _

// kernel: _lambda_.11
$region0: #{_lambda_.11}
  #allocation0 [shape = 'u32[]', space=smem, size = 0x4, offset = 0x4, fixed_abs, tag = 'smem constant byte address 0x4 - core index']
  #allocation1 [shape = 'u32[144,128]{1,0:T(1,128)}', space=vmem, size = 0x12000, scoped, tag = 'internal scratch']
  %s0 = inlined_call_operand.vmem [shape: f32[2,4,64], index: 0, kind: input, shape index: {}]
  %s1 = inlined_call_operand.vmem [shape: f32[49,4,1], index: 1, kind: input, shape index: {}]
  %s2 = inlined_call_operand.vmem [shape: f32[49,64], index: 2, kind: input, shape index: {}]
  %s3 = inlined_call_operand.vmem [shape: f32[1,64], index: 3, kind: input, shape index: {}, may-alias: {3,5,9}]
  %s4 = inlined_call_operand.vmem [shape: f32[1,64], index: 4, kind: input, shape index: {}]
  %s5 = inlined_call_operand.vmem [shape: f32[1,64], index: 5, kind: input, shape index: {}, may-alias: {3,5,9}]
  %s6 = inlined_call_operand.vmem [shape: bf16[64,256], index: 6, kind: input, shape index: {}]
  %s7 = inlined_call_operand.vmem [shape: f32[1,256], index: 7, kind: input, shape index: {}]
  %s8 = inlined_call_operand.vmem [shape: bf16[256,64], index: 8, kind: input, shape index: {}]
  %s9 = inlined_call_operand.vmem [shape: f32[1,64], index: 9, kind: input, shape index: {}, may-alias: {3,5,9}]
  %s10 = inlined_call_operand.vmem [shape: f32[1,64], index: 10, kind: input, shape index: {}]
  %s11 = inlined_call_operand.vmem [shape: f32[2,4,64], index: 11, kind: output, shape index: {}]
  %s12 = sld [smem:[#allocation0]]
  $region77: #{_lambda_.11} parent=0
    _
  %s14 = ssub.s32 1, %s12
  %s15 = scalar_select 0, %s14, %s12
  loop: start=0, step=1, limit=4
  $region2: #{_lambda_.11} parent=0 // loop_pre_header
    _
  $region3: #{_lambda_.11} parent=0 // loop_header
    %s17 = sphi 0, %s21
    %p18 = scmp.ge.s32.totalorder %s17, 4
    %s27 = sphi 0, %s29
    %s30 = sphi 0, %s27
    %s31 = sphi 0, %s30
    %s47 = sphi 0, %s31
    %s51 = sphi 0, %s51
    %s53 = sphi 0, %s51
    %s54 = sphi 0, %s53
    %s68 = sphi 0, %s54
    %s72 = sphi 0, %s72
    %s74 = sphi 0, %s72
    %s75 = sphi 0, %s74
    %s89 = sphi 0, %s75
    %s93 = sphi 0, %s93
    %s95 = sphi 0, %s93
    %s96 = sphi 0, %s95
    %s110 = sphi 0, %s96
    %s114 = sphi 0, %s114
    %s116 = sphi 0, %s114
    %s117 = sphi 0, %s116
    %s131 = sphi 0, %s117
    %s135 = sphi 0, %s135
    %s137 = sphi 0, %s135
    %s138 = sphi 0, %s137
    %s152 = sphi 0, %s138
    %s156 = sphi 0, %s156
    %s158 = sphi 0, %s156
    %s159 = sphi 0, %s158
    %s173 = sphi 0, %s159
    %s177 = sphi 0, %s177
    %s179 = sphi 0, %s177
    %s180 = sphi 0, %s179
    %s194 = sphi 0, %s180
    %s198 = sphi 0, %s198
    %s200 = sphi 0, %s198
    %s201 = sphi 0, %s200
    %s215 = sphi 0, %s201
    %s219 = sphi 0, %s219
    %s221 = sphi 0, %s219
    %s222 = sphi 0, %s221
    %s236 = sphi 0, %s222
    %s240 = sphi 0, %s240
    %s242 = sphi 0, %s240
    %s243 = sphi 0, %s242
    %s257 = sphi 0, %s243
    %s263 = sphi 0, %s265
    %s266 = sphi 0, %s263
    %s267 = sphi 0, %s266
    %s283 = sphi 0, %s267
  $region4: #{_lambda_.11} parent=0 // loop_header_branch
    %20 = sbr.rel (%p18) target = $region8
  $region5: #{_lambda_.11} parent=0 // loop_body
    %s22 = ssub.s32 %s17, 1
    %s23 = ssub.s32 %s17, 2
    %s24 = sadd.s32 %s17, 1
    %s25 = ssub.s32 %s17, %s24
    %p26 = scmp.eq.s32.totalorder %s25, 0
    %s28 = sadd.s32 %s27, 1
    %s29 = scalar_select %p26, %s27, %s28
    %p32 = pneg %p26
    %p33 = scmp.eq.s32.totalorder %s17, 1
    %p34 = por %p32, %p33
    %p35 = scmp.ne.s32.totalorder %s27, %s30
    %p36 = scmp.eq.s32.totalorder %s17, 0
    %p37 = por %p35, %p36
    %p38 = scmp.ne.s32.totalorder %s27, %s30
    %p39 = scmp.eq.s32.totalorder %s22, 1
    %p40 = por %p38, %p39
    %p41 = scmp.ne.s32.totalorder %s30, %s31
    %p42 = scmp.eq.s32.totalorder %s22, 0
    %p43 = por %p41, %p42
    %p44 = scmp.ne.s32.totalorder %s30, %s31
    %p45 = scmp.eq.s32.totalorder %s23, 1
    %p46 = por %p44, %p45
    %p48 = scmp.ne.s32.totalorder %s31, %s47
    %p49 = scmp.eq.s32.totalorder %s23, 0
    %p50 = por %p48, %p49
    %s52 = sadd.s32 %s51, 1
    %p55 = scmp.eq.s32.totalorder %s17, 1
    %p56 = scmp.ne.s32.totalorder %s51, %s53
    %p57 = scmp.eq.s32.totalorder %s17, 0
    %p58 = por %p56, %p57
    %p59 = scmp.ne.s32.totalorder %s51, %s53
    %p60 = scmp.eq.s32.totalorder %s22, 1
    %p61 = por %p59, %p60
    %p62 = scmp.ne.s32.totalorder %s53, %s54
    %p63 = scmp.eq.s32.totalorder %s22, 0
    %p64 = por %p62, %p63
    %p65 = scmp.ne.s32.totalorder %s53, %s54
    %p66 = scmp.eq.s32.totalorder %s23, 1
    %p67 = por %p65, %p66
    %p69 = scmp.ne.s32.totalorder %s54, %s68
    %p70 = scmp.eq.s32.totalorder %s23, 0
    %p71 = por %p69, %p70
    %s73 = sadd.s32 %s72, 1
    %p76 = scmp.eq.s32.totalorder %s17, 1
    %p77 = scmp.ne.s32.totalorder %s72, %s74
    %p78 = scmp.eq.s32.totalorder %s17, 0
    %p79 = por %p77, %p78
    %p80 = scmp.ne.s32.totalorder %s72, %s74
    %p81 = scmp.eq.s32.totalorder %s22, 1
    %p82 = por %p80, %p81
    %p83 = scmp.ne.s32.totalorder %s74, %s75
    %p84 = scmp.eq.s32.totalorder %s22, 0
    %p85 = por %p83, %p84
    %p86 = scmp.ne.s32.totalorder %s74, %s75
    %p87 = scmp.eq.s32.totalorder %s23, 1
    %p88 = por %p86, %p87
    %p90 = scmp.ne.s32.totalorder %s75, %s89
    %p91 = scmp.eq.s32.totalorder %s23, 0
    %p92 = por %p90, %p91
    %s94 = sadd.s32 %s93, 1
    %p97 = scmp.eq.s32.totalorder %s17, 1
    %p98 = scmp.ne.s32.totalorder %s93, %s95
    %p99 = scmp.eq.s32.totalorder %s17, 0
    %p100 = por %p98, %p99
    %p101 = scmp.ne.s32.totalorder %s93, %s95
    %p102 = scmp.eq.s32.totalorder %s22, 1
    %p103 = por %p101, %p102
    %p104 = scmp.ne.s32.totalorder %s95, %s96
    %p105 = scmp.eq.s32.totalorder %s22, 0
    %p106 = por %p104, %p105
    %p107 = scmp.ne.s32.totalorder %s95, %s96
    %p108 = scmp.eq.s32.totalorder %s23, 1
    %p109 = por %p107, %p108
    %p111 = scmp.ne.s32.totalorder %s96, %s110
    %p112 = scmp.eq.s32.totalorder %s23, 0
    %p113 = por %p111, %p112
    %s115 = sadd.s32 %s114, 1
    %p118 = scmp.eq.s32.totalorder %s17, 1
    %p119 = scmp.ne.s32.totalorder %s114, %s116
    %p120 = scmp.eq.s32.totalorder %s17, 0
    %p121 = por %p119, %p120
    %p122 = scmp.ne.s32.totalorder %s114, %s116
    %p123 = scmp.eq.s32.totalorder %s22, 1
    %p124 = por %p122, %p123
    %p125 = scmp.ne.s32.totalorder %s116, %s117
    %p126 = scmp.eq.s32.totalorder %s22, 0
    %p127 = por %p125, %p126
    %p128 = scmp.ne.s32.totalorder %s116, %s117
    %p129 = scmp.eq.s32.totalorder %s23, 1
    %p130 = por %p128, %p129
    %p132 = scmp.ne.s32.totalorder %s117, %s131
    %p133 = scmp.eq.s32.totalorder %s23, 0
    %p134 = por %p132, %p133
    %s136 = sadd.s32 %s135, 1
    %p139 = scmp.eq.s32.totalorder %s17, 1
    %p140 = scmp.ne.s32.totalorder %s135, %s137
    %p141 = scmp.eq.s32.totalorder %s17, 0
    %p142 = por %p140, %p141
    %p143 = scmp.ne.s32.totalorder %s135, %s137
    %p144 = scmp.eq.s32.totalorder %s22, 1
    %p145 = por %p143, %p144
    %p146 = scmp.ne.s32.totalorder %s137, %s138
    %p147 = scmp.eq.s32.totalorder %s22, 0
    %p148 = por %p146, %p147
    %p149 = scmp.ne.s32.totalorder %s137, %s138
    %p150 = scmp.eq.s32.totalorder %s23, 1
    %p151 = por %p149, %p150
    %p153 = scmp.ne.s32.totalorder %s138, %s152
    %p154 = scmp.eq.s32.totalorder %s23, 0
    %p155 = por %p153, %p154
    %s157 = sadd.s32 %s156, 1
    %p160 = scmp.eq.s32.totalorder %s17, 1
    %p161 = scmp.ne.s32.totalorder %s156, %s158
    %p162 = scmp.eq.s32.totalorder %s17, 0
    %p163 = por %p161, %p162
    %p164 = scmp.ne.s32.totalorder %s156, %s158
    %p165 = scmp.eq.s32.totalorder %s22, 1
    %p166 = por %p164, %p165
    %p167 = scmp.ne.s32.totalorder %s158, %s159
    %p168 = scmp.eq.s32.totalorder %s22, 0
    %p169 = por %p167, %p168
    %p170 = scmp.ne.s32.totalorder %s158, %s159
    %p171 = scmp.eq.s32.totalorder %s23, 1
    %p172 = por %p170, %p171
    %p174 = scmp.ne.s32.totalorder %s159, %s173
    %p175 = scmp.eq.s32.totalorder %s23, 0
    %p176 = por %p174, %p175
    %s178 = sadd.s32 %s177, 1
    %p181 = scmp.eq.s32.totalorder %s17, 1
    %p182 = scmp.ne.s32.totalorder %s177, %s179
    %p183 = scmp.eq.s32.totalorder %s17, 0
    %p184 = por %p182, %p183
    %p185 = scmp.ne.s32.totalorder %s177, %s179
    %p186 = scmp.eq.s32.totalorder %s22, 1
    %p187 = por %p185, %p186
    %p188 = scmp.ne.s32.totalorder %s179, %s180
    %p189 = scmp.eq.s32.totalorder %s22, 0
    %p190 = por %p188, %p189
    %p191 = scmp.ne.s32.totalorder %s179, %s180
    %p192 = scmp.eq.s32.totalorder %s23, 1
    %p193 = por %p191, %p192
    %p195 = scmp.ne.s32.totalorder %s180, %s194
    %p196 = scmp.eq.s32.totalorder %s23, 0
    %p197 = por %p195, %p196
    %s199 = sadd.s32 %s198, 1
    %p202 = scmp.eq.s32.totalorder %s17, 1
    %p203 = scmp.ne.s32.totalorder %s198, %s200
    %p204 = scmp.eq.s32.totalorder %s17, 0
    %p205 = por %p203, %p204
    %p206 = scmp.ne.s32.totalorder %s198, %s200
    %p207 = scmp.eq.s32.totalorder %s22, 1
    %p208 = por %p206, %p207
    %p209 = scmp.ne.s32.totalorder %s200, %s201
    %p210 = scmp.eq.s32.totalorder %s22, 0
    %p211 = por %p209, %p210
    %p212 = scmp.ne.s32.totalorder %s200, %s201
    %p213 = scmp.eq.s32.totalorder %s23, 1
    %p214 = por %p212, %p213
    %p216 = scmp.ne.s32.totalorder %s201, %s215
    %p217 = scmp.eq.s32.totalorder %s23, 0
    %p218 = por %p216, %p217
    %s220 = sadd.s32 %s219, 1
    %p223 = scmp.eq.s32.totalorder %s17, 1
    %p224 = scmp.ne.s32.totalorder %s219, %s221
    %p225 = scmp.eq.s32.totalorder %s17, 0
    %p226 = por %p224, %p225
    %p227 = scmp.ne.s32.totalorder %s219, %s221
    %p228 = scmp.eq.s32.totalorder %s22, 1
    %p229 = por %p227, %p228
    %p230 = scmp.ne.s32.totalorder %s221, %s222
    %p231 = scmp.eq.s32.totalorder %s22, 0
    %p232 = por %p230, %p231
    %p233 = scmp.ne.s32.totalorder %s221, %s222
    %p234 = scmp.eq.s32.totalorder %s23, 1
    %p235 = por %p233, %p234
    %p237 = scmp.ne.s32.totalorder %s222, %s236
    %p238 = scmp.eq.s32.totalorder %s23, 0
    %p239 = por %p237, %p238
    %s241 = sadd.s32 %s240, 1
    %p244 = scmp.eq.s32.totalorder %s17, 1
    %p245 = scmp.ne.s32.totalorder %s240, %s242
    %p246 = scmp.eq.s32.totalorder %s17, 0
    %p247 = por %p245, %p246
    %p248 = scmp.ne.s32.totalorder %s240, %s242
    %p249 = scmp.eq.s32.totalorder %s22, 1
    %p250 = por %p248, %p249
    %p251 = scmp.ne.s32.totalorder %s242, %s243
    %p252 = scmp.eq.s32.totalorder %s22, 0
    %p253 = por %p251, %p252
    %p254 = scmp.ne.s32.totalorder %s242, %s243
    %p255 = scmp.eq.s32.totalorder %s23, 1
    %p256 = por %p254, %p255
    %p258 = scmp.ne.s32.totalorder %s243, %s257
    %p259 = scmp.eq.s32.totalorder %s23, 0
    %p260 = por %p258, %p259
    %s261 = ssub.s32 %s17, %s24
    %p262 = scmp.eq.s32.totalorder %s261, 0
    %s264 = sadd.s32 %s263, 1
    %s265 = scalar_select %p262, %s263, %s264
    %p268 = pneg %p262
    %p269 = scmp.eq.s32.totalorder %s17, 1
    %p270 = por %p268, %p269
    %p271 = scmp.ne.s32.totalorder %s263, %s266
    %p272 = scmp.eq.s32.totalorder %s17, 0
    %p273 = por %p271, %p272
    %p274 = scmp.ne.s32.totalorder %s263, %s266
    %p275 = scmp.eq.s32.totalorder %s22, 1
    %p276 = por %p274, %p275
    %p277 = scmp.ne.s32.totalorder %s266, %s267
    %p278 = scmp.eq.s32.totalorder %s22, 0
    %p279 = por %p277, %p278
    %p280 = scmp.ne.s32.totalorder %s266, %s267
    %p281 = scmp.eq.s32.totalorder %s23, 1
    %p282 = por %p280, %p281
    %p284 = scmp.ne.s32.totalorder %s267, %s283
    %p285 = scmp.eq.s32.totalorder %s23, 0
    %p286 = por %p284, %p285
    %p287 = scmp.le.s32.totalorder 1, %s17
    %p288 = scmp.lt.s32.totalorder %s17, 3
    %p289 = pnand %p287, %p288
    %p290 = pneg %p289
    // Predicated region
    $region9: #{_lambda_.11} parent=5 // pred_check
      _
    $region10: #{_lambda_.11} parent=5 // pred_check_branch
      %292 = sbr.rel (%p289) target = $region12
    $region11: #{_lambda_.11} parent=5 // pred_region
      %s293 = ssub.s32 %s17, 1
      // Predicated region
      $region13: #{_lambda_.11} parent=11 // pred_check
        %p294 = pneg %p64
      $region14: #{_lambda_.11} parent=11 // pred_check_branch
        %296 = sbr.rel (%p294) target = $region16
      $region15: #{_lambda_.11} parent=11 // pred_region
        _
      $region16: #{_lambda_.11} parent=11 // pred_fallthru
        _
      // Predicated region
      $region17: #{_lambda_.11} parent=11 // pred_check
        %p297 = pneg %p85
      $region18: #{_lambda_.11} parent=11 // pred_check_branch
        %299 = sbr.rel (%p297) target = $region20
      $region19: #{_lambda_.11} parent=11 // pred_region
        _
      $region20: #{_lambda_.11} parent=11 // pred_fallthru
        _
      // Predicated region
      $region21: #{_lambda_.11} parent=11 // pred_check
        %p300 = pneg %p106
      $region22: #{_lambda_.11} parent=11 // pred_check_branch
        %302 = sbr.rel (%p300) target = $region24
      $region23: #{_lambda_.11} parent=11 // pred_region
        _
      $region24: #{_lambda_.11} parent=11 // pred_fallthru
        _
      // Predicated region
      $region25: #{_lambda_.11} parent=11 // pred_check
        %p303 = pneg %p127
      $region26: #{_lambda_.11} parent=11 // pred_check_branch
        %305 = sbr.rel (%p303) target = $region28
      $region27: #{_lambda_.11} parent=11 // pred_region
        _
      $region28: #{_lambda_.11} parent=11 // pred_fallthru
        _
      // Predicated region
      $region29: #{_lambda_.11} parent=11 // pred_check
        %p306 = pneg %p148
      $region30: #{_lambda_.11} parent=11 // pred_check_branch
        %308 = sbr.rel (%p306) target = $region32
      $region31: #{_lambda_.11} parent=11 // pred_region
        _
      $region32: #{_lambda_.11} parent=11 // pred_fallthru
        _
      // Predicated region
      $region33: #{_lambda_.11} parent=11 // pred_check
        %p309 = pneg %p169
      $region34: #{_lambda_.11} parent=11 // pred_check_branch
        %311 = sbr.rel (%p309) target = $region36
      $region35: #{_lambda_.11} parent=11 // pred_region
        _
      $region36: #{_lambda_.11} parent=11 // pred_fallthru
        _
      // Predicated region
      $region37: #{_lambda_.11} parent=11 // pred_check
        %p312 = pneg %p190
      $region38: #{_lambda_.11} parent=11 // pred_check_branch
        %314 = sbr.rel (%p312) target = $region40
      $region39: #{_lambda_.11} parent=11 // pred_region
        _
      $region40: #{_lambda_.11} parent=11 // pred_fallthru
        _
      // Predicated region
      $region41: #{_lambda_.11} parent=11 // pred_check
        %p315 = pneg %p211
      $region42: #{_lambda_.11} parent=11 // pred_check_branch
        %317 = sbr.rel (%p315) target = $region44
      $region43: #{_lambda_.11} parent=11 // pred_region
        _
      $region44: #{_lambda_.11} parent=11 // pred_fallthru
        _
      // Predicated region
      $region45: #{_lambda_.11} parent=11 // pred_check
        %p318 = pneg %p232
      $region46: #{_lambda_.11} parent=11 // pred_check_branch
        %320 = sbr.rel (%p318) target = $region48
      $region47: #{_lambda_.11} parent=11 // pred_region
        _
      $region48: #{_lambda_.11} parent=11 // pred_fallthru
        _
      // Predicated region
      $region49: #{_lambda_.11} parent=11 // pred_check
        %p321 = pneg %p253
      $region50: #{_lambda_.11} parent=11 // pred_check_branch
        %323 = sbr.rel (%p321) target = $region52
      $region51: #{_lambda_.11} parent=11 // pred_region
        _
      $region52: #{_lambda_.11} parent=11 // pred_fallthru
        _
    $region12: #{_lambda_.11} parent=5 // pred_fallthru
      _
    %p324 = scmp.lt.s32.totalorder %s17, 2
    // Predicated region
    $region53: #{_lambda_.11} parent=5 // pred_check
      %p325 = pneg %p324
    $region54: #{_lambda_.11} parent=5 // pred_check_branch
      %327 = sbr.rel (%p325) target = $region56
    $region55: #{_lambda_.11} parent=5 // pred_region
      // Predicated region
      $region57: #{_lambda_.11} parent=55 // pred_check
        %p328 = pneg %p37
      $region58: #{_lambda_.11} parent=55 // pred_check_branch
        %330 = sbr.rel (%p328) target = $region60
      $region59: #{_lambda_.11} parent=55 // pred_region
        %p331 = scmp.lt.s32.totalorder %s17, 1
        %s332 = scalar_select %p331, %s17, 1
        %s333 = smul.addr %s332, 4
        %s334 = scalar_lea.vmem %s0, %s333
      $region60: #{_lambda_.11} parent=55 // pred_fallthru
        _
    $region56: #{_lambda_.11} parent=5 // pred_fallthru
      _
    %p335 = scmp.le.s32.totalorder 1, %s17
    %p336 = scmp.lt.s32.totalorder %s17, 3
    %p337 = pnand %p335, %p336
    %p338 = pneg %p337
    // Predicated region
    $region61: #{_lambda_.11} parent=5 // pred_check
      _
    $region62: #{_lambda_.11} parent=5 // pred_check_branch
      %340 = sbr.rel (%p337) target = $region64
    $region63: #{_lambda_.11} parent=5 // pred_region
      %s341 = ssub.s32 %s17, 1
      %p342 = scmp.lt.s32.totalorder %s22, 1
      %s343 = scalar_select %p342, %s22, 1
      %s344 = smul.addr %s343, 4
      %s345 = scalar_lea.vmem %s0, %s344
      %p346 = pneg %p43
      %p347 = pneg %p40
      %p348 = pneg %p64
      %p349 = pneg %p61
      %p350 = pneg %p85
      %p351 = pneg %p82
      %p352 = pneg %p106
      %p353 = pneg %p103
      %p354 = pneg %p127
      %p355 = pneg %p124
      %p356 = pneg %p148
      %p357 = pneg %p145
      %p358 = pneg %p169
      %p359 = pneg %p166
      %p360 = pneg %p190
      %p361 = pneg %p187
      %p362 = pneg %p211
      %p363 = pneg %p208
      %p364 = pneg %p232
      %p365 = pneg %p229
      %p366 = pneg %p253
      %p367 = pneg %p250
      %p368 = pneg %p279
      %p369 = pneg %p276
      %p370 = scmp.lt.s32.totalorder %s22, 1
      %s371 = scalar_select %p370, %s22, 1
      %s372 = smul.addr %s371, 4
      %s373 = scalar_lea.vmem %s11, %s372
      %p374 = scmp.lt.s32.totalorder %s22, 1
      %s375 = scalar_select %p374, %s22, 1
      %s376 = smul.addr %s375, 4
      %s377 = scalar_lea.vmem %s0, %s376
      %p378 = scmp.lt.s32.totalorder %s22, 1
      %s379 = scalar_select %p378, %s22, 1
      %s380 = smul.addr %s379, 4
      %s381 = scalar_lea.vmem %s11, %s380
      %v383 = vld [vmem:[%s377] sm:$0xf]
      %vm384 = vcmask 1047556
      %v385 = vrot.slane %v383, 4
      %v386 = vsel %vm384, %v385, %v383
      %v387 = vrot.slane %v386, 4
      %v388 = vsel %vm384, %v387, %v383
      %v389 = vld [vmem:[%s1] sm:$0xf]
      %391 = vset.pattern.permute.xlu0 0
      %392 = vperm.xlu0 %391, %v389
      %v393 = vpop.permute.xlu0 %392
      %v394 = vrot.slane %v393, 5
      %v396 = vmul.f32 %v388, %v394
      %v397 = vld [vmem:[%s2] sm:$0x1]
      %v398 = vlaneseq
      %v399 = vshrl.u32 %v398, 7
      %v400 = vsub.s32 0, %v399
      %v401 = vrot.slane %v397, %v400
      %v402 = vmul.f32 %v396, %v401
      %v403 = vadd.f32 %v402, 0.0
      %s404 = scalar_lea.vmem %s1, 4
      %v405 = vld [vmem:[%s404] sm:$0xf]
      %407 = vset.pattern.permute.xlu0 0
      %408 = vperm.xlu0 %407, %v405
      %v409 = vpop.permute.xlu0 %408
      %v411 = vmul.f32 %v383, %v409
      %v412 = vld [vmem:[%s2 + $0x1] sm:$0x1]
      %v413 = vlaneseq
      %v414 = vshrl.u32 %v413, 7
      %v415 = vsub.s32 0, %v414
      %v416 = vrot.slane %v412, %v415
      %v417 = vmul.f32 %v411, %v416
      %v419 = vrot.slane %v417, 5
      %v421 = vadd.f32 %v403, %v419
      %s422 = scalar_lea.vmem %s1, 8
      %v423 = vld [vmem:[%s422] sm:$0xf]
      %425 = vset.pattern.permute.xlu0 0
      %426 = vperm.xlu0 %425, %v423
      %v427 = vpop.permute.xlu0 %426
      %v428 = vrot.slane %v427, 7
      %v430 = vmul.f32 %v388, %v428
      %v431 = vld [vmem:[%s2 + $0x2] sm:$0x1]
      %v432 = vlaneseq
      %v433 = vshrl.u32 %v432, 7
      %v434 = vsub.s32 0, %v433
      %v435 = vrot.slane %v431, %v434
      %v436 = vmul.f32 %v430, %v435
      %v438 = vrot.slane %v436, 6
      %v440 = vadd.f32 %v421, %v438
      %s441 = scalar_lea.vmem %s1, 12
      %v442 = vld [vmem:[%s441] sm:$0xf]
      %444 = vset.pattern.permute.xlu0 0
      %445 = vperm.xlu0 %444, %v442
      %v446 = vpop.permute.xlu0 %445
      %v447 = vrot.slane %v446, 6
      %v449 = vmul.f32 %v388, %v447
      %v450 = vld [vmem:[%s2 + $0x3] sm:$0x1]
      %v451 = vlaneseq
      %v452 = vshrl.u32 %v451, 7
      %v453 = vsub.s32 0, %v452
      %v454 = vrot.slane %v450, %v453
      %v455 = vmul.f32 %v449, %v454
      %v457 = vrot.slane %v455, 7
      %v459 = vadd.f32 %v440, %v457
      %s460 = scalar_lea.vmem %s1, 16
      %v461 = vld [vmem:[%s460] sm:$0xf]
      %463 = vset.pattern.permute.xlu0 0
      %464 = vperm.xlu0 %463, %v461
      %v465 = vpop.permute.xlu0 %464
      %v466 = vrot.slane %v465, 5
      %v468 = vmul.f32 %v388, %v466
      %v469 = vld [vmem:[%s2 + $0x4] sm:$0x1]
      %v470 = vlaneseq
      %v471 = vshrl.u32 %v470, 7
      %v472 = vsub.s32 0, %v471
      %v473 = vrot.slane %v469, %v472
      %v474 = vmul.f32 %v468, %v473
      %v475 = vadd.f32 %v459, %v474
      %s476 = scalar_lea.vmem %s1, 20
      %v477 = vld [vmem:[%s476] sm:$0xf]
      %479 = vset.pattern.permute.xlu0 0
      %480 = vperm.xlu0 %479, %v477
      %v481 = vpop.permute.xlu0 %480
      %v483 = vmul.f32 %v383, %v481
      %v484 = vld [vmem:[%s2 + $0x5] sm:$0x1]
      %v485 = vlaneseq
      %v486 = vshrl.u32 %v485, 7
      %v487 = vsub.s32 0, %v486
      %v488 = vrot.slane %v484, %v487
      %v489 = vmul.f32 %v483, %v488
      %v491 = vrot.slane %v489, 5
      %v493 = vadd.f32 %v475, %v491
      %s494 = scalar_lea.vmem %s1, 24
      %v495 = vld [vmem:[%s494] sm:$0xf]
      %497 = vset.pattern.permute.xlu0 0
      %498 = vperm.xlu0 %497, %v495
      %v499 = vpop.permute.xlu0 %498
      %v500 = vrot.slane %v499, 7
      %v502 = vmul.f32 %v388, %v500
      %v503 = vld [vmem:[%s2 + $0x6] sm:$0x1]
      %v504 = vlaneseq
      %v505 = vshrl.u32 %v504, 7
      %v506 = vsub.s32 0, %v505
      %v507 = vrot.slane %v503, %v506
      %v508 = vmul.f32 %v502, %v507
      %v510 = vrot.slane %v508, 6
      %v512 = vadd.f32 %v493, %v510
      %s513 = scalar_lea.vmem %s1, 28
      %v514 = vld [vmem:[%s513] sm:$0xf]
      %516 = vset.pattern.permute.xlu0 0
      %517 = vperm.xlu0 %516, %v514
      %v518 = vpop.permute.xlu0 %517
      %v519 = vrot.slane %v518, 7
      %v521 = vmul.f32 %v388, %v519
      %v522 = vld [vmem:[%s2 + $0x7] sm:$0x1]
      %v523 = vlaneseq
      %v524 = vshrl.u32 %v523, 7
      %v525 = vsub.s32 0, %v524
      %v526 = vrot.slane %v522, %v525
      %v527 = vmul.f32 %v521, %v526
      %v529 = vrot.slane %v527, 6
      %v531 = vadd.f32 %v512, %v529
      %s532 = scalar_lea.vmem %s1, 32
      %v533 = vld [vmem:[%s532] sm:$0xf]
      %535 = vset.pattern.permute.xlu0 0
      %536 = vperm.xlu0 %535, %v533
      %v537 = vpop.permute.xlu0 %536
      %v538 = vrot.slane %v537, 6
      %v540 = vmul.f32 %v388, %v538
      %v541 = vld [vmem:[%s2 + $0x8] sm:$0x1]
      %v542 = vlaneseq
      %v543 = vshrl.u32 %v542, 7
      %v544 = vsub.s32 0, %v543
      %v545 = vrot.slane %v541, %v544
      %v546 = vmul.f32 %v540, %v545
      %v548 = vrot.slane %v546, 7
      %v550 = vadd.f32 %v531, %v548
      %s551 = scalar_lea.vmem %s1, 36
      %v552 = vld [vmem:[%s551] sm:$0xf]
      %554 = vset.pattern.permute.xlu0 0
      %555 = vperm.xlu0 %554, %v552
      %v556 = vpop.permute.xlu0 %555
      %v557 = vrot.slane %v556, 5
      %v559 = vmul.f32 %v388, %v557
      %v560 = vld [vmem:[%s2 + $0x9] sm:$0x1]
      %v561 = vlaneseq
      %v562 = vshrl.u32 %v561, 7
      %v563 = vsub.s32 0, %v562
      %v564 = vrot.slane %v560, %v563
      %v565 = vmul.f32 %v559, %v564
      %v566 = vadd.f32 %v550, %v565
      %s567 = scalar_lea.vmem %s1, 40
      %v568 = vld [vmem:[%s567] sm:$0xf]
      %570 = vset.pattern.permute.xlu0 0
      %571 = vperm.xlu0 %570, %v568
      %v572 = vpop.permute.xlu0 %571
      %v574 = vmul.f32 %v383, %v572
      %v575 = vld [vmem:[%s2 + $0xa] sm:$0x1]
      %v576 = vlaneseq
      %v577 = vshrl.u32 %v576, 7
      %v578 = vsub.s32 0, %v577
      %v579 = vrot.slane %v575, %v578
      %v580 = vmul.f32 %v574, %v579
      %v582 = vrot.slane %v580, 5
      %v584 = vadd.f32 %v566, %v582
      %s585 = scalar_lea.vmem %s1, 44
      %v586 = vld [vmem:[%s585] sm:$0xf]
      %588 = vset.pattern.permute.xlu0 0
      %589 = vperm.xlu0 %588, %v586
      %v590 = vpop.permute.xlu0 %589
      %v591 = vrot.slane %v590, 7
      %v593 = vmul.f32 %v388, %v591
      %v594 = vld [vmem:[%s2 + $0xb] sm:$0x1]
      %v595 = vlaneseq
      %v596 = vshrl.u32 %v595, 7
      %v597 = vsub.s32 0, %v596
      %v598 = vrot.slane %v594, %v597
      %v599 = vmul.f32 %v593, %v598
      %v601 = vrot.slane %v599, 6
      %v603 = vadd.f32 %v584, %v601
      %s604 = scalar_lea.vmem %s1, 48
      %v605 = vld [vmem:[%s604] sm:$0xf]
      %607 = vset.pattern.permute.xlu0 0
      %608 = vperm.xlu0 %607, %v605
      %v609 = vpop.permute.xlu0 %608
      %v610 = vrot.slane %v609, 6
      %v612 = vmul.f32 %v388, %v610
      %v613 = vld [vmem:[%s2 + $0xc] sm:$0x1]
      %v614 = vlaneseq
      %v615 = vshrl.u32 %v614, 7
      %v616 = vsub.s32 0, %v615
      %v617 = vrot.slane %v613, %v616
      %v618 = vmul.f32 %v612, %v617
      %v620 = vrot.slane %v618, 7
      %v622 = vadd.f32 %v603, %v620
      %s623 = scalar_lea.vmem %s1, 52
      %v624 = vld [vmem:[%s623] sm:$0xf]
      %626 = vset.pattern.permute.xlu0 0
      %627 = vperm.xlu0 %626, %v624
      %v628 = vpop.permute.xlu0 %627
      %v629 = vrot.slane %v628, 5
      %v631 = vmul.f32 %v388, %v629
      %v632 = vld [vmem:[%s2 + $0xd] sm:$0x1]
      %v633 = vlaneseq
      %v634 = vshrl.u32 %v633, 7
      %v635 = vsub.s32 0, %v634
      %v636 = vrot.slane %v632, %v635
      %v637 = vmul.f32 %v631, %v636
      %v638 = vadd.f32 %v622, %v637
      %s639 = scalar_lea.vmem %s1, 56
      %v640 = vld [vmem:[%s639] sm:$0xf]
      %642 = vset.pattern.permute.xlu0 0
      %643 = vperm.xlu0 %642, %v640
      %v644 = vpop.permute.xlu0 %643
      %v645 = vrot.slane %v644, 5
      %v647 = vmul.f32 %v388, %v645
      %v648 = vld [vmem:[%s2 + $0xe] sm:$0x1]
      %v649 = vlaneseq
      %v650 = vshrl.u32 %v649, 7
      %v651 = vsub.s32 0, %v650
      %v652 = vrot.slane %v648, %v651
      %v653 = vmul.f32 %v647, %v652
      %v654 = vadd.f32 %v638, %v653
      %s655 = scalar_lea.vmem %s1, 60
      %v656 = vld [vmem:[%s655] sm:$0xf]
      %658 = vset.pattern.permute.xlu0 0
      %659 = vperm.xlu0 %658, %v656
      %v660 = vpop.permute.xlu0 %659
      %v662 = vmul.f32 %v383, %v660
      %v663 = vld [vmem:[%s2 + $0xf] sm:$0x1]
      %v664 = vlaneseq
      %v665 = vshrl.u32 %v664, 7
      %v666 = vsub.s32 0, %v665
      %v667 = vrot.slane %v663, %v666
      %v668 = vmul.f32 %v662, %v667
      %v670 = vrot.slane %v668, 5
      %v672 = vadd.f32 %v654, %v670
      %s673 = scalar_lea.vmem %s1, 64
      %v674 = vld [vmem:[%s673] sm:$0xf]
      %676 = vset.pattern.permute.xlu0 0
      %677 = vperm.xlu0 %676, %v674
      %v678 = vpop.permute.xlu0 %677
      %v679 = vrot.slane %v678, 7
      %v681 = vmul.f32 %v388, %v679
      %v682 = vld [vmem:[%s2 + $0x10] sm:$0x1]
      %v683 = vlaneseq
      %v684 = vshrl.u32 %v683, 7
      %v685 = vsub.s32 0, %v684
      %v686 = vrot.slane %v682, %v685
      %v687 = vmul.f32 %v681, %v686
      %v689 = vrot.slane %v687, 6
      %v691 = vadd.f32 %v672, %v689
      %s692 = scalar_lea.vmem %s1, 68
      %v693 = vld [vmem:[%s692] sm:$0xf]
      %695 = vset.pattern.permute.xlu0 0
      %696 = vperm.xlu0 %695, %v693
      %v697 = vpop.permute.xlu0 %696
      %v698 = vrot.slane %v697, 6
      %v700 = vmul.f32 %v388, %v698
      %v701 = vld [vmem:[%s2 + $0x11] sm:$0x1]
      %v702 = vlaneseq
      %v703 = vshrl.u32 %v702, 7
      %v704 = vsub.s32 0, %v703
      %v705 = vrot.slane %v701, %v704
      %v706 = vmul.f32 %v700, %v705
      %v708 = vrot.slane %v706, 7
      %v710 = vadd.f32 %v691, %v708
      %s711 = scalar_lea.vmem %s1, 72
      %v712 = vld [vmem:[%s711] sm:$0xf]
      %714 = vset.pattern.permute.xlu0 0
      %715 = vperm.xlu0 %714, %v712
      %v716 = vpop.permute.xlu0 %715
      %v717 = vrot.slane %v716, 5
      %v719 = vmul.f32 %v388, %v717
      %v720 = vld [vmem:[%s2 + $0x12] sm:$0x1]
      %v721 = vlaneseq
      %v722 = vshrl.u32 %v721, 7
      %v723 = vsub.s32 0, %v722
      %v724 = vrot.slane %v720, %v723
      %v725 = vmul.f32 %v719, %v724
      %v726 = vadd.f32 %v710, %v725
      %s727 = scalar_lea.vmem %s1, 76
      %v728 = vld [vmem:[%s727] sm:$0xf]
      %730 = vset.pattern.permute.xlu0 0
      %731 = vperm.xlu0 %730, %v728
      %v732 = vpop.permute.xlu0 %731
      %v734 = vmul.f32 %v383, %v732
      %v735 = vld [vmem:[%s2 + $0x13] sm:$0x1]
      %v736 = vlaneseq
      %v737 = vshrl.u32 %v736, 7
      %v738 = vsub.s32 0, %v737
      %v739 = vrot.slane %v735, %v738
      %v740 = vmul.f32 %v734, %v739
      %v742 = vrot.slane %v740, 5
      %v744 = vadd.f32 %v726, %v742
      %s745 = scalar_lea.vmem %s1, 80
      %v746 = vld [vmem:[%s745] sm:$0xf]
      %748 = vset.pattern.permute.xlu0 0
      %749 = vperm.xlu0 %748, %v746
      %v750 = vpop.permute.xlu0 %749
      %v751 = vrot.slane %v750, 7
      %v753 = vmul.f32 %v388, %v751
      %v754 = vld [vmem:[%s2 + $0x14] sm:$0x1]
      %v755 = vlaneseq
      %v756 = vshrl.u32 %v755, 7
      %v757 = vsub.s32 0, %v756
      %v758 = vrot.slane %v754, %v757
      %v759 = vmul.f32 %v753, %v758
      %v761 = vrot.slane %v759, 6
      %v763 = vadd.f32 %v744, %v761
      %s764 = scalar_lea.vmem %s1, 84
      %v765 = vld [vmem:[%s764] sm:$0xf]
      %767 = vset.pattern.permute.xlu0 0
      %768 = vperm.xlu0 %767, %v765
      %v769 = vpop.permute.xlu0 %768
      %v770 = vrot.slane %v769, 7
      %v772 = vmul.f32 %v388, %v770
      %v773 = vld [vmem:[%s2 + $0x15] sm:$0x1]
      %v774 = vlaneseq
      %v775 = vshrl.u32 %v774, 7
      %v776 = vsub.s32 0, %v775
      %v777 = vrot.slane %v773, %v776
      %v778 = vmul.f32 %v772, %v777
      %v780 = vrot.slane %v778, 6
      %v782 = vadd.f32 %v763, %v780
      %s783 = scalar_lea.vmem %s1, 88
      %v784 = vld [vmem:[%s783] sm:$0xf]
      %786 = vset.pattern.permute.xlu0 0
      %787 = vperm.xlu0 %786, %v784
      %v788 = vpop.permute.xlu0 %787
      %v789 = vrot.slane %v788, 6
      %v791 = vmul.f32 %v388, %v789
      %v792 = vld [vmem:[%s2 + $0x16] sm:$0x1]
      %v793 = vlaneseq
      %v794 = vshrl.u32 %v793, 7
      %v795 = vsub.s32 0, %v794
      %v796 = vrot.slane %v792, %v795
      %v797 = vmul.f32 %v791, %v796
      %v799 = vrot.slane %v797, 7
      %v801 = vadd.f32 %v782, %v799
      %s802 = scalar_lea.vmem %s1, 92
      %v803 = vld [vmem:[%s802] sm:$0xf]
      %805 = vset.pattern.permute.xlu0 0
      %806 = vperm.xlu0 %805, %v803
      %v807 = vpop.permute.xlu0 %806
      %v808 = vrot.slane %v807, 5
      %v810 = vmul.f32 %v388, %v808
      %v811 = vld [vmem:[%s2 + $0x17] sm:$0x1]
      %v812 = vlaneseq
      %v813 = vshrl.u32 %v812, 7
      %v814 = vsub.s32 0, %v813
      %v815 = vrot.slane %v811, %v814
      %v816 = vmul.f32 %v810, %v815
      %v817 = vadd.f32 %v801, %v816
      %s818 = scalar_lea.vmem %s1, 96
      %v819 = vld [vmem:[%s818] sm:$0xf]
      %821 = vset.pattern.permute.xlu0 0
      %822 = vperm.xlu0 %821, %v819
      %v823 = vpop.permute.xlu0 %822
      %v825 = vmul.f32 %v383, %v823
      %v826 = vld [vmem:[%s2 + $0x18] sm:$0x1]
      %v827 = vlaneseq
      %v828 = vshrl.u32 %v827, 7
      %v829 = vsub.s32 0, %v828
      %v830 = vrot.slane %v826, %v829
      %v831 = vmul.f32 %v825, %v830
      %v833 = vrot.slane %v831, 5
      %v835 = vadd.f32 %v817, %v833
      %s836 = scalar_lea.vmem %s1, 100
      %v837 = vld [vmem:[%s836] sm:$0xf]
      %839 = vset.pattern.permute.xlu0 0
      %840 = vperm.xlu0 %839, %v837
      %v841 = vpop.permute.xlu0 %840
      %v842 = vrot.slane %v841, 7
      %v844 = vmul.f32 %v388, %v842
      %v845 = vld [vmem:[%s2 + $0x19] sm:$0x1]
      %v846 = vlaneseq
      %v847 = vshrl.u32 %v846, 7
      %v848 = vsub.s32 0, %v847
      %v849 = vrot.slane %v845, %v848
      %v850 = vmul.f32 %v844, %v849
      %v852 = vrot.slane %v850, 6
      %v854 = vadd.f32 %v835, %v852
      %s855 = scalar_lea.vmem %s1, 104
      %v856 = vld [vmem:[%s855] sm:$0xf]
      %858 = vset.pattern.permute.xlu0 0
      %859 = vperm.xlu0 %858, %v856
      %v860 = vpop.permute.xlu0 %859
      %v861 = vrot.slane %v860, 6
      %v863 = vmul.f32 %v388, %v861
      %v864 = vld [vmem:[%s2 + $0x1a] sm:$0x1]
      %v865 = vlaneseq
      %v866 = vshrl.u32 %v865, 7
      %v867 = vsub.s32 0, %v866
      %v868 = vrot.slane %v864, %v867
      %v869 = vmul.f32 %v863, %v868
      %v871 = vrot.slane %v869, 7
      %v873 = vadd.f32 %v854, %v871
      %s874 = scalar_lea.vmem %s1, 108
      %v875 = vld [vmem:[%s874] sm:$0xf]
      %877 = vset.pattern.permute.xlu0 0
      %878 = vperm.xlu0 %877, %v875
      %v879 = vpop.permute.xlu0 %878
      %v880 = vrot.slane %v879, 5
      %v882 = vmul.f32 %v388, %v880
      %v883 = vld [vmem:[%s2 + $0x1b] sm:$0x1]
      %v884 = vlaneseq
      %v885 = vshrl.u32 %v884, 7
      %v886 = vsub.s32 0, %v885
      %v887 = vrot.slane %v883, %v886
      %v888 = vmul.f32 %v882, %v887
      %v889 = vadd.f32 %v873, %v888
      %s890 = scalar_lea.vmem %s1, 112
      %v891 = vld [vmem:[%s890] sm:$0xf]
      %893 = vset.pattern.permute.xlu0 0
      %894 = vperm.xlu0 %893, %v891
      %v895 = vpop.permute.xlu0 %894
      %v896 = vrot.slane %v895, 5
      %v898 = vmul.f32 %v388, %v896
      %v899 = vld [vmem:[%s2 + $0x1c] sm:$0x1]
      %v900 = vlaneseq
      %v901 = vshrl.u32 %v900, 7
      %v902 = vsub.s32 0, %v901
      %v903 = vrot.slane %v899, %v902
      %v904 = vmul.f32 %v898, %v903
      %v905 = vadd.f32 %v889, %v904
      %s906 = scalar_lea.vmem %s1, 116
      %v907 = vld [vmem:[%s906] sm:$0xf]
      %909 = vset.pattern.permute.xlu0 0
      %910 = vperm.xlu0 %909, %v907
      %v911 = vpop.permute.xlu0 %910
      %v913 = vmul.f32 %v383, %v911
      %v914 = vld [vmem:[%s2 + $0x1d] sm:$0x1]
      %v915 = vlaneseq
      %v916 = vshrl.u32 %v915, 7
      %v917 = vsub.s32 0, %v916
      %v918 = vrot.slane %v914, %v917
      %v919 = vmul.f32 %v913, %v918
      %v921 = vrot.slane %v919, 5
      %v923 = vadd.f32 %v905, %v921
      %s924 = scalar_lea.vmem %s1, 120
      %v925 = vld [vmem:[%s924] sm:$0xf]
      %927 = vset.pattern.permute.xlu0 0
      %928 = vperm.xlu0 %927, %v925
      %v929 = vpop.permute.xlu0 %928
      %v930 = vrot.slane %v929, 7
      %v932 = vmul.f32 %v388, %v930
      %v933 = vld [vmem:[%s2 + $0x1e] sm:$0x1]
      %v934 = vlaneseq
      %v935 = vshrl.u32 %v934, 7
      %v936 = vsub.s32 0, %v935
      %v937 = vrot.slane %v933, %v936
      %v938 = vmul.f32 %v932, %v937
      %v940 = vrot.slane %v938, 6
      %v942 = vadd.f32 %v923, %v940
      %s943 = scalar_lea.vmem %s1, 124
      %v944 = vld [vmem:[%s943] sm:$0xf]
      %946 = vset.pattern.permute.xlu0 0
      %947 = vperm.xlu0 %946, %v944
      %v948 = vpop.permute.xlu0 %947
      %v949 = vrot.slane %v948, 6
      %v951 = vmul.f32 %v388, %v949
      %v952 = vld [vmem:[%s2 + $0x1f] sm:$0x1]
      %v953 = vlaneseq
      %v954 = vshrl.u32 %v953, 7
      %v955 = vsub.s32 0, %v954
      %v956 = vrot.slane %v952, %v955
      %v957 = vmul.f32 %v951, %v956
      %v959 = vrot.slane %v957, 7
      %v961 = vadd.f32 %v942, %v959
      %s962 = scalar_lea.vmem %s1, 128
      %v963 = vld [vmem:[%s962] sm:$0xf]
      %965 = vset.pattern.permute.xlu0 0
      %966 = vperm.xlu0 %965, %v963
      %v967 = vpop.permute.xlu0 %966
      %v968 = vrot.slane %v967, 5
      %v970 = vmul.f32 %v388, %v968
      %v971 = vld [vmem:[%s2 + $0x20] sm:$0x1]
      %v972 = vlaneseq
      %v973 = vshrl.u32 %v972, 7
      %v974 = vsub.s32 0, %v973
      %v975 = vrot.slane %v971, %v974
      %v976 = vmul.f32 %v970, %v975
      %v977 = vadd.f32 %v961, %v976
      %s978 = scalar_lea.vmem %s1, 132
      %v979 = vld [vmem:[%s978] sm:$0xf]
      %981 = vset.pattern.permute.xlu0 0
      %982 = vperm.xlu0 %981, %v979
      %v983 = vpop.permute.xlu0 %982
      %v985 = vmul.f32 %v383, %v983
      %v986 = vld [vmem:[%s2 + $0x21] sm:$0x1]
      %v987 = vlaneseq
      %v988 = vshrl.u32 %v987, 7
      %v989 = vsub.s32 0, %v988
      %v990 = vrot.slane %v986, %v989
      %v991 = vmul.f32 %v985, %v990
      %v993 = vrot.slane %v991, 5
      %v995 = vadd.f32 %v977, %v993
      %s996 = scalar_lea.vmem %s1, 136
      %v997 = vld [vmem:[%s996] sm:$0xf]
      %999 = vset.pattern.permute.xlu0 0
      %1000 = vperm.xlu0 %999, %v997
      %v1001 = vpop.permute.xlu0 %1000
      %v1002 = vrot.slane %v1001, 7
      %v1004 = vmul.f32 %v388, %v1002
      %v1005 = vld [vmem:[%s2 + $0x22] sm:$0x1]
      %v1006 = vlaneseq
      %v1007 = vshrl.u32 %v1006, 7
      %v1008 = vsub.s32 0, %v1007
      %v1009 = vrot.slane %v1005, %v1008
      %v1010 = vmul.f32 %v1004, %v1009
      %v1012 = vrot.slane %v1010, 6
      %v1014 = vadd.f32 %v995, %v1012
      %s1015 = scalar_lea.vmem %s1, 140
      %v1016 = vld [vmem:[%s1015] sm:$0xf]
      %1018 = vset.pattern.permute.xlu0 0
      %1019 = vperm.xlu0 %1018, %v1016
      %v1020 = vpop.permute.xlu0 %1019
      %v1021 = vrot.slane %v1020, 7
      %v1023 = vmul.f32 %v388, %v1021
      %v1024 = vld [vmem:[%s2 + $0x23] sm:$0x1]
      %v1025 = vlaneseq
      %v1026 = vshrl.u32 %v1025, 7
      %v1027 = vsub.s32 0, %v1026
      %v1028 = vrot.slane %v1024, %v1027
      %v1029 = vmul.f32 %v1023, %v1028
      %v1031 = vrot.slane %v1029, 6
      %v1033 = vadd.f32 %v1014, %v1031
      %s1034 = scalar_lea.vmem %s1, 144
      %v1035 = vld [vmem:[%s1034] sm:$0xf]
      %1037 = vset.pattern.permute.xlu0 0
      %1038 = vperm.xlu0 %1037, %v1035
      %v1039 = vpop.permute.xlu0 %1038
      %v1040 = vrot.slane %v1039, 6
      %v1042 = vmul.f32 %v388, %v1040
      %v1043 = vld [vmem:[%s2 + $0x24] sm:$0x1]
      %v1044 = vlaneseq
      %v1045 = vshrl.u32 %v1044, 7
      %v1046 = vsub.s32 0, %v1045
      %v1047 = vrot.slane %v1043, %v1046
      %v1048 = vmul.f32 %v1042, %v1047
      %v1050 = vrot.slane %v1048, 7
      %v1052 = vadd.f32 %v1033, %v1050
      %s1053 = scalar_lea.vmem %s1, 148
      %v1054 = vld [vmem:[%s1053] sm:$0xf]
      %1056 = vset.pattern.permute.xlu0 0
      %1057 = vperm.xlu0 %1056, %v1054
      %v1058 = vpop.permute.xlu0 %1057
      %v1059 = vrot.slane %v1058, 5
      %v1061 = vmul.f32 %v388, %v1059
      %v1062 = vld [vmem:[%s2 + $0x25] sm:$0x1]
      %v1063 = vlaneseq
      %v1064 = vshrl.u32 %v1063, 7
      %v1065 = vsub.s32 0, %v1064
      %v1066 = vrot.slane %v1062, %v1065
      %v1067 = vmul.f32 %v1061, %v1066
      %v1068 = vadd.f32 %v1052, %v1067
      %s1069 = scalar_lea.vmem %s1, 152
      %v1070 = vld [vmem:[%s1069] sm:$0xf]
      %1072 = vset.pattern.permute.xlu0 0
      %1073 = vperm.xlu0 %1072, %v1070
      %v1074 = vpop.permute.xlu0 %1073
      %v1076 = vmul.f32 %v383, %v1074
      %v1077 = vld [vmem:[%s2 + $0x26] sm:$0x1]
      %v1078 = vlaneseq
      %v1079 = vshrl.u32 %v1078, 7
      %v1080 = vsub.s32 0, %v1079
      %v1081 = vrot.slane %v1077, %v1080
      %v1082 = vmul.f32 %v1076, %v1081
      %v1084 = vrot.slane %v1082, 5
      %v1086 = vadd.f32 %v1068, %v1084
      %s1087 = scalar_lea.vmem %s1, 156
      %v1088 = vld [vmem:[%s1087] sm:$0xf]
      %1090 = vset.pattern.permute.xlu0 0
      %1091 = vperm.xlu0 %1090, %v1088
      %v1092 = vpop.permute.xlu0 %1091
      %v1093 = vrot.slane %v1092, 7
      %v1095 = vmul.f32 %v388, %v1093
      %v1096 = vld [vmem:[%s2 + $0x27] sm:$0x1]
      %v1097 = vlaneseq
      %v1098 = vshrl.u32 %v1097, 7
      %v1099 = vsub.s32 0, %v1098
      %v1100 = vrot.slane %v1096, %v1099
      %v1101 = vmul.f32 %v1095, %v1100
      %v1103 = vrot.slane %v1101, 6
      %v1105 = vadd.f32 %v1086, %v1103
      %s1106 = scalar_lea.vmem %s1, 160
      %v1107 = vld [vmem:[%s1106] sm:$0xf]
      %1109 = vset.pattern.permute.xlu0 0
      %1110 = vperm.xlu0 %1109, %v1107
      %v1111 = vpop.permute.xlu0 %1110
      %v1112 = vrot.slane %v1111, 6
      %v1114 = vmul.f32 %v388, %v1112
      %v1115 = vld [vmem:[%s2 + $0x28] sm:$0x1]
      %v1116 = vlaneseq
      %v1117 = vshrl.u32 %v1116, 7
      %v1118 = vsub.s32 0, %v1117
      %v1119 = vrot.slane %v1115, %v1118
      %v1120 = vmul.f32 %v1114, %v1119
      %v1122 = vrot.slane %v1120, 7
      %v1124 = vadd.f32 %v1105, %v1122
      %s1125 = scalar_lea.vmem %s1, 164
      %v1126 = vld [vmem:[%s1125] sm:$0xf]
      %1128 = vset.pattern.permute.xlu0 0
      %1129 = vperm.xlu0 %1128, %v1126
      %v1130 = vpop.permute.xlu0 %1129
      %v1131 = vrot.slane %v1130, 5
      %v1133 = vmul.f32 %v388, %v1131
      %v1134 = vld [vmem:[%s2 + $0x29] sm:$0x1]
      %v1135 = vlaneseq
      %v1136 = vshrl.u32 %v1135, 7
      %v1137 = vsub.s32 0, %v1136
      %v1138 = vrot.slane %v1134, %v1137
      %v1139 = vmul.f32 %v1133, %v1138
      %v1140 = vadd.f32 %v1124, %v1139
      %s1141 = scalar_lea.vmem %s1, 168
      %v1142 = vld [vmem:[%s1141] sm:$0xf]
      %1144 = vset.pattern.permute.xlu0 0
      %1145 = vperm.xlu0 %1144, %v1142
      %v1146 = vpop.permute.xlu0 %1145
      %v1147 = vrot.slane %v1146, 5
      %v1149 = vmul.f32 %v388, %v1147
      %v1150 = vld [vmem:[%s2 + $0x2a] sm:$0x1]
      %v1151 = vlaneseq
      %v1152 = vshrl.u32 %v1151, 7
      %v1153 = vsub.s32 0, %v1152
      %v1154 = vrot.slane %v1150, %v1153
      %v1155 = vmul.f32 %v1149, %v1154
      %v1156 = vadd.f32 %v1140, %v1155
      %s1157 = scalar_lea.vmem %s1, 172
      %v1158 = vld [vmem:[%s1157] sm:$0xf]
      %1160 = vset.pattern.permute.xlu0 0
      %1161 = vperm.xlu0 %1160, %v1158
      %v1162 = vpop.permute.xlu0 %1161
      %v1164 = vmul.f32 %v383, %v1162
      %v1165 = vld [vmem:[%s2 + $0x2b] sm:$0x1]
      %v1166 = vlaneseq
      %v1167 = vshrl.u32 %v1166, 7
      %v1168 = vsub.s32 0, %v1167
      %v1169 = vrot.slane %v1165, %v1168
      %v1170 = vmul.f32 %v1164, %v1169
      %v1172 = vrot.slane %v1170, 5
      %v1174 = vadd.f32 %v1156, %v1172
      %s1175 = scalar_lea.vmem %s1, 176
      %v1176 = vld [vmem:[%s1175] sm:$0xf]
      %1178 = vset.pattern.permute.xlu0 0
      %1179 = vperm.xlu0 %1178, %v1176
      %v1180 = vpop.permute.xlu0 %1179
      %v1181 = vrot.slane %v1180, 7
      %v1183 = vmul.f32 %v388, %v1181
      %v1184 = vld [vmem:[%s2 + $0x2c] sm:$0x1]
      %v1185 = vlaneseq
      %v1186 = vshrl.u32 %v1185, 7
      %v1187 = vsub.s32 0, %v1186
      %v1188 = vrot.slane %v1184, %v1187
      %v1189 = vmul.f32 %v1183, %v1188
      %v1191 = vrot.slane %v1189, 6
      %v1193 = vadd.f32 %v1174, %v1191
      %s1194 = scalar_lea.vmem %s1, 180
      %v1195 = vld [vmem:[%s1194] sm:$0xf]
      %1197 = vset.pattern.permute.xlu0 0
      %1198 = vperm.xlu0 %1197, %v1195
      %v1199 = vpop.permute.xlu0 %1198
      %v1200 = vrot.slane %v1199, 6
      %v1202 = vmul.f32 %v388, %v1200
      %v1203 = vld [vmem:[%s2 + $0x2d] sm:$0x1]
      %v1204 = vlaneseq
      %v1205 = vshrl.u32 %v1204, 7
      %v1206 = vsub.s32 0, %v1205
      %v1207 = vrot.slane %v1203, %v1206
      %v1208 = vmul.f32 %v1202, %v1207
      %v1210 = vrot.slane %v1208, 7
      %v1212 = vadd.f32 %v1193, %v1210
      %s1213 = scalar_lea.vmem %s1, 184
      %v1214 = vld [vmem:[%s1213] sm:$0xf]
      %1216 = vset.pattern.permute.xlu0 0
      %1217 = vperm.xlu0 %1216, %v1214
      %v1218 = vpop.permute.xlu0 %1217
      %v1219 = vrot.slane %v1218, 5
      %v1221 = vmul.f32 %v388, %v1219
      %v1222 = vld [vmem:[%s2 + $0x2e] sm:$0x1]
      %v1223 = vlaneseq
      %v1224 = vshrl.u32 %v1223, 7
      %v1225 = vsub.s32 0, %v1224
      %v1226 = vrot.slane %v1222, %v1225
      %v1227 = vmul.f32 %v1221, %v1226
      %v1228 = vadd.f32 %v1212, %v1227
      %s1229 = scalar_lea.vmem %s1, 188
      %v1230 = vld [vmem:[%s1229] sm:$0xf]
      %1232 = vset.pattern.permute.xlu0 0
      %1233 = vperm.xlu0 %1232, %v1230
      %v1234 = vpop.permute.xlu0 %1233
      %v1236 = vmul.f32 %v383, %v1234
      %v1237 = vld [vmem:[%s2 + $0x2f] sm:$0x1]
      %v1238 = vlaneseq
      %v1239 = vshrl.u32 %v1238, 7
      %v1240 = vsub.s32 0, %v1239
      %v1241 = vrot.slane %v1237, %v1240
      %v1242 = vmul.f32 %v1236, %v1241
      %v1244 = vrot.slane %v1242, 5
      %v1246 = vadd.f32 %v1228, %v1244
      %s1247 = scalar_lea.vmem %s1, 192
      %v1248 = vld [vmem:[%s1247] sm:$0xf]
      %1250 = vset.pattern.permute.xlu0 0
      %1251 = vperm.xlu0 %1250, %v1248
      %v1252 = vpop.permute.xlu0 %1251
      %v1253 = vrot.slane %v1252, 7
      %v1255 = vmul.f32 %v388, %v1253
      %v1256 = vld [vmem:[%s2 + $0x30] sm:$0x1]
      %v1257 = vlaneseq
      %v1258 = vshrl.u32 %v1257, 7
      %v1259 = vsub.s32 0, %v1258
      %v1260 = vrot.slane %v1256, %v1259
      %v1261 = vmul.f32 %v1255, %v1260
      %v1263 = vrot.slane %v1261, 6
      %v1265 = vadd.f32 %v1246, %v1263
      %v1266 = vld [vmem:[%s3] sm:$0x1]
      %v1268 = vlaneseq
      %v1269 = vshrl.u32 %v1268, 7
      %v1270 = vsub.s32 0, %v1269
      %v1271 = vrot.slane %v1266, %v1270
      %v1273 = vadd.f32 %v1265, %v1271
      %v1274 = vld [vmem:[%s4] sm:$0x1]
      %v1275 = vld [vmem:[%s5] sm:$0x1]
      %vm1276 = vcmask 522243
      %v1277 = vsel %vm1276, %v1273, 0.0
      %1278 = vadd.xlane.f32.xlu0 %v1277
      %v1279 = vpop.xlane.xlu0 %1278
      %v1280 = vrcp.pop 64.0
      %v1281 = vmul.f32 %v1279, %v1280
      %v1282 = vsub.f32 %v1273, %v1281
      %v1283 = vmul.f32 %v1282, %v1282
      %v1284 = vsel %vm1276, %v1283, 0.0
      %1285 = vadd.xlane.f32.xlu0 %v1284
      %v1286 = vpop.xlane.xlu0 %1285
      %v1287 = vmul.f32 %v1286, %v1280
      %v1288 = vadd.f32 %v1287, 1e-06
      %v1289 = vrsqrt.pop %v1288
      %v1290 = vmul.f32 %v1282, %v1289
      %v1292 = vlaneseq
      %v1293 = vshrl.u32 %v1292, 7
      %v1294 = vsub.s32 0, %v1293
      %v1295 = vrot.slane %v1274, %v1294
      %v1297 = vmul.f32 %v1290, %v1295
      %v1299 = vlaneseq
      %v1300 = vshrl.u32 %v1299, 7
      %v1301 = vsub.s32 0, %v1300
      %v1302 = vrot.slane %v1275, %v1301
      %v1304 = vadd.f32 %v1297, %v1302
      %v1305 = vpack.c.bf16 %v1304, %v1304
      %v1306 = vld [vmem:[%s6] sm:$0xff]
      %v1307 = vld [vmem:[%s6 + $0x8] sm:$0xff]
      %v1308 = vld [vmem:[%s6 + $0x10] sm:$0xff]
      %v1309 = vld [vmem:[%s6 + $0x18] sm:$0xff]
      %v1310 = vld [vmem:[%s6 + $0x20] sm:$0xff]
      %v1311 = vld [vmem:[%s6 + $0x28] sm:$0xff]
      %v1312 = vld [vmem:[%s6 + $0x30] sm:$0xff]
      %v1313 = vld [vmem:[%s6 + $0x38] sm:$0xff]
      %v1314 = vld [vmem:[%s7] sm:$0x3]
      %v1316 = vlaneseq
      %v1317 = vshrl.u32 %v1316, 7
      %v1318 = vsub.s32 0, %v1317
      %v1319 = vrot.slane %v1314, %v1318
      %v1320 = vlaneseq
      %v1321 = vshrl.u32 %v1320, 7
      %v1322 = vsub.s32 1, %v1321
      %v1323 = vrot.slane %v1314, %v1322
      %v1327 = vshrl.u32 %v1305, 16
      %v1329 = vrot.slane %v1327, 1
      %v1330 = vshll.u32 %v1305, 16
      %v1332 = vrot.slane %v1330, 2
      %v1333 = vor.u32 %v1329, %v1332
      %v1342 = vunpack.c.l.b16 %v1306
      %v1343 = vunpack.c.h.b16 %v1306
      %v1344 = vunpack.c.l.b16 %v1307
      %v1345 = vunpack.c.h.b16 %v1307
      %v1346 = vunpack.c.l.b16 %v1308
      %v1347 = vunpack.c.h.b16 %v1308
      %v1348 = vunpack.c.l.b16 %v1309
      %v1349 = vunpack.c.h.b16 %v1309
      %v1350 = vunpack.c.l.b16 %v1310
      %v1351 = vunpack.c.h.b16 %v1310
      %v1352 = vunpack.c.l.b16 %v1311
      %v1353 = vunpack.c.h.b16 %v1311
      %v1354 = vunpack.c.l.b16 %v1312
      %v1355 = vunpack.c.h.b16 %v1312
      %v1356 = vunpack.c.l.b16 %v1313
      %v1357 = vunpack.c.h.b16 %v1313
      %v1358 = vpack.c.b16 %v1344, %v1342
      %v1359 = vpack.c.b16 %v1345, %v1343
      %v1360 = vpack.c.b16 %v1348, %v1346
      %v1361 = vpack.c.b16 %v1349, %v1347
      %v1362 = vpack.c.b16 %v1352, %v1350
      %v1363 = vpack.c.b16 %v1353, %v1351
      %v1364 = vpack.c.b16 %v1356, %v1354
      %v1365 = vpack.c.b16 %v1357, %v1355
      %vm1374 = vcmask 523264
      %v1376 = vsel %vm1374, %v1333, 0
      %1378 = vmatprep.subr.bf16.mxu0 %v1359
      %1379 = vmatpush1.bf16.msra.mxu0 %v1358
      %1380 = vmatprep.subr.bf16.mxu0 %v1361
      %1381 = vmatpush1.bf16.msra.mxu0 %v1360
      %1382 = vmatprep.subr.bf16.mxu0 %v1363
      %1383 = vmatpush1.bf16.msra.mxu0 %v1362
      %1384 = vmatprep.subr.bf16.mxu0 %v1365
      %1385 = vmatpush1.bf16.msra.mxu0 %v1364
      %1386 = vmatprep.subr.bf16.mxu0 0
      %1387 = vmatpush1.bf16.msra.mxu0 0
      %1388 = vmatprep.subr.bf16.mxu0 0
      %1389 = vmatpush1.bf16.msra.mxu0 0
      %1390 = vmatprep.subr.bf16.mxu0 0
      %1391 = vmatpush1.bf16.msra.mxu0 0
      %1392 = vmatprep.subr.bf16.mxu0 0
      %1393 = vmatpush1.bf16.msra.mxu0 0
      %1394 = vmatprep.subr.bf16.mxu0 0
      %1395 = vmatpush1.bf16.msra.mxu0 0
      %1396 = vmatprep.subr.bf16.mxu0 0
      %1397 = vmatpush1.bf16.msra.mxu0 0
      %1398 = vmatprep.subr.bf16.mxu0 0
      %1399 = vmatpush1.bf16.msra.mxu0 0
      %1400 = vmatprep.subr.bf16.mxu0 0
      %1401 = vmatpush1.bf16.msra.mxu0 0
      %1402 = vmatprep.subr.bf16.mxu0 0
      %1403 = vmatpush1.bf16.msra.mxu0 0
      %1404 = vmatprep.subr.bf16.mxu0 0
      %1405 = vmatpush1.bf16.msra.mxu0 0
      %1406 = vmatprep.subr.bf16.mxu0 0
      %1407 = vmatpush1.bf16.msra.mxu0 0
      %1408 = vmatprep.subr.bf16.mxu0 0
      %1409 = vmatpush1.bf16.msra.mxu0 0
      %1410 = vmatprep.mubr.bf16.mxu0 0
      %1411 = vmatmul.mubr.bf16.gmra.mrb[0].mxu0 %v1376
      %v1412 = vpop.f32.mrb[0].mxu0
      %v1413 = vadd.f32 %v1319, %v1412
      %v1414 = vpop.f32.mrb[0].mxu0
      %v1415 = vadd.f32 %v1323, %v1414
      %v1416 = vpop.f32.mrb[0].mxu0
      %v1417 = vpop.f32.mrb[0].mxu0
      %1418 = vdwg.mxu0
      %v1419 = vmul.f32 %v1413, 0.5
      %v1420 = vmul.f32 %v1415, 0.5
      %v1421 = vmul.f32 %v1413, 0.70710677
      %v1422 = vmul.f32 %v1415, 0.70710677
      %v1423 = vand.u32 2147483647, %v1421
      %v1424 = vand.u32 2147483647, %v1422
      %v1425 = vmul.f32 %v1423, 0.3275911
      %v1426 = vmul.f32 %v1424, 0.3275911
      %v1427 = vadd.f32 %v1425, 1.0
      %v1428 = vadd.f32 %v1426, 1.0
      %v1429 = vrcp.pop %v1427
      %v1430 = vrcp.pop %v1428
      %v1431 = vmul.f32 %v1429, 1.0614054
      %v1432 = vmul.f32 %v1430, 1.0614054
      %v1433 = vadd.f32 %v1431, -1.4531521
      %v1434 = vadd.f32 %v1432, -1.4531521
      %v1435 = vmul.f32 %v1433, %v1429
      %v1436 = vmul.f32 %v1434, %v1430
      %v1437 = vadd.f32 %v1435, 1.4214138
      %v1438 = vadd.f32 %v1436, 1.4214138
      %v1439 = vmul.f32 %v1437, %v1429
      %v1440 = vmul.f32 %v1438, %v1430
      %v1441 = vadd.f32 %v1439, -0.28449672
      %v1442 = vadd.f32 %v1440, -0.28449672
      %v1443 = vmul.f32 %v1441, %v1429
      %v1444 = vmul.f32 %v1442, %v1430
      %v1445 = vadd.f32 %v1443, 0.2548296
      %v1446 = vadd.f32 %v1444, 0.2548296
      %v1447 = vmul.f32 %v1445, %v1429
      %v1448 = vmul.f32 %v1446, %v1430
      %v1449 = vsub.f32 0.0, %v1423
      %v1450 = vsub.f32 0.0, %v1424
      %v1451 = vmul.f32 %v1449, %v1423
      %v1452 = vmul.f32 %v1450, %v1424
      %v1453 = vmul.f32 %v1451, 1.442695
      %v1454 = vpow.pop %v1453
      %v1455 = vmul.f32 %v1452, 1.442695
      %v1456 = vpow.pop %v1455
      %v1457 = vmul.f32 %v1447, %v1454
      %v1458 = vmul.f32 %v1448, %v1456
      %v1459 = vsub.f32 1.0, %v1457
      %v1460 = vsub.f32 1.0, %v1458
      %vm1461 = vcmp.lt.f32.partialorder %v1421, 0.0
      %vm1462 = vcmp.lt.f32.partialorder %v1422, 0.0
      %v1463 = vsub.f32 0.0, %v1459
      %v1464 = vsub.f32 0.0, %v1460
      %v1465 = vsel %vm1461, %v1463, %v1459
      %v1466 = vsel %vm1462, %v1464, %v1460
      %v1467 = vadd.f32 %v1465, 1.0
      %v1468 = vadd.f32 %v1466, 1.0
      %v1469 = vmul.f32 %v1419, %v1467
      %v1470 = vmul.f32 %v1420, %v1468
      %v1471 = vpack.c.bf16 %v1469, %v1469
      %v1472 = vpack.c.bf16 %v1470, %v1470
      %v1473 = vld [vmem:[%s8] sm:$0xf]
      %v1474 = vld [vmem:[%s8 + $0x4] sm:$0xf]
      %v1475 = vld [vmem:[%s8 + $0x8] sm:$0xf]
      %v1476 = vld [vmem:[%s8 + $0xc] sm:$0xf]
      %v1477 = vld [vmem:[%s8 + $0x10] sm:$0xf]
      %v1478 = vld [vmem:[%s8 + $0x14] sm:$0xf]
      %v1479 = vld [vmem:[%s8 + $0x18] sm:$0xf]
      %v1480 = vld [vmem:[%s8 + $0x1c] sm:$0xf]
      %v1481 = vld [vmem:[%s8 + $0x20] sm:$0xf]
      %v1482 = vld [vmem:[%s8 + $0x24] sm:$0xf]
      %v1483 = vld [vmem:[%s8 + $0x28] sm:$0xf]
      %v1484 = vld [vmem:[%s8 + $0x2c] sm:$0xf]
      %v1485 = vld [vmem:[%s8 + $0x30] sm:$0xf]
      %v1486 = vld [vmem:[%s8 + $0x34] sm:$0xf]
      %v1487 = vld [vmem:[%s8 + $0x38] sm:$0xf]
      %v1488 = vld [vmem:[%s8 + $0x3c] sm:$0xf]
      %v1489 = vld [vmem:[%s8 + $0x40] sm:$0xf]
      %v1490 = vld [vmem:[%s8 + $0x44] sm:$0xf]
      %v1491 = vld [vmem:[%s8 + $0x48] sm:$0xf]
      %v1492 = vld [vmem:[%s8 + $0x4c] sm:$0xf]
      %v1493 = vld [vmem:[%s8 + $0x50] sm:$0xf]
      %v1494 = vld [vmem:[%s8 + $0x54] sm:$0xf]
      %v1495 = vld [vmem:[%s8 + $0x58] sm:$0xf]
      %v1496 = vld [vmem:[%s8 + $0x5c] sm:$0xf]
      %v1497 = vld [vmem:[%s8 + $0x60] sm:$0xf]
      %v1498 = vld [vmem:[%s8 + $0x64] sm:$0xf]
      %v1499 = vld [vmem:[%s8 + $0x68] sm:$0xf]
      %v1500 = vld [vmem:[%s8 + $0x6c] sm:$0xf]
      %v1501 = vld [vmem:[%s8 + $0x70] sm:$0xf]
      %v1502 = vld [vmem:[%s8 + $0x74] sm:$0xf]
      %v1503 = vld [vmem:[%s8 + $0x78] sm:$0xf]
      %v1504 = vld [vmem:[%s8 + $0x7c] sm:$0xf]
      %v1505 = vld [vmem:[%s9] sm:$0x1]
      %v1507 = vlaneseq
      %v1508 = vshrl.u32 %v1507, 7
      %v1509 = vsub.s32 0, %v1508
      %v1510 = vrot.slane %v1505, %v1509
      %v1544 = vunpack.c.l.b16 %v1473
      %v1545 = vunpack.c.l.b16 %v1474
      %v1546 = vunpack.c.l.b16 %v1475
      %v1547 = vunpack.c.l.b16 %v1476
      %v1548 = vunpack.c.l.b16 %v1477
      %v1549 = vunpack.c.l.b16 %v1478
      %v1550 = vunpack.c.l.b16 %v1479
      %v1551 = vunpack.c.l.b16 %v1480
      %v1552 = vunpack.c.l.b16 %v1481
      %v1553 = vunpack.c.l.b16 %v1482
      %v1554 = vunpack.c.l.b16 %v1483
      %v1555 = vunpack.c.l.b16 %v1484
      %v1556 = vunpack.c.l.b16 %v1485
      %v1557 = vunpack.c.l.b16 %v1486
      %v1558 = vunpack.c.l.b16 %v1487
      %v1559 = vunpack.c.l.b16 %v1488
      %v1560 = vunpack.c.l.b16 %v1489
      %v1561 = vunpack.c.l.b16 %v1490
      %v1562 = vunpack.c.l.b16 %v1491
      %v1563 = vunpack.c.l.b16 %v1492
      %v1564 = vunpack.c.l.b16 %v1493
      %v1565 = vunpack.c.l.b16 %v1494
      %v1566 = vunpack.c.l.b16 %v1495
      %v1567 = vunpack.c.l.b16 %v1496
      %v1568 = vunpack.c.l.b16 %v1497
      %v1569 = vunpack.c.l.b16 %v1498
      %v1570 = vunpack.c.l.b16 %v1499
      %v1571 = vunpack.c.l.b16 %v1500
      %v1572 = vunpack.c.l.b16 %v1501
      %v1573 = vunpack.c.l.b16 %v1502
      %v1574 = vunpack.c.l.b16 %v1503
      %v1575 = vunpack.c.l.b16 %v1504
      %v1576 = vpack.c.b16 %v1545, %v1544
      %v1577 = vpack.c.b16 %v1547, %v1546
      %v1578 = vpack.c.b16 %v1549, %v1548
      %v1579 = vpack.c.b16 %v1551, %v1550
      %v1580 = vpack.c.b16 %v1553, %v1552
      %v1581 = vpack.c.b16 %v1555, %v1554
      %v1582 = vpack.c.b16 %v1557, %v1556
      %v1583 = vpack.c.b16 %v1559, %v1558
      %v1584 = vpack.c.b16 %v1561, %v1560
      %v1585 = vpack.c.b16 %v1563, %v1562
      %v1586 = vpack.c.b16 %v1565, %v1564
      %v1587 = vpack.c.b16 %v1567, %v1566
      %v1588 = vpack.c.b16 %v1569, %v1568
      %v1589 = vpack.c.b16 %v1571, %v1570
      %v1590 = vpack.c.b16 %v1573, %v1572
      %v1591 = vpack.c.b16 %v1575, %v1574
      %1608 = vmatprep.subr.bf16.mxu0 0
      %1609 = vmatpush1.bf16.msra.mxu0 %v1576
      %1610 = vmatprep.subr.bf16.mxu0 0
      %1611 = vmatpush1.bf16.msra.mxu0 %v1577
      %1612 = vmatprep.subr.bf16.mxu0 0
      %1613 = vmatpush1.bf16.msra.mxu0 %v1578
      %1614 = vmatprep.subr.bf16.mxu0 0
      %1615 = vmatpush1.bf16.msra.mxu0 %v1579
      %1616 = vmatprep.subr.bf16.mxu0 0
      %1617 = vmatpush1.bf16.msra.mxu0 %v1580
      %1618 = vmatprep.subr.bf16.mxu0 0
      %1619 = vmatpush1.bf16.msra.mxu0 %v1581
      %1620 = vmatprep.subr.bf16.mxu0 0
      %1621 = vmatpush1.bf16.msra.mxu0 %v1582
      %1622 = vmatprep.subr.bf16.mxu0 0
      %1623 = vmatpush1.bf16.msra.mxu0 %v1583
      %1624 = vmatprep.subr.bf16.mxu0 0
      %1625 = vmatpush1.bf16.msra.mxu0 %v1584
      %1626 = vmatprep.subr.bf16.mxu0 0
      %1627 = vmatpush1.bf16.msra.mxu0 %v1585
      %1628 = vmatprep.subr.bf16.mxu0 0
      %1629 = vmatpush1.bf16.msra.mxu0 %v1586
      %1630 = vmatprep.subr.bf16.mxu0 0
      %1631 = vmatpush1.bf16.msra.mxu0 %v1587
      %1632 = vmatprep.subr.bf16.mxu0 0
      %1633 = vmatpush1.bf16.msra.mxu0 %v1588
      %1634 = vmatprep.subr.bf16.mxu0 0
      %1635 = vmatpush1.bf16.msra.mxu0 %v1589
      %1636 = vmatprep.subr.bf16.mxu0 0
      %1637 = vmatpush1.bf16.msra.mxu0 %v1590
      %1638 = vmatprep.subr.bf16.mxu0 0
      %1639 = vmatpush1.bf16.msra.mxu0 %v1591
      %1640 = vmatprep.mubr.bf16.mxu0 %v1472
      %1641 = vmatmul.mubr.bf16.gmra.mrb[0].mxu0 %v1471
      %v1642 = vpop.f32.mrb[0].mxu0
      %v1643 = vadd.f32 %v1510, %v1642
      %v1644 = vpop.f32.mrb[0].mxu0
      %v1645 = vpop.f32.mrb[0].mxu0
      %v1646 = vpop.f32.mrb[0].mxu0
      %1647 = vdwg.mxu0
      %v1648 = vld [vmem:[%s10] sm:$0x1]
      %v1650 = vlaneseq
      %v1651 = vshrl.u32 %v1650, 7
      %v1652 = vsub.s32 0, %v1651
      %v1653 = vrot.slane %v1648, %v1652
      %v1655 = vmul.f32 %v1653, %v1643
      %v1656 = vadd.f32 %v383, %v1655
      %vm1657 = vcmask 519168
      %1658 = vst.msk [vmem:[%s381] sm:$0xf] %vm1657, %v1656
      %p1659 = scmp.lt.s32.totalorder %s22, 1
      %s1660 = scalar_select %p1659, %s22, 1
      %s1661 = smul.addr %s1660, 4
      %s1662 = scalar_lea.vmem %s11, %s1661
      // Predicated region
      $region65: #{_lambda_.11} parent=63 // pred_check
        %p1663 = pneg %p276
      $region66: #{_lambda_.11} parent=63 // pred_check_branch
        %1665 = sbr.rel (%p1663) target = $region68
      $region67: #{_lambda_.11} parent=63 // pred_region
        _
      $region68: #{_lambda_.11} parent=63 // pred_fallthru
        _
    $region64: #{_lambda_.11} parent=5 // pred_fallthru
      _
    %p1666 = scmp.le.s32.totalorder 2, %s17
    // Predicated region
    $region69: #{_lambda_.11} parent=5 // pred_check
      %p1667 = pneg %p1666
    $region70: #{_lambda_.11} parent=5 // pred_check_branch
      %1669 = sbr.rel (%p1667) target = $region72
    $region71: #{_lambda_.11} parent=5 // pred_region
      %s1670 = ssub.s32 %s17, 2
      // Predicated region
      $region73: #{_lambda_.11} parent=71 // pred_check
        %p1671 = pneg %p282
      $region74: #{_lambda_.11} parent=71 // pred_check_branch
        %1673 = sbr.rel (%p1671) target = $region76
      $region75: #{_lambda_.11} parent=71 // pred_region
        %p1674 = scmp.lt.s32.totalorder %s23, 1
        %s1675 = scalar_select %p1674, %s23, 1
        %s1676 = smul.addr %s1675, 4
        %s1677 = scalar_lea.vmem %s11, %s1676
      $region76: #{_lambda_.11} parent=71 // pred_fallthru
        _
    $region72: #{_lambda_.11} parent=5 // pred_fallthru
      _
  $region6: #{_lambda_.11} parent=0 // loop_footer
    %s21 = sadd.s32 1, %s17
  $region7: #{_lambda_.11} parent=0 // loop_footer_branch
    %16 = sbr.rel target = $region3
  $region8: #{_lambda_.11} parent=0 // loop_exit
    _

</llo_original>
